<compile_context>
chip_gen: v6e
topology: v6e:2x2x1
jax: 0.10.0
libtpu: 0.0.40
codegen_flags: <defaults>
</compile_context>

<pallas_src>
import math

import numpy as np
import jax
import jax.numpy as jnp
from jax.experimental import pallas as pl
from jax.experimental.pallas import tpu as pltpu

BN_EPS = 1e-5
BN_SCALE = 1.0 / math.sqrt(1.0 + BN_EPS)   # gamma=1, beta=0, mean=0, var=1


# --------------------------- gather matrices --------------------------------- #
def _gather_matrix(H, W, stride):
    """0/1 matrices S[t] (Ho*Wo, H*W): tap-t source of each output position of a
    3x3 / pad-1 / given-stride conv (zero row where the tap hits the padding)."""
    Ho = (H + 2 - 3) // stride + 1
    Wo = (W + 2 - 3) // stride + 1
    S = np.zeros((9, Ho * Wo, H * W), np.float32)
    for kh in range(3):
        for kw in range(3):
            t = kh * 3 + kw
            for i in range(Ho):
                for j in range(Wo):
                    h = i * stride + kh - 1
                    w = j * stride + kw - 1
                    if 0 <= h < H and 0 <= w < W:
                        S[t, i * Wo + j, h * W + w] = 1.0
    return jnp.asarray(S, jnp.bfloat16)


# ------------------------------ Pallas kernel -------------------------------- #
def _mff_oce_kernel(
    x0_ref, x1_ref, x2_ref,
    s1_ref, s2_ref, s3_ref, s4_ref,
    w_c1_ref, w_c21_ref, b21_ref, w_c2_ref, w_c31_ref, b31_ref, w_cf_ref, bf_ref,
    w_b0c1_ref, w_b0c2_ref, w_b0ds_ref, w_b1c1_ref, w_b1c2_ref,
    o_ref,
):
    bf16 = jnp.bfloat16
    f32 = jnp.float32
    relu = lambda v: jnp.maximum(v, 0.0)

    def mm(a, b):  # bf16 x bf16 -> f32 accumulate
        return jnp.dot(a.astype(bf16), b, preferred_element_type=f32)

    def conv3x3(x_bf16, s_ref, w_ref):
        # x: (Min, Cin) bf16, s_ref: (9, Mo, Min) bf16, w_ref: (9, Cin, Cout) bf16
        acc = None
        for t in range(9):                                   # unrolled at trace time
            taps = jnp.dot(s_ref[t], x_bf16, preferred_element_type=f32)   # (Mo, Cin)
            y = jnp.dot(taps.astype(bf16), w_ref[t], preferred_element_type=f32)
            acc = y if acc is None else acc + y
        return acc                                            # (Mo, Cout) f32

    # ----------------------------- head ------------------------------------- #
    x0 = x0_ref[0]                                            # (256, 16) bf16
    fpn0 = relu(conv3x3(x0, s1_ref, w_c1_ref))                # (64, 32)  f32

    x1 = x1_ref[0]                                            # (64, 32)
    fpn1 = relu(mm(x1, w_c21_ref[...]) + b21_ref[...]) + fpn0 # (64, 32)

    x2 = x2_ref[0]                                            # (16, 64)
    branch = relu(mm(x2, w_c31_ref[...]) + b31_ref[...])      # (16, 64)

    sv = relu(conv3x3(fpn1.astype(bf16), s2_ref, w_c2_ref)) + branch   # (16, 64)
    sv = relu(mm(sv, w_cf_ref[...]) + bf_ref[...])            # (16, 64)

    # ----------------- BasicBlock 0 (stride 2, downsample) ------------------ #
    sv_b = sv.astype(bf16)
    out = relu(conv3x3(sv_b, s3_ref, w_b0c1_ref))             # (4, 128)
    out = conv3x3(out.astype(bf16), s4_ref, w_b0c2_ref)       # (4, 128)
    # 1x1 stride-2 downsample == centre tap (t=4) of the stride-2 gather matrix
    ident = jnp.dot(
        jnp.dot(s3_ref[4], sv_b, preferred_element_type=f32).astype(bf16),
        w_b0ds_ref[...], preferred_element_type=f32)          # (4, 128)
    x = relu(out + ident)

    # ----------------- BasicBlock 1 (stride 1, identity) -------------------- #
    out = relu(conv3x3(x.astype(bf16), s4_ref, w_b1c1_ref))   # (4, 128)
    out = conv3x3(out.astype(bf16), s4_ref, w_b1c2_ref)       # (4, 128)
    x = relu(out + x)

    o_ref[0] = x                                              # lane-dense (4, 128) f32


# ------------------------------ pallas_call ----------------------------------- #
def _batch_spec(shape):
    def imap(b):
        return (b, 0, 0)
    return pl.BlockSpec((1,) + tuple(shape[1:]), imap)


def _const_spec(arr):
    nd = arr.ndim
    def imap(b):
        return (0,) * nd
    return pl.BlockSpec(arr.shape, imap)


def _mff_oce_pallas(params, x0, x1, x2):
    B = x0.shape[0]
    const_inputs = [
        params["S1"], params["S2"], params["S3"], params["S4"],
        params["w_c1"], params["w_c21"], params["b21"],
        params["w_c2"], params["w_c31"], params["b31"],
        params["w_cf"], params["bf"],
        params["w_b0c1"], params["w_b0c2"], params["w_b0ds"],
        params["w_b1c1"], params["w_b1c2"],
    ]
    in_specs = [_batch_spec(x0.shape), _batch_spec(x1.shape), _batch_spec(x2.shape)]
    in_specs += [_const_spec(a) for a in const_inputs]
    return pl.pallas_call(
        _mff_oce_kernel,
        out_shape=jax.ShapeDtypeStruct((B, 4, 128), jnp.float32),
        grid=(B,),
        in_specs=in_specs,
        out_specs=pl.BlockSpec((1, 4, 128), lambda b: (b, 0, 0)),
        compiler_params=pltpu.CompilerParams(dimension_semantics=("parallel",)),
    )(x0, x1, x2, *const_inputs)


# ---------------------------- parameter setup --------------------------------- #
def _kaiming_conv3x3(key, cin, cout):
    std = math.sqrt(2.0 / (cout * 9))       # kaiming_normal_(fan_out, relu)
    w = jax.random.normal(key, (3, 3, cin, cout), jnp.float32) * std
    return w.reshape(9, cin, cout)


def _kaiming_conv1x1(key, cin, cout):
    std = math.sqrt(2.0 / cout)
    return jax.random.normal(key, (cin, cout), jnp.float32) * std


def _conv_bias(key, cin, cout):              # PyTorch default Conv2d bias init
    bound = 1.0 / math.sqrt(cin)
    return jax.random.uniform(key, (cout,), jnp.float32, -bound, bound)


def init_params(key, expansion=1, layers=2):
    assert layers == 2 and expansion == 1, "synthetic instantiation"
    c16, c32, c64, c128 = 16 * expansion, 32 * expansion, 64 * expansion, 128 * expansion
    keys = iter(jax.random.split(key, 16))
    nk = lambda: next(keys)
    s = BN_SCALE
    bf16 = jnp.bfloat16

    p = {}
    # head: conv1(3x3 s2, no bias) / conv21(1x1 bias) / conv2(3x3 s2) / conv31 / convf
    p["w_c1"]  = (_kaiming_conv3x3(nk(), c16, c32) * s).astype(bf16)
    p["w_c21"] = (_kaiming_conv1x1(nk(), c32, c32) * s).astype(bf16)
    p["b21"]   = (_conv_bias(nk(), c32, c32) * s).reshape(1, c32)
    p["w_c2"]  = (_kaiming_conv3x3(nk(), c32, c64) * s).astype(bf16)
    p["w_c31"] = (_kaiming_conv1x1(nk(), c64, c64) * s).astype(bf16)
    p["b31"]   = (_conv_bias(nk(), c64, c64) * s).reshape(1, c64)
    p["w_cf"]  = (_kaiming_conv1x1(nk(), c64, c64) * s).astype(bf16)
    p["bf"]    = (_conv_bias(nk(), c64, c64) * s).reshape(1, c64)

    # bn_layer = 2 BasicBlocks (planes=128, first has stride 2 + downsample)
    p["w_b0c1"] = (_kaiming_conv3x3(nk(), c64, c128) * s).astype(bf16)
    p["w_b0c2"] = (_kaiming_conv3x3(nk(), c128, c128) * s).astype(bf16)
    p["w_b0ds"] = (_kaiming_conv1x1(nk(), c64, c128) * s).astype(bf16)
    p["w_b1c1"] = (_kaiming_conv3x3(nk(), c128, c128) * s).astype(bf16)
    p["w_b1c2"] = (_kaiming_conv3x3(nk(), c128, c128) * s).astype(bf16)

    # gather matrices for the synthetic spatial sizes (16x16 -> 8x8 -> 4x4 -> 2x2)
    p["S1"] = _gather_matrix(16, 16, 2)     # conv1
    p["S2"] = _gather_matrix(8, 8, 2)       # conv2
    p["S3"] = _gather_matrix(4, 4, 2)       # block0 conv1 (+ downsample via tap 4)
    p["S4"] = _gather_matrix(2, 2, 1)       # block0 conv2, block1 conv1/conv2
    return p


# --------------------------------- forward ------------------------------------ #
def mff_oce_forward(params, x0_nchw, x1_nchw, x2_nchw):
    B = x0_nchw.shape[0]

    def to2d(x):  # NCHW -> (B, H*W, C) bf16, channels lane-resident
        B_, C, H, W = x.shape
        return jnp.transpose(x, (0, 2, 3, 1)).reshape(B_, H * W, C).astype(jnp.bfloat16)

    out2d = _mff_oce_pallas(params, to2d(x0_nchw), to2d(x1_nchw), to2d(x2_nchw))
    out = out2d.reshape(B, 2, 2, 128)
    return jnp.transpose(out, (0, 3, 1, 2))   # back to NCHW (.contiguous() is a no-op)


# ----------------------------------- main -------------------------------------- #
if __name__ == "__main__":
    key = jax.random.PRNGKey(0)
    kp, k0, k1, k2 = jax.random.split(key, 4)
    params = init_params(kp, expansion=1, layers=2)

    B = 2
    # x is a list of 3 NCHW feature maps (expansion=1): 16ch@16x16, 32ch@8x8, 64ch@4x4
    x0 = jax.random.normal(k0, (B, 16, 16, 16), jnp.float32)
    x1 = jax.random.normal(k1, (B, 32, 8, 8), jnp.float32)
    x2 = jax.random.normal(k2, (B, 64, 4, 4), jnp.float32)

    out = jax.jit(mff_oce_forward)(params, x0, x1, x2)
    out = jax.block_until_ready(out)
    assert out.shape == (B, 128, 2, 2), out.shape
    assert bool(jnp.all(jnp.isfinite(out)))
    print("KERNEL_OK")
</pallas_src>

<mosaic_0001>
module attributes {stable_mosaic.version = 11 : i64} {
  func.func @_mff_oce_kernel(%arg0: i32, %arg1: memref<1x256x16xbf16, #tpu.memory_space<vmem>>, %arg2: memref<1x64x32xbf16, #tpu.memory_space<vmem>>, %arg3: memref<1x16x64xbf16, #tpu.memory_space<vmem>>, %arg4: memref<9x64x256xbf16, #tpu.memory_space<vmem>>, %arg5: memref<9x16x64xbf16, #tpu.memory_space<vmem>>, %arg6: memref<9x4x16xbf16, #tpu.memory_space<vmem>>, %arg7: memref<9x4x4xbf16, #tpu.memory_space<vmem>>, %arg8: memref<9x16x32xbf16, #tpu.memory_space<vmem>>, %arg9: memref<32x32xbf16, #tpu.memory_space<vmem>>, %arg10: memref<1x32xf32, #tpu.memory_space<vmem>>, %arg11: memref<9x32x64xbf16, #tpu.memory_space<vmem>>, %arg12: memref<64x64xbf16, #tpu.memory_space<vmem>>, %arg13: memref<1x64xf32, #tpu.memory_space<vmem>>, %arg14: memref<64x64xbf16, #tpu.memory_space<vmem>>, %arg15: memref<1x64xf32, #tpu.memory_space<vmem>>, %arg16: memref<9x64x128xbf16, #tpu.memory_space<vmem>>, %arg17: memref<9x128x128xbf16, #tpu.memory_space<vmem>>, %arg18: memref<64x128xbf16, #tpu.memory_space<vmem>>, %arg19: memref<9x128x128xbf16, #tpu.memory_space<vmem>>, %arg20: memref<9x128x128xbf16, #tpu.memory_space<vmem>>, %arg21: memref<1x4x128xf32, #tpu.memory_space<vmem>>) attributes {dimension_semantics = [#tpu.dimension_semantics<parallel>], iteration_bounds = array<i64: 2>, scalar_prefetch = 0 : i64, scratch_operands = 0 : i64, tpu.core_type = #tpu.core_type<tc>, window_params = [{transform_indices = @transform_0, window_bounds = array<i64: 1, 256, 16>}, {transform_indices = @transform_1, window_bounds = array<i64: 1, 64, 32>}, {transform_indices = @transform_2, window_bounds = array<i64: 1, 16, 64>}, {pipeline_mode = #tpu.pipeline_mode<synchronous>, transform_indices = @transform_3, window_bounds = array<i64: 9, 64, 256>}, {pipeline_mode = #tpu.pipeline_mode<synchronous>, transform_indices = @transform_4, window_bounds = array<i64: 9, 16, 64>}, {pipeline_mode = #tpu.pipeline_mode<synchronous>, transform_indices = @transform_5, window_bounds = array<i64: 9, 4, 16>}, {pipeline_mode = #tpu.pipeline_mode<synchronous>, transform_indices = @transform_6, window_bounds = array<i64: 9, 4, 4>}, {pipeline_mode = #tpu.pipeline_mode<synchronous>, transform_indices = @transform_7, window_bounds = array<i64: 9, 16, 32>}, {pipeline_mode = #tpu.pipeline_mode<synchronous>, transform_indices = @transform_8, window_bounds = array<i64: 32, 32>}, {pipeline_mode = #tpu.pipeline_mode<synchronous>, transform_indices = @transform_9, window_bounds = array<i64: 1, 32>}, {pipeline_mode = #tpu.pipeline_mode<synchronous>, transform_indices = @transform_10, window_bounds = array<i64: 9, 32, 64>}, {pipeline_mode = #tpu.pipeline_mode<synchronous>, transform_indices = @transform_11, window_bounds = array<i64: 64, 64>}, {pipeline_mode = #tpu.pipeline_mode<synchronous>, transform_indices = @transform_12, window_bounds = array<i64: 1, 64>}, {pipeline_mode = #tpu.pipeline_mode<synchronous>, transform_indices = @transform_13, window_bounds = array<i64: 64, 64>}, {pipeline_mode = #tpu.pipeline_mode<synchronous>, transform_indices = @transform_14, window_bounds = array<i64: 1, 64>}, {pipeline_mode = #tpu.pipeline_mode<synchronous>, transform_indices = @transform_15, window_bounds = array<i64: 9, 64, 128>}, {pipeline_mode = #tpu.pipeline_mode<synchronous>, transform_indices = @transform_16, window_bounds = array<i64: 9, 128, 128>}, {pipeline_mode = #tpu.pipeline_mode<synchronous>, transform_indices = @transform_17, window_bounds = array<i64: 64, 128>}, {pipeline_mode = #tpu.pipeline_mode<synchronous>, transform_indices = @transform_18, window_bounds = array<i64: 9, 128, 128>}, {pipeline_mode = #tpu.pipeline_mode<synchronous>, transform_indices = @transform_19, window_bounds = array<i64: 9, 128, 128>}, {transform_indices = @transform_20, window_bounds = array<i64: 1, 4, 128>}]} {
    %c0 = arith.constant 0 : index
    %c0_0 = arith.constant 0 : index
    %c0_1 = arith.constant 0 : index
    %0 = vector.load %arg1[%c0, %c0_0, %c0_1] : memref<1x256x16xbf16, #tpu.memory_space<vmem>>, vector<1x256x16xbf16>
    %1 = vector.shape_cast %0 : vector<1x256x16xbf16> to vector<256x16xbf16>
    %c0_2 = arith.constant 0 : index
    %c0_3 = arith.constant 0 : index
    %c0_4 = arith.constant 0 : index
    %2 = vector.load %arg4[%c0_2, %c0_3, %c0_4] : memref<9x64x256xbf16, #tpu.memory_space<vmem>>, vector<1x64x256xbf16>
    %3 = vector.shape_cast %2 : vector<1x64x256xbf16> to vector<64x256xbf16>
    %cst = arith.constant dense<0.000000e+00> : vector<64x16xf32>
    %4 = tpu.matmul %3, %1, %cst {dimension_numbers = #tpu.dot_dimension_numbers<[1], [0], [0], [1], [0, 0, 1, 1], [], []>} : vector<64x256xbf16>, vector<256x16xbf16>, vector<64x16xf32> -> vector<64x16xf32>
    %5 = arith.truncf %4 : vector<64x16xf32> to vector<64x16xbf16>
    %c0_5 = arith.constant 0 : index
    %c0_6 = arith.constant 0 : index
    %c0_7 = arith.constant 0 : index
    %6 = vector.load %arg8[%c0_5, %c0_6, %c0_7] : memref<9x16x32xbf16, #tpu.memory_space<vmem>>, vector<1x16x32xbf16>
    %7 = vector.shape_cast %6 : vector<1x16x32xbf16> to vector<16x32xbf16>
    %cst_8 = arith.constant dense<0.000000e+00> : vector<64x32xf32>
    %8 = tpu.matmul %5, %7, %cst_8 {dimension_numbers = #tpu.dot_dimension_numbers<[1], [0], [0], [1], [0, 0, 1, 1], [], []>} : vector<64x16xbf16>, vector<16x32xbf16>, vector<64x32xf32> -> vector<64x32xf32>
    %c1 = arith.constant 1 : index
    %c0_9 = arith.constant 0 : index
    %c0_10 = arith.constant 0 : index
    %9 = vector.load %arg4[%c1, %c0_9, %c0_10] : memref<9x64x256xbf16, #tpu.memory_space<vmem>>, vector<1x64x256xbf16>
    %10 = vector.shape_cast %9 : vector<1x64x256xbf16> to vector<64x256xbf16>
    %cst_11 = arith.constant dense<0.000000e+00> : vector<64x16xf32>
    %11 = tpu.matmul %10, %1, %cst_11 {dimension_numbers = #tpu.dot_dimension_numbers<[1], [0], [0], [1], [0, 0, 1, 1], [], []>} : vector<64x256xbf16>, vector<256x16xbf16>, vector<64x16xf32> -> vector<64x16xf32>
    %12 = arith.truncf %11 : vector<64x16xf32> to vector<64x16xbf16>
    %c1_12 = arith.constant 1 : index
    %c0_13 = arith.constant 0 : index
    %c0_14 = arith.constant 0 : index
    %13 = vector.load %arg8[%c1_12, %c0_13, %c0_14] : memref<9x16x32xbf16, #tpu.memory_space<vmem>>, vector<1x16x32xbf16>
    %14 = vector.shape_cast %13 : vector<1x16x32xbf16> to vector<16x32xbf16>
    %cst_15 = arith.constant dense<0.000000e+00> : vector<64x32xf32>
    %15 = tpu.matmul %12, %14, %cst_15 {dimension_numbers = #tpu.dot_dimension_numbers<[1], [0], [0], [1], [0, 0, 1, 1], [], []>} : vector<64x16xbf16>, vector<16x32xbf16>, vector<64x32xf32> -> vector<64x32xf32>
    %16 = arith.addf %8, %15 : vector<64x32xf32>
    %c2 = arith.constant 2 : index
    %c0_16 = arith.constant 0 : index
    %c0_17 = arith.constant 0 : index
    %17 = vector.load %arg4[%c2, %c0_16, %c0_17] : memref<9x64x256xbf16, #tpu.memory_space<vmem>>, vector<1x64x256xbf16>
    %18 = vector.shape_cast %17 : vector<1x64x256xbf16> to vector<64x256xbf16>
    %cst_18 = arith.constant dense<0.000000e+00> : vector<64x16xf32>
    %19 = tpu.matmul %18, %1, %cst_18 {dimension_numbers = #tpu.dot_dimension_numbers<[1], [0], [0], [1], [0, 0, 1, 1], [], []>} : vector<64x256xbf16>, vector<256x16xbf16>, vector<64x16xf32> -> vector<64x16xf32>
    %20 = arith.truncf %19 : vector<64x16xf32> to vector<64x16xbf16>
    %c2_19 = arith.constant 2 : index
    %c0_20 = arith.constant 0 : index
    %c0_21 = arith.constant 0 : index
    %21 = vector.load %arg8[%c2_19, %c0_20, %c0_21] : memref<9x16x32xbf16, #tpu.memory_space<vmem>>, vector<1x16x32xbf16>
    %22 = vector.shape_cast %21 : vector<1x16x32xbf16> to vector<16x32xbf16>
    %cst_22 = arith.constant dense<0.000000e+00> : vector<64x32xf32>
    %23 = tpu.matmul %20, %22, %cst_22 {dimension_numbers = #tpu.dot_dimension_numbers<[1], [0], [0], [1], [0, 0, 1, 1], [], []>} : vector<64x16xbf16>, vector<16x32xbf16>, vector<64x32xf32> -> vector<64x32xf32>
    %24 = arith.addf %16, %23 : vector<64x32xf32>
    %c3 = arith.constant 3 : index
    %c0_23 = arith.constant 0 : index
    %c0_24 = arith.constant 0 : index
    %25 = vector.load %arg4[%c3, %c0_23, %c0_24] : memref<9x64x256xbf16, #tpu.memory_space<vmem>>, vector<1x64x256xbf16>
    %26 = vector.shape_cast %25 : vector<1x64x256xbf16> to vector<64x256xbf16>
    %cst_25 = arith.constant dense<0.000000e+00> : vector<64x16xf32>
    %27 = tpu.matmul %26, %1, %cst_25 {dimension_numbers = #tpu.dot_dimension_numbers<[1], [0], [0], [1], [0, 0, 1, 1], [], []>} : vector<64x256xbf16>, vector<256x16xbf16>, vector<64x16xf32> -> vector<64x16xf32>
    %28 = arith.truncf %27 : vector<64x16xf32> to vector<64x16xbf16>
    %c3_26 = arith.constant 3 : index
    %c0_27 = arith.constant 0 : index
    %c0_28 = arith.constant 0 : index
    %29 = vector.load %arg8[%c3_26, %c0_27, %c0_28] : memref<9x16x32xbf16, #tpu.memory_space<vmem>>, vector<1x16x32xbf16>
    %30 = vector.shape_cast %29 : vector<1x16x32xbf16> to vector<16x32xbf16>
    %cst_29 = arith.constant dense<0.000000e+00> : vector<64x32xf32>
    %31 = tpu.matmul %28, %30, %cst_29 {dimension_numbers = #tpu.dot_dimension_numbers<[1], [0], [0], [1], [0, 0, 1, 1], [], []>} : vector<64x16xbf16>, vector<16x32xbf16>, vector<64x32xf32> -> vector<64x32xf32>
    %32 = arith.addf %24, %31 : vector<64x32xf32>
    %c4 = arith.constant 4 : index
    %c0_30 = arith.constant 0 : index
    %c0_31 = arith.constant 0 : index
    %33 = vector.load %arg4[%c4, %c0_30, %c0_31] : memref<9x64x256xbf16, #tpu.memory_space<vmem>>, vector<1x64x256xbf16>
    %34 = vector.shape_cast %33 : vector<1x64x256xbf16> to vector<64x256xbf16>
    %cst_32 = arith.constant dense<0.000000e+00> : vector<64x16xf32>
    %35 = tpu.matmul %34, %1, %cst_32 {dimension_numbers = #tpu.dot_dimension_numbers<[1], [0], [0], [1], [0, 0, 1, 1], [], []>} : vector<64x256xbf16>, vector<256x16xbf16>, vector<64x16xf32> -> vector<64x16xf32>
    %36 = arith.truncf %35 : vector<64x16xf32> to vector<64x16xbf16>
    %c4_33 = arith.constant 4 : index
    %c0_34 = arith.constant 0 : index
    %c0_35 = arith.constant 0 : index
    %37 = vector.load %arg8[%c4_33, %c0_34, %c0_35] : memref<9x16x32xbf16, #tpu.memory_space<vmem>>, vector<1x16x32xbf16>
    %38 = vector.shape_cast %37 : vector<1x16x32xbf16> to vector<16x32xbf16>
    %cst_36 = arith.constant dense<0.000000e+00> : vector<64x32xf32>
    %39 = tpu.matmul %36, %38, %cst_36 {dimension_numbers = #tpu.dot_dimension_numbers<[1], [0], [0], [1], [0, 0, 1, 1], [], []>} : vector<64x16xbf16>, vector<16x32xbf16>, vector<64x32xf32> -> vector<64x32xf32>
    %40 = arith.addf %32, %39 : vector<64x32xf32>
    %c5 = arith.constant 5 : index
    %c0_37 = arith.constant 0 : index
    %c0_38 = arith.constant 0 : index
    %41 = vector.load %arg4[%c5, %c0_37, %c0_38] : memref<9x64x256xbf16, #tpu.memory_space<vmem>>, vector<1x64x256xbf16>
    %42 = vector.shape_cast %41 : vector<1x64x256xbf16> to vector<64x256xbf16>
    %cst_39 = arith.constant dense<0.000000e+00> : vector<64x16xf32>
    %43 = tpu.matmul %42, %1, %cst_39 {dimension_numbers = #tpu.dot_dimension_numbers<[1], [0], [0], [1], [0, 0, 1, 1], [], []>} : vector<64x256xbf16>, vector<256x16xbf16>, vector<64x16xf32> -> vector<64x16xf32>
    %44 = arith.truncf %43 : vector<64x16xf32> to vector<64x16xbf16>
    %c5_40 = arith.constant 5 : index
    %c0_41 = arith.constant 0 : index
    %c0_42 = arith.constant 0 : index
    %45 = vector.load %arg8[%c5_40, %c0_41, %c0_42] : memref<9x16x32xbf16, #tpu.memory_space<vmem>>, vector<1x16x32xbf16>
    %46 = vector.shape_cast %45 : vector<1x16x32xbf16> to vector<16x32xbf16>
    %cst_43 = arith.constant dense<0.000000e+00> : vector<64x32xf32>
    %47 = tpu.matmul %44, %46, %cst_43 {dimension_numbers = #tpu.dot_dimension_numbers<[1], [0], [0], [1], [0, 0, 1, 1], [], []>} : vector<64x16xbf16>, vector<16x32xbf16>, vector<64x32xf32> -> vector<64x32xf32>
    %48 = arith.addf %40, %47 : vector<64x32xf32>
    %c6 = arith.constant 6 : index
    %c0_44 = arith.constant 0 : index
    %c0_45 = arith.constant 0 : index
    %49 = vector.load %arg4[%c6, %c0_44, %c0_45] : memref<9x64x256xbf16, #tpu.memory_space<vmem>>, vector<1x64x256xbf16>
    %50 = vector.shape_cast %49 : vector<1x64x256xbf16> to vector<64x256xbf16>
    %cst_46 = arith.constant dense<0.000000e+00> : vector<64x16xf32>
    %51 = tpu.matmul %50, %1, %cst_46 {dimension_numbers = #tpu.dot_dimension_numbers<[1], [0], [0], [1], [0, 0, 1, 1], [], []>} : vector<64x256xbf16>, vector<256x16xbf16>, vector<64x16xf32> -> vector<64x16xf32>
    %52 = arith.truncf %51 : vector<64x16xf32> to vector<64x16xbf16>
    %c6_47 = arith.constant 6 : index
    %c0_48 = arith.constant 0 : index
    %c0_49 = arith.constant 0 : index
    %53 = vector.load %arg8[%c6_47, %c0_48, %c0_49] : memref<9x16x32xbf16, #tpu.memory_space<vmem>>, vector<1x16x32xbf16>
    %54 = vector.shape_cast %53 : vector<1x16x32xbf16> to vector<16x32xbf16>
    %cst_50 = arith.constant dense<0.000000e+00> : vector<64x32xf32>
    %55 = tpu.matmul %52, %54, %cst_50 {dimension_numbers = #tpu.dot_dimension_numbers<[1], [0], [0], [1], [0, 0, 1, 1], [], []>} : vector<64x16xbf16>, vector<16x32xbf16>, vector<64x32xf32> -> vector<64x32xf32>
    %56 = arith.addf %48, %55 : vector<64x32xf32>
    %c7 = arith.constant 7 : index
    %c0_51 = arith.constant 0 : index
    %c0_52 = arith.constant 0 : index
    %57 = vector.load %arg4[%c7, %c0_51, %c0_52] : memref<9x64x256xbf16, #tpu.memory_space<vmem>>, vector<1x64x256xbf16>
    %58 = vector.shape_cast %57 : vector<1x64x256xbf16> to vector<64x256xbf16>
    %cst_53 = arith.constant dense<0.000000e+00> : vector<64x16xf32>
    %59 = tpu.matmul %58, %1, %cst_53 {dimension_numbers = #tpu.dot_dimension_numbers<[1], [0], [0], [1], [0, 0, 1, 1], [], []>} : vector<64x256xbf16>, vector<256x16xbf16>, vector<64x16xf32> -> vector<64x16xf32>
    %60 = arith.truncf %59 : vector<64x16xf32> to vector<64x16xbf16>
    %c7_54 = arith.constant 7 : index
    %c0_55 = arith.constant 0 : index
    %c0_56 = arith.constant 0 : index
    %61 = vector.load %arg8[%c7_54, %c0_55, %c0_56] : memref<9x16x32xbf16, #tpu.memory_space<vmem>>, vector<1x16x32xbf16>
    %62 = vector.shape_cast %61 : vector<1x16x32xbf16> to vector<16x32xbf16>
    %cst_57 = arith.constant dense<0.000000e+00> : vector<64x32xf32>
    %63 = tpu.matmul %60, %62, %cst_57 {dimension_numbers = #tpu.dot_dimension_numbers<[1], [0], [0], [1], [0, 0, 1, 1], [], []>} : vector<64x16xbf16>, vector<16x32xbf16>, vector<64x32xf32> -> vector<64x32xf32>
    %64 = arith.addf %56, %63 : vector<64x32xf32>
    %c8 = arith.constant 8 : index
    %c0_58 = arith.constant 0 : index
    %c0_59 = arith.constant 0 : index
    %65 = vector.load %arg4[%c8, %c0_58, %c0_59] : memref<9x64x256xbf16, #tpu.memory_space<vmem>>, vector<1x64x256xbf16>
    %66 = vector.shape_cast %65 : vector<1x64x256xbf16> to vector<64x256xbf16>
    %cst_60 = arith.constant dense<0.000000e+00> : vector<64x16xf32>
    %67 = tpu.matmul %66, %1, %cst_60 {dimension_numbers = #tpu.dot_dimension_numbers<[1], [0], [0], [1], [0, 0, 1, 1], [], []>} : vector<64x256xbf16>, vector<256x16xbf16>, vector<64x16xf32> -> vector<64x16xf32>
    %68 = arith.truncf %67 : vector<64x16xf32> to vector<64x16xbf16>
    %c8_61 = arith.constant 8 : index
    %c0_62 = arith.constant 0 : index
    %c0_63 = arith.constant 0 : index
    %69 = vector.load %arg8[%c8_61, %c0_62, %c0_63] : memref<9x16x32xbf16, #tpu.memory_space<vmem>>, vector<1x16x32xbf16>
    %70 = vector.shape_cast %69 : vector<1x16x32xbf16> to vector<16x32xbf16>
    %cst_64 = arith.constant dense<0.000000e+00> : vector<64x32xf32>
    %71 = tpu.matmul %68, %70, %cst_64 {dimension_numbers = #tpu.dot_dimension_numbers<[1], [0], [0], [1], [0, 0, 1, 1], [], []>} : vector<64x16xbf16>, vector<16x32xbf16>, vector<64x32xf32> -> vector<64x32xf32>
    %72 = arith.addf %64, %71 : vector<64x32xf32>
    %cst_65 = arith.constant 0.000000e+00 : f32
    %73 = vector.broadcast %cst_65 : f32 to vector<64x32xf32>
    %74 = arith.maximumf %72, %73 : vector<64x32xf32>
    %c0_66 = arith.constant 0 : index
    %c0_67 = arith.constant 0 : index
    %c0_68 = arith.constant 0 : index
    %75 = vector.load %arg2[%c0_66, %c0_67, %c0_68] : memref<1x64x32xbf16, #tpu.memory_space<vmem>>, vector<1x64x32xbf16>
    %76 = vector.shape_cast %75 : vector<1x64x32xbf16> to vector<64x32xbf16>
    %c0_69 = arith.constant 0 : index
    %c0_70 = arith.constant 0 : index
    %77 = vector.load %arg9[%c0_69, %c0_70] : memref<32x32xbf16, #tpu.memory_space<vmem>>, vector<32x32xbf16>
    %cst_71 = arith.constant dense<0.000000e+00> : vector<64x32xf32>
    %78 = tpu.matmul %76, %77, %cst_71 {dimension_numbers = #tpu.dot_dimension_numbers<[1], [0], [0], [1], [0, 0, 1, 1], [], []>} : vector<64x32xbf16>, vector<32x32xbf16>, vector<64x32xf32> -> vector<64x32xf32>
    %c0_72 = arith.constant 0 : index
    %c0_73 = arith.constant 0 : index
    %79 = vector.load %arg10[%c0_72, %c0_73] : memref<1x32xf32, #tpu.memory_space<vmem>>, vector<1x32xf32>
    %80 = vector.broadcast %79 : vector<1x32xf32> to vector<64x32xf32>
    %81 = arith.addf %78, %80 : vector<64x32xf32>
    %cst_74 = arith.constant 0.000000e+00 : f32
    %82 = vector.broadcast %cst_74 : f32 to vector<64x32xf32>
    %83 = arith.maximumf %81, %82 : vector<64x32xf32>
    %84 = arith.addf %83, %74 : vector<64x32xf32>
    %c0_75 = arith.constant 0 : index
    %c0_76 = arith.constant 0 : index
    %c0_77 = arith.constant 0 : index
    %85 = vector.load %arg3[%c0_75, %c0_76, %c0_77] : memref<1x16x64xbf16, #tpu.memory_space<vmem>>, vector<1x16x64xbf16>
    %86 = vector.shape_cast %85 : vector<1x16x64xbf16> to vector<16x64xbf16>
    %c0_78 = arith.constant 0 : index
    %c0_79 = arith.constant 0 : index
    %87 = vector.load %arg12[%c0_78, %c0_79] : memref<64x64xbf16, #tpu.memory_space<vmem>>, vector<64x64xbf16>
    %cst_80 = arith.constant dense<0.000000e+00> : vector<16x64xf32>
    %88 = tpu.matmul %86, %87, %cst_80 {dimension_numbers = #tpu.dot_dimension_numbers<[1], [0], [0], [1], [0, 0, 1, 1], [], []>} : vector<16x64xbf16>, vector<64x64xbf16>, vector<16x64xf32> -> vector<16x64xf32>
    %c0_81 = arith.constant 0 : index
    %c0_82 = arith.constant 0 : index
    %89 = vector.load %arg13[%c0_81, %c0_82] : memref<1x64xf32, #tpu.memory_space<vmem>>, vector<1x64xf32>
    %90 = vector.broadcast %89 : vector<1x64xf32> to vector<16x64xf32>
    %91 = arith.addf %88, %90 : vector<16x64xf32>
    %cst_83 = arith.constant 0.000000e+00 : f32
    %92 = vector.broadcast %cst_83 : f32 to vector<16x64xf32>
    %93 = arith.maximumf %91, %92 : vector<16x64xf32>
    %94 = arith.truncf %84 : vector<64x32xf32> to vector<64x32xbf16>
    %c0_84 = arith.constant 0 : index
    %c0_85 = arith.constant 0 : index
    %c0_86 = arith.constant 0 : index
    %95 = vector.load %arg5[%c0_84, %c0_85, %c0_86] : memref<9x16x64xbf16, #tpu.memory_space<vmem>>, vector<1x16x64xbf16>
    %96 = vector.shape_cast %95 : vector<1x16x64xbf16> to vector<16x64xbf16>
    %cst_87 = arith.constant dense<0.000000e+00> : vector<16x32xf32>
    %97 = tpu.matmul %96, %94, %cst_87 {dimension_numbers = #tpu.dot_dimension_numbers<[1], [0], [0], [1], [0, 0, 1, 1], [], []>} : vector<16x64xbf16>, vector<64x32xbf16>, vector<16x32xf32> -> vector<16x32xf32>
    %98 = arith.truncf %97 : vector<16x32xf32> to vector<16x32xbf16>
    %c0_88 = arith.constant 0 : index
    %c0_89 = arith.constant 0 : index
    %c0_90 = arith.constant 0 : index
    %99 = vector.load %arg11[%c0_88, %c0_89, %c0_90] : memref<9x32x64xbf16, #tpu.memory_space<vmem>>, vector<1x32x64xbf16>
    %100 = vector.shape_cast %99 : vector<1x32x64xbf16> to vector<32x64xbf16>
    %cst_91 = arith.constant dense<0.000000e+00> : vector<16x64xf32>
    %101 = tpu.matmul %98, %100, %cst_91 {dimension_numbers = #tpu.dot_dimension_numbers<[1], [0], [0], [1], [0, 0, 1, 1], [], []>} : vector<16x32xbf16>, vector<32x64xbf16>, vector<16x64xf32> -> vector<16x64xf32>
    %c1_92 = arith.constant 1 : index
    %c0_93 = arith.constant 0 : index
    %c0_94 = arith.constant 0 : index
    %102 = vector.load %arg5[%c1_92, %c0_93, %c0_94] : memref<9x16x64xbf16, #tpu.memory_space<vmem>>, vector<1x16x64xbf16>
    %103 = vector.shape_cast %102 : vector<1x16x64xbf16> to vector<16x64xbf16>
    %cst_95 = arith.constant dense<0.000000e+00> : vector<16x32xf32>
    %104 = tpu.matmul %103, %94, %cst_95 {dimension_numbers = #tpu.dot_dimension_numbers<[1], [0], [0], [1], [0, 0, 1, 1], [], []>} : vector<16x64xbf16>, vector<64x32xbf16>, vector<16x32xf32> -> vector<16x32xf32>
    %105 = arith.truncf %104 : vector<16x32xf32> to vector<16x32xbf16>
    %c1_96 = arith.constant 1 : index
    %c0_97 = arith.constant 0 : index
    %c0_98 = arith.constant 0 : index
    %106 = vector.load %arg11[%c1_96, %c0_97, %c0_98] : memref<9x32x64xbf16, #tpu.memory_space<vmem>>, vector<1x32x64xbf16>
    %107 = vector.shape_cast %106 : vector<1x32x64xbf16> to vector<32x64xbf16>
    %cst_99 = arith.constant dense<0.000000e+00> : vector<16x64xf32>
    %108 = tpu.matmul %105, %107, %cst_99 {dimension_numbers = #tpu.dot_dimension_numbers<[1], [0], [0], [1], [0, 0, 1, 1], [], []>} : vector<16x32xbf16>, vector<32x64xbf16>, vector<16x64xf32> -> vector<16x64xf32>
    %109 = arith.addf %101, %108 : vector<16x64xf32>
    %c2_100 = arith.constant 2 : index
    %c0_101 = arith.constant 0 : index
    %c0_102 = arith.constant 0 : index
    %110 = vector.load %arg5[%c2_100, %c0_101, %c0_102] : memref<9x16x64xbf16, #tpu.memory_space<vmem>>, vector<1x16x64xbf16>
    %111 = vector.shape_cast %110 : vector<1x16x64xbf16> to vector<16x64xbf16>
    %cst_103 = arith.constant dense<0.000000e+00> : vector<16x32xf32>
    %112 = tpu.matmul %111, %94, %cst_103 {dimension_numbers = #tpu.dot_dimension_numbers<[1], [0], [0], [1], [0, 0, 1, 1], [], []>} : vector<16x64xbf16>, vector<64x32xbf16>, vector<16x32xf32> -> vector<16x32xf32>
    %113 = arith.truncf %112 : vector<16x32xf32> to vector<16x32xbf16>
    %c2_104 = arith.constant 2 : index
    %c0_105 = arith.constant 0 : index
    %c0_106 = arith.constant 0 : index
    %114 = vector.load %arg11[%c2_104, %c0_105, %c0_106] : memref<9x32x64xbf16, #tpu.memory_space<vmem>>, vector<1x32x64xbf16>
    %115 = vector.shape_cast %114 : vector<1x32x64xbf16> to vector<32x64xbf16>
    %cst_107 = arith.constant dense<0.000000e+00> : vector<16x64xf32>
    %116 = tpu.matmul %113, %115, %cst_107 {dimension_numbers = #tpu.dot_dimension_numbers<[1], [0], [0], [1], [0, 0, 1, 1], [], []>} : vector<16x32xbf16>, vector<32x64xbf16>, vector<16x64xf32> -> vector<16x64xf32>
    %117 = arith.addf %109, %116 : vector<16x64xf32>
    %c3_108 = arith.constant 3 : index
    %c0_109 = arith.constant 0 : index
    %c0_110 = arith.constant 0 : index
    %118 = vector.load %arg5[%c3_108, %c0_109, %c0_110] : memref<9x16x64xbf16, #tpu.memory_space<vmem>>, vector<1x16x64xbf16>
    %119 = vector.shape_cast %118 : vector<1x16x64xbf16> to vector<16x64xbf16>
    %cst_111 = arith.constant dense<0.000000e+00> : vector<16x32xf32>
    %120 = tpu.matmul %119, %94, %cst_111 {dimension_numbers = #tpu.dot_dimension_numbers<[1], [0], [0], [1], [0, 0, 1, 1], [], []>} : vector<16x64xbf16>, vector<64x32xbf16>, vector<16x32xf32> -> vector<16x32xf32>
    %121 = arith.truncf %120 : vector<16x32xf32> to vector<16x32xbf16>
    %c3_112 = arith.constant 3 : index
    %c0_113 = arith.constant 0 : index
    %c0_114 = arith.constant 0 : index
    %122 = vector.load %arg11[%c3_112, %c0_113, %c0_114] : memref<9x32x64xbf16, #tpu.memory_space<vmem>>, vector<1x32x64xbf16>
    %123 = vector.shape_cast %122 : vector<1x32x64xbf16> to vector<32x64xbf16>
    %cst_115 = arith.constant dense<0.000000e+00> : vector<16x64xf32>
    %124 = tpu.matmul %121, %123, %cst_115 {dimension_numbers = #tpu.dot_dimension_numbers<[1], [0], [0], [1], [0, 0, 1, 1], [], []>} : vector<16x32xbf16>, vector<32x64xbf16>, vector<16x64xf32> -> vector<16x64xf32>
    %125 = arith.addf %117, %124 : vector<16x64xf32>
    %c4_116 = arith.constant 4 : index
    %c0_117 = arith.constant 0 : index
    %c0_118 = arith.constant 0 : index
    %126 = vector.load %arg5[%c4_116, %c0_117, %c0_118] : memref<9x16x64xbf16, #tpu.memory_space<vmem>>, vector<1x16x64xbf16>
    %127 = vector.shape_cast %126 : vector<1x16x64xbf16> to vector<16x64xbf16>
    %cst_119 = arith.constant dense<0.000000e+00> : vector<16x32xf32>
    %128 = tpu.matmul %127, %94, %cst_119 {dimension_numbers = #tpu.dot_dimension_numbers<[1], [0], [0], [1], [0, 0, 1, 1], [], []>} : vector<16x64xbf16>, vector<64x32xbf16>, vector<16x32xf32> -> vector<16x32xf32>
    %129 = arith.truncf %128 : vector<16x32xf32> to vector<16x32xbf16>
    %c4_120 = arith.constant 4 : index
    %c0_121 = arith.constant 0 : index
    %c0_122 = arith.constant 0 : index
    %130 = vector.load %arg11[%c4_120, %c0_121, %c0_122] : memref<9x32x64xbf16, #tpu.memory_space<vmem>>, vector<1x32x64xbf16>
    %131 = vector.shape_cast %130 : vector<1x32x64xbf16> to vector<32x64xbf16>
    %cst_123 = arith.constant dense<0.000000e+00> : vector<16x64xf32>
    %132 = tpu.matmul %129, %131, %cst_123 {dimension_numbers = #tpu.dot_dimension_numbers<[1], [0], [0], [1], [0, 0, 1, 1], [], []>} : vector<16x32xbf16>, vector<32x64xbf16>, vector<16x64xf32> -> vector<16x64xf32>
    %133 = arith.addf %125, %132 : vector<16x64xf32>
    %c5_124 = arith.constant 5 : index
    %c0_125 = arith.constant 0 : index
    %c0_126 = arith.constant 0 : index
    %134 = vector.load %arg5[%c5_124, %c0_125, %c0_126] : memref<9x16x64xbf16, #tpu.memory_space<vmem>>, vector<1x16x64xbf16>
    %135 = vector.shape_cast %134 : vector<1x16x64xbf16> to vector<16x64xbf16>
    %cst_127 = arith.constant dense<0.000000e+00> : vector<16x32xf32>
    %136 = tpu.matmul %135, %94, %cst_127 {dimension_numbers = #tpu.dot_dimension_numbers<[1], [0], [0], [1], [0, 0, 1, 1], [], []>} : vector<16x64xbf16>, vector<64x32xbf16>, vector<16x32xf32> -> vector<16x32xf32>
    %137 = arith.truncf %136 : vector<16x32xf32> to vector<16x32xbf16>
    %c5_128 = arith.constant 5 : index
    %c0_129 = arith.constant 0 : index
    %c0_130 = arith.constant 0 : index
    %138 = vector.load %arg11[%c5_128, %c0_129, %c0_130] : memref<9x32x64xbf16, #tpu.memory_space<vmem>>, vector<1x32x64xbf16>
    %139 = vector.shape_cast %138 : vector<1x32x64xbf16> to vector<32x64xbf16>
    %cst_131 = arith.constant dense<0.000000e+00> : vector<16x64xf32>
    %140 = tpu.matmul %137, %139, %cst_131 {dimension_numbers = #tpu.dot_dimension_numbers<[1], [0], [0], [1], [0, 0, 1, 1], [], []>} : vector<16x32xbf16>, vector<32x64xbf16>, vector<16x64xf32> -> vector<16x64xf32>
    %141 = arith.addf %133, %140 : vector<16x64xf32>
    %c6_132 = arith.constant 6 : index
    %c0_133 = arith.constant 0 : index
    %c0_134 = arith.constant 0 : index
    %142 = vector.load %arg5[%c6_132, %c0_133, %c0_134] : memref<9x16x64xbf16, #tpu.memory_space<vmem>>, vector<1x16x64xbf16>
    %143 = vector.shape_cast %142 : vector<1x16x64xbf16> to vector<16x64xbf16>
    %cst_135 = arith.constant dense<0.000000e+00> : vector<16x32xf32>
    %144 = tpu.matmul %143, %94, %cst_135 {dimension_numbers = #tpu.dot_dimension_numbers<[1], [0], [0], [1], [0, 0, 1, 1], [], []>} : vector<16x64xbf16>, vector<64x32xbf16>, vector<16x32xf32> -> vector<16x32xf32>
    %145 = arith.truncf %144 : vector<16x32xf32> to vector<16x32xbf16>
    %c6_136 = arith.constant 6 : index
    %c0_137 = arith.constant 0 : index
    %c0_138 = arith.constant 0 : index
    %146 = vector.load %arg11[%c6_136, %c0_137, %c0_138] : memref<9x32x64xbf16, #tpu.memory_space<vmem>>, vector<1x32x64xbf16>
    %147 = vector.shape_cast %146 : vector<1x32x64xbf16> to vector<32x64xbf16>
    %cst_139 = arith.constant dense<0.000000e+00> : vector<16x64xf32>
    %148 = tpu.matmul %145, %147, %cst_139 {dimension_numbers = #tpu.dot_dimension_numbers<[1], [0], [0], [1], [0, 0, 1, 1], [], []>} : vector<16x32xbf16>, vector<32x64xbf16>, vector<16x64xf32> -> vector<16x64xf32>
    %149 = arith.addf %141, %148 : vector<16x64xf32>
    %c7_140 = arith.constant 7 : index
    %c0_141 = arith.constant 0 : index
    %c0_142 = arith.constant 0 : index
    %150 = vector.load %arg5[%c7_140, %c0_141, %c0_142] : memref<9x16x64xbf16, #tpu.memory_space<vmem>>, vector<1x16x64xbf16>
    %151 = vector.shape_cast %150 : vector<1x16x64xbf16> to vector<16x64xbf16>
    %cst_143 = arith.constant dense<0.000000e+00> : vector<16x32xf32>
    %152 = tpu.matmul %151, %94, %cst_143 {dimension_numbers = #tpu.dot_dimension_numbers<[1], [0], [0], [1], [0, 0, 1, 1], [], []>} : vector<16x64xbf16>, vector<64x32xbf16>, vector<16x32xf32> -> vector<16x32xf32>
    %153 = arith.truncf %152 : vector<16x32xf32> to vector<16x32xbf16>
    %c7_144 = arith.constant 7 : index
    %c0_145 = arith.constant 0 : index
    %c0_146 = arith.constant 0 : index
    %154 = vector.load %arg11[%c7_144, %c0_145, %c0_146] : memref<9x32x64xbf16, #tpu.memory_space<vmem>>, vector<1x32x64xbf16>
    %155 = vector.shape_cast %154 : vector<1x32x64xbf16> to vector<32x64xbf16>
    %cst_147 = arith.constant dense<0.000000e+00> : vector<16x64xf32>
    %156 = tpu.matmul %153, %155, %cst_147 {dimension_numbers = #tpu.dot_dimension_numbers<[1], [0], [0], [1], [0, 0, 1, 1], [], []>} : vector<16x32xbf16>, vector<32x64xbf16>, vector<16x64xf32> -> vector<16x64xf32>
    %157 = arith.addf %149, %156 : vector<16x64xf32>
    %c8_148 = arith.constant 8 : index
    %c0_149 = arith.constant 0 : index
    %c0_150 = arith.constant 0 : index
    %158 = vector.load %arg5[%c8_148, %c0_149, %c0_150] : memref<9x16x64xbf16, #tpu.memory_space<vmem>>, vector<1x16x64xbf16>
    %159 = vector.shape_cast %158 : vector<1x16x64xbf16> to vector<16x64xbf16>
    %cst_151 = arith.constant dense<0.000000e+00> : vector<16x32xf32>
    %160 = tpu.matmul %159, %94, %cst_151 {dimension_numbers = #tpu.dot_dimension_numbers<[1], [0], [0], [1], [0, 0, 1, 1], [], []>} : vector<16x64xbf16>, vector<64x32xbf16>, vector<16x32xf32> -> vector<16x32xf32>
    %161 = arith.truncf %160 : vector<16x32xf32> to vector<16x32xbf16>
    %c8_152 = arith.constant 8 : index
    %c0_153 = arith.constant 0 : index
    %c0_154 = arith.constant 0 : index
    %162 = vector.load %arg11[%c8_152, %c0_153, %c0_154] : memref<9x32x64xbf16, #tpu.memory_space<vmem>>, vector<1x32x64xbf16>
    %163 = vector.shape_cast %162 : vector<1x32x64xbf16> to vector<32x64xbf16>
    %cst_155 = arith.constant dense<0.000000e+00> : vector<16x64xf32>
    %164 = tpu.matmul %161, %163, %cst_155 {dimension_numbers = #tpu.dot_dimension_numbers<[1], [0], [0], [1], [0, 0, 1, 1], [], []>} : vector<16x32xbf16>, vector<32x64xbf16>, vector<16x64xf32> -> vector<16x64xf32>
    %165 = arith.addf %157, %164 : vector<16x64xf32>
    %cst_156 = arith.constant 0.000000e+00 : f32
    %166 = vector.broadcast %cst_156 : f32 to vector<16x64xf32>
    %167 = arith.maximumf %165, %166 : vector<16x64xf32>
    %168 = arith.addf %167, %93 : vector<16x64xf32>
    %c0_157 = arith.constant 0 : index
    %c0_158 = arith.constant 0 : index
    %169 = vector.load %arg14[%c0_157, %c0_158] : memref<64x64xbf16, #tpu.memory_space<vmem>>, vector<64x64xbf16>
    %170 = arith.truncf %168 : vector<16x64xf32> to vector<16x64xbf16>
    %cst_159 = arith.constant dense<0.000000e+00> : vector<16x64xf32>
    %171 = tpu.matmul %170, %169, %cst_159 {dimension_numbers = #tpu.dot_dimension_numbers<[1], [0], [0], [1], [0, 0, 1, 1], [], []>} : vector<16x64xbf16>, vector<64x64xbf16>, vector<16x64xf32> -> vector<16x64xf32>
    %c0_160 = arith.constant 0 : index
    %c0_161 = arith.constant 0 : index
    %172 = vector.load %arg15[%c0_160, %c0_161] : memref<1x64xf32, #tpu.memory_space<vmem>>, vector<1x64xf32>
    %173 = vector.broadcast %172 : vector<1x64xf32> to vector<16x64xf32>
    %174 = arith.addf %171, %173 : vector<16x64xf32>
    %cst_162 = arith.constant 0.000000e+00 : f32
    %175 = vector.broadcast %cst_162 : f32 to vector<16x64xf32>
    %176 = arith.maximumf %174, %175 : vector<16x64xf32>
    %177 = arith.truncf %176 : vector<16x64xf32> to vector<16x64xbf16>
    %c0_163 = arith.constant 0 : index
    %c0_164 = arith.constant 0 : index
    %c0_165 = arith.constant 0 : index
    %178 = vector.load %arg6[%c0_163, %c0_164, %c0_165] : memref<9x4x16xbf16, #tpu.memory_space<vmem>>, vector<1x4x16xbf16>
    %179 = vector.shape_cast %178 : vector<1x4x16xbf16> to vector<4x16xbf16>
    %cst_166 = arith.constant dense<0.000000e+00> : vector<4x64xf32>
    %180 = tpu.matmul %179, %177, %cst_166 {dimension_numbers = #tpu.dot_dimension_numbers<[1], [0], [0], [1], [0, 0, 1, 1], [], []>} : vector<4x16xbf16>, vector<16x64xbf16>, vector<4x64xf32> -> vector<4x64xf32>
    %181 = arith.truncf %180 : vector<4x64xf32> to vector<4x64xbf16>
    %c0_167 = arith.constant 0 : index
    %c0_168 = arith.constant 0 : index
    %c0_169 = arith.constant 0 : index
    %182 = vector.load %arg16[%c0_167, %c0_168, %c0_169] : memref<9x64x128xbf16, #tpu.memory_space<vmem>>, vector<1x64x128xbf16>
    %183 = vector.shape_cast %182 : vector<1x64x128xbf16> to vector<64x128xbf16>
    %cst_170 = arith.constant dense<0.000000e+00> : vector<4x128xf32>
    %184 = tpu.matmul %181, %183, %cst_170 {dimension_numbers = #tpu.dot_dimension_numbers<[1], [0], [0], [1], [0, 0, 1, 1], [], []>} : vector<4x64xbf16>, vector<64x128xbf16>, vector<4x128xf32> -> vector<4x128xf32>
    %c1_171 = arith.constant 1 : index
    %c0_172 = arith.constant 0 : index
    %c0_173 = arith.constant 0 : index
    %185 = vector.load %arg6[%c1_171, %c0_172, %c0_173] : memref<9x4x16xbf16, #tpu.memory_space<vmem>>, vector<1x4x16xbf16>
    %186 = vector.shape_cast %185 : vector<1x4x16xbf16> to vector<4x16xbf16>
    %cst_174 = arith.constant dense<0.000000e+00> : vector<4x64xf32>
    %187 = tpu.matmul %186, %177, %cst_174 {dimension_numbers = #tpu.dot_dimension_numbers<[1], [0], [0], [1], [0, 0, 1, 1], [], []>} : vector<4x16xbf16>, vector<16x64xbf16>, vector<4x64xf32> -> vector<4x64xf32>
    %188 = arith.truncf %187 : vector<4x64xf32> to vector<4x64xbf16>
    %c1_175 = arith.constant 1 : index
    %c0_176 = arith.constant 0 : index
    %c0_177 = arith.constant 0 : index
    %189 = vector.load %arg16[%c1_175, %c0_176, %c0_177] : memref<9x64x128xbf16, #tpu.memory_space<vmem>>, vector<1x64x128xbf16>
    %190 = vector.shape_cast %189 : vector<1x64x128xbf16> to vector<64x128xbf16>
    %cst_178 = arith.constant dense<0.000000e+00> : vector<4x128xf32>
    %191 = tpu.matmul %188, %190, %cst_178 {dimension_numbers = #tpu.dot_dimension_numbers<[1], [0], [0], [1], [0, 0, 1, 1], [], []>} : vector<4x64xbf16>, vector<64x128xbf16>, vector<4x128xf32> -> vector<4x128xf32>
    %192 = arith.addf %184, %191 : vector<4x128xf32>
    %c2_179 = arith.constant 2 : index
    %c0_180 = arith.constant 0 : index
    %c0_181 = arith.constant 0 : index
    %193 = vector.load %arg6[%c2_179, %c0_180, %c0_181] : memref<9x4x16xbf16, #tpu.memory_space<vmem>>, vector<1x4x16xbf16>
    %194 = vector.shape_cast %193 : vector<1x4x16xbf16> to vector<4x16xbf16>
    %cst_182 = arith.constant dense<0.000000e+00> : vector<4x64xf32>
    %195 = tpu.matmul %194, %177, %cst_182 {dimension_numbers = #tpu.dot_dimension_numbers<[1], [0], [0], [1], [0, 0, 1, 1], [], []>} : vector<4x16xbf16>, vector<16x64xbf16>, vector<4x64xf32> -> vector<4x64xf32>
    %196 = arith.truncf %195 : vector<4x64xf32> to vector<4x64xbf16>
    %c2_183 = arith.constant 2 : index
    %c0_184 = arith.constant 0 : index
    %c0_185 = arith.constant 0 : index
    %197 = vector.load %arg16[%c2_183, %c0_184, %c0_185] : memref<9x64x128xbf16, #tpu.memory_space<vmem>>, vector<1x64x128xbf16>
    %198 = vector.shape_cast %197 : vector<1x64x128xbf16> to vector<64x128xbf16>
    %cst_186 = arith.constant dense<0.000000e+00> : vector<4x128xf32>
    %199 = tpu.matmul %196, %198, %cst_186 {dimension_numbers = #tpu.dot_dimension_numbers<[1], [0], [0], [1], [0, 0, 1, 1], [], []>} : vector<4x64xbf16>, vector<64x128xbf16>, vector<4x128xf32> -> vector<4x128xf32>
    %200 = arith.addf %192, %199 : vector<4x128xf32>
    %c3_187 = arith.constant 3 : index
    %c0_188 = arith.constant 0 : index
    %c0_189 = arith.constant 0 : index
    %201 = vector.load %arg6[%c3_187, %c0_188, %c0_189] : memref<9x4x16xbf16, #tpu.memory_space<vmem>>, vector<1x4x16xbf16>
    %202 = vector.shape_cast %201 : vector<1x4x16xbf16> to vector<4x16xbf16>
    %cst_190 = arith.constant dense<0.000000e+00> : vector<4x64xf32>
    %203 = tpu.matmul %202, %177, %cst_190 {dimension_numbers = #tpu.dot_dimension_numbers<[1], [0], [0], [1], [0, 0, 1, 1], [], []>} : vector<4x16xbf16>, vector<16x64xbf16>, vector<4x64xf32> -> vector<4x64xf32>
    %204 = arith.truncf %203 : vector<4x64xf32> to vector<4x64xbf16>
    %c3_191 = arith.constant 3 : index
    %c0_192 = arith.constant 0 : index
    %c0_193 = arith.constant 0 : index
    %205 = vector.load %arg16[%c3_191, %c0_192, %c0_193] : memref<9x64x128xbf16, #tpu.memory_space<vmem>>, vector<1x64x128xbf16>
    %206 = vector.shape_cast %205 : vector<1x64x128xbf16> to vector<64x128xbf16>
    %cst_194 = arith.constant dense<0.000000e+00> : vector<4x128xf32>
    %207 = tpu.matmul %204, %206, %cst_194 {dimension_numbers = #tpu.dot_dimension_numbers<[1], [0], [0], [1], [0, 0, 1, 1], [], []>} : vector<4x64xbf16>, vector<64x128xbf16>, vector<4x128xf32> -> vector<4x128xf32>
    %208 = arith.addf %200, %207 : vector<4x128xf32>
    %c4_195 = arith.constant 4 : index
    %c0_196 = arith.constant 0 : index
    %c0_197 = arith.constant 0 : index
    %209 = vector.load %arg6[%c4_195, %c0_196, %c0_197] : memref<9x4x16xbf16, #tpu.memory_space<vmem>>, vector<1x4x16xbf16>
    %210 = vector.shape_cast %209 : vector<1x4x16xbf16> to vector<4x16xbf16>
    %cst_198 = arith.constant dense<0.000000e+00> : vector<4x64xf32>
    %211 = tpu.matmul %210, %177, %cst_198 {dimension_numbers = #tpu.dot_dimension_numbers<[1], [0], [0], [1], [0, 0, 1, 1], [], []>} : vector<4x16xbf16>, vector<16x64xbf16>, vector<4x64xf32> -> vector<4x64xf32>
    %212 = arith.truncf %211 : vector<4x64xf32> to vector<4x64xbf16>
    %c4_199 = arith.constant 4 : index
    %c0_200 = arith.constant 0 : index
    %c0_201 = arith.constant 0 : index
    %213 = vector.load %arg16[%c4_199, %c0_200, %c0_201] : memref<9x64x128xbf16, #tpu.memory_space<vmem>>, vector<1x64x128xbf16>
    %214 = vector.shape_cast %213 : vector<1x64x128xbf16> to vector<64x128xbf16>
    %cst_202 = arith.constant dense<0.000000e+00> : vector<4x128xf32>
    %215 = tpu.matmul %212, %214, %cst_202 {dimension_numbers = #tpu.dot_dimension_numbers<[1], [0], [0], [1], [0, 0, 1, 1], [], []>} : vector<4x64xbf16>, vector<64x128xbf16>, vector<4x128xf32> -> vector<4x128xf32>
    %216 = arith.addf %208, %215 : vector<4x128xf32>
    %c5_203 = arith.constant 5 : index
    %c0_204 = arith.constant 0 : index
    %c0_205 = arith.constant 0 : index
    %217 = vector.load %arg6[%c5_203, %c0_204, %c0_205] : memref<9x4x16xbf16, #tpu.memory_space<vmem>>, vector<1x4x16xbf16>
    %218 = vector.shape_cast %217 : vector<1x4x16xbf16> to vector<4x16xbf16>
    %cst_206 = arith.constant dense<0.000000e+00> : vector<4x64xf32>
    %219 = tpu.matmul %218, %177, %cst_206 {dimension_numbers = #tpu.dot_dimension_numbers<[1], [0], [0], [1], [0, 0, 1, 1], [], []>} : vector<4x16xbf16>, vector<16x64xbf16>, vector<4x64xf32> -> vector<4x64xf32>
    %220 = arith.truncf %219 : vector<4x64xf32> to vector<4x64xbf16>
    %c5_207 = arith.constant 5 : index
    %c0_208 = arith.constant 0 : index
    %c0_209 = arith.constant 0 : index
    %221 = vector.load %arg16[%c5_207, %c0_208, %c0_209] : memref<9x64x128xbf16, #tpu.memory_space<vmem>>, vector<1x64x128xbf16>
    %222 = vector.shape_cast %221 : vector<1x64x128xbf16> to vector<64x128xbf16>
    %cst_210 = arith.constant dense<0.000000e+00> : vector<4x128xf32>
    %223 = tpu.matmul %220, %222, %cst_210 {dimension_numbers = #tpu.dot_dimension_numbers<[1], [0], [0], [1], [0, 0, 1, 1], [], []>} : vector<4x64xbf16>, vector<64x128xbf16>, vector<4x128xf32> -> vector<4x128xf32>
    %224 = arith.addf %216, %223 : vector<4x128xf32>
    %c6_211 = arith.constant 6 : index
    %c0_212 = arith.constant 0 : index
    %c0_213 = arith.constant 0 : index
    %225 = vector.load %arg6[%c6_211, %c0_212, %c0_213] : memref<9x4x16xbf16, #tpu.memory_space<vmem>>, vector<1x4x16xbf16>
    %226 = vector.shape_cast %225 : vector<1x4x16xbf16> to vector<4x16xbf16>
    %cst_214 = arith.constant dense<0.000000e+00> : vector<4x64xf32>
    %227 = tpu.matmul %226, %177, %cst_214 {dimension_numbers = #tpu.dot_dimension_numbers<[1], [0], [0], [1], [0, 0, 1, 1], [], []>} : vector<4x16xbf16>, vector<16x64xbf16>, vector<4x64xf32> -> vector<4x64xf32>
    %228 = arith.truncf %227 : vector<4x64xf32> to vector<4x64xbf16>
    %c6_215 = arith.constant 6 : index
    %c0_216 = arith.constant 0 : index
    %c0_217 = arith.constant 0 : index
    %229 = vector.load %arg16[%c6_215, %c0_216, %c0_217] : memref<9x64x128xbf16, #tpu.memory_space<vmem>>, vector<1x64x128xbf16>
    %230 = vector.shape_cast %229 : vector<1x64x128xbf16> to vector<64x128xbf16>
    %cst_218 = arith.constant dense<0.000000e+00> : vector<4x128xf32>
    %231 = tpu.matmul %228, %230, %cst_218 {dimension_numbers = #tpu.dot_dimension_numbers<[1], [0], [0], [1], [0, 0, 1, 1], [], []>} : vector<4x64xbf16>, vector<64x128xbf16>, vector<4x128xf32> -> vector<4x128xf32>
    %232 = arith.addf %224, %231 : vector<4x128xf32>
    %c7_219 = arith.constant 7 : index
    %c0_220 = arith.constant 0 : index
    %c0_221 = arith.constant 0 : index
    %233 = vector.load %arg6[%c7_219, %c0_220, %c0_221] : memref<9x4x16xbf16, #tpu.memory_space<vmem>>, vector<1x4x16xbf16>
    %234 = vector.shape_cast %233 : vector<1x4x16xbf16> to vector<4x16xbf16>
    %cst_222 = arith.constant dense<0.000000e+00> : vector<4x64xf32>
    %235 = tpu.matmul %234, %177, %cst_222 {dimension_numbers = #tpu.dot_dimension_numbers<[1], [0], [0], [1], [0, 0, 1, 1], [], []>} : vector<4x16xbf16>, vector<16x64xbf16>, vector<4x64xf32> -> vector<4x64xf32>
    %236 = arith.truncf %235 : vector<4x64xf32> to vector<4x64xbf16>
    %c7_223 = arith.constant 7 : index
    %c0_224 = arith.constant 0 : index
    %c0_225 = arith.constant 0 : index
    %237 = vector.load %arg16[%c7_223, %c0_224, %c0_225] : memref<9x64x128xbf16, #tpu.memory_space<vmem>>, vector<1x64x128xbf16>
    %238 = vector.shape_cast %237 : vector<1x64x128xbf16> to vector<64x128xbf16>
    %cst_226 = arith.constant dense<0.000000e+00> : vector<4x128xf32>
    %239 = tpu.matmul %236, %238, %cst_226 {dimension_numbers = #tpu.dot_dimension_numbers<[1], [0], [0], [1], [0, 0, 1, 1], [], []>} : vector<4x64xbf16>, vector<64x128xbf16>, vector<4x128xf32> -> vector<4x128xf32>
    %240 = arith.addf %232, %239 : vector<4x128xf32>
    %c8_227 = arith.constant 8 : index
    %c0_228 = arith.constant 0 : index
    %c0_229 = arith.constant 0 : index
    %241 = vector.load %arg6[%c8_227, %c0_228, %c0_229] : memref<9x4x16xbf16, #tpu.memory_space<vmem>>, vector<1x4x16xbf16>
    %242 = vector.shape_cast %241 : vector<1x4x16xbf16> to vector<4x16xbf16>
    %cst_230 = arith.constant dense<0.000000e+00> : vector<4x64xf32>
    %243 = tpu.matmul %242, %177, %cst_230 {dimension_numbers = #tpu.dot_dimension_numbers<[1], [0], [0], [1], [0, 0, 1, 1], [], []>} : vector<4x16xbf16>, vector<16x64xbf16>, vector<4x64xf32> -> vector<4x64xf32>
    %244 = arith.truncf %243 : vector<4x64xf32> to vector<4x64xbf16>
    %c8_231 = arith.constant 8 : index
    %c0_232 = arith.constant 0 : index
    %c0_233 = arith.constant 0 : index
    %245 = vector.load %arg16[%c8_231, %c0_232, %c0_233] : memref<9x64x128xbf16, #tpu.memory_space<vmem>>, vector<1x64x128xbf16>
    %246 = vector.shape_cast %245 : vector<1x64x128xbf16> to vector<64x128xbf16>
    %cst_234 = arith.constant dense<0.000000e+00> : vector<4x128xf32>
    %247 = tpu.matmul %244, %246, %cst_234 {dimension_numbers = #tpu.dot_dimension_numbers<[1], [0], [0], [1], [0, 0, 1, 1], [], []>} : vector<4x64xbf16>, vector<64x128xbf16>, vector<4x128xf32> -> vector<4x128xf32>
    %248 = arith.addf %240, %247 : vector<4x128xf32>
    %cst_235 = arith.constant 0.000000e+00 : f32
    %249 = vector.broadcast %cst_235 : f32 to vector<4x128xf32>
    %250 = arith.maximumf %248, %249 : vector<4x128xf32>
    %251 = arith.truncf %250 : vector<4x128xf32> to vector<4x128xbf16>
    %c0_236 = arith.constant 0 : index
    %c0_237 = arith.constant 0 : index
    %c0_238 = arith.constant 0 : index
    %252 = vector.load %arg7[%c0_236, %c0_237, %c0_238] : memref<9x4x4xbf16, #tpu.memory_space<vmem>>, vector<1x4x4xbf16>
    %253 = vector.shape_cast %252 : vector<1x4x4xbf16> to vector<4x4xbf16>
    %cst_239 = arith.constant dense<0.000000e+00> : vector<4x128xf32>
    %254 = tpu.matmul %253, %251, %cst_239 {dimension_numbers = #tpu.dot_dimension_numbers<[1], [0], [0], [1], [0, 0, 1, 1], [], []>} : vector<4x4xbf16>, vector<4x128xbf16>, vector<4x128xf32> -> vector<4x128xf32>
    %255 = arith.truncf %254 : vector<4x128xf32> to vector<4x128xbf16>
    %c0_240 = arith.constant 0 : index
    %c0_241 = arith.constant 0 : index
    %c0_242 = arith.constant 0 : index
    %256 = vector.load %arg17[%c0_240, %c0_241, %c0_242] : memref<9x128x128xbf16, #tpu.memory_space<vmem>>, vector<1x128x128xbf16>
    %257 = vector.shape_cast %256 : vector<1x128x128xbf16> to vector<128x128xbf16>
    %cst_243 = arith.constant dense<0.000000e+00> : vector<4x128xf32>
    %258 = tpu.matmul %255, %257, %cst_243 {dimension_numbers = #tpu.dot_dimension_numbers<[1], [0], [0], [1], [0, 0, 1, 1], [], []>} : vector<4x128xbf16>, vector<128x128xbf16>, vector<4x128xf32> -> vector<4x128xf32>
    %c1_244 = arith.constant 1 : index
    %c0_245 = arith.constant 0 : index
    %c0_246 = arith.constant 0 : index
    %259 = vector.load %arg7[%c1_244, %c0_245, %c0_246] : memref<9x4x4xbf16, #tpu.memory_space<vmem>>, vector<1x4x4xbf16>
    %260 = vector.shape_cast %259 : vector<1x4x4xbf16> to vector<4x4xbf16>
    %cst_247 = arith.constant dense<0.000000e+00> : vector<4x128xf32>
    %261 = tpu.matmul %260, %251, %cst_247 {dimension_numbers = #tpu.dot_dimension_numbers<[1], [0], [0], [1], [0, 0, 1, 1], [], []>} : vector<4x4xbf16>, vector<4x128xbf16>, vector<4x128xf32> -> vector<4x128xf32>
    %262 = arith.truncf %261 : vector<4x128xf32> to vector<4x128xbf16>
    %c1_248 = arith.constant 1 : index
    %c0_249 = arith.constant 0 : index
    %c0_250 = arith.constant 0 : index
    %263 = vector.load %arg17[%c1_248, %c0_249, %c0_250] : memref<9x128x128xbf16, #tpu.memory_space<vmem>>, vector<1x128x128xbf16>
    %264 = vector.shape_cast %263 : vector<1x128x128xbf16> to vector<128x128xbf16>
    %cst_251 = arith.constant dense<0.000000e+00> : vector<4x128xf32>
    %265 = tpu.matmul %262, %264, %cst_251 {dimension_numbers = #tpu.dot_dimension_numbers<[1], [0], [0], [1], [0, 0, 1, 1], [], []>} : vector<4x128xbf16>, vector<128x128xbf16>, vector<4x128xf32> -> vector<4x128xf32>
    %266 = arith.addf %258, %265 : vector<4x128xf32>
    %c2_252 = arith.constant 2 : index
    %c0_253 = arith.constant 0 : index
    %c0_254 = arith.constant 0 : index
    %267 = vector.load %arg7[%c2_252, %c0_253, %c0_254] : memref<9x4x4xbf16, #tpu.memory_space<vmem>>, vector<1x4x4xbf16>
    %268 = vector.shape_cast %267 : vector<1x4x4xbf16> to vector<4x4xbf16>
    %cst_255 = arith.constant dense<0.000000e+00> : vector<4x128xf32>
    %269 = tpu.matmul %268, %251, %cst_255 {dimension_numbers = #tpu.dot_dimension_numbers<[1], [0], [0], [1], [0, 0, 1, 1], [], []>} : vector<4x4xbf16>, vector<4x128xbf16>, vector<4x128xf32> -> vector<4x128xf32>
    %270 = arith.truncf %269 : vector<4x128xf32> to vector<4x128xbf16>
    %c2_256 = arith.constant 2 : index
    %c0_257 = arith.constant 0 : index
    %c0_258 = arith.constant 0 : index
    %271 = vector.load %arg17[%c2_256, %c0_257, %c0_258] : memref<9x128x128xbf16, #tpu.memory_space<vmem>>, vector<1x128x128xbf16>
    %272 = vector.shape_cast %271 : vector<1x128x128xbf16> to vector<128x128xbf16>
    %cst_259 = arith.constant dense<0.000000e+00> : vector<4x128xf32>
    %273 = tpu.matmul %270, %272, %cst_259 {dimension_numbers = #tpu.dot_dimension_numbers<[1], [0], [0], [1], [0, 0, 1, 1], [], []>} : vector<4x128xbf16>, vector<128x128xbf16>, vector<4x128xf32> -> vector<4x128xf32>
    %274 = arith.addf %266, %273 : vector<4x128xf32>
    %c3_260 = arith.constant 3 : index
    %c0_261 = arith.constant 0 : index
    %c0_262 = arith.constant 0 : index
    %275 = vector.load %arg7[%c3_260, %c0_261, %c0_262] : memref<9x4x4xbf16, #tpu.memory_space<vmem>>, vector<1x4x4xbf16>
    %276 = vector.shape_cast %275 : vector<1x4x4xbf16> to vector<4x4xbf16>
    %cst_263 = arith.constant dense<0.000000e+00> : vector<4x128xf32>
    %277 = tpu.matmul %276, %251, %cst_263 {dimension_numbers = #tpu.dot_dimension_numbers<[1], [0], [0], [1], [0, 0, 1, 1], [], []>} : vector<4x4xbf16>, vector<4x128xbf16>, vector<4x128xf32> -> vector<4x128xf32>
    %278 = arith.truncf %277 : vector<4x128xf32> to vector<4x128xbf16>
    %c3_264 = arith.constant 3 : index
    %c0_265 = arith.constant 0 : index
    %c0_266 = arith.constant 0 : index
    %279 = vector.load %arg17[%c3_264, %c0_265, %c0_266] : memref<9x128x128xbf16, #tpu.memory_space<vmem>>, vector<1x128x128xbf16>
    %280 = vector.shape_cast %279 : vector<1x128x128xbf16> to vector<128x128xbf16>
    %cst_267 = arith.constant dense<0.000000e+00> : vector<4x128xf32>
    %281 = tpu.matmul %278, %280, %cst_267 {dimension_numbers = #tpu.dot_dimension_numbers<[1], [0], [0], [1], [0, 0, 1, 1], [], []>} : vector<4x128xbf16>, vector<128x128xbf16>, vector<4x128xf32> -> vector<4x128xf32>
    %282 = arith.addf %274, %281 : vector<4x128xf32>
    %c4_268 = arith.constant 4 : index
    %c0_269 = arith.constant 0 : index
    %c0_270 = arith.constant 0 : index
    %283 = vector.load %arg7[%c4_268, %c0_269, %c0_270] : memref<9x4x4xbf16, #tpu.memory_space<vmem>>, vector<1x4x4xbf16>
    %284 = vector.shape_cast %283 : vector<1x4x4xbf16> to vector<4x4xbf16>
    %cst_271 = arith.constant dense<0.000000e+00> : vector<4x128xf32>
    %285 = tpu.matmul %284, %251, %cst_271 {dimension_numbers = #tpu.dot_dimension_numbers<[1], [0], [0], [1], [0, 0, 1, 1], [], []>} : vector<4x4xbf16>, vector<4x128xbf16>, vector<4x128xf32> -> vector<4x128xf32>
    %286 = arith.truncf %285 : vector<4x128xf32> to vector<4x128xbf16>
    %c4_272 = arith.constant 4 : index
    %c0_273 = arith.constant 0 : index
    %c0_274 = arith.constant 0 : index
    %287 = vector.load %arg17[%c4_272, %c0_273, %c0_274] : memref<9x128x128xbf16, #tpu.memory_space<vmem>>, vector<1x128x128xbf16>
    %288 = vector.shape_cast %287 : vector<1x128x128xbf16> to vector<128x128xbf16>
    %cst_275 = arith.constant dense<0.000000e+00> : vector<4x128xf32>
    %289 = tpu.matmul %286, %288, %cst_275 {dimension_numbers = #tpu.dot_dimension_numbers<[1], [0], [0], [1], [0, 0, 1, 1], [], []>} : vector<4x128xbf16>, vector<128x128xbf16>, vector<4x128xf32> -> vector<4x128xf32>
    %290 = arith.addf %282, %289 : vector<4x128xf32>
    %c5_276 = arith.constant 5 : index
    %c0_277 = arith.constant 0 : index
    %c0_278 = arith.constant 0 : index
    %291 = vector.load %arg7[%c5_276, %c0_277, %c0_278] : memref<9x4x4xbf16, #tpu.memory_space<vmem>>, vector<1x4x4xbf16>
    %292 = vector.shape_cast %291 : vector<1x4x4xbf16> to vector<4x4xbf16>
    %cst_279 = arith.constant dense<0.000000e+00> : vector<4x128xf32>
    %293 = tpu.matmul %292, %251, %cst_279 {dimension_numbers = #tpu.dot_dimension_numbers<[1], [0], [0], [1], [0, 0, 1, 1], [], []>} : vector<4x4xbf16>, vector<4x128xbf16>, vector<4x128xf32> -> vector<4x128xf32>
    %294 = arith.truncf %293 : vector<4x128xf32> to vector<4x128xbf16>
    %c5_280 = arith.constant 5 : index
    %c0_281 = arith.constant 0 : index
    %c0_282 = arith.constant 0 : index
    %295 = vector.load %arg17[%c5_280, %c0_281, %c0_282] : memref<9x128x128xbf16, #tpu.memory_space<vmem>>, vector<1x128x128xbf16>
    %296 = vector.shape_cast %295 : vector<1x128x128xbf16> to vector<128x128xbf16>
    %cst_283 = arith.constant dense<0.000000e+00> : vector<4x128xf32>
    %297 = tpu.matmul %294, %296, %cst_283 {dimension_numbers = #tpu.dot_dimension_numbers<[1], [0], [0], [1], [0, 0, 1, 1], [], []>} : vector<4x128xbf16>, vector<128x128xbf16>, vector<4x128xf32> -> vector<4x128xf32>
    %298 = arith.addf %290, %297 : vector<4x128xf32>
    %c6_284 = arith.constant 6 : index
    %c0_285 = arith.constant 0 : index
    %c0_286 = arith.constant 0 : index
    %299 = vector.load %arg7[%c6_284, %c0_285, %c0_286] : memref<9x4x4xbf16, #tpu.memory_space<vmem>>, vector<1x4x4xbf16>
    %300 = vector.shape_cast %299 : vector<1x4x4xbf16> to vector<4x4xbf16>
    %cst_287 = arith.constant dense<0.000000e+00> : vector<4x128xf32>
    %301 = tpu.matmul %300, %251, %cst_287 {dimension_numbers = #tpu.dot_dimension_numbers<[1], [0], [0], [1], [0, 0, 1, 1], [], []>} : vector<4x4xbf16>, vector<4x128xbf16>, vector<4x128xf32> -> vector<4x128xf32>
    %302 = arith.truncf %301 : vector<4x128xf32> to vector<4x128xbf16>
    %c6_288 = arith.constant 6 : index
    %c0_289 = arith.constant 0 : index
    %c0_290 = arith.constant 0 : index
    %303 = vector.load %arg17[%c6_288, %c0_289, %c0_290] : memref<9x128x128xbf16, #tpu.memory_space<vmem>>, vector<1x128x128xbf16>
    %304 = vector.shape_cast %303 : vector<1x128x128xbf16> to vector<128x128xbf16>
    %cst_291 = arith.constant dense<0.000000e+00> : vector<4x128xf32>
    %305 = tpu.matmul %302, %304, %cst_291 {dimension_numbers = #tpu.dot_dimension_numbers<[1], [0], [0], [1], [0, 0, 1, 1], [], []>} : vector<4x128xbf16>, vector<128x128xbf16>, vector<4x128xf32> -> vector<4x128xf32>
    %306 = arith.addf %298, %305 : vector<4x128xf32>
    %c7_292 = arith.constant 7 : index
    %c0_293 = arith.constant 0 : index
    %c0_294 = arith.constant 0 : index
    %307 = vector.load %arg7[%c7_292, %c0_293, %c0_294] : memref<9x4x4xbf16, #tpu.memory_space<vmem>>, vector<1x4x4xbf16>
    %308 = vector.shape_cast %307 : vector<1x4x4xbf16> to vector<4x4xbf16>
    %cst_295 = arith.constant dense<0.000000e+00> : vector<4x128xf32>
    %309 = tpu.matmul %308, %251, %cst_295 {dimension_numbers = #tpu.dot_dimension_numbers<[1], [0], [0], [1], [0, 0, 1, 1], [], []>} : vector<4x4xbf16>, vector<4x128xbf16>, vector<4x128xf32> -> vector<4x128xf32>
    %310 = arith.truncf %309 : vector<4x128xf32> to vector<4x128xbf16>
    %c7_296 = arith.constant 7 : index
    %c0_297 = arith.constant 0 : index
    %c0_298 = arith.constant 0 : index
    %311 = vector.load %arg17[%c7_296, %c0_297, %c0_298] : memref<9x128x128xbf16, #tpu.memory_space<vmem>>, vector<1x128x128xbf16>
    %312 = vector.shape_cast %311 : vector<1x128x128xbf16> to vector<128x128xbf16>
    %cst_299 = arith.constant dense<0.000000e+00> : vector<4x128xf32>
    %313 = tpu.matmul %310, %312, %cst_299 {dimension_numbers = #tpu.dot_dimension_numbers<[1], [0], [0], [1], [0, 0, 1, 1], [], []>} : vector<4x128xbf16>, vector<128x128xbf16>, vector<4x128xf32> -> vector<4x128xf32>
    %314 = arith.addf %306, %313 : vector<4x128xf32>
    %c8_300 = arith.constant 8 : index
    %c0_301 = arith.constant 0 : index
    %c0_302 = arith.constant 0 : index
    %315 = vector.load %arg7[%c8_300, %c0_301, %c0_302] : memref<9x4x4xbf16, #tpu.memory_space<vmem>>, vector<1x4x4xbf16>
    %316 = vector.shape_cast %315 : vector<1x4x4xbf16> to vector<4x4xbf16>
    %cst_303 = arith.constant dense<0.000000e+00> : vector<4x128xf32>
    %317 = tpu.matmul %316, %251, %cst_303 {dimension_numbers = #tpu.dot_dimension_numbers<[1], [0], [0], [1], [0, 0, 1, 1], [], []>} : vector<4x4xbf16>, vector<4x128xbf16>, vector<4x128xf32> -> vector<4x128xf32>
    %318 = arith.truncf %317 : vector<4x128xf32> to vector<4x128xbf16>
    %c8_304 = arith.constant 8 : index
    %c0_305 = arith.constant 0 : index
    %c0_306 = arith.constant 0 : index
    %319 = vector.load %arg17[%c8_304, %c0_305, %c0_306] : memref<9x128x128xbf16, #tpu.memory_space<vmem>>, vector<1x128x128xbf16>
    %320 = vector.shape_cast %319 : vector<1x128x128xbf16> to vector<128x128xbf16>
    %cst_307 = arith.constant dense<0.000000e+00> : vector<4x128xf32>
    %321 = tpu.matmul %318, %320, %cst_307 {dimension_numbers = #tpu.dot_dimension_numbers<[1], [0], [0], [1], [0, 0, 1, 1], [], []>} : vector<4x128xbf16>, vector<128x128xbf16>, vector<4x128xf32> -> vector<4x128xf32>
    %322 = arith.addf %314, %321 : vector<4x128xf32>
    %c4_308 = arith.constant 4 : index
    %c0_309 = arith.constant 0 : index
    %c0_310 = arith.constant 0 : index
    %323 = vector.load %arg6[%c4_308, %c0_309, %c0_310] : memref<9x4x16xbf16, #tpu.memory_space<vmem>>, vector<1x4x16xbf16>
    %324 = vector.shape_cast %323 : vector<1x4x16xbf16> to vector<4x16xbf16>
    %cst_311 = arith.constant dense<0.000000e+00> : vector<4x64xf32>
    %325 = tpu.matmul %324, %177, %cst_311 {dimension_numbers = #tpu.dot_dimension_numbers<[1], [0], [0], [1], [0, 0, 1, 1], [], []>} : vector<4x16xbf16>, vector<16x64xbf16>, vector<4x64xf32> -> vector<4x64xf32>
    %326 = arith.truncf %325 : vector<4x64xf32> to vector<4x64xbf16>
    %c0_312 = arith.constant 0 : index
    %c0_313 = arith.constant 0 : index
    %327 = vector.load %arg18[%c0_312, %c0_313] : memref<64x128xbf16, #tpu.memory_space<vmem>>, vector<64x128xbf16>
    %cst_314 = arith.constant dense<0.000000e+00> : vector<4x128xf32>
    %328 = tpu.matmul %326, %327, %cst_314 {dimension_numbers = #tpu.dot_dimension_numbers<[1], [0], [0], [1], [0, 0, 1, 1], [], []>} : vector<4x64xbf16>, vector<64x128xbf16>, vector<4x128xf32> -> vector<4x128xf32>
    %329 = arith.addf %322, %328 : vector<4x128xf32>
    %cst_315 = arith.constant 0.000000e+00 : f32
    %330 = vector.broadcast %cst_315 : f32 to vector<4x128xf32>
    %331 = arith.maximumf %329, %330 : vector<4x128xf32>
    %332 = arith.truncf %331 : vector<4x128xf32> to vector<4x128xbf16>
    %c0_316 = arith.constant 0 : index
    %c0_317 = arith.constant 0 : index
    %c0_318 = arith.constant 0 : index
    %333 = vector.load %arg7[%c0_316, %c0_317, %c0_318] : memref<9x4x4xbf16, #tpu.memory_space<vmem>>, vector<1x4x4xbf16>
    %334 = vector.shape_cast %333 : vector<1x4x4xbf16> to vector<4x4xbf16>
    %cst_319 = arith.constant dense<0.000000e+00> : vector<4x128xf32>
    %335 = tpu.matmul %334, %332, %cst_319 {dimension_numbers = #tpu.dot_dimension_numbers<[1], [0], [0], [1], [0, 0, 1, 1], [], []>} : vector<4x4xbf16>, vector<4x128xbf16>, vector<4x128xf32> -> vector<4x128xf32>
    %336 = arith.truncf %335 : vector<4x128xf32> to vector<4x128xbf16>
    %c0_320 = arith.constant 0 : index
    %c0_321 = arith.constant 0 : index
    %c0_322 = arith.constant 0 : index
    %337 = vector.load %arg19[%c0_320, %c0_321, %c0_322] : memref<9x128x128xbf16, #tpu.memory_space<vmem>>, vector<1x128x128xbf16>
    %338 = vector.shape_cast %337 : vector<1x128x128xbf16> to vector<128x128xbf16>
    %cst_323 = arith.constant dense<0.000000e+00> : vector<4x128xf32>
    %339 = tpu.matmul %336, %338, %cst_323 {dimension_numbers = #tpu.dot_dimension_numbers<[1], [0], [0], [1], [0, 0, 1, 1], [], []>} : vector<4x128xbf16>, vector<128x128xbf16>, vector<4x128xf32> -> vector<4x128xf32>
    %c1_324 = arith.constant 1 : index
    %c0_325 = arith.constant 0 : index
    %c0_326 = arith.constant 0 : index
    %340 = vector.load %arg7[%c1_324, %c0_325, %c0_326] : memref<9x4x4xbf16, #tpu.memory_space<vmem>>, vector<1x4x4xbf16>
    %341 = vector.shape_cast %340 : vector<1x4x4xbf16> to vector<4x4xbf16>
    %cst_327 = arith.constant dense<0.000000e+00> : vector<4x128xf32>
    %342 = tpu.matmul %341, %332, %cst_327 {dimension_numbers = #tpu.dot_dimension_numbers<[1], [0], [0], [1], [0, 0, 1, 1], [], []>} : vector<4x4xbf16>, vector<4x128xbf16>, vector<4x128xf32> -> vector<4x128xf32>
    %343 = arith.truncf %342 : vector<4x128xf32> to vector<4x128xbf16>
    %c1_328 = arith.constant 1 : index
    %c0_329 = arith.constant 0 : index
    %c0_330 = arith.constant 0 : index
    %344 = vector.load %arg19[%c1_328, %c0_329, %c0_330] : memref<9x128x128xbf16, #tpu.memory_space<vmem>>, vector<1x128x128xbf16>
    %345 = vector.shape_cast %344 : vector<1x128x128xbf16> to vector<128x128xbf16>
    %cst_331 = arith.constant dense<0.000000e+00> : vector<4x128xf32>
    %346 = tpu.matmul %343, %345, %cst_331 {dimension_numbers = #tpu.dot_dimension_numbers<[1], [0], [0], [1], [0, 0, 1, 1], [], []>} : vector<4x128xbf16>, vector<128x128xbf16>, vector<4x128xf32> -> vector<4x128xf32>
    %347 = arith.addf %339, %346 : vector<4x128xf32>
    %c2_332 = arith.constant 2 : index
    %c0_333 = arith.constant 0 : index
    %c0_334 = arith.constant 0 : index
    %348 = vector.load %arg7[%c2_332, %c0_333, %c0_334] : memref<9x4x4xbf16, #tpu.memory_space<vmem>>, vector<1x4x4xbf16>
    %349 = vector.shape_cast %348 : vector<1x4x4xbf16> to vector<4x4xbf16>
    %cst_335 = arith.constant dense<0.000000e+00> : vector<4x128xf32>
    %350 = tpu.matmul %349, %332, %cst_335 {dimension_numbers = #tpu.dot_dimension_numbers<[1], [0], [0], [1], [0, 0, 1, 1], [], []>} : vector<4x4xbf16>, vector<4x128xbf16>, vector<4x128xf32> -> vector<4x128xf32>
    %351 = arith.truncf %350 : vector<4x128xf32> to vector<4x128xbf16>
    %c2_336 = arith.constant 2 : index
    %c0_337 = arith.constant 0 : index
    %c0_338 = arith.constant 0 : index
    %352 = vector.load %arg19[%c2_336, %c0_337, %c0_338] : memref<9x128x128xbf16, #tpu.memory_space<vmem>>, vector<1x128x128xbf16>
    %353 = vector.shape_cast %352 : vector<1x128x128xbf16> to vector<128x128xbf16>
    %cst_339 = arith.constant dense<0.000000e+00> : vector<4x128xf32>
    %354 = tpu.matmul %351, %353, %cst_339 {dimension_numbers = #tpu.dot_dimension_numbers<[1], [0], [0], [1], [0, 0, 1, 1], [], []>} : vector<4x128xbf16>, vector<128x128xbf16>, vector<4x128xf32> -> vector<4x128xf32>
    %355 = arith.addf %347, %354 : vector<4x128xf32>
    %c3_340 = arith.constant 3 : index
    %c0_341 = arith.constant 0 : index
    %c0_342 = arith.constant 0 : index
    %356 = vector.load %arg7[%c3_340, %c0_341, %c0_342] : memref<9x4x4xbf16, #tpu.memory_space<vmem>>, vector<1x4x4xbf16>
    %357 = vector.shape_cast %356 : vector<1x4x4xbf16> to vector<4x4xbf16>
    %cst_343 = arith.constant dense<0.000000e+00> : vector<4x128xf32>
    %358 = tpu.matmul %357, %332, %cst_343 {dimension_numbers = #tpu.dot_dimension_numbers<[1], [0], [0], [1], [0, 0, 1, 1], [], []>} : vector<4x4xbf16>, vector<4x128xbf16>, vector<4x128xf32> -> vector<4x128xf32>
    %359 = arith.truncf %358 : vector<4x128xf32> to vector<4x128xbf16>
    %c3_344 = arith.constant 3 : index
    %c0_345 = arith.constant 0 : index
    %c0_346 = arith.constant 0 : index
    %360 = vector.load %arg19[%c3_344, %c0_345, %c0_346] : memref<9x128x128xbf16, #tpu.memory_space<vmem>>, vector<1x128x128xbf16>
    %361 = vector.shape_cast %360 : vector<1x128x128xbf16> to vector<128x128xbf16>
    %cst_347 = arith.constant dense<0.000000e+00> : vector<4x128xf32>
    %362 = tpu.matmul %359, %361, %cst_347 {dimension_numbers = #tpu.dot_dimension_numbers<[1], [0], [0], [1], [0, 0, 1, 1], [], []>} : vector<4x128xbf16>, vector<128x128xbf16>, vector<4x128xf32> -> vector<4x128xf32>
    %363 = arith.addf %355, %362 : vector<4x128xf32>
    %c4_348 = arith.constant 4 : index
    %c0_349 = arith.constant 0 : index
    %c0_350 = arith.constant 0 : index
    %364 = vector.load %arg7[%c4_348, %c0_349, %c0_350] : memref<9x4x4xbf16, #tpu.memory_space<vmem>>, vector<1x4x4xbf16>
    %365 = vector.shape_cast %364 : vector<1x4x4xbf16> to vector<4x4xbf16>
    %cst_351 = arith.constant dense<0.000000e+00> : vector<4x128xf32>
    %366 = tpu.matmul %365, %332, %cst_351 {dimension_numbers = #tpu.dot_dimension_numbers<[1], [0], [0], [1], [0, 0, 1, 1], [], []>} : vector<4x4xbf16>, vector<4x128xbf16>, vector<4x128xf32> -> vector<4x128xf32>
    %367 = arith.truncf %366 : vector<4x128xf32> to vector<4x128xbf16>
    %c4_352 = arith.constant 4 : index
    %c0_353 = arith.constant 0 : index
    %c0_354 = arith.constant 0 : index
    %368 = vector.load %arg19[%c4_352, %c0_353, %c0_354] : memref<9x128x128xbf16, #tpu.memory_space<vmem>>, vector<1x128x128xbf16>
    %369 = vector.shape_cast %368 : vector<1x128x128xbf16> to vector<128x128xbf16>
    %cst_355 = arith.constant dense<0.000000e+00> : vector<4x128xf32>
    %370 = tpu.matmul %367, %369, %cst_355 {dimension_numbers = #tpu.dot_dimension_numbers<[1], [0], [0], [1], [0, 0, 1, 1], [], []>} : vector<4x128xbf16>, vector<128x128xbf16>, vector<4x128xf32> -> vector<4x128xf32>
    %371 = arith.addf %363, %370 : vector<4x128xf32>
    %c5_356 = arith.constant 5 : index
    %c0_357 = arith.constant 0 : index
    %c0_358 = arith.constant 0 : index
    %372 = vector.load %arg7[%c5_356, %c0_357, %c0_358] : memref<9x4x4xbf16, #tpu.memory_space<vmem>>, vector<1x4x4xbf16>
    %373 = vector.shape_cast %372 : vector<1x4x4xbf16> to vector<4x4xbf16>
    %cst_359 = arith.constant dense<0.000000e+00> : vector<4x128xf32>
    %374 = tpu.matmul %373, %332, %cst_359 {dimension_numbers = #tpu.dot_dimension_numbers<[1], [0], [0], [1], [0, 0, 1, 1], [], []>} : vector<4x4xbf16>, vector<4x128xbf16>, vector<4x128xf32> -> vector<4x128xf32>
    %375 = arith.truncf %374 : vector<4x128xf32> to vector<4x128xbf16>
    %c5_360 = arith.constant 5 : index
    %c0_361 = arith.constant 0 : index
    %c0_362 = arith.constant 0 : index
    %376 = vector.load %arg19[%c5_360, %c0_361, %c0_362] : memref<9x128x128xbf16, #tpu.memory_space<vmem>>, vector<1x128x128xbf16>
    %377 = vector.shape_cast %376 : vector<1x128x128xbf16> to vector<128x128xbf16>
    %cst_363 = arith.constant dense<0.000000e+00> : vector<4x128xf32>
    %378 = tpu.matmul %375, %377, %cst_363 {dimension_numbers = #tpu.dot_dimension_numbers<[1], [0], [0], [1], [0, 0, 1, 1], [], []>} : vector<4x128xbf16>, vector<128x128xbf16>, vector<4x128xf32> -> vector<4x128xf32>
    %379 = arith.addf %371, %378 : vector<4x128xf32>
    %c6_364 = arith.constant 6 : index
    %c0_365 = arith.constant 0 : index
    %c0_366 = arith.constant 0 : index
    %380 = vector.load %arg7[%c6_364, %c0_365, %c0_366] : memref<9x4x4xbf16, #tpu.memory_space<vmem>>, vector<1x4x4xbf16>
    %381 = vector.shape_cast %380 : vector<1x4x4xbf16> to vector<4x4xbf16>
    %cst_367 = arith.constant dense<0.000000e+00> : vector<4x128xf32>
    %382 = tpu.matmul %381, %332, %cst_367 {dimension_numbers = #tpu.dot_dimension_numbers<[1], [0], [0], [1], [0, 0, 1, 1], [], []>} : vector<4x4xbf16>, vector<4x128xbf16>, vector<4x128xf32> -> vector<4x128xf32>
    %383 = arith.truncf %382 : vector<4x128xf32> to vector<4x128xbf16>
    %c6_368 = arith.constant 6 : index
    %c0_369 = arith.constant 0 : index
    %c0_370 = arith.constant 0 : index
    %384 = vector.load %arg19[%c6_368, %c0_369, %c0_370] : memref<9x128x128xbf16, #tpu.memory_space<vmem>>, vector<1x128x128xbf16>
    %385 = vector.shape_cast %384 : vector<1x128x128xbf16> to vector<128x128xbf16>
    %cst_371 = arith.constant dense<0.000000e+00> : vector<4x128xf32>
    %386 = tpu.matmul %383, %385, %cst_371 {dimension_numbers = #tpu.dot_dimension_numbers<[1], [0], [0], [1], [0, 0, 1, 1], [], []>} : vector<4x128xbf16>, vector<128x128xbf16>, vector<4x128xf32> -> vector<4x128xf32>
    %387 = arith.addf %379, %386 : vector<4x128xf32>
    %c7_372 = arith.constant 7 : index
    %c0_373 = arith.constant 0 : index
    %c0_374 = arith.constant 0 : index
    %388 = vector.load %arg7[%c7_372, %c0_373, %c0_374] : memref<9x4x4xbf16, #tpu.memory_space<vmem>>, vector<1x4x4xbf16>
    %389 = vector.shape_cast %388 : vector<1x4x4xbf16> to vector<4x4xbf16>
    %cst_375 = arith.constant dense<0.000000e+00> : vector<4x128xf32>
    %390 = tpu.matmul %389, %332, %cst_375 {dimension_numbers = #tpu.dot_dimension_numbers<[1], [0], [0], [1], [0, 0, 1, 1], [], []>} : vector<4x4xbf16>, vector<4x128xbf16>, vector<4x128xf32> -> vector<4x128xf32>
    %391 = arith.truncf %390 : vector<4x128xf32> to vector<4x128xbf16>
    %c7_376 = arith.constant 7 : index
    %c0_377 = arith.constant 0 : index
    %c0_378 = arith.constant 0 : index
    %392 = vector.load %arg19[%c7_376, %c0_377, %c0_378] : memref<9x128x128xbf16, #tpu.memory_space<vmem>>, vector<1x128x128xbf16>
    %393 = vector.shape_cast %392 : vector<1x128x128xbf16> to vector<128x128xbf16>
    %cst_379 = arith.constant dense<0.000000e+00> : vector<4x128xf32>
    %394 = tpu.matmul %391, %393, %cst_379 {dimension_numbers = #tpu.dot_dimension_numbers<[1], [0], [0], [1], [0, 0, 1, 1], [], []>} : vector<4x128xbf16>, vector<128x128xbf16>, vector<4x128xf32> -> vector<4x128xf32>
    %395 = arith.addf %387, %394 : vector<4x128xf32>
    %c8_380 = arith.constant 8 : index
    %c0_381 = arith.constant 0 : index
    %c0_382 = arith.constant 0 : index
    %396 = vector.load %arg7[%c8_380, %c0_381, %c0_382] : memref<9x4x4xbf16, #tpu.memory_space<vmem>>, vector<1x4x4xbf16>
    %397 = vector.shape_cast %396 : vector<1x4x4xbf16> to vector<4x4xbf16>
    %cst_383 = arith.constant dense<0.000000e+00> : vector<4x128xf32>
    %398 = tpu.matmul %397, %332, %cst_383 {dimension_numbers = #tpu.dot_dimension_numbers<[1], [0], [0], [1], [0, 0, 1, 1], [], []>} : vector<4x4xbf16>, vector<4x128xbf16>, vector<4x128xf32> -> vector<4x128xf32>
    %399 = arith.truncf %398 : vector<4x128xf32> to vector<4x128xbf16>
    %c8_384 = arith.constant 8 : index
    %c0_385 = arith.constant 0 : index
    %c0_386 = arith.constant 0 : index
    %400 = vector.load %arg19[%c8_384, %c0_385, %c0_386] : memref<9x128x128xbf16, #tpu.memory_space<vmem>>, vector<1x128x128xbf16>
    %401 = vector.shape_cast %400 : vector<1x128x128xbf16> to vector<128x128xbf16>
    %cst_387 = arith.constant dense<0.000000e+00> : vector<4x128xf32>
    %402 = tpu.matmul %399, %401, %cst_387 {dimension_numbers = #tpu.dot_dimension_numbers<[1], [0], [0], [1], [0, 0, 1, 1], [], []>} : vector<4x128xbf16>, vector<128x128xbf16>, vector<4x128xf32> -> vector<4x128xf32>
    %403 = arith.addf %395, %402 : vector<4x128xf32>
    %cst_388 = arith.constant 0.000000e+00 : f32
    %404 = vector.broadcast %cst_388 : f32 to vector<4x128xf32>
    %405 = arith.maximumf %403, %404 : vector<4x128xf32>
    %406 = arith.truncf %405 : vector<4x128xf32> to vector<4x128xbf16>
    %c0_389 = arith.constant 0 : index
    %c0_390 = arith.constant 0 : index
    %c0_391 = arith.constant 0 : index
    %407 = vector.load %arg7[%c0_389, %c0_390, %c0_391] : memref<9x4x4xbf16, #tpu.memory_space<vmem>>, vector<1x4x4xbf16>
    %408 = vector.shape_cast %407 : vector<1x4x4xbf16> to vector<4x4xbf16>
    %cst_392 = arith.constant dense<0.000000e+00> : vector<4x128xf32>
    %409 = tpu.matmul %408, %406, %cst_392 {dimension_numbers = #tpu.dot_dimension_numbers<[1], [0], [0], [1], [0, 0, 1, 1], [], []>} : vector<4x4xbf16>, vector<4x128xbf16>, vector<4x128xf32> -> vector<4x128xf32>
    %410 = arith.truncf %409 : vector<4x128xf32> to vector<4x128xbf16>
    %c0_393 = arith.constant 0 : index
    %c0_394 = arith.constant 0 : index
    %c0_395 = arith.constant 0 : index
    %411 = vector.load %arg20[%c0_393, %c0_394, %c0_395] : memref<9x128x128xbf16, #tpu.memory_space<vmem>>, vector<1x128x128xbf16>
    %412 = vector.shape_cast %411 : vector<1x128x128xbf16> to vector<128x128xbf16>
    %cst_396 = arith.constant dense<0.000000e+00> : vector<4x128xf32>
    %413 = tpu.matmul %410, %412, %cst_396 {dimension_numbers = #tpu.dot_dimension_numbers<[1], [0], [0], [1], [0, 0, 1, 1], [], []>} : vector<4x128xbf16>, vector<128x128xbf16>, vector<4x128xf32> -> vector<4x128xf32>
    %c1_397 = arith.constant 1 : index
    %c0_398 = arith.constant 0 : index
    %c0_399 = arith.constant 0 : index
    %414 = vector.load %arg7[%c1_397, %c0_398, %c0_399] : memref<9x4x4xbf16, #tpu.memory_space<vmem>>, vector<1x4x4xbf16>
    %415 = vector.shape_cast %414 : vector<1x4x4xbf16> to vector<4x4xbf16>
    %cst_400 = arith.constant dense<0.000000e+00> : vector<4x128xf32>
    %416 = tpu.matmul %415, %406, %cst_400 {dimension_numbers = #tpu.dot_dimension_numbers<[1], [0], [0], [1], [0, 0, 1, 1], [], []>} : vector<4x4xbf16>, vector<4x128xbf16>, vector<4x128xf32> -> vector<4x128xf32>
    %417 = arith.truncf %416 : vector<4x128xf32> to vector<4x128xbf16>
    %c1_401 = arith.constant 1 : index
    %c0_402 = arith.constant 0 : index
    %c0_403 = arith.constant 0 : index
    %418 = vector.load %arg20[%c1_401, %c0_402, %c0_403] : memref<9x128x128xbf16, #tpu.memory_space<vmem>>, vector<1x128x128xbf16>
    %419 = vector.shape_cast %418 : vector<1x128x128xbf16> to vector<128x128xbf16>
    %cst_404 = arith.constant dense<0.000000e+00> : vector<4x128xf32>
    %420 = tpu.matmul %417, %419, %cst_404 {dimension_numbers = #tpu.dot_dimension_numbers<[1], [0], [0], [1], [0, 0, 1, 1], [], []>} : vector<4x128xbf16>, vector<128x128xbf16>, vector<4x128xf32> -> vector<4x128xf32>
    %421 = arith.addf %413, %420 : vector<4x128xf32>
    %c2_405 = arith.constant 2 : index
    %c0_406 = arith.constant 0 : index
    %c0_407 = arith.constant 0 : index
    %422 = vector.load %arg7[%c2_405, %c0_406, %c0_407] : memref<9x4x4xbf16, #tpu.memory_space<vmem>>, vector<1x4x4xbf16>
    %423 = vector.shape_cast %422 : vector<1x4x4xbf16> to vector<4x4xbf16>
    %cst_408 = arith.constant dense<0.000000e+00> : vector<4x128xf32>
    %424 = tpu.matmul %423, %406, %cst_408 {dimension_numbers = #tpu.dot_dimension_numbers<[1], [0], [0], [1], [0, 0, 1, 1], [], []>} : vector<4x4xbf16>, vector<4x128xbf16>, vector<4x128xf32> -> vector<4x128xf32>
    %425 = arith.truncf %424 : vector<4x128xf32> to vector<4x128xbf16>
    %c2_409 = arith.constant 2 : index
    %c0_410 = arith.constant 0 : index
    %c0_411 = arith.constant 0 : index
    %426 = vector.load %arg20[%c2_409, %c0_410, %c0_411] : memref<9x128x128xbf16, #tpu.memory_space<vmem>>, vector<1x128x128xbf16>
    %427 = vector.shape_cast %426 : vector<1x128x128xbf16> to vector<128x128xbf16>
    %cst_412 = arith.constant dense<0.000000e+00> : vector<4x128xf32>
    %428 = tpu.matmul %425, %427, %cst_412 {dimension_numbers = #tpu.dot_dimension_numbers<[1], [0], [0], [1], [0, 0, 1, 1], [], []>} : vector<4x128xbf16>, vector<128x128xbf16>, vector<4x128xf32> -> vector<4x128xf32>
    %429 = arith.addf %421, %428 : vector<4x128xf32>
    %c3_413 = arith.constant 3 : index
    %c0_414 = arith.constant 0 : index
    %c0_415 = arith.constant 0 : index
    %430 = vector.load %arg7[%c3_413, %c0_414, %c0_415] : memref<9x4x4xbf16, #tpu.memory_space<vmem>>, vector<1x4x4xbf16>
    %431 = vector.shape_cast %430 : vector<1x4x4xbf16> to vector<4x4xbf16>
    %cst_416 = arith.constant dense<0.000000e+00> : vector<4x128xf32>
    %432 = tpu.matmul %431, %406, %cst_416 {dimension_numbers = #tpu.dot_dimension_numbers<[1], [0], [0], [1], [0, 0, 1, 1], [], []>} : vector<4x4xbf16>, vector<4x128xbf16>, vector<4x128xf32> -> vector<4x128xf32>
    %433 = arith.truncf %432 : vector<4x128xf32> to vector<4x128xbf16>
    %c3_417 = arith.constant 3 : index
    %c0_418 = arith.constant 0 : index
    %c0_419 = arith.constant 0 : index
    %434 = vector.load %arg20[%c3_417, %c0_418, %c0_419] : memref<9x128x128xbf16, #tpu.memory_space<vmem>>, vector<1x128x128xbf16>
    %435 = vector.shape_cast %434 : vector<1x128x128xbf16> to vector<128x128xbf16>
    %cst_420 = arith.constant dense<0.000000e+00> : vector<4x128xf32>
    %436 = tpu.matmul %433, %435, %cst_420 {dimension_numbers = #tpu.dot_dimension_numbers<[1], [0], [0], [1], [0, 0, 1, 1], [], []>} : vector<4x128xbf16>, vector<128x128xbf16>, vector<4x128xf32> -> vector<4x128xf32>
    %437 = arith.addf %429, %436 : vector<4x128xf32>
    %c4_421 = arith.constant 4 : index
    %c0_422 = arith.constant 0 : index
    %c0_423 = arith.constant 0 : index
    %438 = vector.load %arg7[%c4_421, %c0_422, %c0_423] : memref<9x4x4xbf16, #tpu.memory_space<vmem>>, vector<1x4x4xbf16>
    %439 = vector.shape_cast %438 : vector<1x4x4xbf16> to vector<4x4xbf16>
    %cst_424 = arith.constant dense<0.000000e+00> : vector<4x128xf32>
    %440 = tpu.matmul %439, %406, %cst_424 {dimension_numbers = #tpu.dot_dimension_numbers<[1], [0], [0], [1], [0, 0, 1, 1], [], []>} : vector<4x4xbf16>, vector<4x128xbf16>, vector<4x128xf32> -> vector<4x128xf32>
    %441 = arith.truncf %440 : vector<4x128xf32> to vector<4x128xbf16>
    %c4_425 = arith.constant 4 : index
    %c0_426 = arith.constant 0 : index
    %c0_427 = arith.constant 0 : index
    %442 = vector.load %arg20[%c4_425, %c0_426, %c0_427] : memref<9x128x128xbf16, #tpu.memory_space<vmem>>, vector<1x128x128xbf16>
    %443 = vector.shape_cast %442 : vector<1x128x128xbf16> to vector<128x128xbf16>
    %cst_428 = arith.constant dense<0.000000e+00> : vector<4x128xf32>
    %444 = tpu.matmul %441, %443, %cst_428 {dimension_numbers = #tpu.dot_dimension_numbers<[1], [0], [0], [1], [0, 0, 1, 1], [], []>} : vector<4x128xbf16>, vector<128x128xbf16>, vector<4x128xf32> -> vector<4x128xf32>
    %445 = arith.addf %437, %444 : vector<4x128xf32>
    %c5_429 = arith.constant 5 : index
    %c0_430 = arith.constant 0 : index
    %c0_431 = arith.constant 0 : index
    %446 = vector.load %arg7[%c5_429, %c0_430, %c0_431] : memref<9x4x4xbf16, #tpu.memory_space<vmem>>, vector<1x4x4xbf16>
    %447 = vector.shape_cast %446 : vector<1x4x4xbf16> to vector<4x4xbf16>
    %cst_432 = arith.constant dense<0.000000e+00> : vector<4x128xf32>
    %448 = tpu.matmul %447, %406, %cst_432 {dimension_numbers = #tpu.dot_dimension_numbers<[1], [0], [0], [1], [0, 0, 1, 1], [], []>} : vector<4x4xbf16>, vector<4x128xbf16>, vector<4x128xf32> -> vector<4x128xf32>
    %449 = arith.truncf %448 : vector<4x128xf32> to vector<4x128xbf16>
    %c5_433 = arith.constant 5 : index
    %c0_434 = arith.constant 0 : index
    %c0_435 = arith.constant 0 : index
    %450 = vector.load %arg20[%c5_433, %c0_434, %c0_435] : memref<9x128x128xbf16, #tpu.memory_space<vmem>>, vector<1x128x128xbf16>
    %451 = vector.shape_cast %450 : vector<1x128x128xbf16> to vector<128x128xbf16>
    %cst_436 = arith.constant dense<0.000000e+00> : vector<4x128xf32>
    %452 = tpu.matmul %449, %451, %cst_436 {dimension_numbers = #tpu.dot_dimension_numbers<[1], [0], [0], [1], [0, 0, 1, 1], [], []>} : vector<4x128xbf16>, vector<128x128xbf16>, vector<4x128xf32> -> vector<4x128xf32>
    %453 = arith.addf %445, %452 : vector<4x128xf32>
    %c6_437 = arith.constant 6 : index
    %c0_438 = arith.constant 0 : index
    %c0_439 = arith.constant 0 : index
    %454 = vector.load %arg7[%c6_437, %c0_438, %c0_439] : memref<9x4x4xbf16, #tpu.memory_space<vmem>>, vector<1x4x4xbf16>
    %455 = vector.shape_cast %454 : vector<1x4x4xbf16> to vector<4x4xbf16>
    %cst_440 = arith.constant dense<0.000000e+00> : vector<4x128xf32>
    %456 = tpu.matmul %455, %406, %cst_440 {dimension_numbers = #tpu.dot_dimension_numbers<[1], [0], [0], [1], [0, 0, 1, 1], [], []>} : vector<4x4xbf16>, vector<4x128xbf16>, vector<4x128xf32> -> vector<4x128xf32>
    %457 = arith.truncf %456 : vector<4x128xf32> to vector<4x128xbf16>
    %c6_441 = arith.constant 6 : index
    %c0_442 = arith.constant 0 : index
    %c0_443 = arith.constant 0 : index
    %458 = vector.load %arg20[%c6_441, %c0_442, %c0_443] : memref<9x128x128xbf16, #tpu.memory_space<vmem>>, vector<1x128x128xbf16>
    %459 = vector.shape_cast %458 : vector<1x128x128xbf16> to vector<128x128xbf16>
    %cst_444 = arith.constant dense<0.000000e+00> : vector<4x128xf32>
    %460 = tpu.matmul %457, %459, %cst_444 {dimension_numbers = #tpu.dot_dimension_numbers<[1], [0], [0], [1], [0, 0, 1, 1], [], []>} : vector<4x128xbf16>, vector<128x128xbf16>, vector<4x128xf32> -> vector<4x128xf32>
    %461 = arith.addf %453, %460 : vector<4x128xf32>
    %c7_445 = arith.constant 7 : index
    %c0_446 = arith.constant 0 : index
    %c0_447 = arith.constant 0 : index
    %462 = vector.load %arg7[%c7_445, %c0_446, %c0_447] : memref<9x4x4xbf16, #tpu.memory_space<vmem>>, vector<1x4x4xbf16>
    %463 = vector.shape_cast %462 : vector<1x4x4xbf16> to vector<4x4xbf16>
    %cst_448 = arith.constant dense<0.000000e+00> : vector<4x128xf32>
    %464 = tpu.matmul %463, %406, %cst_448 {dimension_numbers = #tpu.dot_dimension_numbers<[1], [0], [0], [1], [0, 0, 1, 1], [], []>} : vector<4x4xbf16>, vector<4x128xbf16>, vector<4x128xf32> -> vector<4x128xf32>
    %465 = arith.truncf %464 : vector<4x128xf32> to vector<4x128xbf16>
    %c7_449 = arith.constant 7 : index
    %c0_450 = arith.constant 0 : index
    %c0_451 = arith.constant 0 : index
    %466 = vector.load %arg20[%c7_449, %c0_450, %c0_451] : memref<9x128x128xbf16, #tpu.memory_space<vmem>>, vector<1x128x128xbf16>
    %467 = vector.shape_cast %466 : vector<1x128x128xbf16> to vector<128x128xbf16>
    %cst_452 = arith.constant dense<0.000000e+00> : vector<4x128xf32>
    %468 = tpu.matmul %465, %467, %cst_452 {dimension_numbers = #tpu.dot_dimension_numbers<[1], [0], [0], [1], [0, 0, 1, 1], [], []>} : vector<4x128xbf16>, vector<128x128xbf16>, vector<4x128xf32> -> vector<4x128xf32>
    %469 = arith.addf %461, %468 : vector<4x128xf32>
    %c8_453 = arith.constant 8 : index
    %c0_454 = arith.constant 0 : index
    %c0_455 = arith.constant 0 : index
    %470 = vector.load %arg7[%c8_453, %c0_454, %c0_455] : memref<9x4x4xbf16, #tpu.memory_space<vmem>>, vector<1x4x4xbf16>
    %471 = vector.shape_cast %470 : vector<1x4x4xbf16> to vector<4x4xbf16>
    %cst_456 = arith.constant dense<0.000000e+00> : vector<4x128xf32>
    %472 = tpu.matmul %471, %406, %cst_456 {dimension_numbers = #tpu.dot_dimension_numbers<[1], [0], [0], [1], [0, 0, 1, 1], [], []>} : vector<4x4xbf16>, vector<4x128xbf16>, vector<4x128xf32> -> vector<4x128xf32>
    %473 = arith.truncf %472 : vector<4x128xf32> to vector<4x128xbf16>
    %c8_457 = arith.constant 8 : index
    %c0_458 = arith.constant 0 : index
    %c0_459 = arith.constant 0 : index
    %474 = vector.load %arg20[%c8_457, %c0_458, %c0_459] : memref<9x128x128xbf16, #tpu.memory_space<vmem>>, vector<1x128x128xbf16>
    %475 = vector.shape_cast %474 : vector<1x128x128xbf16> to vector<128x128xbf16>
    %cst_460 = arith.constant dense<0.000000e+00> : vector<4x128xf32>
    %476 = tpu.matmul %473, %475, %cst_460 {dimension_numbers = #tpu.dot_dimension_numbers<[1], [0], [0], [1], [0, 0, 1, 1], [], []>} : vector<4x128xbf16>, vector<128x128xbf16>, vector<4x128xf32> -> vector<4x128xf32>
    %477 = arith.addf %469, %476 : vector<4x128xf32>
    %478 = arith.addf %477, %331 : vector<4x128xf32>
    %cst_461 = arith.constant 0.000000e+00 : f32
    %479 = vector.broadcast %cst_461 : f32 to vector<4x128xf32>
    %480 = arith.maximumf %478, %479 : vector<4x128xf32>
    %c0_462 = arith.constant 0 : index
    %c0_463 = arith.constant 0 : index
    %c0_464 = arith.constant 0 : index
    %481 = vector.load %arg21[%c0_462, %c0_463, %c0_464] : memref<1x4x128xf32, #tpu.memory_space<vmem>>, vector<1x4x128xf32>
    %482 = vector.shape_cast %481 : vector<1x4x128xf32> to vector<4x128xf32>
    %483 = vector.shape_cast %480 : vector<4x128xf32> to vector<1x4x128xf32>
    tpu.vector_store %arg21[%c0_462, %c0_463, %c0_464], %483 {strides = array<i32>} : memref<1x4x128xf32, #tpu.memory_space<vmem>>, vector<1x4x128xf32>,
    return
  }
  func.func @transform_0(%arg0: i32) -> (i32, i32, i32) {
    %c0_i32 = arith.constant 0 : i32
    %c0_i32_0 = arith.constant 0 : i32
    %c0_i32_1 = arith.constant 0 : i32
    return %arg0, %c0_i32, %c0_i32_0 : i32, i32, i32
  }
  func.func @transform_1(%arg0: i32) -> (i32, i32, i32) {
    %c0_i32 = arith.constant 0 : i32
    %c0_i32_0 = arith.constant 0 : i32
    %c0_i32_1 = arith.constant 0 : i32
    return %arg0, %c0_i32, %c0_i32_0 : i32, i32, i32
  }
  func.func @transform_2(%arg0: i32) -> (i32, i32, i32) {
    %c0_i32 = arith.constant 0 : i32
    %c0_i32_0 = arith.constant 0 : i32
    %c0_i32_1 = arith.constant 0 : i32
    return %arg0, %c0_i32, %c0_i32_0 : i32, i32, i32
  }
  func.func @transform_3(%arg0: i32) -> (i32, i32, i32) {
    %c0_i32 = arith.constant 0 : i32
    %c0_i32_0 = arith.constant 0 : i32
    %c0_i32_1 = arith.constant 0 : i32
    %c0_i32_2 = arith.constant 0 : i32
    return %c0_i32, %c0_i32_0, %c0_i32_1 : i32, i32, i32
  }
  func.func @transform_4(%arg0: i32) -> (i32, i32, i32) {
    %c0_i32 = arith.constant 0 : i32
    %c0_i32_0 = arith.constant 0 : i32
    %c0_i32_1 = arith.constant 0 : i32
    %c0_i32_2 = arith.constant 0 : i32
    return %c0_i32, %c0_i32_0, %c0_i32_1 : i32, i32, i32
  }
  func.func @transform_5(%arg0: i32) -> (i32, i32, i32) {
    %c0_i32 = arith.constant 0 : i32
    %c0_i32_0 = arith.constant 0 : i32
    %c0_i32_1 = arith.constant 0 : i32
    %c0_i32_2 = arith.constant 0 : i32
    return %c0_i32, %c0_i32_0, %c0_i32_1 : i32, i32, i32
  }
  func.func @transform_6(%arg0: i32) -> (i32, i32, i32) {
    %c0_i32 = arith.constant 0 : i32
    %c0_i32_0 = arith.constant 0 : i32
    %c0_i32_1 = arith.constant 0 : i32
    %c0_i32_2 = arith.constant 0 : i32
    return %c0_i32, %c0_i32_0, %c0_i32_1 : i32, i32, i32
  }
  func.func @transform_7(%arg0: i32) -> (i32, i32, i32) {
    %c0_i32 = arith.constant 0 : i32
    %c0_i32_0 = arith.constant 0 : i32
    %c0_i32_1 = arith.constant 0 : i32
    %c0_i32_2 = arith.constant 0 : i32
    return %c0_i32, %c0_i32_0, %c0_i32_1 : i32, i32, i32
  }
  func.func @transform_8(%arg0: i32) -> (i32, i32) {
    %c0_i32 = arith.constant 0 : i32
    %c0_i32_0 = arith.constant 0 : i32
    %c0_i32_1 = arith.constant 0 : i32
    return %c0_i32, %c0_i32_0 : i32, i32
  }
  func.func @transform_9(%arg0: i32) -> (i32, i32) {
    %c0_i32 = arith.constant 0 : i32
    %c0_i32_0 = arith.constant 0 : i32
    %c0_i32_1 = arith.constant 0 : i32
    return %c0_i32, %c0_i32_0 : i32, i32
  }
  func.func @transform_10(%arg0: i32) -> (i32, i32, i32) {
    %c0_i32 = arith.constant 0 : i32
    %c0_i32_0 = arith.constant 0 : i32
    %c0_i32_1 = arith.constant 0 : i32
    %c0_i32_2 = arith.constant 0 : i32
    return %c0_i32, %c0_i32_0, %c0_i32_1 : i32, i32, i32
  }
  func.func @transform_11(%arg0: i32) -> (i32, i32) {
    %c0_i32 = arith.constant 0 : i32
    %c0_i32_0 = arith.constant 0 : i32
    %c0_i32_1 = arith.constant 0 : i32
    return %c0_i32, %c0_i32_0 : i32, i32
  }
  func.func @transform_12(%arg0: i32) -> (i32, i32) {
    %c0_i32 = arith.constant 0 : i32
    %c0_i32_0 = arith.constant 0 : i32
    %c0_i32_1 = arith.constant 0 : i32
    return %c0_i32, %c0_i32_0 : i32, i32
  }
  func.func @transform_13(%arg0: i32) -> (i32, i32) {
    %c0_i32 = arith.constant 0 : i32
    %c0_i32_0 = arith.constant 0 : i32
    %c0_i32_1 = arith.constant 0 : i32
    return %c0_i32, %c0_i32_0 : i32, i32
  }
  func.func @transform_14(%arg0: i32) -> (i32, i32) {
    %c0_i32 = arith.constant 0 : i32
    %c0_i32_0 = arith.constant 0 : i32
    %c0_i32_1 = arith.constant 0 : i32
    return %c0_i32, %c0_i32_0 : i32, i32
  }
  func.func @transform_15(%arg0: i32) -> (i32, i32, i32) {
    %c0_i32 = arith.constant 0 : i32
    %c0_i32_0 = arith.constant 0 : i32
    %c0_i32_1 = arith.constant 0 : i32
    %c0_i32_2 = arith.constant 0 : i32
    return %c0_i32, %c0_i32_0, %c0_i32_1 : i32, i32, i32
  }
  func.func @transform_16(%arg0: i32) -> (i32, i32, i32) {
    %c0_i32 = arith.constant 0 : i32
    %c0_i32_0 = arith.constant 0 : i32
    %c0_i32_1 = arith.constant 0 : i32
    %c0_i32_2 = arith.constant 0 : i32
    return %c0_i32, %c0_i32_0, %c0_i32_1 : i32, i32, i32
  }
  func.func @transform_17(%arg0: i32) -> (i32, i32) {
    %c0_i32 = arith.constant 0 : i32
    %c0_i32_0 = arith.constant 0 : i32
    %c0_i32_1 = arith.constant 0 : i32
    return %c0_i32, %c0_i32_0 : i32, i32
  }
  func.func @transform_18(%arg0: i32) -> (i32, i32, i32) {
    %c0_i32 = arith.constant 0 : i32
    %c0_i32_0 = arith.constant 0 : i32
    %c0_i32_1 = arith.constant 0 : i32
    %c0_i32_2 = arith.constant 0 : i32
    return %c0_i32, %c0_i32_0, %c0_i32_1 : i32, i32, i32
  }
  func.func @transform_19(%arg0: i32) -> (i32, i32, i32) {
    %c0_i32 = arith.constant 0 : i32
    %c0_i32_0 = arith.constant 0 : i32
    %c0_i32_1 = arith.constant 0 : i32
    %c0_i32_2 = arith.constant 0 : i32
    return %c0_i32, %c0_i32_0, %c0_i32_1 : i32, i32, i32
  }
  func.func @transform_20(%arg0: i32) -> (i32, i32, i32) {
    %c0_i32 = arith.constant 0 : i32
    %c0_i32_0 = arith.constant 0 : i32
    %c0_i32_1 = arith.constant 0 : i32
    return %arg0, %c0_i32, %c0_i32_0 : i32, i32, i32
  }
}

</mosaic_0001>

<llo_original>
// kernel: mff_oce_forward.1
$region0: #{mff_oce_forward.1}
  #allocation0 [shape = 'u32[]', space=smem, size = 0x4, offset = 0x4, fixed_abs, tag = 'smem constant byte address 0x4 - core index']
  #allocation1 [shape = 'u32[144,128]{1,0:T(1,128)}', space=vmem, size = 0x12000, scoped, tag = 'internal scratch']
  %s0 = inlined_call_operand.vmem [shape: bf16[2,256,16], index: 0, kind: input, shape index: {}]
  %s1 = inlined_call_operand.vmem [shape: bf16[2,64,32], index: 1, kind: input, shape index: {}]
  %s2 = inlined_call_operand.vmem [shape: bf16[2,16,64], index: 2, kind: input, shape index: {}]
  %s3 = inlined_call_operand.vmem [shape: bf16[9,64,256], index: 3, kind: input, shape index: {}]
  %s4 = inlined_call_operand.hbm [shape: bf16[9,16,64], index: 4, kind: input, shape index: {}]
  %s5 = inlined_call_operand.hbm [shape: bf16[9,4,16], index: 5, kind: input, shape index: {}]
  %s6 = inlined_call_operand.vmem [shape: bf16[9,4,4], index: 6, kind: input, shape index: {}]
  %s7 = inlined_call_operand.hbm [shape: bf16[9,16,32], index: 7, kind: input, shape index: {}]
  %s8 = inlined_call_operand.hbm [shape: bf16[32,32], index: 8, kind: input, shape index: {}]
  %s9 = inlined_call_operand.vmem [shape: f32[1,32], index: 9, kind: input, shape index: {}]
  %s10 = inlined_call_operand.hbm [shape: bf16[9,32,64], index: 10, kind: input, shape index: {}]
  %s11 = inlined_call_operand.hbm [shape: bf16[64,64], index: 11, kind: input, shape index: {}]
  %s12 = inlined_call_operand.vmem [shape: f32[1,64], index: 12, kind: input, shape index: {}]
  %s13 = inlined_call_operand.hbm [shape: bf16[64,64], index: 13, kind: input, shape index: {}]
  %s14 = inlined_call_operand.hbm [shape: f32[1,64], index: 14, kind: input, shape index: {}]
  %s15 = inlined_call_operand.vmem [shape: bf16[9,64,128], index: 15, kind: input, shape index: {}]
  %s16 = inlined_call_operand.vmem [shape: bf16[9,128,128], index: 16, kind: input, shape index: {}]
  %s17 = inlined_call_operand.hbm [shape: bf16[64,128], index: 17, kind: input, shape index: {}]
  %s18 = inlined_call_operand.hbm [shape: bf16[9,128,128], index: 18, kind: input, shape index: {}]
  %s19 = inlined_call_operand.hbm [shape: bf16[9,128,128], index: 19, kind: input, shape index: {}]
  %s20 = inlined_call_operand.hbm [shape: f32[2,4,128], index: 20, kind: output, shape index: {}]
  %s21 = sld [smem:[#allocation0]]
  $region157: #{mff_oce_forward.1} parent=0
    _
  %s23 = ssub.s32 1, %s21
  %s24 = scalar_select 0, %s23, %s21
  $region1: #{mff_oce_forward.1} parent=0
    #allocation2 [shape = 'u8[36864]{0}', space=vmem, size = 0x9000, scoped, tag = 'input window, operand 4, single buffered']
    #allocation3 [shape = 's32[2]{0}', space=sflag, size = 0x8, scoped, tag = 'scoped memory for mff_oce_forward.1']
    #allocation4 [shape = 's32[2]{0}', space=sflag, size = 0x8, scoped, tag = 'scoped memory for mff_oce_forward.1']
    #allocation5 [shape = 'u8[9216]{0}', space=vmem, size = 0x2400, scoped, tag = 'input window, operand 5, single buffered']
    #allocation6 [shape = 's32[1]{0}', space=sflag, size = 0x4, scoped, tag = 'scoped memory for mff_oce_forward.1']
    #allocation7 [shape = 'u8[36864]{0}', space=vmem, size = 0x9000, scoped, tag = 'input window, operand 7, single buffered']
    #allocation8 [shape = 'u8[8192]{0}', space=vmem, size = 0x2000, scoped, tag = 'input window, operand 8, single buffered']
    #allocation9 [shape = 's32[1]{0}', space=sflag, size = 0x4, scoped, tag = 'scoped memory for mff_oce_forward.1']
    #allocation10 [shape = 'u8[73728]{0}', space=vmem, size = 0x12000, scoped, tag = 'input window, operand 10, single buffered']
    #allocation11 [shape = 'u8[16384]{0}', space=vmem, size = 0x4000, scoped, tag = 'input window, operand 11, single buffered']
    #allocation12 [shape = 's32[1]{0}', space=sflag, size = 0x4, scoped, tag = 'scoped memory for mff_oce_forward.1']
    #allocation13 [shape = 'u8[16384]{0}', space=vmem, size = 0x4000, scoped, tag = 'input window, operand 13, single buffered']
    #allocation14 [shape = 'u8[512]{0}', space=vmem, size = 0x400, scoped, tag = 'input window, operand 14, single buffered']
    #allocation15 [shape = 's32[1]{0}', space=sflag, size = 0x4, scoped, tag = 'scoped memory for mff_oce_forward.1']
    #allocation16 [shape = 'u8[16384]{0}', space=vmem, size = 0x4000, scoped, tag = 'input window, operand 17, single buffered']
    #allocation17 [shape = 'u8[294912]{0}', space=vmem, size = 0x48000, scoped, tag = 'input window, operand 18, single buffered']
    #allocation18 [shape = 's32[1]{0}', space=sflag, size = 0x4, scoped, tag = 'scoped memory for mff_oce_forward.1']
    #allocation19 [shape = 'u8[294912]{0}', space=vmem, size = 0x48000, scoped, tag = 'input window, operand 19, single buffered']
    #allocation20 [shape = 'u8[4096]{0}', space=vmem, size = 0x1000, scoped, tag = 'output window, operand 0']
    %25 = vsyncpa [#allocation3], 0
    %26 = vsyncpa [#allocation6], 0
    %27 = vsyncpa [#allocation9], 0
    %28 = vsyncpa [#allocation12], 0
    %29 = vsyncpa [#allocation15], 0
    %30 = vsyncpa [#allocation18], 0
    %31 = vsyncpa [#allocation4], 0
    %s32 = scalar_lea.sflag [#allocation4], 1
    %33 = vsyncpa %s32, 0
    loop: start=0, step=1, limit=4
    $region2: #{mff_oce_forward.1} parent=1 // loop_pre_header
      _
    $region3: #{mff_oce_forward.1} parent=1 // loop_header
      %s35 = sphi 0, %s39
      %p36 = scmp.ge.s32.totalorder %s35, 4
      %s45 = sphi 0, %s47
      %s48 = sphi 0, %s45
      %s49 = sphi 0, %s48
      %s65 = sphi 0, %s49
      %s71 = sphi 0, %s73
      %s74 = sphi 0, %s71
      %s75 = sphi 0, %s74
      %s91 = sphi 0, %s75
      %s97 = sphi 0, %s99
      %s100 = sphi 0, %s97
      %s101 = sphi 0, %s100
      %s117 = sphi 0, %s101
      %s121 = sphi 0, %s121
      %s123 = sphi 0, %s121
      %s124 = sphi 0, %s123
      %s138 = sphi 0, %s124
      %s142 = sphi 0, %s142
      %s144 = sphi 0, %s142
      %s145 = sphi 0, %s144
      %s159 = sphi 0, %s145
      %s163 = sphi 0, %s163
      %s165 = sphi 0, %s163
      %s166 = sphi 0, %s165
      %s180 = sphi 0, %s166
      %s184 = sphi 0, %s184
      %s186 = sphi 0, %s184
      %s187 = sphi 0, %s186
      %s201 = sphi 0, %s187
      %s205 = sphi 0, %s205
      %s207 = sphi 0, %s205
      %s208 = sphi 0, %s207
      %s222 = sphi 0, %s208
      %s226 = sphi 0, %s226
      %s228 = sphi 0, %s226
      %s229 = sphi 0, %s228
      %s243 = sphi 0, %s229
      %s247 = sphi 0, %s247
      %s249 = sphi 0, %s247
      %s250 = sphi 0, %s249
      %s264 = sphi 0, %s250
      %s268 = sphi 0, %s268
      %s270 = sphi 0, %s268
      %s271 = sphi 0, %s270
      %s285 = sphi 0, %s271
      %s289 = sphi 0, %s289
      %s291 = sphi 0, %s289
      %s292 = sphi 0, %s291
      %s306 = sphi 0, %s292
      %s310 = sphi 0, %s310
      %s312 = sphi 0, %s310
      %s313 = sphi 0, %s312
      %s327 = sphi 0, %s313
      %s331 = sphi 0, %s331
      %s333 = sphi 0, %s331
      %s334 = sphi 0, %s333
      %s348 = sphi 0, %s334
      %s352 = sphi 0, %s352
      %s354 = sphi 0, %s352
      %s355 = sphi 0, %s354
      %s369 = sphi 0, %s355
      %s373 = sphi 0, %s373
      %s375 = sphi 0, %s373
      %s376 = sphi 0, %s375
      %s390 = sphi 0, %s376
      %s394 = sphi 0, %s394
      %s396 = sphi 0, %s394
      %s397 = sphi 0, %s396
      %s411 = sphi 0, %s397
      %s415 = sphi 0, %s415
      %s417 = sphi 0, %s415
      %s418 = sphi 0, %s417
      %s432 = sphi 0, %s418
      %s436 = sphi 0, %s436
      %s438 = sphi 0, %s436
      %s439 = sphi 0, %s438
      %s453 = sphi 0, %s439
      %s457 = sphi 0, %s457
      %s459 = sphi 0, %s457
      %s460 = sphi 0, %s459
      %s474 = sphi 0, %s460
      %s480 = sphi 0, %s482
      %s483 = sphi 0, %s480
      %s484 = sphi 0, %s483
      %s500 = sphi 0, %s484
    $region4: #{mff_oce_forward.1} parent=1 // loop_header_branch
      %38 = sbr.rel (%p36) target = $region8
    $region5: #{mff_oce_forward.1} parent=1 // loop_body
      %s40 = ssub.s32 %s35, 1
      %s41 = ssub.s32 %s35, 2
      %s42 = sadd.s32 %s35, 1
      %s43 = ssub.s32 %s35, %s42
      %p44 = scmp.eq.s32.totalorder %s43, 0
      %s46 = sadd.s32 %s45, 1
      %s47 = scalar_select %p44, %s45, %s46
      %p50 = pneg %p44
      %p51 = scmp.eq.s32.totalorder %s35, 1
      %p52 = por %p50, %p51
      %p53 = scmp.ne.s32.totalorder %s45, %s48
      %p54 = scmp.eq.s32.totalorder %s35, 0
      %p55 = por %p53, %p54
      %p56 = scmp.ne.s32.totalorder %s45, %s48
      %p57 = scmp.eq.s32.totalorder %s40, 1
      %p58 = por %p56, %p57
      %p59 = scmp.ne.s32.totalorder %s48, %s49
      %p60 = scmp.eq.s32.totalorder %s40, 0
      %p61 = por %p59, %p60
      %p62 = scmp.ne.s32.totalorder %s48, %s49
      %p63 = scmp.eq.s32.totalorder %s41, 1
      %p64 = por %p62, %p63
      %p66 = scmp.ne.s32.totalorder %s49, %s65
      %p67 = scmp.eq.s32.totalorder %s41, 0
      %p68 = por %p66, %p67
      %s69 = ssub.s32 %s35, %s42
      %p70 = scmp.eq.s32.totalorder %s69, 0
      %s72 = sadd.s32 %s71, 1
      %s73 = scalar_select %p70, %s71, %s72
      %p76 = pneg %p70
      %p77 = scmp.eq.s32.totalorder %s35, 1
      %p78 = por %p76, %p77
      %p79 = scmp.ne.s32.totalorder %s71, %s74
      %p80 = scmp.eq.s32.totalorder %s35, 0
      %p81 = por %p79, %p80
      %p82 = scmp.ne.s32.totalorder %s71, %s74
      %p83 = scmp.eq.s32.totalorder %s40, 1
      %p84 = por %p82, %p83
      %p85 = scmp.ne.s32.totalorder %s74, %s75
      %p86 = scmp.eq.s32.totalorder %s40, 0
      %p87 = por %p85, %p86
      %p88 = scmp.ne.s32.totalorder %s74, %s75
      %p89 = scmp.eq.s32.totalorder %s41, 1
      %p90 = por %p88, %p89
      %p92 = scmp.ne.s32.totalorder %s75, %s91
      %p93 = scmp.eq.s32.totalorder %s41, 0
      %p94 = por %p92, %p93
      %s95 = ssub.s32 %s35, %s42
      %p96 = scmp.eq.s32.totalorder %s95, 0
      %s98 = sadd.s32 %s97, 1
      %s99 = scalar_select %p96, %s97, %s98
      %p102 = pneg %p96
      %p103 = scmp.eq.s32.totalorder %s35, 1
      %p104 = por %p102, %p103
      %p105 = scmp.ne.s32.totalorder %s97, %s100
      %p106 = scmp.eq.s32.totalorder %s35, 0
      %p107 = por %p105, %p106
      %p108 = scmp.ne.s32.totalorder %s97, %s100
      %p109 = scmp.eq.s32.totalorder %s40, 1
      %p110 = por %p108, %p109
      %p111 = scmp.ne.s32.totalorder %s100, %s101
      %p112 = scmp.eq.s32.totalorder %s40, 0
      %p113 = por %p111, %p112
      %p114 = scmp.ne.s32.totalorder %s100, %s101
      %p115 = scmp.eq.s32.totalorder %s41, 1
      %p116 = por %p114, %p115
      %p118 = scmp.ne.s32.totalorder %s101, %s117
      %p119 = scmp.eq.s32.totalorder %s41, 0
      %p120 = por %p118, %p119
      %s122 = sadd.s32 %s121, 1
      %p125 = scmp.eq.s32.totalorder %s35, 1
      %p126 = scmp.ne.s32.totalorder %s121, %s123
      %p127 = scmp.eq.s32.totalorder %s35, 0
      %p128 = por %p126, %p127
      %p129 = scmp.ne.s32.totalorder %s121, %s123
      %p130 = scmp.eq.s32.totalorder %s40, 1
      %p131 = por %p129, %p130
      %p132 = scmp.ne.s32.totalorder %s123, %s124
      %p133 = scmp.eq.s32.totalorder %s40, 0
      %p134 = por %p132, %p133
      %p135 = scmp.ne.s32.totalorder %s123, %s124
      %p136 = scmp.eq.s32.totalorder %s41, 1
      %p137 = por %p135, %p136
      %p139 = scmp.ne.s32.totalorder %s124, %s138
      %p140 = scmp.eq.s32.totalorder %s41, 0
      %p141 = por %p139, %p140
      %s143 = sadd.s32 %s142, 1
      %p146 = scmp.eq.s32.totalorder %s35, 1
      %p147 = scmp.ne.s32.totalorder %s142, %s144
      %p148 = scmp.eq.s32.totalorder %s35, 0
      %p149 = por %p147, %p148
      %p150 = scmp.ne.s32.totalorder %s142, %s144
      %p151 = scmp.eq.s32.totalorder %s40, 1
      %p152 = por %p150, %p151
      %p153 = scmp.ne.s32.totalorder %s144, %s145
      %p154 = scmp.eq.s32.totalorder %s40, 0
      %p155 = por %p153, %p154
      %p156 = scmp.ne.s32.totalorder %s144, %s145
      %p157 = scmp.eq.s32.totalorder %s41, 1
      %p158 = por %p156, %p157
      %p160 = scmp.ne.s32.totalorder %s145, %s159
      %p161 = scmp.eq.s32.totalorder %s41, 0
      %p162 = por %p160, %p161
      %s164 = sadd.s32 %s163, 1
      %p167 = scmp.eq.s32.totalorder %s35, 1
      %p168 = scmp.ne.s32.totalorder %s163, %s165
      %p169 = scmp.eq.s32.totalorder %s35, 0
      %p170 = por %p168, %p169
      %p171 = scmp.ne.s32.totalorder %s163, %s165
      %p172 = scmp.eq.s32.totalorder %s40, 1
      %p173 = por %p171, %p172
      %p174 = scmp.ne.s32.totalorder %s165, %s166
      %p175 = scmp.eq.s32.totalorder %s40, 0
      %p176 = por %p174, %p175
      %p177 = scmp.ne.s32.totalorder %s165, %s166
      %p178 = scmp.eq.s32.totalorder %s41, 1
      %p179 = por %p177, %p178
      %p181 = scmp.ne.s32.totalorder %s166, %s180
      %p182 = scmp.eq.s32.totalorder %s41, 0
      %p183 = por %p181, %p182
      %s185 = sadd.s32 %s184, 1
      %p188 = scmp.eq.s32.totalorder %s35, 1
      %p189 = scmp.ne.s32.totalorder %s184, %s186
      %p190 = scmp.eq.s32.totalorder %s35, 0
      %p191 = por %p189, %p190
      %p192 = scmp.ne.s32.totalorder %s184, %s186
      %p193 = scmp.eq.s32.totalorder %s40, 1
      %p194 = por %p192, %p193
      %p195 = scmp.ne.s32.totalorder %s186, %s187
      %p196 = scmp.eq.s32.totalorder %s40, 0
      %p197 = por %p195, %p196
      %p198 = scmp.ne.s32.totalorder %s186, %s187
      %p199 = scmp.eq.s32.totalorder %s41, 1
      %p200 = por %p198, %p199
      %p202 = scmp.ne.s32.totalorder %s187, %s201
      %p203 = scmp.eq.s32.totalorder %s41, 0
      %p204 = por %p202, %p203
      %s206 = sadd.s32 %s205, 1
      %p209 = scmp.eq.s32.totalorder %s35, 1
      %p210 = scmp.ne.s32.totalorder %s205, %s207
      %p211 = scmp.eq.s32.totalorder %s35, 0
      %p212 = por %p210, %p211
      %p213 = scmp.ne.s32.totalorder %s205, %s207
      %p214 = scmp.eq.s32.totalorder %s40, 1
      %p215 = por %p213, %p214
      %p216 = scmp.ne.s32.totalorder %s207, %s208
      %p217 = scmp.eq.s32.totalorder %s40, 0
      %p218 = por %p216, %p217
      %p219 = scmp.ne.s32.totalorder %s207, %s208
      %p220 = scmp.eq.s32.totalorder %s41, 1
      %p221 = por %p219, %p220
      %p223 = scmp.ne.s32.totalorder %s208, %s222
      %p224 = scmp.eq.s32.totalorder %s41, 0
      %p225 = por %p223, %p224
      %s227 = sadd.s32 %s226, 1
      %p230 = scmp.eq.s32.totalorder %s35, 1
      %p231 = scmp.ne.s32.totalorder %s226, %s228
      %p232 = scmp.eq.s32.totalorder %s35, 0
      %p233 = por %p231, %p232
      %p234 = scmp.ne.s32.totalorder %s226, %s228
      %p235 = scmp.eq.s32.totalorder %s40, 1
      %p236 = por %p234, %p235
      %p237 = scmp.ne.s32.totalorder %s228, %s229
      %p238 = scmp.eq.s32.totalorder %s40, 0
      %p239 = por %p237, %p238
      %p240 = scmp.ne.s32.totalorder %s228, %s229
      %p241 = scmp.eq.s32.totalorder %s41, 1
      %p242 = por %p240, %p241
      %p244 = scmp.ne.s32.totalorder %s229, %s243
      %p245 = scmp.eq.s32.totalorder %s41, 0
      %p246 = por %p244, %p245
      %s248 = sadd.s32 %s247, 1
      %p251 = scmp.eq.s32.totalorder %s35, 1
      %p252 = scmp.ne.s32.totalorder %s247, %s249
      %p253 = scmp.eq.s32.totalorder %s35, 0
      %p254 = por %p252, %p253
      %p255 = scmp.ne.s32.totalorder %s247, %s249
      %p256 = scmp.eq.s32.totalorder %s40, 1
      %p257 = por %p255, %p256
      %p258 = scmp.ne.s32.totalorder %s249, %s250
      %p259 = scmp.eq.s32.totalorder %s40, 0
      %p260 = por %p258, %p259
      %p261 = scmp.ne.s32.totalorder %s249, %s250
      %p262 = scmp.eq.s32.totalorder %s41, 1
      %p263 = por %p261, %p262
      %p265 = scmp.ne.s32.totalorder %s250, %s264
      %p266 = scmp.eq.s32.totalorder %s41, 0
      %p267 = por %p265, %p266
      %s269 = sadd.s32 %s268, 1
      %p272 = scmp.eq.s32.totalorder %s35, 1
      %p273 = scmp.ne.s32.totalorder %s268, %s270
      %p274 = scmp.eq.s32.totalorder %s35, 0
      %p275 = por %p273, %p274
      %p276 = scmp.ne.s32.totalorder %s268, %s270
      %p277 = scmp.eq.s32.totalorder %s40, 1
      %p278 = por %p276, %p277
      %p279 = scmp.ne.s32.totalorder %s270, %s271
      %p280 = scmp.eq.s32.totalorder %s40, 0
      %p281 = por %p279, %p280
      %p282 = scmp.ne.s32.totalorder %s270, %s271
      %p283 = scmp.eq.s32.totalorder %s41, 1
      %p284 = por %p282, %p283
      %p286 = scmp.ne.s32.totalorder %s271, %s285
      %p287 = scmp.eq.s32.totalorder %s41, 0
      %p288 = por %p286, %p287
      %s290 = sadd.s32 %s289, 1
      %p293 = scmp.eq.s32.totalorder %s35, 1
      %p294 = scmp.ne.s32.totalorder %s289, %s291
      %p295 = scmp.eq.s32.totalorder %s35, 0
      %p296 = por %p294, %p295
      %p297 = scmp.ne.s32.totalorder %s289, %s291
      %p298 = scmp.eq.s32.totalorder %s40, 1
      %p299 = por %p297, %p298
      %p300 = scmp.ne.s32.totalorder %s291, %s292
      %p301 = scmp.eq.s32.totalorder %s40, 0
      %p302 = por %p300, %p301
      %p303 = scmp.ne.s32.totalorder %s291, %s292
      %p304 = scmp.eq.s32.totalorder %s41, 1
      %p305 = por %p303, %p304
      %p307 = scmp.ne.s32.totalorder %s292, %s306
      %p308 = scmp.eq.s32.totalorder %s41, 0
      %p309 = por %p307, %p308
      %s311 = sadd.s32 %s310, 1
      %p314 = scmp.eq.s32.totalorder %s35, 1
      %p315 = scmp.ne.s32.totalorder %s310, %s312
      %p316 = scmp.eq.s32.totalorder %s35, 0
      %p317 = por %p315, %p316
      %p318 = scmp.ne.s32.totalorder %s310, %s312
      %p319 = scmp.eq.s32.totalorder %s40, 1
      %p320 = por %p318, %p319
      %p321 = scmp.ne.s32.totalorder %s312, %s313
      %p322 = scmp.eq.s32.totalorder %s40, 0
      %p323 = por %p321, %p322
      %p324 = scmp.ne.s32.totalorder %s312, %s313
      %p325 = scmp.eq.s32.totalorder %s41, 1
      %p326 = por %p324, %p325
      %p328 = scmp.ne.s32.totalorder %s313, %s327
      %p329 = scmp.eq.s32.totalorder %s41, 0
      %p330 = por %p328, %p329
      %s332 = sadd.s32 %s331, 1
      %p335 = scmp.eq.s32.totalorder %s35, 1
      %p336 = scmp.ne.s32.totalorder %s331, %s333
      %p337 = scmp.eq.s32.totalorder %s35, 0
      %p338 = por %p336, %p337
      %p339 = scmp.ne.s32.totalorder %s331, %s333
      %p340 = scmp.eq.s32.totalorder %s40, 1
      %p341 = por %p339, %p340
      %p342 = scmp.ne.s32.totalorder %s333, %s334
      %p343 = scmp.eq.s32.totalorder %s40, 0
      %p344 = por %p342, %p343
      %p345 = scmp.ne.s32.totalorder %s333, %s334
      %p346 = scmp.eq.s32.totalorder %s41, 1
      %p347 = por %p345, %p346
      %p349 = scmp.ne.s32.totalorder %s334, %s348
      %p350 = scmp.eq.s32.totalorder %s41, 0
      %p351 = por %p349, %p350
      %s353 = sadd.s32 %s352, 1
      %p356 = scmp.eq.s32.totalorder %s35, 1
      %p357 = scmp.ne.s32.totalorder %s352, %s354
      %p358 = scmp.eq.s32.totalorder %s35, 0
      %p359 = por %p357, %p358
      %p360 = scmp.ne.s32.totalorder %s352, %s354
      %p361 = scmp.eq.s32.totalorder %s40, 1
      %p362 = por %p360, %p361
      %p363 = scmp.ne.s32.totalorder %s354, %s355
      %p364 = scmp.eq.s32.totalorder %s40, 0
      %p365 = por %p363, %p364
      %p366 = scmp.ne.s32.totalorder %s354, %s355
      %p367 = scmp.eq.s32.totalorder %s41, 1
      %p368 = por %p366, %p367
      %p370 = scmp.ne.s32.totalorder %s355, %s369
      %p371 = scmp.eq.s32.totalorder %s41, 0
      %p372 = por %p370, %p371
      %s374 = sadd.s32 %s373, 1
      %p377 = scmp.eq.s32.totalorder %s35, 1
      %p378 = scmp.ne.s32.totalorder %s373, %s375
      %p379 = scmp.eq.s32.totalorder %s35, 0
      %p380 = por %p378, %p379
      %p381 = scmp.ne.s32.totalorder %s373, %s375
      %p382 = scmp.eq.s32.totalorder %s40, 1
      %p383 = por %p381, %p382
      %p384 = scmp.ne.s32.totalorder %s375, %s376
      %p385 = scmp.eq.s32.totalorder %s40, 0
      %p386 = por %p384, %p385
      %p387 = scmp.ne.s32.totalorder %s375, %s376
      %p388 = scmp.eq.s32.totalorder %s41, 1
      %p389 = por %p387, %p388
      %p391 = scmp.ne.s32.totalorder %s376, %s390
      %p392 = scmp.eq.s32.totalorder %s41, 0
      %p393 = por %p391, %p392
      %s395 = sadd.s32 %s394, 1
      %p398 = scmp.eq.s32.totalorder %s35, 1
      %p399 = scmp.ne.s32.totalorder %s394, %s396
      %p400 = scmp.eq.s32.totalorder %s35, 0
      %p401 = por %p399, %p400
      %p402 = scmp.ne.s32.totalorder %s394, %s396
      %p403 = scmp.eq.s32.totalorder %s40, 1
      %p404 = por %p402, %p403
      %p405 = scmp.ne.s32.totalorder %s396, %s397
      %p406 = scmp.eq.s32.totalorder %s40, 0
      %p407 = por %p405, %p406
      %p408 = scmp.ne.s32.totalorder %s396, %s397
      %p409 = scmp.eq.s32.totalorder %s41, 1
      %p410 = por %p408, %p409
      %p412 = scmp.ne.s32.totalorder %s397, %s411
      %p413 = scmp.eq.s32.totalorder %s41, 0
      %p414 = por %p412, %p413
      %s416 = sadd.s32 %s415, 1
      %p419 = scmp.eq.s32.totalorder %s35, 1
      %p420 = scmp.ne.s32.totalorder %s415, %s417
      %p421 = scmp.eq.s32.totalorder %s35, 0
      %p422 = por %p420, %p421
      %p423 = scmp.ne.s32.totalorder %s415, %s417
      %p424 = scmp.eq.s32.totalorder %s40, 1
      %p425 = por %p423, %p424
      %p426 = scmp.ne.s32.totalorder %s417, %s418
      %p427 = scmp.eq.s32.totalorder %s40, 0
      %p428 = por %p426, %p427
      %p429 = scmp.ne.s32.totalorder %s417, %s418
      %p430 = scmp.eq.s32.totalorder %s41, 1
      %p431 = por %p429, %p430
      %p433 = scmp.ne.s32.totalorder %s418, %s432
      %p434 = scmp.eq.s32.totalorder %s41, 0
      %p435 = por %p433, %p434
      %s437 = sadd.s32 %s436, 1
      %p440 = scmp.eq.s32.totalorder %s35, 1
      %p441 = scmp.ne.s32.totalorder %s436, %s438
      %p442 = scmp.eq.s32.totalorder %s35, 0
      %p443 = por %p441, %p442
      %p444 = scmp.ne.s32.totalorder %s436, %s438
      %p445 = scmp.eq.s32.totalorder %s40, 1
      %p446 = por %p444, %p445
      %p447 = scmp.ne.s32.totalorder %s438, %s439
      %p448 = scmp.eq.s32.totalorder %s40, 0
      %p449 = por %p447, %p448
      %p450 = scmp.ne.s32.totalorder %s438, %s439
      %p451 = scmp.eq.s32.totalorder %s41, 1
      %p452 = por %p450, %p451
      %p454 = scmp.ne.s32.totalorder %s439, %s453
      %p455 = scmp.eq.s32.totalorder %s41, 0
      %p456 = por %p454, %p455
      %s458 = sadd.s32 %s457, 1
      %p461 = scmp.eq.s32.totalorder %s35, 1
      %p462 = scmp.ne.s32.totalorder %s457, %s459
      %p463 = scmp.eq.s32.totalorder %s35, 0
      %p464 = por %p462, %p463
      %p465 = scmp.ne.s32.totalorder %s457, %s459
      %p466 = scmp.eq.s32.totalorder %s40, 1
      %p467 = por %p465, %p466
      %p468 = scmp.ne.s32.totalorder %s459, %s460
      %p469 = scmp.eq.s32.totalorder %s40, 0
      %p470 = por %p468, %p469
      %p471 = scmp.ne.s32.totalorder %s459, %s460
      %p472 = scmp.eq.s32.totalorder %s41, 1
      %p473 = por %p471, %p472
      %p475 = scmp.ne.s32.totalorder %s460, %s474
      %p476 = scmp.eq.s32.totalorder %s41, 0
      %p477 = por %p475, %p476
      %s478 = ssub.s32 %s35, %s42
      %p479 = scmp.eq.s32.totalorder %s478, 0
      %s481 = sadd.s32 %s480, 1
      %s482 = scalar_select %p479, %s480, %s481
      %p485 = pneg %p479
      %p486 = scmp.eq.s32.totalorder %s35, 1
      %p487 = por %p485, %p486
      %p488 = scmp.ne.s32.totalorder %s480, %s483
      %p489 = scmp.eq.s32.totalorder %s35, 0
      %p490 = por %p488, %p489
      %p491 = scmp.ne.s32.totalorder %s480, %s483
      %p492 = scmp.eq.s32.totalorder %s40, 1
      %p493 = por %p491, %p492
      %p494 = scmp.ne.s32.totalorder %s483, %s484
      %p495 = scmp.eq.s32.totalorder %s40, 0
      %p496 = por %p494, %p495
      %p497 = scmp.ne.s32.totalorder %s483, %s484
      %p498 = scmp.eq.s32.totalorder %s41, 1
      %p499 = por %p497, %p498
      %p501 = scmp.ne.s32.totalorder %s484, %s500
      %p502 = scmp.eq.s32.totalorder %s41, 0
      %p503 = por %p501, %p502
      %p504 = scmp.le.s32.totalorder 1, %s35
      %p505 = scmp.lt.s32.totalorder %s35, 3
      %p506 = pnand %p504, %p505
      %p507 = pneg %p506
      // Predicated region
      $region9: #{mff_oce_forward.1} parent=5 // pred_check
        _
      $region10: #{mff_oce_forward.1} parent=5 // pred_check_branch
        %509 = sbr.rel (%p506) target = $region12
      $region11: #{mff_oce_forward.1} parent=5 // pred_region
        %s510 = ssub.s32 %s35, 1
        // Predicated region
        $region13: #{mff_oce_forward.1} parent=11 // pred_check
          %p511 = pneg %p134
        $region14: #{mff_oce_forward.1} parent=11 // pred_check_branch
          %513 = sbr.rel (%p511) target = $region16
        $region15: #{mff_oce_forward.1} parent=11 // pred_region
          _
        $region16: #{mff_oce_forward.1} parent=11 // pred_fallthru
          _
        // Predicated region
        $region17: #{mff_oce_forward.1} parent=11 // pred_check
          %p514 = pneg %p155
        $region18: #{mff_oce_forward.1} parent=11 // pred_check_branch
          %516 = sbr.rel (%p514) target = $region20
        $region19: #{mff_oce_forward.1} parent=11 // pred_region
          %s518 = ssub.s32 1152, 1152
          %519 = vsyncadd [#allocation3], %s518
          %s520 = sshll.u32 [#allocation2], 4
          %s521 = int_to_ptr.vmem [resolvable:$true] %s520
          %526 = dma.hbm_to_vmem [thread:$0]  %s4, 1152, %s521, [#allocation3], 64, 64, 4
        $region20: #{mff_oce_forward.1} parent=11 // pred_fallthru
          _
        // Predicated region
        $region21: #{mff_oce_forward.1} parent=11 // pred_check
          %p527 = pneg %p176
        $region22: #{mff_oce_forward.1} parent=11 // pred_check_branch
          %529 = sbr.rel (%p527) target = $region24
        $region23: #{mff_oce_forward.1} parent=11 // pred_region
          %s531 = ssub.s32 288, 288
          %532 = vsyncadd [#allocation6], %s531
          %s533 = sshll.u32 [#allocation5], 4
          %s534 = int_to_ptr.vmem [resolvable:$true] %s533
          %539 = dma.hbm_to_vmem [thread:$0]  %s5, 288, %s534, [#allocation6], 32, 32, 2
        $region24: #{mff_oce_forward.1} parent=11 // pred_fallthru
          _
        // Predicated region
        $region25: #{mff_oce_forward.1} parent=11 // pred_check
          %p540 = pneg %p197
        $region26: #{mff_oce_forward.1} parent=11 // pred_check_branch
          %542 = sbr.rel (%p540) target = $region28
        $region27: #{mff_oce_forward.1} parent=11 // pred_region
          _
        $region28: #{mff_oce_forward.1} parent=11 // pred_fallthru
          _
        // Predicated region
        $region29: #{mff_oce_forward.1} parent=11 // pred_check
          %p543 = pneg %p218
        $region30: #{mff_oce_forward.1} parent=11 // pred_check_branch
          %545 = sbr.rel (%p543) target = $region32
        $region31: #{mff_oce_forward.1} parent=11 // pred_region
          %s547 = ssub.s32 1152, 1152
          %548 = vsyncadd [#allocation6], %s547
          %s549 = sshll.u32 [#allocation7], 4
          %s550 = int_to_ptr.vmem [resolvable:$true] %s549
          %555 = dma.hbm_to_vmem [thread:$0]  %s7, 1152, %s550, [#allocation6], 64, 64, 4
        $region32: #{mff_oce_forward.1} parent=11 // pred_fallthru
          _
        // Predicated region
        $region33: #{mff_oce_forward.1} parent=11 // pred_check
          %p556 = pneg %p239
        $region34: #{mff_oce_forward.1} parent=11 // pred_check_branch
          %558 = sbr.rel (%p556) target = $region36
        $region35: #{mff_oce_forward.1} parent=11 // pred_region
          %s560 = ssub.s32 256, 256
          %561 = vsyncadd [#allocation9], %s560
          %s562 = sshll.u32 [#allocation8], 4
          %s563 = int_to_ptr.vmem [resolvable:$true] %s562
          %568 = dma.hbm_to_vmem [thread:$0]  %s8, 256, %s563, [#allocation9], 64, 64, 4
        $region36: #{mff_oce_forward.1} parent=11 // pred_fallthru
          _
        // Predicated region
        $region37: #{mff_oce_forward.1} parent=11 // pred_check
          %p569 = pneg %p260
        $region38: #{mff_oce_forward.1} parent=11 // pred_check_branch
          %571 = sbr.rel (%p569) target = $region40
        $region39: #{mff_oce_forward.1} parent=11 // pred_region
          _
        $region40: #{mff_oce_forward.1} parent=11 // pred_fallthru
          _
        // Predicated region
        $region41: #{mff_oce_forward.1} parent=11 // pred_check
          %p572 = pneg %p281
        $region42: #{mff_oce_forward.1} parent=11 // pred_check_branch
          %574 = sbr.rel (%p572) target = $region44
        $region43: #{mff_oce_forward.1} parent=11 // pred_region
          %s576 = ssub.s32 2304, 2304
          %577 = vsyncadd [#allocation9], %s576
          %s578 = sshll.u32 [#allocation10], 4
          %s579 = int_to_ptr.vmem [resolvable:$true] %s578
          %584 = dma.hbm_to_vmem [thread:$0]  %s10, 2304, %s579, [#allocation9], 64, 64, 4
        $region44: #{mff_oce_forward.1} parent=11 // pred_fallthru
          _
        // Predicated region
        $region45: #{mff_oce_forward.1} parent=11 // pred_check
          %p585 = pneg %p302
        $region46: #{mff_oce_forward.1} parent=11 // pred_check_branch
          %587 = sbr.rel (%p585) target = $region48
        $region47: #{mff_oce_forward.1} parent=11 // pred_region
          %s589 = ssub.s32 512, 512
          %590 = vsyncadd [#allocation12], %s589
          %s591 = sshll.u32 [#allocation11], 4
          %s592 = int_to_ptr.vmem [resolvable:$true] %s591
          %597 = dma.hbm_to_vmem [thread:$0]  %s11, 512, %s592, [#allocation12], 64, 64, 4
        $region48: #{mff_oce_forward.1} parent=11 // pred_fallthru
          _
        // Predicated region
        $region49: #{mff_oce_forward.1} parent=11 // pred_check
          %p598 = pneg %p323
        $region50: #{mff_oce_forward.1} parent=11 // pred_check_branch
          %600 = sbr.rel (%p598) target = $region52
        $region51: #{mff_oce_forward.1} parent=11 // pred_region
          _
        $region52: #{mff_oce_forward.1} parent=11 // pred_fallthru
          _
        // Predicated region
        $region53: #{mff_oce_forward.1} parent=11 // pred_check
          %p601 = pneg %p344
        $region54: #{mff_oce_forward.1} parent=11 // pred_check_branch
          %603 = sbr.rel (%p601) target = $region56
        $region55: #{mff_oce_forward.1} parent=11 // pred_region
          %s605 = ssub.s32 512, 512
          %606 = vsyncadd [#allocation12], %s605
          %s607 = sshll.u32 [#allocation13], 4
          %s608 = int_to_ptr.vmem [resolvable:$true] %s607
          %613 = dma.hbm_to_vmem [thread:$0]  %s13, 512, %s608, [#allocation12], 64, 64, 4
        $region56: #{mff_oce_forward.1} parent=11 // pred_fallthru
          _
        // Predicated region
        $region57: #{mff_oce_forward.1} parent=11 // pred_check
          %p614 = pneg %p365
        $region58: #{mff_oce_forward.1} parent=11 // pred_check_branch
          %616 = sbr.rel (%p614) target = $region60
        $region59: #{mff_oce_forward.1} parent=11 // pred_region
          %s618 = ssub.s32 16, 16
          %619 = vsyncadd [#allocation15], %s618
          %s621 = sshll.u32 [#allocation14], 4
          %s622 = int_to_ptr.vmem [resolvable:$true] %s621
          %624 = dma.hbm_to_vmem [thread:$0]  %s14, 16, %s622, [#allocation15]
        $region60: #{mff_oce_forward.1} parent=11 // pred_fallthru
          _
        // Predicated region
        $region61: #{mff_oce_forward.1} parent=11 // pred_check
          %p625 = pneg %p386
        $region62: #{mff_oce_forward.1} parent=11 // pred_check_branch
          %627 = sbr.rel (%p625) target = $region64
        $region63: #{mff_oce_forward.1} parent=11 // pred_region
          _
        $region64: #{mff_oce_forward.1} parent=11 // pred_fallthru
          _
        // Predicated region
        $region65: #{mff_oce_forward.1} parent=11 // pred_check
          %p628 = pneg %p407
        $region66: #{mff_oce_forward.1} parent=11 // pred_check_branch
          %630 = sbr.rel (%p628) target = $region68
        $region67: #{mff_oce_forward.1} parent=11 // pred_region
          _
        $region68: #{mff_oce_forward.1} parent=11 // pred_fallthru
          _
        // Predicated region
        $region69: #{mff_oce_forward.1} parent=11 // pred_check
          %p631 = pneg %p428
        $region70: #{mff_oce_forward.1} parent=11 // pred_check_branch
          %633 = sbr.rel (%p631) target = $region72
        $region71: #{mff_oce_forward.1} parent=11 // pred_region
          %s635 = ssub.s32 512, 512
          %636 = vsyncadd [#allocation15], %s635
          %s637 = sshll.u32 [#allocation16], 4
          %s638 = int_to_ptr.vmem [resolvable:$true] %s637
          %643 = dma.hbm_to_vmem [thread:$0]  %s17, 512, %s638, [#allocation15], 64, 64, 4
        $region72: #{mff_oce_forward.1} parent=11 // pred_fallthru
          _
        // Predicated region
        $region73: #{mff_oce_forward.1} parent=11 // pred_check
          %p644 = pneg %p449
        $region74: #{mff_oce_forward.1} parent=11 // pred_check_branch
          %646 = sbr.rel (%p644) target = $region76
        $region75: #{mff_oce_forward.1} parent=11 // pred_region
          %s648 = ssub.s32 9216, 9216
          %649 = vsyncadd [#allocation18], %s648
          %s650 = sshll.u32 [#allocation17], 4
          %s651 = int_to_ptr.vmem [resolvable:$true] %s650
          %656 = dma.hbm_to_vmem [thread:$0]  %s18, 9216, %s651, [#allocation18], 64, 64, 4
        $region76: #{mff_oce_forward.1} parent=11 // pred_fallthru
          _
        // Predicated region
        $region77: #{mff_oce_forward.1} parent=11 // pred_check
          %p657 = pneg %p470
        $region78: #{mff_oce_forward.1} parent=11 // pred_check_branch
          %659 = sbr.rel (%p657) target = $region80
        $region79: #{mff_oce_forward.1} parent=11 // pred_region
          %s661 = ssub.s32 9216, 9216
          %662 = vsyncadd [#allocation18], %s661
          %s663 = sshll.u32 [#allocation19], 4
          %s664 = int_to_ptr.vmem [resolvable:$true] %s663
          %669 = dma.hbm_to_vmem [thread:$0]  %s19, 9216, %s664, [#allocation18], 64, 64, 4
        $region80: #{mff_oce_forward.1} parent=11 // pred_fallthru
          _
      $region12: #{mff_oce_forward.1} parent=5 // pred_fallthru
        _
      %p670 = scmp.lt.s32.totalorder %s35, 2
      // Predicated region
      $region81: #{mff_oce_forward.1} parent=5 // pred_check
        %p671 = pneg %p670
      $region82: #{mff_oce_forward.1} parent=5 // pred_check_branch
        %673 = sbr.rel (%p671) target = $region84
      $region83: #{mff_oce_forward.1} parent=5 // pred_region
        // Predicated region
        $region85: #{mff_oce_forward.1} parent=83 // pred_check
          %p674 = pneg %p55
        $region86: #{mff_oce_forward.1} parent=83 // pred_check_branch
          %676 = sbr.rel (%p674) target = $region88
        $region87: #{mff_oce_forward.1} parent=83 // pred_region
          %p677 = scmp.lt.s32.totalorder %s35, 1
          %s678 = scalar_select %p677, %s35, 1
          %s679 = smul.addr %s678, 32
          %s680 = smul.addr %s679, 4
          %s681 = scalar_lea.vmem %s0, %s680
        $region88: #{mff_oce_forward.1} parent=83 // pred_fallthru
          _
        // Predicated region
        $region89: #{mff_oce_forward.1} parent=83 // pred_check
          %p682 = pneg %p81
        $region90: #{mff_oce_forward.1} parent=83 // pred_check_branch
          %684 = sbr.rel (%p682) target = $region92
        $region91: #{mff_oce_forward.1} parent=83 // pred_region
          %p685 = scmp.lt.s32.totalorder %s35, 1
          %s686 = scalar_select %p685, %s35, 1
          %s687 = smul.addr %s686, 8
          %s688 = smul.addr %s687, 4
          %s689 = scalar_lea.vmem %s1, %s688
        $region92: #{mff_oce_forward.1} parent=83 // pred_fallthru
          _
        // Predicated region
        $region93: #{mff_oce_forward.1} parent=83 // pred_check
          %p690 = pneg %p107
        $region94: #{mff_oce_forward.1} parent=83 // pred_check_branch
          %692 = sbr.rel (%p690) target = $region96
        $region95: #{mff_oce_forward.1} parent=83 // pred_region
          %p693 = scmp.lt.s32.totalorder %s35, 1
          %s694 = scalar_select %p693, %s35, 1
          %s695 = smul.addr %s694, 2
          %s696 = smul.addr %s695, 4
          %s697 = scalar_lea.vmem %s2, %s696
        $region96: #{mff_oce_forward.1} parent=83 // pred_fallthru
          _
      $region84: #{mff_oce_forward.1} parent=5 // pred_fallthru
        _
      %p698 = scmp.le.s32.totalorder 1, %s35
      %p699 = scmp.lt.s32.totalorder %s35, 3
      %p700 = pnand %p698, %p699
      %p701 = pneg %p700
      // Predicated region
      $region97: #{mff_oce_forward.1} parent=5 // pred_check
        _
      $region98: #{mff_oce_forward.1} parent=5 // pred_check_branch
        %703 = sbr.rel (%p700) target = $region100
      $region99: #{mff_oce_forward.1} parent=5 // pred_region
        %s704 = ssub.s32 %s35, 1
        // Predicated region
        $region101: #{mff_oce_forward.1} parent=99 // pred_check
          %p705 = pneg %p155
        $region102: #{mff_oce_forward.1} parent=99 // pred_check_branch
          %707 = sbr.rel (%p705) target = $region104
        $region103: #{mff_oce_forward.1} parent=99 // pred_region
          %708 = dma.done [#allocation3], 1152
        $region104: #{mff_oce_forward.1} parent=99 // pred_fallthru
          _
        // Predicated region
        $region105: #{mff_oce_forward.1} parent=99 // pred_check
          %p709 = pneg %p176
        $region106: #{mff_oce_forward.1} parent=99 // pred_check_branch
          %711 = sbr.rel (%p709) target = $region108
        $region107: #{mff_oce_forward.1} parent=99 // pred_region
          %712 = dma.done [#allocation6], 288
        $region108: #{mff_oce_forward.1} parent=99 // pred_fallthru
          _
        // Predicated region
        $region109: #{mff_oce_forward.1} parent=99 // pred_check
          %p713 = pneg %p218
        $region110: #{mff_oce_forward.1} parent=99 // pred_check_branch
          %715 = sbr.rel (%p713) target = $region112
        $region111: #{mff_oce_forward.1} parent=99 // pred_region
          %716 = dma.done [#allocation6], 1152
        $region112: #{mff_oce_forward.1} parent=99 // pred_fallthru
          _
        // Predicated region
        $region113: #{mff_oce_forward.1} parent=99 // pred_check
          %p717 = pneg %p239
        $region114: #{mff_oce_forward.1} parent=99 // pred_check_branch
          %719 = sbr.rel (%p717) target = $region116
        $region115: #{mff_oce_forward.1} parent=99 // pred_region
          %720 = dma.done [#allocation9], 256
        $region116: #{mff_oce_forward.1} parent=99 // pred_fallthru
          _
        // Predicated region
        $region117: #{mff_oce_forward.1} parent=99 // pred_check
          %p721 = pneg %p281
        $region118: #{mff_oce_forward.1} parent=99 // pred_check_branch
          %723 = sbr.rel (%p721) target = $region120
        $region119: #{mff_oce_forward.1} parent=99 // pred_region
          %724 = dma.done [#allocation9], 2304
        $region120: #{mff_oce_forward.1} parent=99 // pred_fallthru
          _
        // Predicated region
        $region121: #{mff_oce_forward.1} parent=99 // pred_check
          %p725 = pneg %p302
        $region122: #{mff_oce_forward.1} parent=99 // pred_check_branch
          %727 = sbr.rel (%p725) target = $region124
        $region123: #{mff_oce_forward.1} parent=99 // pred_region
          %728 = dma.done [#allocation12], 512
        $region124: #{mff_oce_forward.1} parent=99 // pred_fallthru
          _
        // Predicated region
        $region125: #{mff_oce_forward.1} parent=99 // pred_check
          %p729 = pneg %p344
        $region126: #{mff_oce_forward.1} parent=99 // pred_check_branch
          %731 = sbr.rel (%p729) target = $region128
        $region127: #{mff_oce_forward.1} parent=99 // pred_region
          %732 = dma.done [#allocation12], 512
        $region128: #{mff_oce_forward.1} parent=99 // pred_fallthru
          _
        // Predicated region
        $region129: #{mff_oce_forward.1} parent=99 // pred_check
          %p733 = pneg %p365
        $region130: #{mff_oce_forward.1} parent=99 // pred_check_branch
          %735 = sbr.rel (%p733) target = $region132
        $region131: #{mff_oce_forward.1} parent=99 // pred_region
          %736 = dma.done [#allocation15], 16
        $region132: #{mff_oce_forward.1} parent=99 // pred_fallthru
          _
        // Predicated region
        $region133: #{mff_oce_forward.1} parent=99 // pred_check
          %p737 = pneg %p428
        $region134: #{mff_oce_forward.1} parent=99 // pred_check_branch
          %739 = sbr.rel (%p737) target = $region136
        $region135: #{mff_oce_forward.1} parent=99 // pred_region
          %740 = dma.done [#allocation15], 512
        $region136: #{mff_oce_forward.1} parent=99 // pred_fallthru
          _
        // Predicated region
        $region137: #{mff_oce_forward.1} parent=99 // pred_check
          %p741 = pneg %p449
        $region138: #{mff_oce_forward.1} parent=99 // pred_check_branch
          %743 = sbr.rel (%p741) target = $region140
        $region139: #{mff_oce_forward.1} parent=99 // pred_region
          %744 = dma.done [#allocation18], 9216
        $region140: #{mff_oce_forward.1} parent=99 // pred_fallthru
          _
        // Predicated region
        $region141: #{mff_oce_forward.1} parent=99 // pred_check
          %p745 = pneg %p470
        $region142: #{mff_oce_forward.1} parent=99 // pred_check_branch
          %747 = sbr.rel (%p745) target = $region144
        $region143: #{mff_oce_forward.1} parent=99 // pred_region
          %748 = dma.done [#allocation18], 9216
        $region144: #{mff_oce_forward.1} parent=99 // pred_fallthru
          _
        %p749 = scmp.lt.s32.totalorder %s40, 1
        %s750 = scalar_select %p749, %s40, 1
        %s751 = smul.addr %s750, 32
        %s752 = smul.addr %s751, 4
        %s753 = scalar_lea.vmem %s0, %s752
        %p754 = pneg %p61
        %p755 = pneg %p58
        %p756 = scmp.lt.s32.totalorder %s40, 1
        %s757 = scalar_select %p756, %s40, 1
        %s758 = smul.addr %s757, 8
        %s759 = smul.addr %s758, 4
        %s760 = scalar_lea.vmem %s1, %s759
        %p761 = pneg %p87
        %p762 = pneg %p84
        %p763 = scmp.lt.s32.totalorder %s40, 1
        %s764 = scalar_select %p763, %s40, 1
        %s765 = smul.addr %s764, 2
        %s766 = smul.addr %s765, 4
        %s767 = scalar_lea.vmem %s2, %s766
        %p768 = pneg %p113
        %p769 = pneg %p110
        %p770 = pneg %p134
        %p771 = pneg %p131
        %p772 = pneg %p155
        %p773 = pneg %p152
        %p774 = pneg %p176
        %p775 = pneg %p173
        %p776 = pneg %p197
        %p777 = pneg %p194
        %p778 = pneg %p218
        %p779 = pneg %p215
        %p780 = pneg %p239
        %p781 = pneg %p236
        %p782 = pneg %p260
        %p783 = pneg %p257
        %p784 = pneg %p281
        %p785 = pneg %p278
        %p786 = pneg %p302
        %p787 = pneg %p299
        %p788 = pneg %p323
        %p789 = pneg %p320
        %p790 = pneg %p344
        %p791 = pneg %p341
        %p792 = pneg %p365
        %p793 = pneg %p362
        %p794 = pneg %p386
        %p795 = pneg %p383
        %p796 = pneg %p407
        %p797 = pneg %p404
        %p798 = pneg %p428
        %p799 = pneg %p425
        %p800 = pneg %p449
        %p801 = pneg %p446
        %p802 = pneg %p470
        %p803 = pneg %p467
        %p804 = pneg %p496
        %p805 = pneg %p493
        %s806 = sand.u32 %s483, 1
        %s807 = scalar_lea.sflag [#allocation4], %s806
        %s808 = sand.u32 %s483, 1
        %s809 = smul.addr %s808, 4
        %s810 = scalar_lea.vmem [#allocation20], %s809
        %p811 = scmp.lt.s32.totalorder %s40, 1
        %s812 = scalar_select %p811, %s40, 1
        %s813 = smul.addr %s812, 32
        %s814 = smul.addr %s813, 4
        %s815 = scalar_lea.vmem %s0, %s814
        %p816 = scmp.lt.s32.totalorder %s40, 1
        %s817 = scalar_select %p816, %s40, 1
        %s818 = smul.addr %s817, 8
        %s819 = smul.addr %s818, 4
        %s820 = scalar_lea.vmem %s1, %s819
        %p821 = scmp.lt.s32.totalorder %s40, 1
        %s822 = scalar_select %p821, %s40, 1
        %s823 = smul.addr %s822, 2
        %s824 = smul.addr %s823, 4
        %s825 = scalar_lea.vmem %s2, %s824
        %v827 = vld [vmem:[%s815] sm:$0xf]
        %v828 = vld [vmem:[%s815 + $0x4] sm:$0xf]
        %v829 = vld [vmem:[%s815 + $0x8] sm:$0xf]
        %v830 = vld [vmem:[%s815 + $0xc] sm:$0xf]
        %v831 = vld [vmem:[%s815 + $0x10] sm:$0xf]
        %v832 = vld [vmem:[%s815 + $0x14] sm:$0xf]
        %v833 = vld [vmem:[%s815 + $0x18] sm:$0xf]
        %v834 = vld [vmem:[%s815 + $0x1c] sm:$0xf]
        %v835 = vld [vmem:[%s815 + $0x20] sm:$0xf]
        %v836 = vld [vmem:[%s815 + $0x24] sm:$0xf]
        %v837 = vld [vmem:[%s815 + $0x28] sm:$0xf]
        %v838 = vld [vmem:[%s815 + $0x2c] sm:$0xf]
        %v839 = vld [vmem:[%s815 + $0x30] sm:$0xf]
        %v840 = vld [vmem:[%s815 + $0x34] sm:$0xf]
        %v841 = vld [vmem:[%s815 + $0x38] sm:$0xf]
        %v842 = vld [vmem:[%s815 + $0x3c] sm:$0xf]
        %v843 = vld [vmem:[%s815 + $0x40] sm:$0xf]
        %v844 = vld [vmem:[%s815 + $0x44] sm:$0xf]
        %v845 = vld [vmem:[%s815 + $0x48] sm:$0xf]
        %v846 = vld [vmem:[%s815 + $0x4c] sm:$0xf]
        %v847 = vld [vmem:[%s815 + $0x50] sm:$0xf]
        %v848 = vld [vmem:[%s815 + $0x54] sm:$0xf]
        %v849 = vld [vmem:[%s815 + $0x58] sm:$0xf]
        %v850 = vld [vmem:[%s815 + $0x5c] sm:$0xf]
        %v851 = vld [vmem:[%s815 + $0x60] sm:$0xf]
        %v852 = vld [vmem:[%s815 + $0x64] sm:$0xf]
        %v853 = vld [vmem:[%s815 + $0x68] sm:$0xf]
        %v854 = vld [vmem:[%s815 + $0x6c] sm:$0xf]
        %v855 = vld [vmem:[%s815 + $0x70] sm:$0xf]
        %v856 = vld [vmem:[%s815 + $0x74] sm:$0xf]
        %v857 = vld [vmem:[%s815 + $0x78] sm:$0xf]
        %v858 = vld [vmem:[%s815 + $0x7c] sm:$0xf]
        %v859 = vld [vmem:[%s3] sm:$0xff]
        %v860 = vld [vmem:[%s3 + $0x8] sm:$0xff]
        %v861 = vld [vmem:[%s3 + $0x10] sm:$0xff]
        %v862 = vld [vmem:[%s3 + $0x18] sm:$0xff]
        %v863 = vld [vmem:[%s3 + $0x20] sm:$0xff]
        %v864 = vld [vmem:[%s3 + $0x28] sm:$0xff]
        %v865 = vld [vmem:[%s3 + $0x30] sm:$0xff]
        %v866 = vld [vmem:[%s3 + $0x38] sm:$0xff]
        %v875 = vunpack.c.l.b16 %v859
        %v876 = vunpack.c.h.b16 %v859
        %v877 = vunpack.c.l.b16 %v860
        %v878 = vunpack.c.h.b16 %v860
        %v879 = vunpack.c.l.b16 %v861
        %v880 = vunpack.c.h.b16 %v861
        %v881 = vunpack.c.l.b16 %v862
        %v882 = vunpack.c.h.b16 %v862
        %v883 = vunpack.c.l.b16 %v863
        %v884 = vunpack.c.h.b16 %v863
        %v885 = vunpack.c.l.b16 %v864
        %v886 = vunpack.c.h.b16 %v864
        %v887 = vunpack.c.l.b16 %v865
        %v888 = vunpack.c.h.b16 %v865
        %v889 = vunpack.c.l.b16 %v866
        %v890 = vunpack.c.h.b16 %v866
        %v891 = vpack.c.b16 %v877, %v875
        %v892 = vpack.c.b16 %v878, %v876
        %v893 = vpack.c.b16 %v881, %v879
        %v894 = vpack.c.b16 %v882, %v880
        %v895 = vpack.c.b16 %v885, %v883
        %v896 = vpack.c.b16 %v886, %v884
        %v897 = vpack.c.b16 %v889, %v887
        %v898 = vpack.c.b16 %v890, %v888
        %v939 = vunpack.c.l.b16 %v827
        %v940 = vunpack.c.l.b16 %v828
        %v941 = vunpack.c.l.b16 %v829
        %v942 = vunpack.c.l.b16 %v830
        %v943 = vunpack.c.l.b16 %v831
        %v944 = vunpack.c.l.b16 %v832
        %v945 = vunpack.c.l.b16 %v833
        %v946 = vunpack.c.l.b16 %v834
        %v947 = vunpack.c.l.b16 %v835
        %v948 = vunpack.c.l.b16 %v836
        %v949 = vunpack.c.l.b16 %v837
        %v950 = vunpack.c.l.b16 %v838
        %v951 = vunpack.c.l.b16 %v839
        %v952 = vunpack.c.l.b16 %v840
        %v953 = vunpack.c.l.b16 %v841
        %v954 = vunpack.c.l.b16 %v842
        %v955 = vunpack.c.l.b16 %v843
        %v956 = vunpack.c.l.b16 %v844
        %v957 = vunpack.c.l.b16 %v845
        %v958 = vunpack.c.l.b16 %v846
        %v959 = vunpack.c.l.b16 %v847
        %v960 = vunpack.c.l.b16 %v848
        %v961 = vunpack.c.l.b16 %v849
        %v962 = vunpack.c.l.b16 %v850
        %v963 = vunpack.c.l.b16 %v851
        %v964 = vunpack.c.l.b16 %v852
        %v965 = vunpack.c.l.b16 %v853
        %v966 = vunpack.c.l.b16 %v854
        %v967 = vunpack.c.l.b16 %v855
        %v968 = vunpack.c.l.b16 %v856
        %v969 = vunpack.c.l.b16 %v857
        %v970 = vunpack.c.l.b16 %v858
        %v971 = vpack.c.b16 %v940, %v939
        %v972 = vpack.c.b16 %v942, %v941
        %v973 = vpack.c.b16 %v944, %v943
        %v974 = vpack.c.b16 %v946, %v945
        %v975 = vpack.c.b16 %v948, %v947
        %v976 = vpack.c.b16 %v950, %v949
        %v977 = vpack.c.b16 %v952, %v951
        %v978 = vpack.c.b16 %v954, %v953
        %v979 = vpack.c.b16 %v956, %v955
        %v980 = vpack.c.b16 %v958, %v957
        %v981 = vpack.c.b16 %v960, %v959
        %v982 = vpack.c.b16 %v962, %v961
        %v983 = vpack.c.b16 %v964, %v963
        %v984 = vpack.c.b16 %v966, %v965
        %v985 = vpack.c.b16 %v968, %v967
        %v986 = vpack.c.b16 %v970, %v969
        %1003 = vmatprep.subr.bf16.mxu0 0
        %1004 = vmatpush1.bf16.msra.mxu0 %v978
        %1005 = vmatprep.subr.bf16.mxu0 0
        %1006 = vmatpush1.bf16.msra.mxu0 %v977
        %1007 = vmatprep.subr.bf16.mxu0 0
        %1008 = vmatpush1.bf16.msra.mxu0 %v976
        %1009 = vmatprep.subr.bf16.mxu0 0
        %1010 = vmatpush1.bf16.msra.mxu0 %v975
        %1011 = vmatprep.subr.bf16.mxu0 0
        %1012 = vmatpush1.bf16.msra.mxu0 %v974
        %1013 = vmatprep.subr.bf16.mxu0 0
        %1014 = vmatpush1.bf16.msra.mxu0 %v973
        %1015 = vmatprep.subr.bf16.mxu0 0
        %1016 = vmatpush1.bf16.msra.mxu0 %v972
        %1017 = vmatprep.subr.bf16.mxu0 0
        %1018 = vmatpush1.bf16.msra.mxu0 %v971
        %1019 = vmatprep.subr.bf16.mxu0 0
        %1020 = vmatpush2.bf16.msra.mxu0 %v986
        %1021 = vmatprep.subr.bf16.mxu0 0
        %1022 = vmatpush2.bf16.msra.mxu0 %v985
        %1023 = vmatprep.subr.bf16.mxu0 0
        %1024 = vmatpush2.bf16.msra.mxu0 %v984
        %1025 = vmatprep.subr.bf16.mxu0 0
        %1026 = vmatpush2.bf16.msra.mxu0 %v983
        %1027 = vmatprep.subr.bf16.mxu0 0
        %1028 = vmatpush2.bf16.msra.mxu0 %v982
        %1029 = vmatprep.subr.bf16.mxu0 0
        %1030 = vmatpush2.bf16.msra.mxu0 %v981
        %1031 = vmatprep.subr.bf16.mxu0 0
        %1032 = vmatpush2.bf16.msra.mxu0 %v980
        %1033 = vmatprep.subr.bf16.mxu0 0
        %1034 = vmatpush2.bf16.msra.mxu0 %v979
        %1035 = vmatprep.mubr.bf16.mxu0 %v892
        %1036 = vmatmul.mubr.bf16.gmra.mxu0 %v891
        %v1037 = vpop.f32.mrf.mxu0
        %v1038 = vadd.f32 0.0, %v1037
        %v1039 = vpop.f32.mrf.mxu0
        %v1040 = vpop.f32.mrf.mxu0
        %v1041 = vadd.f32 0.0, %v1040
        %v1042 = vpop.f32.mrf.mxu0
        %1043 = vmatprep.mubr.bf16.mxu0 %v894
        %1044 = vmatmul.mubr.bf16.gmra.mxu0 %v893
        %v1045 = vpop.f32.mrf.mxu0
        %v1046 = vadd.f32 0.0, %v1045
        %v1047 = vpop.f32.mrf.mxu0
        %v1048 = vpop.f32.mrf.mxu0
        %v1049 = vadd.f32 0.0, %v1048
        %v1050 = vpop.f32.mrf.mxu0
        %1051 = vmatprep.mubr.bf16.mxu0 %v896
        %1052 = vmatmul.mubr.bf16.gmra.mxu0 %v895
        %v1053 = vpop.f32.mrf.mxu0
        %v1054 = vadd.f32 0.0, %v1053
        %v1055 = vpop.f32.mrf.mxu0
        %v1056 = vpop.f32.mrf.mxu0
        %v1057 = vadd.f32 0.0, %v1056
        %v1058 = vpop.f32.mrf.mxu0
        %1059 = vmatprep.mubr.bf16.mxu0 %v898
        %1060 = vmatmul.mubr.bf16.gmra.mxu0 %v897
        %v1061 = vpop.f32.mrf.mxu0
        %v1062 = vadd.f32 0.0, %v1061
        %v1063 = vpop.f32.mrf.mxu0
        %v1064 = vpop.f32.mrf.mxu0
        %v1065 = vadd.f32 0.0, %v1064
        %v1066 = vpop.f32.mrf.mxu0
        %1067 = vdwg.mxu0
        %v1068 = vpack.c.bf16 %v1041, %v1038
        %v1069 = vpack.c.bf16 %v1049, %v1046
        %v1070 = vpack.c.bf16 %v1057, %v1054
        %v1071 = vpack.c.bf16 %v1065, %v1062
        %v1072 = vld [vmem:[#allocation7] sm:$0xf]
        %v1073 = vld [vmem:[#allocation7 + $0x4] sm:$0xf]
        %s1074 = scalar_lea.vmem %s3, 64
        %v1075 = vld [vmem:[%s1074] sm:$0xff]
        %v1076 = vld [vmem:[%s1074 + $0x8] sm:$0xff]
        %v1077 = vld [vmem:[%s1074 + $0x10] sm:$0xff]
        %v1078 = vld [vmem:[%s1074 + $0x18] sm:$0xff]
        %v1079 = vld [vmem:[%s1074 + $0x20] sm:$0xff]
        %v1080 = vld [vmem:[%s1074 + $0x28] sm:$0xff]
        %v1081 = vld [vmem:[%s1074 + $0x30] sm:$0xff]
        %v1082 = vld [vmem:[%s1074 + $0x38] sm:$0xff]
        %v1091 = vunpack.c.l.b16 %v1075
        %v1092 = vunpack.c.h.b16 %v1075
        %v1093 = vunpack.c.l.b16 %v1076
        %v1094 = vunpack.c.h.b16 %v1076
        %v1095 = vunpack.c.l.b16 %v1077
        %v1096 = vunpack.c.h.b16 %v1077
        %v1097 = vunpack.c.l.b16 %v1078
        %v1098 = vunpack.c.h.b16 %v1078
        %v1099 = vunpack.c.l.b16 %v1079
        %v1100 = vunpack.c.h.b16 %v1079
        %v1101 = vunpack.c.l.b16 %v1080
        %v1102 = vunpack.c.h.b16 %v1080
        %v1103 = vunpack.c.l.b16 %v1081
        %v1104 = vunpack.c.h.b16 %v1081
        %v1105 = vunpack.c.l.b16 %v1082
        %v1106 = vunpack.c.h.b16 %v1082
        %v1107 = vpack.c.b16 %v1093, %v1091
        %v1108 = vpack.c.b16 %v1094, %v1092
        %v1109 = vpack.c.b16 %v1097, %v1095
        %v1110 = vpack.c.b16 %v1098, %v1096
        %v1111 = vpack.c.b16 %v1101, %v1099
        %v1112 = vpack.c.b16 %v1102, %v1100
        %v1113 = vpack.c.b16 %v1105, %v1103
        %v1114 = vpack.c.b16 %v1106, %v1104
        %1123 = vmatprep.subr.bf16.mxu0 0
        %1124 = vmatpush1.bf16.msra.mxu0 %v978
        %1125 = vmatprep.subr.bf16.mxu0 0
        %1126 = vmatpush1.bf16.msra.mxu0 %v977
        %1127 = vmatprep.subr.bf16.mxu0 0
        %1128 = vmatpush1.bf16.msra.mxu0 %v976
        %1129 = vmatprep.subr.bf16.mxu0 0
        %1130 = vmatpush1.bf16.msra.mxu0 %v975
        %1131 = vmatprep.subr.bf16.mxu0 0
        %1132 = vmatpush1.bf16.msra.mxu0 %v974
        %1133 = vmatprep.subr.bf16.mxu0 0
        %1134 = vmatpush1.bf16.msra.mxu0 %v973
        %1135 = vmatprep.subr.bf16.mxu0 0
        %1136 = vmatpush1.bf16.msra.mxu0 %v972
        %1137 = vmatprep.subr.bf16.mxu0 0
        %1138 = vmatpush1.bf16.msra.mxu0 %v971
        %1139 = vmatprep.subr.bf16.mxu0 0
        %1140 = vmatpush2.bf16.msra.mxu0 %v986
        %1141 = vmatprep.subr.bf16.mxu0 0
        %1142 = vmatpush2.bf16.msra.mxu0 %v985
        %1143 = vmatprep.subr.bf16.mxu0 0
        %1144 = vmatpush2.bf16.msra.mxu0 %v984
        %1145 = vmatprep.subr.bf16.mxu0 0
        %1146 = vmatpush2.bf16.msra.mxu0 %v983
        %1147 = vmatprep.subr.bf16.mxu0 0
        %1148 = vmatpush2.bf16.msra.mxu0 %v982
        %1149 = vmatprep.subr.bf16.mxu0 0
        %1150 = vmatpush2.bf16.msra.mxu0 %v981
        %1151 = vmatprep.subr.bf16.mxu0 0
        %1152 = vmatpush2.bf16.msra.mxu0 %v980
        %1153 = vmatprep.subr.bf16.mxu0 0
        %1154 = vmatpush2.bf16.msra.mxu0 %v979
        %1155 = vmatprep.mubr.bf16.mxu0 %v1108
        %1156 = vmatmul.mubr.bf16.gmra.mxu0 %v1107
        %v1157 = vpop.f32.mrf.mxu0
        %v1158 = vadd.f32 0.0, %v1157
        %v1159 = vpop.f32.mrf.mxu0
        %v1160 = vpop.f32.mrf.mxu0
        %v1161 = vadd.f32 0.0, %v1160
        %v1162 = vpop.f32.mrf.mxu0
        %1163 = vmatprep.mubr.bf16.mxu0 %v1110
        %1164 = vmatmul.mubr.bf16.gmra.mxu0 %v1109
        %v1165 = vpop.f32.mrf.mxu0
        %v1166 = vadd.f32 0.0, %v1165
        %v1167 = vpop.f32.mrf.mxu0
        %v1168 = vpop.f32.mrf.mxu0
        %v1169 = vadd.f32 0.0, %v1168
        %v1170 = vpop.f32.mrf.mxu0
        %1171 = vmatprep.mubr.bf16.mxu0 %v1112
        %1172 = vmatmul.mubr.bf16.gmra.mxu0 %v1111
        %v1173 = vpop.f32.mrf.mxu0
        %v1174 = vadd.f32 0.0, %v1173
        %v1175 = vpop.f32.mrf.mxu0
        %v1176 = vpop.f32.mrf.mxu0
        %v1177 = vadd.f32 0.0, %v1176
        %v1178 = vpop.f32.mrf.mxu0
        %1179 = vmatprep.mubr.bf16.mxu0 %v1114
        %1180 = vmatmul.mubr.bf16.gmra.mxu0 %v1113
        %v1181 = vpop.f32.mrf.mxu0
        %v1182 = vadd.f32 0.0, %v1181
        %v1183 = vpop.f32.mrf.mxu0
        %v1184 = vpop.f32.mrf.mxu0
        %v1185 = vadd.f32 0.0, %v1184
        %v1186 = vpop.f32.mrf.mxu0
        %1187 = vdwg.mxu0
        %v1188 = vpack.c.bf16 %v1161, %v1158
        %v1189 = vpack.c.bf16 %v1169, %v1166
        %v1190 = vpack.c.bf16 %v1177, %v1174
        %v1191 = vpack.c.bf16 %v1185, %v1182
        %s1192 = scalar_lea.vmem [#allocation7], 8
        %v1193 = vld [vmem:[%s1192] sm:$0xf]
        %v1194 = vld [vmem:[%s1192 + $0x4] sm:$0xf]
        %v1197 = vunpack.c.l.b16 %v1193
        %v1198 = vunpack.c.l.b16 %v1194
        %v1199 = vpack.c.b16 %v1198, %v1197
        %vm1201 = vcmask 130048
        %v1203 = vsel %vm1201, %v1188, 0
        %v1206 = vsel %vm1201, %v1189, 0
        %v1209 = vsel %vm1201, %v1190, 0
        %v1212 = vsel %vm1201, %v1191, 0
        %1214 = vmatprep.subr.bf16.mxu0 0
        %1215 = vmatpush1.bf16.msra.mxu0 0
        %1216 = vmatprep.subr.bf16.mxu0 0
        %1217 = vmatpush1.bf16.msra.mxu0 0
        %1218 = vmatprep.subr.bf16.mxu0 0
        %1219 = vmatpush1.bf16.msra.mxu0 0
        %1220 = vmatprep.subr.bf16.mxu0 0
        %1221 = vmatpush1.bf16.msra.mxu0 0
        %1222 = vmatprep.subr.bf16.mxu0 0
        %1223 = vmatpush1.bf16.msra.mxu0 0
        %1224 = vmatprep.subr.bf16.mxu0 0
        %1225 = vmatpush1.bf16.msra.mxu0 0
        %1226 = vmatprep.subr.bf16.mxu0 0
        %1227 = vmatpush1.bf16.msra.mxu0 0
        %1228 = vmatprep.subr.bf16.mxu0 0
        %1229 = vmatpush1.bf16.msra.mxu0 %v1199
        %1230 = vmatprep.subr.bf16.mxu0 0
        %1231 = vmatpush2.bf16.msra.mxu0 0
        %1232 = vmatprep.subr.bf16.mxu0 0
        %1233 = vmatpush2.bf16.msra.mxu0 0
        %1234 = vmatprep.subr.bf16.mxu0 0
        %1235 = vmatpush2.bf16.msra.mxu0 0
        %1236 = vmatprep.subr.bf16.mxu0 0
        %1237 = vmatpush2.bf16.msra.mxu0 0
        %1238 = vmatprep.subr.bf16.mxu0 0
        %1239 = vmatpush2.bf16.msra.mxu0 0
        %1240 = vmatprep.subr.bf16.mxu0 0
        %1241 = vmatpush2.bf16.msra.mxu0 0
        %1242 = vmatprep.subr.bf16.mxu0 0
        %1243 = vmatpush2.bf16.msra.mxu0 0
        %1244 = vmatprep.subr.bf16.mxu0 0
        %1245 = vmatpush2.bf16.msra.mxu0 0
        %1246 = vmatprep.mubr.bf16.mxu0 0
        %1247 = vmatmul.mubr.bf16.gmra.mxu0 %v1203
        %v1248 = vpop.f32.mrf.mxu0
        %v1249 = vadd.f32 0.0, %v1248
        %v1250 = vpop.f32.mrf.mxu0
        %v1251 = vpop.f32.mrf.mxu0
        %v1252 = vadd.f32 0.0, %v1251
        %v1253 = vpop.f32.mrf.mxu0
        %1254 = vmatprep.mubr.bf16.mxu0 0
        %1255 = vmatmul.mubr.bf16.gmra.mxu0 %v1206
        %v1256 = vpop.f32.mrf.mxu0
        %v1257 = vadd.f32 0.0, %v1256
        %v1258 = vpop.f32.mrf.mxu0
        %v1259 = vpop.f32.mrf.mxu0
        %v1260 = vadd.f32 0.0, %v1259
        %v1261 = vpop.f32.mrf.mxu0
        %1262 = vmatprep.mubr.bf16.mxu0 0
        %1263 = vmatmul.mubr.bf16.gmra.mxu0 %v1209
        %v1264 = vpop.f32.mrf.mxu0
        %v1265 = vadd.f32 0.0, %v1264
        %v1266 = vpop.f32.mrf.mxu0
        %v1267 = vpop.f32.mrf.mxu0
        %v1268 = vadd.f32 0.0, %v1267
        %v1269 = vpop.f32.mrf.mxu0
        %1270 = vmatprep.mubr.bf16.mxu0 0
        %1271 = vmatmul.mubr.bf16.gmra.mxu0 %v1212
        %v1272 = vpop.f32.mrf.mxu0
        %v1273 = vadd.f32 0.0, %v1272
        %v1274 = vpop.f32.mrf.mxu0
        %v1275 = vpop.f32.mrf.mxu0
        %v1276 = vadd.f32 0.0, %v1275
        %v1277 = vpop.f32.mrf.mxu0
        %1278 = vdwg.mxu0
        %v1281 = vunpack.c.l.b16 %v1072
        %v1282 = vunpack.c.l.b16 %v1073
        %v1283 = vpack.c.b16 %v1282, %v1281
        %v1286 = vsel %vm1201, %v1068, 0
        %v1289 = vsel %vm1201, %v1069, 0
        %v1292 = vsel %vm1201, %v1070, 0
        %v1295 = vsel %vm1201, %v1071, 0
        %1297 = vmatprep.subr.bf16.mxu0 0
        %1298 = vmatpush1.bf16.msra.mxu0 0
        %1299 = vmatprep.subr.bf16.mxu0 0
        %1300 = vmatpush1.bf16.msra.mxu0 0
        %1301 = vmatprep.subr.bf16.mxu0 0
        %1302 = vmatpush1.bf16.msra.mxu0 0
        %1303 = vmatprep.subr.bf16.mxu0 0
        %1304 = vmatpush1.bf16.msra.mxu0 0
        %1305 = vmatprep.subr.bf16.mxu0 0
        %1306 = vmatpush1.bf16.msra.mxu0 0
        %1307 = vmatprep.subr.bf16.mxu0 0
        %1308 = vmatpush1.bf16.msra.mxu0 0
        %1309 = vmatprep.subr.bf16.mxu0 0
        %1310 = vmatpush1.bf16.msra.mxu0 0
        %1311 = vmatprep.subr.bf16.mxu0 0
        %1312 = vmatpush1.bf16.msra.mxu0 %v1283
        %1313 = vmatprep.subr.bf16.mxu0 0
        %1314 = vmatpush2.bf16.msra.mxu0 0
        %1315 = vmatprep.subr.bf16.mxu0 0
        %1316 = vmatpush2.bf16.msra.mxu0 0
        %1317 = vmatprep.subr.bf16.mxu0 0
        %1318 = vmatpush2.bf16.msra.mxu0 0
        %1319 = vmatprep.subr.bf16.mxu0 0
        %1320 = vmatpush2.bf16.msra.mxu0 0
        %1321 = vmatprep.subr.bf16.mxu0 0
        %1322 = vmatpush2.bf16.msra.mxu0 0
        %1323 = vmatprep.subr.bf16.mxu0 0
        %1324 = vmatpush2.bf16.msra.mxu0 0
        %1325 = vmatprep.subr.bf16.mxu0 0
        %1326 = vmatpush2.bf16.msra.mxu0 0
        %1327 = vmatprep.subr.bf16.mxu0 0
        %1328 = vmatpush2.bf16.msra.mxu0 0
        %1329 = vmatprep.mubr.bf16.mxu0 0
        %1330 = vmatmul.mubr.bf16.gmra.mxu0 %v1286
        %v1331 = vpop.f32.mrf.mxu0
        %v1332 = vadd.f32 %v1249, %v1331
        %v1333 = vpop.f32.mrf.mxu0
        %v1334 = vpop.f32.mrf.mxu0
        %v1335 = vadd.f32 %v1252, %v1334
        %v1336 = vpop.f32.mrf.mxu0
        %1337 = vmatprep.mubr.bf16.mxu0 0
        %1338 = vmatmul.mubr.bf16.gmra.mxu0 %v1289
        %v1339 = vpop.f32.mrf.mxu0
        %v1340 = vadd.f32 %v1257, %v1339
        %v1341 = vpop.f32.mrf.mxu0
        %v1342 = vpop.f32.mrf.mxu0
        %v1343 = vadd.f32 %v1260, %v1342
        %v1344 = vpop.f32.mrf.mxu0
        %1345 = vmatprep.mubr.bf16.mxu0 0
        %1346 = vmatmul.mubr.bf16.gmra.mxu0 %v1292
        %v1347 = vpop.f32.mrf.mxu0
        %v1348 = vadd.f32 %v1265, %v1347
        %v1349 = vpop.f32.mrf.mxu0
        %v1350 = vpop.f32.mrf.mxu0
        %v1351 = vadd.f32 %v1268, %v1350
        %v1352 = vpop.f32.mrf.mxu0
        %1353 = vmatprep.mubr.bf16.mxu0 0
        %1354 = vmatmul.mubr.bf16.gmra.mxu0 %v1295
        %v1355 = vpop.f32.mrf.mxu0
        %v1356 = vadd.f32 %v1273, %v1355
        %v1357 = vpop.f32.mrf.mxu0
        %v1358 = vpop.f32.mrf.mxu0
        %v1359 = vadd.f32 %v1276, %v1358
        %v1360 = vpop.f32.mrf.mxu0
        %1361 = vdwg.mxu0
        %s1362 = scalar_lea.vmem %s3, 128
        %v1363 = vld [vmem:[%s1362] sm:$0xff]
        %v1364 = vld [vmem:[%s1362 + $0x8] sm:$0xff]
        %v1365 = vld [vmem:[%s1362 + $0x10] sm:$0xff]
        %v1366 = vld [vmem:[%s1362 + $0x18] sm:$0xff]
        %v1367 = vld [vmem:[%s1362 + $0x20] sm:$0xff]
        %v1368 = vld [vmem:[%s1362 + $0x28] sm:$0xff]
        %v1369 = vld [vmem:[%s1362 + $0x30] sm:$0xff]
        %v1370 = vld [vmem:[%s1362 + $0x38] sm:$0xff]
        %v1379 = vunpack.c.l.b16 %v1363
        %v1380 = vunpack.c.h.b16 %v1363
        %v1381 = vunpack.c.l.b16 %v1364
        %v1382 = vunpack.c.h.b16 %v1364
        %v1383 = vunpack.c.l.b16 %v1365
        %v1384 = vunpack.c.h.b16 %v1365
        %v1385 = vunpack.c.l.b16 %v1366
        %v1386 = vunpack.c.h.b16 %v1366
        %v1387 = vunpack.c.l.b16 %v1367
        %v1388 = vunpack.c.h.b16 %v1367
        %v1389 = vunpack.c.l.b16 %v1368
        %v1390 = vunpack.c.h.b16 %v1368
        %v1391 = vunpack.c.l.b16 %v1369
        %v1392 = vunpack.c.h.b16 %v1369
        %v1393 = vunpack.c.l.b16 %v1370
        %v1394 = vunpack.c.h.b16 %v1370
        %v1395 = vpack.c.b16 %v1381, %v1379
        %v1396 = vpack.c.b16 %v1382, %v1380
        %v1397 = vpack.c.b16 %v1385, %v1383
        %v1398 = vpack.c.b16 %v1386, %v1384
        %v1399 = vpack.c.b16 %v1389, %v1387
        %v1400 = vpack.c.b16 %v1390, %v1388
        %v1401 = vpack.c.b16 %v1393, %v1391
        %v1402 = vpack.c.b16 %v1394, %v1392
        %1411 = vmatprep.subr.bf16.mxu0 0
        %1412 = vmatpush1.bf16.msra.mxu0 %v978
        %1413 = vmatprep.subr.bf16.mxu0 0
        %1414 = vmatpush1.bf16.msra.mxu0 %v977
        %1415 = vmatprep.subr.bf16.mxu0 0
        %1416 = vmatpush1.bf16.msra.mxu0 %v976
        %1417 = vmatprep.subr.bf16.mxu0 0
        %1418 = vmatpush1.bf16.msra.mxu0 %v975
        %1419 = vmatprep.subr.bf16.mxu0 0
        %1420 = vmatpush1.bf16.msra.mxu0 %v974
        %1421 = vmatprep.subr.bf16.mxu0 0
        %1422 = vmatpush1.bf16.msra.mxu0 %v973
        %1423 = vmatprep.subr.bf16.mxu0 0
        %1424 = vmatpush1.bf16.msra.mxu0 %v972
        %1425 = vmatprep.subr.bf16.mxu0 0
        %1426 = vmatpush1.bf16.msra.mxu0 %v971
        %1427 = vmatprep.subr.bf16.mxu0 0
        %1428 = vmatpush2.bf16.msra.mxu0 %v986
        %1429 = vmatprep.subr.bf16.mxu0 0
        %1430 = vmatpush2.bf16.msra.mxu0 %v985
        %1431 = vmatprep.subr.bf16.mxu0 0
        %1432 = vmatpush2.bf16.msra.mxu0 %v984
        %1433 = vmatprep.subr.bf16.mxu0 0
        %1434 = vmatpush2.bf16.msra.mxu0 %v983
        %1435 = vmatprep.subr.bf16.mxu0 0
        %1436 = vmatpush2.bf16.msra.mxu0 %v982
        %1437 = vmatprep.subr.bf16.mxu0 0
        %1438 = vmatpush2.bf16.msra.mxu0 %v981
        %1439 = vmatprep.subr.bf16.mxu0 0
        %1440 = vmatpush2.bf16.msra.mxu0 %v980
        %1441 = vmatprep.subr.bf16.mxu0 0
        %1442 = vmatpush2.bf16.msra.mxu0 %v979
        %1443 = vmatprep.mubr.bf16.mxu0 %v1396
        %1444 = vmatmul.mubr.bf16.gmra.mxu0 %v1395
        %v1445 = vpop.f32.mrf.mxu0
        %v1446 = vadd.f32 0.0, %v1445
        %v1447 = vpop.f32.mrf.mxu0
        %v1448 = vpop.f32.mrf.mxu0
        %v1449 = vadd.f32 0.0, %v1448
        %v1450 = vpop.f32.mrf.mxu0
        %1451 = vmatprep.mubr.bf16.mxu0 %v1398
        %1452 = vmatmul.mubr.bf16.gmra.mxu0 %v1397
        %v1453 = vpop.f32.mrf.mxu0
        %v1454 = vadd.f32 0.0, %v1453
        %v1455 = vpop.f32.mrf.mxu0
        %v1456 = vpop.f32.mrf.mxu0
        %v1457 = vadd.f32 0.0, %v1456
        %v1458 = vpop.f32.mrf.mxu0
        %1459 = vmatprep.mubr.bf16.mxu0 %v1400
        %1460 = vmatmul.mubr.bf16.gmra.mxu0 %v1399
        %v1461 = vpop.f32.mrf.mxu0
        %v1462 = vadd.f32 0.0, %v1461
        %v1463 = vpop.f32.mrf.mxu0
        %v1464 = vpop.f32.mrf.mxu0
        %v1465 = vadd.f32 0.0, %v1464
        %v1466 = vpop.f32.mrf.mxu0
        %1467 = vmatprep.mubr.bf16.mxu0 %v1402
        %1468 = vmatmul.mubr.bf16.gmra.mxu0 %v1401
        %v1469 = vpop.f32.mrf.mxu0
        %v1470 = vadd.f32 0.0, %v1469
        %v1471 = vpop.f32.mrf.mxu0
        %v1472 = vpop.f32.mrf.mxu0
        %v1473 = vadd.f32 0.0, %v1472
        %v1474 = vpop.f32.mrf.mxu0
        %1475 = vdwg.mxu0
        %v1476 = vpack.c.bf16 %v1449, %v1446
        %v1477 = vpack.c.bf16 %v1457, %v1454
        %v1478 = vpack.c.bf16 %v1465, %v1462
        %v1479 = vpack.c.bf16 %v1473, %v1470
        %s1480 = scalar_lea.vmem [#allocation7], 16
        %v1481 = vld [vmem:[%s1480] sm:$0xf]
        %v1482 = vld [vmem:[%s1480 + $0x4] sm:$0xf]
        %v1485 = vunpack.c.l.b16 %v1481
        %v1486 = vunpack.c.l.b16 %v1482
        %v1487 = vpack.c.b16 %v1486, %v1485
        %v1490 = vsel %vm1201, %v1476, 0
        %v1493 = vsel %vm1201, %v1477, 0
        %v1496 = vsel %vm1201, %v1478, 0
        %v1499 = vsel %vm1201, %v1479, 0
        %1501 = vmatprep.subr.bf16.mxu0 0
        %1502 = vmatpush1.bf16.msra.mxu0 0
        %1503 = vmatprep.subr.bf16.mxu0 0
        %1504 = vmatpush1.bf16.msra.mxu0 0
        %1505 = vmatprep.subr.bf16.mxu0 0
        %1506 = vmatpush1.bf16.msra.mxu0 0
        %1507 = vmatprep.subr.bf16.mxu0 0
        %1508 = vmatpush1.bf16.msra.mxu0 0
        %1509 = vmatprep.subr.bf16.mxu0 0
        %1510 = vmatpush1.bf16.msra.mxu0 0
        %1511 = vmatprep.subr.bf16.mxu0 0
        %1512 = vmatpush1.bf16.msra.mxu0 0
        %1513 = vmatprep.subr.bf16.mxu0 0
        %1514 = vmatpush1.bf16.msra.mxu0 0
        %1515 = vmatprep.subr.bf16.mxu0 0
        %1516 = vmatpush1.bf16.msra.mxu0 %v1487
        %1517 = vmatprep.subr.bf16.mxu0 0
        %1518 = vmatpush2.bf16.msra.mxu0 0
        %1519 = vmatprep.subr.bf16.mxu0 0
        %1520 = vmatpush2.bf16.msra.mxu0 0
        %1521 = vmatprep.subr.bf16.mxu0 0
        %1522 = vmatpush2.bf16.msra.mxu0 0
        %1523 = vmatprep.subr.bf16.mxu0 0
        %1524 = vmatpush2.bf16.msra.mxu0 0
        %1525 = vmatprep.subr.bf16.mxu0 0
        %1526 = vmatpush2.bf16.msra.mxu0 0
        %1527 = vmatprep.subr.bf16.mxu0 0
        %1528 = vmatpush2.bf16.msra.mxu0 0
        %1529 = vmatprep.subr.bf16.mxu0 0
        %1530 = vmatpush2.bf16.msra.mxu0 0
        %1531 = vmatprep.subr.bf16.mxu0 0
        %1532 = vmatpush2.bf16.msra.mxu0 0
        %1533 = vmatprep.mubr.bf16.mxu0 0
        %1534 = vmatmul.mubr.bf16.gmra.mxu0 %v1490
        %v1535 = vpop.f32.mrf.mxu0
        %v1536 = vadd.f32 0.0, %v1535
        %v1537 = vpop.f32.mrf.mxu0
        %v1538 = vpop.f32.mrf.mxu0
        %v1539 = vadd.f32 0.0, %v1538
        %v1540 = vpop.f32.mrf.mxu0
        %1541 = vmatprep.mubr.bf16.mxu0 0
        %1542 = vmatmul.mubr.bf16.gmra.mxu0 %v1493
        %v1543 = vpop.f32.mrf.mxu0
        %v1544 = vadd.f32 0.0, %v1543
        %v1545 = vpop.f32.mrf.mxu0
        %v1546 = vpop.f32.mrf.mxu0
        %v1547 = vadd.f32 0.0, %v1546
        %v1548 = vpop.f32.mrf.mxu0
        %1549 = vmatprep.mubr.bf16.mxu0 0
        %1550 = vmatmul.mubr.bf16.gmra.mxu0 %v1496
        %v1551 = vpop.f32.mrf.mxu0
        %v1552 = vadd.f32 0.0, %v1551
        %v1553 = vpop.f32.mrf.mxu0
        %v1554 = vpop.f32.mrf.mxu0
        %v1555 = vadd.f32 0.0, %v1554
        %v1556 = vpop.f32.mrf.mxu0
        %1557 = vmatprep.mubr.bf16.mxu0 0
        %1558 = vmatmul.mubr.bf16.gmra.mxu0 %v1499
        %v1559 = vpop.f32.mrf.mxu0
        %v1560 = vadd.f32 0.0, %v1559
        %v1561 = vpop.f32.mrf.mxu0
        %v1562 = vpop.f32.mrf.mxu0
        %v1563 = vadd.f32 0.0, %v1562
        %v1564 = vpop.f32.mrf.mxu0
        %1565 = vdwg.mxu0
        %v1566 = vadd.f32 %v1332, %v1536
        %v1567 = vadd.f32 %v1335, %v1539
        %v1568 = vadd.f32 %v1340, %v1544
        %v1569 = vadd.f32 %v1343, %v1547
        %v1570 = vadd.f32 %v1348, %v1552
        %v1571 = vadd.f32 %v1351, %v1555
        %v1572 = vadd.f32 %v1356, %v1560
        %v1573 = vadd.f32 %v1359, %v1563
        %s1574 = scalar_lea.vmem %s3, 192
        %v1575 = vld [vmem:[%s1574] sm:$0xff]
        %v1576 = vld [vmem:[%s1574 + $0x8] sm:$0xff]
        %v1577 = vld [vmem:[%s1574 + $0x10] sm:$0xff]
        %v1578 = vld [vmem:[%s1574 + $0x18] sm:$0xff]
        %v1579 = vld [vmem:[%s1574 + $0x20] sm:$0xff]
        %v1580 = vld [vmem:[%s1574 + $0x28] sm:$0xff]
        %v1581 = vld [vmem:[%s1574 + $0x30] sm:$0xff]
        %v1582 = vld [vmem:[%s1574 + $0x38] sm:$0xff]
        %v1591 = vunpack.c.l.b16 %v1575
        %v1592 = vunpack.c.h.b16 %v1575
        %v1593 = vunpack.c.l.b16 %v1576
        %v1594 = vunpack.c.h.b16 %v1576
        %v1595 = vunpack.c.l.b16 %v1577
        %v1596 = vunpack.c.h.b16 %v1577
        %v1597 = vunpack.c.l.b16 %v1578
        %v1598 = vunpack.c.h.b16 %v1578
        %v1599 = vunpack.c.l.b16 %v1579
        %v1600 = vunpack.c.h.b16 %v1579
        %v1601 = vunpack.c.l.b16 %v1580
        %v1602 = vunpack.c.h.b16 %v1580
        %v1603 = vunpack.c.l.b16 %v1581
        %v1604 = vunpack.c.h.b16 %v1581
        %v1605 = vunpack.c.l.b16 %v1582
        %v1606 = vunpack.c.h.b16 %v1582
        %v1607 = vpack.c.b16 %v1593, %v1591
        %v1608 = vpack.c.b16 %v1594, %v1592
        %v1609 = vpack.c.b16 %v1597, %v1595
        %v1610 = vpack.c.b16 %v1598, %v1596
        %v1611 = vpack.c.b16 %v1601, %v1599
        %v1612 = vpack.c.b16 %v1602, %v1600
        %v1613 = vpack.c.b16 %v1605, %v1603
        %v1614 = vpack.c.b16 %v1606, %v1604
        %1623 = vmatprep.subr.bf16.mxu0 0
        %1624 = vmatpush1.bf16.msra.mxu0 %v978
        %1625 = vmatprep.subr.bf16.mxu0 0
        %1626 = vmatpush1.bf16.msra.mxu0 %v977
        %1627 = vmatprep.subr.bf16.mxu0 0
        %1628 = vmatpush1.bf16.msra.mxu0 %v976
        %1629 = vmatprep.subr.bf16.mxu0 0
        %1630 = vmatpush1.bf16.msra.mxu0 %v975
        %1631 = vmatprep.subr.bf16.mxu0 0
        %1632 = vmatpush1.bf16.msra.mxu0 %v974
        %1633 = vmatprep.subr.bf16.mxu0 0
        %1634 = vmatpush1.bf16.msra.mxu0 %v973
        %1635 = vmatprep.subr.bf16.mxu0 0
        %1636 = vmatpush1.bf16.msra.mxu0 %v972
        %1637 = vmatprep.subr.bf16.mxu0 0
        %1638 = vmatpush1.bf16.msra.mxu0 %v971
        %1639 = vmatprep.subr.bf16.mxu0 0
        %1640 = vmatpush2.bf16.msra.mxu0 %v986
        %1641 = vmatprep.subr.bf16.mxu0 0
        %1642 = vmatpush2.bf16.msra.mxu0 %v985
        %1643 = vmatprep.subr.bf16.mxu0 0
        %1644 = vmatpush2.bf16.msra.mxu0 %v984
        %1645 = vmatprep.subr.bf16.mxu0 0
        %1646 = vmatpush2.bf16.msra.mxu0 %v983
        %1647 = vmatprep.subr.bf16.mxu0 0
        %1648 = vmatpush2.bf16.msra.mxu0 %v982
        %1649 = vmatprep.subr.bf16.mxu0 0
        %1650 = vmatpush2.bf16.msra.mxu0 %v981
        %1651 = vmatprep.subr.bf16.mxu0 0
        %1652 = vmatpush2.bf16.msra.mxu0 %v980
        %1653 = vmatprep.subr.bf16.mxu0 0
        %1654 = vmatpush2.bf16.msra.mxu0 %v979
        %1655 = vmatprep.mubr.bf16.mxu0 %v1608
        %1656 = vmatmul.mubr.bf16.gmra.mxu0 %v1607
        %v1657 = vpop.f32.mrf.mxu0
        %v1658 = vadd.f32 0.0, %v1657
        %v1659 = vpop.f32.mrf.mxu0
        %v1660 = vpop.f32.mrf.mxu0
        %v1661 = vadd.f32 0.0, %v1660
        %v1662 = vpop.f32.mrf.mxu0
        %1663 = vmatprep.mubr.bf16.mxu0 %v1610
        %1664 = vmatmul.mubr.bf16.gmra.mxu0 %v1609
        %v1665 = vpop.f32.mrf.mxu0
        %v1666 = vadd.f32 0.0, %v1665
        %v1667 = vpop.f32.mrf.mxu0
        %v1668 = vpop.f32.mrf.mxu0
        %v1669 = vadd.f32 0.0, %v1668
        %v1670 = vpop.f32.mrf.mxu0
        %1671 = vmatprep.mubr.bf16.mxu0 %v1612
        %1672 = vmatmul.mubr.bf16.gmra.mxu0 %v1611
        %v1673 = vpop.f32.mrf.mxu0
        %v1674 = vadd.f32 0.0, %v1673
        %v1675 = vpop.f32.mrf.mxu0
        %v1676 = vpop.f32.mrf.mxu0
        %v1677 = vadd.f32 0.0, %v1676
        %v1678 = vpop.f32.mrf.mxu0
        %1679 = vmatprep.mubr.bf16.mxu0 %v1614
        %1680 = vmatmul.mubr.bf16.gmra.mxu0 %v1613
        %v1681 = vpop.f32.mrf.mxu0
        %v1682 = vadd.f32 0.0, %v1681
        %v1683 = vpop.f32.mrf.mxu0
        %v1684 = vpop.f32.mrf.mxu0
        %v1685 = vadd.f32 0.0, %v1684
        %v1686 = vpop.f32.mrf.mxu0
        %1687 = vdwg.mxu0
        %v1688 = vpack.c.bf16 %v1661, %v1658
        %v1689 = vpack.c.bf16 %v1669, %v1666
        %v1690 = vpack.c.bf16 %v1677, %v1674
        %v1691 = vpack.c.bf16 %v1685, %v1682
        %s1692 = scalar_lea.vmem [#allocation7], 24
        %v1693 = vld [vmem:[%s1692] sm:$0xf]
        %v1694 = vld [vmem:[%s1692 + $0x4] sm:$0xf]
        %v1697 = vunpack.c.l.b16 %v1693
        %v1698 = vunpack.c.l.b16 %v1694
        %v1699 = vpack.c.b16 %v1698, %v1697
        %v1702 = vsel %vm1201, %v1688, 0
        %v1705 = vsel %vm1201, %v1689, 0
        %v1708 = vsel %vm1201, %v1690, 0
        %v1711 = vsel %vm1201, %v1691, 0
        %1713 = vmatprep.subr.bf16.mxu0 0
        %1714 = vmatpush1.bf16.msra.mxu0 0
        %1715 = vmatprep.subr.bf16.mxu0 0
        %1716 = vmatpush1.bf16.msra.mxu0 0
        %1717 = vmatprep.subr.bf16.mxu0 0
        %1718 = vmatpush1.bf16.msra.mxu0 0
        %1719 = vmatprep.subr.bf16.mxu0 0
        %1720 = vmatpush1.bf16.msra.mxu0 0
        %1721 = vmatprep.subr.bf16.mxu0 0
        %1722 = vmatpush1.bf16.msra.mxu0 0
        %1723 = vmatprep.subr.bf16.mxu0 0
        %1724 = vmatpush1.bf16.msra.mxu0 0
        %1725 = vmatprep.subr.bf16.mxu0 0
        %1726 = vmatpush1.bf16.msra.mxu0 0
        %1727 = vmatprep.subr.bf16.mxu0 0
        %1728 = vmatpush1.bf16.msra.mxu0 %v1699
        %1729 = vmatprep.subr.bf16.mxu0 0
        %1730 = vmatpush2.bf16.msra.mxu0 0
        %1731 = vmatprep.subr.bf16.mxu0 0
        %1732 = vmatpush2.bf16.msra.mxu0 0
        %1733 = vmatprep.subr.bf16.mxu0 0
        %1734 = vmatpush2.bf16.msra.mxu0 0
        %1735 = vmatprep.subr.bf16.mxu0 0
        %1736 = vmatpush2.bf16.msra.mxu0 0
        %1737 = vmatprep.subr.bf16.mxu0 0
        %1738 = vmatpush2.bf16.msra.mxu0 0
        %1739 = vmatprep.subr.bf16.mxu0 0
        %1740 = vmatpush2.bf16.msra.mxu0 0
        %1741 = vmatprep.subr.bf16.mxu0 0
        %1742 = vmatpush2.bf16.msra.mxu0 0
        %1743 = vmatprep.subr.bf16.mxu0 0
        %1744 = vmatpush2.bf16.msra.mxu0 0
        %1745 = vmatprep.mubr.bf16.mxu0 0
        %1746 = vmatmul.mubr.bf16.gmra.mxu0 %v1702
        %v1747 = vpop.f32.mrf.mxu0
        %v1748 = vadd.f32 0.0, %v1747
        %v1749 = vpop.f32.mrf.mxu0
        %v1750 = vpop.f32.mrf.mxu0
        %v1751 = vadd.f32 0.0, %v1750
        %v1752 = vpop.f32.mrf.mxu0
        %1753 = vmatprep.mubr.bf16.mxu0 0
        %1754 = vmatmul.mubr.bf16.gmra.mxu0 %v1705
        %v1755 = vpop.f32.mrf.mxu0
        %v1756 = vadd.f32 0.0, %v1755
        %v1757 = vpop.f32.mrf.mxu0
        %v1758 = vpop.f32.mrf.mxu0
        %v1759 = vadd.f32 0.0, %v1758
        %v1760 = vpop.f32.mrf.mxu0
        %1761 = vmatprep.mubr.bf16.mxu0 0
        %1762 = vmatmul.mubr.bf16.gmra.mxu0 %v1708
        %v1763 = vpop.f32.mrf.mxu0
        %v1764 = vadd.f32 0.0, %v1763
        %v1765 = vpop.f32.mrf.mxu0
        %v1766 = vpop.f32.mrf.mxu0
        %v1767 = vadd.f32 0.0, %v1766
        %v1768 = vpop.f32.mrf.mxu0
        %1769 = vmatprep.mubr.bf16.mxu0 0
        %1770 = vmatmul.mubr.bf16.gmra.mxu0 %v1711
        %v1771 = vpop.f32.mrf.mxu0
        %v1772 = vadd.f32 0.0, %v1771
        %v1773 = vpop.f32.mrf.mxu0
        %v1774 = vpop.f32.mrf.mxu0
        %v1775 = vadd.f32 0.0, %v1774
        %v1776 = vpop.f32.mrf.mxu0
        %1777 = vdwg.mxu0
        %v1778 = vadd.f32 %v1566, %v1748
        %v1779 = vadd.f32 %v1567, %v1751
        %v1780 = vadd.f32 %v1568, %v1756
        %v1781 = vadd.f32 %v1569, %v1759
        %v1782 = vadd.f32 %v1570, %v1764
        %v1783 = vadd.f32 %v1571, %v1767
        %v1784 = vadd.f32 %v1572, %v1772
        %v1785 = vadd.f32 %v1573, %v1775
        %s1786 = scalar_lea.vmem %s3, 256
        %v1787 = vld [vmem:[%s1786] sm:$0xff]
        %v1788 = vld [vmem:[%s1786 + $0x8] sm:$0xff]
        %v1789 = vld [vmem:[%s1786 + $0x10] sm:$0xff]
        %v1790 = vld [vmem:[%s1786 + $0x18] sm:$0xff]
        %v1791 = vld [vmem:[%s1786 + $0x20] sm:$0xff]
        %v1792 = vld [vmem:[%s1786 + $0x28] sm:$0xff]
        %v1793 = vld [vmem:[%s1786 + $0x30] sm:$0xff]
        %v1794 = vld [vmem:[%s1786 + $0x38] sm:$0xff]
        %v1803 = vunpack.c.l.b16 %v1787
        %v1804 = vunpack.c.h.b16 %v1787
        %v1805 = vunpack.c.l.b16 %v1788
        %v1806 = vunpack.c.h.b16 %v1788
        %v1807 = vunpack.c.l.b16 %v1789
        %v1808 = vunpack.c.h.b16 %v1789
        %v1809 = vunpack.c.l.b16 %v1790
        %v1810 = vunpack.c.h.b16 %v1790
        %v1811 = vunpack.c.l.b16 %v1791
        %v1812 = vunpack.c.h.b16 %v1791
        %v1813 = vunpack.c.l.b16 %v1792
        %v1814 = vunpack.c.h.b16 %v1792
        %v1815 = vunpack.c.l.b16 %v1793
        %v1816 = vunpack.c.h.b16 %v1793
        %v1817 = vunpack.c.l.b16 %v1794
        %v1818 = vunpack.c.h.b16 %v1794
        %v1819 = vpack.c.b16 %v1805, %v1803
        %v1820 = vpack.c.b16 %v1806, %v1804
        %v1821 = vpack.c.b16 %v1809, %v1807
        %v1822 = vpack.c.b16 %v1810, %v1808
        %v1823 = vpack.c.b16 %v1813, %v1811
        %v1824 = vpack.c.b16 %v1814, %v1812
        %v1825 = vpack.c.b16 %v1817, %v1815
        %v1826 = vpack.c.b16 %v1818, %v1816
        %1835 = vmatprep.subr.bf16.mxu0 0
        %1836 = vmatpush1.bf16.msra.mxu0 %v978
        %1837 = vmatprep.subr.bf16.mxu0 0
        %1838 = vmatpush1.bf16.msra.mxu0 %v977
        %1839 = vmatprep.subr.bf16.mxu0 0
        %1840 = vmatpush1.bf16.msra.mxu0 %v976
        %1841 = vmatprep.subr.bf16.mxu0 0
        %1842 = vmatpush1.bf16.msra.mxu0 %v975
        %1843 = vmatprep.subr.bf16.mxu0 0
        %1844 = vmatpush1.bf16.msra.mxu0 %v974
        %1845 = vmatprep.subr.bf16.mxu0 0
        %1846 = vmatpush1.bf16.msra.mxu0 %v973
        %1847 = vmatprep.subr.bf16.mxu0 0
        %1848 = vmatpush1.bf16.msra.mxu0 %v972
        %1849 = vmatprep.subr.bf16.mxu0 0
        %1850 = vmatpush1.bf16.msra.mxu0 %v971
        %1851 = vmatprep.subr.bf16.mxu0 0
        %1852 = vmatpush2.bf16.msra.mxu0 %v986
        %1853 = vmatprep.subr.bf16.mxu0 0
        %1854 = vmatpush2.bf16.msra.mxu0 %v985
        %1855 = vmatprep.subr.bf16.mxu0 0
        %1856 = vmatpush2.bf16.msra.mxu0 %v984
        %1857 = vmatprep.subr.bf16.mxu0 0
        %1858 = vmatpush2.bf16.msra.mxu0 %v983
        %1859 = vmatprep.subr.bf16.mxu0 0
        %1860 = vmatpush2.bf16.msra.mxu0 %v982
        %1861 = vmatprep.subr.bf16.mxu0 0
        %1862 = vmatpush2.bf16.msra.mxu0 %v981
        %1863 = vmatprep.subr.bf16.mxu0 0
        %1864 = vmatpush2.bf16.msra.mxu0 %v980
        %1865 = vmatprep.subr.bf16.mxu0 0
        %1866 = vmatpush2.bf16.msra.mxu0 %v979
        %1867 = vmatprep.mubr.bf16.mxu0 %v1820
        %1868 = vmatmul.mubr.bf16.gmra.mxu0 %v1819
        %v1869 = vpop.f32.mrf.mxu0
        %v1870 = vadd.f32 0.0, %v1869
        %v1871 = vpop.f32.mrf.mxu0
        %v1872 = vpop.f32.mrf.mxu0
        %v1873 = vadd.f32 0.0, %v1872
        %v1874 = vpop.f32.mrf.mxu0
        %1875 = vmatprep.mubr.bf16.mxu0 %v1822
        %1876 = vmatmul.mubr.bf16.gmra.mxu0 %v1821
        %v1877 = vpop.f32.mrf.mxu0
        %v1878 = vadd.f32 0.0, %v1877
        %v1879 = vpop.f32.mrf.mxu0
        %v1880 = vpop.f32.mrf.mxu0
        %v1881 = vadd.f32 0.0, %v1880
        %v1882 = vpop.f32.mrf.mxu0
        %1883 = vmatprep.mubr.bf16.mxu0 %v1824
        %1884 = vmatmul.mubr.bf16.gmra.mxu0 %v1823
        %v1885 = vpop.f32.mrf.mxu0
        %v1886 = vadd.f32 0.0, %v1885
        %v1887 = vpop.f32.mrf.mxu0
        %v1888 = vpop.f32.mrf.mxu0
        %v1889 = vadd.f32 0.0, %v1888
        %v1890 = vpop.f32.mrf.mxu0
        %1891 = vmatprep.mubr.bf16.mxu0 %v1826
        %1892 = vmatmul.mubr.bf16.gmra.mxu0 %v1825
        %v1893 = vpop.f32.mrf.mxu0
        %v1894 = vadd.f32 0.0, %v1893
        %v1895 = vpop.f32.mrf.mxu0
        %v1896 = vpop.f32.mrf.mxu0
        %v1897 = vadd.f32 0.0, %v1896
        %v1898 = vpop.f32.mrf.mxu0
        %1899 = vdwg.mxu0
        %v1900 = vpack.c.bf16 %v1873, %v1870
        %v1901 = vpack.c.bf16 %v1881, %v1878
        %v1902 = vpack.c.bf16 %v1889, %v1886
        %v1903 = vpack.c.bf16 %v1897, %v1894
        %s1904 = scalar_lea.vmem [#allocation7], 32
        %v1905 = vld [vmem:[%s1904] sm:$0xf]
        %v1906 = vld [vmem:[%s1904 + $0x4] sm:$0xf]
        %v1909 = vunpack.c.l.b16 %v1905
        %v1910 = vunpack.c.l.b16 %v1906
        %v1911 = vpack.c.b16 %v1910, %v1909
        %v1914 = vsel %vm1201, %v1900, 0
        %v1917 = vsel %vm1201, %v1901, 0
        %v1920 = vsel %vm1201, %v1902, 0
        %v1923 = vsel %vm1201, %v1903, 0
        %1925 = vmatprep.subr.bf16.mxu0 0
        %1926 = vmatpush1.bf16.msra.mxu0 0
        %1927 = vmatprep.subr.bf16.mxu0 0
        %1928 = vmatpush1.bf16.msra.mxu0 0
        %1929 = vmatprep.subr.bf16.mxu0 0
        %1930 = vmatpush1.bf16.msra.mxu0 0
        %1931 = vmatprep.subr.bf16.mxu0 0
        %1932 = vmatpush1.bf16.msra.mxu0 0
        %1933 = vmatprep.subr.bf16.mxu0 0
        %1934 = vmatpush1.bf16.msra.mxu0 0
        %1935 = vmatprep.subr.bf16.mxu0 0
        %1936 = vmatpush1.bf16.msra.mxu0 0
        %1937 = vmatprep.subr.bf16.mxu0 0
        %1938 = vmatpush1.bf16.msra.mxu0 0
        %1939 = vmatprep.subr.bf16.mxu0 0
        %1940 = vmatpush1.bf16.msra.mxu0 %v1911
        %1941 = vmatprep.subr.bf16.mxu0 0
        %1942 = vmatpush2.bf16.msra.mxu0 0
        %1943 = vmatprep.subr.bf16.mxu0 0
        %1944 = vmatpush2.bf16.msra.mxu0 0
        %1945 = vmatprep.subr.bf16.mxu0 0
        %1946 = vmatpush2.bf16.msra.mxu0 0
        %1947 = vmatprep.subr.bf16.mxu0 0
        %1948 = vmatpush2.bf16.msra.mxu0 0
        %1949 = vmatprep.subr.bf16.mxu0 0
        %1950 = vmatpush2.bf16.msra.mxu0 0
        %1951 = vmatprep.subr.bf16.mxu0 0
        %1952 = vmatpush2.bf16.msra.mxu0 0
        %1953 = vmatprep.subr.bf16.mxu0 0
        %1954 = vmatpush2.bf16.msra.mxu0 0
        %1955 = vmatprep.subr.bf16.mxu0 0
        %1956 = vmatpush2.bf16.msra.mxu0 0
        %1957 = vmatprep.mubr.bf16.mxu0 0
        %1958 = vmatmul.mubr.bf16.gmra.mxu0 %v1914
        %v1959 = vpop.f32.mrf.mxu0
        %v1960 = vadd.f32 0.0, %v1959
        %v1961 = vpop.f32.mrf.mxu0
        %v1962 = vpop.f32.mrf.mxu0
        %v1963 = vadd.f32 0.0, %v1962
        %v1964 = vpop.f32.mrf.mxu0
        %1965 = vmatprep.mubr.bf16.mxu0 0
        %1966 = vmatmul.mubr.bf16.gmra.mxu0 %v1917
        %v1967 = vpop.f32.mrf.mxu0
        %v1968 = vadd.f32 0.0, %v1967
        %v1969 = vpop.f32.mrf.mxu0
        %v1970 = vpop.f32.mrf.mxu0
        %v1971 = vadd.f32 0.0, %v1970
        %v1972 = vpop.f32.mrf.mxu0
        %1973 = vmatprep.mubr.bf16.mxu0 0
        %1974 = vmatmul.mubr.bf16.gmra.mxu0 %v1920
        %v1975 = vpop.f32.mrf.mxu0
        %v1976 = vadd.f32 0.0, %v1975
        %v1977 = vpop.f32.mrf.mxu0
        %v1978 = vpop.f32.mrf.mxu0
        %v1979 = vadd.f32 0.0, %v1978
        %v1980 = vpop.f32.mrf.mxu0
        %1981 = vmatprep.mubr.bf16.mxu0 0
        %1982 = vmatmul.mubr.bf16.gmra.mxu0 %v1923
        %v1983 = vpop.f32.mrf.mxu0
        %v1984 = vadd.f32 0.0, %v1983
        %v1985 = vpop.f32.mrf.mxu0
        %v1986 = vpop.f32.mrf.mxu0
        %v1987 = vadd.f32 0.0, %v1986
        %v1988 = vpop.f32.mrf.mxu0
        %1989 = vdwg.mxu0
        %v1990 = vadd.f32 %v1778, %v1960
        %v1991 = vadd.f32 %v1779, %v1963
        %v1992 = vadd.f32 %v1780, %v1968
        %v1993 = vadd.f32 %v1781, %v1971
        %v1994 = vadd.f32 %v1782, %v1976
        %v1995 = vadd.f32 %v1783, %v1979
        %v1996 = vadd.f32 %v1784, %v1984
        %v1997 = vadd.f32 %v1785, %v1987
        %s1998 = scalar_lea.vmem %s3, 320
        %v1999 = vld [vmem:[%s1998] sm:$0xff]
        %v2000 = vld [vmem:[%s1998 + $0x8] sm:$0xff]
        %v2001 = vld [vmem:[%s1998 + $0x10] sm:$0xff]
        %v2002 = vld [vmem:[%s1998 + $0x18] sm:$0xff]
        %v2003 = vld [vmem:[%s1998 + $0x20] sm:$0xff]
        %v2004 = vld [vmem:[%s1998 + $0x28] sm:$0xff]
        %v2005 = vld [vmem:[%s1998 + $0x30] sm:$0xff]
        %v2006 = vld [vmem:[%s1998 + $0x38] sm:$0xff]
        %v2015 = vunpack.c.l.b16 %v1999
        %v2016 = vunpack.c.h.b16 %v1999
        %v2017 = vunpack.c.l.b16 %v2000
        %v2018 = vunpack.c.h.b16 %v2000
        %v2019 = vunpack.c.l.b16 %v2001
        %v2020 = vunpack.c.h.b16 %v2001
        %v2021 = vunpack.c.l.b16 %v2002
        %v2022 = vunpack.c.h.b16 %v2002
        %v2023 = vunpack.c.l.b16 %v2003
        %v2024 = vunpack.c.h.b16 %v2003
        %v2025 = vunpack.c.l.b16 %v2004
        %v2026 = vunpack.c.h.b16 %v2004
        %v2027 = vunpack.c.l.b16 %v2005
        %v2028 = vunpack.c.h.b16 %v2005
        %v2029 = vunpack.c.l.b16 %v2006
        %v2030 = vunpack.c.h.b16 %v2006
        %v2031 = vpack.c.b16 %v2017, %v2015
        %v2032 = vpack.c.b16 %v2018, %v2016
        %v2033 = vpack.c.b16 %v2021, %v2019
        %v2034 = vpack.c.b16 %v2022, %v2020
        %v2035 = vpack.c.b16 %v2025, %v2023
        %v2036 = vpack.c.b16 %v2026, %v2024
        %v2037 = vpack.c.b16 %v2029, %v2027
        %v2038 = vpack.c.b16 %v2030, %v2028
        %2047 = vmatprep.subr.bf16.mxu0 0
        %2048 = vmatpush1.bf16.msra.mxu0 %v978
        %2049 = vmatprep.subr.bf16.mxu0 0
        %2050 = vmatpush1.bf16.msra.mxu0 %v977
        %2051 = vmatprep.subr.bf16.mxu0 0
        %2052 = vmatpush1.bf16.msra.mxu0 %v976
        %2053 = vmatprep.subr.bf16.mxu0 0
        %2054 = vmatpush1.bf16.msra.mxu0 %v975
        %2055 = vmatprep.subr.bf16.mxu0 0
        %2056 = vmatpush1.bf16.msra.mxu0 %v974
        %2057 = vmatprep.subr.bf16.mxu0 0
        %2058 = vmatpush1.bf16.msra.mxu0 %v973
        %2059 = vmatprep.subr.bf16.mxu0 0
        %2060 = vmatpush1.bf16.msra.mxu0 %v972
        %2061 = vmatprep.subr.bf16.mxu0 0
        %2062 = vmatpush1.bf16.msra.mxu0 %v971
        %2063 = vmatprep.subr.bf16.mxu0 0
        %2064 = vmatpush2.bf16.msra.mxu0 %v986
        %2065 = vmatprep.subr.bf16.mxu0 0
        %2066 = vmatpush2.bf16.msra.mxu0 %v985
        %2067 = vmatprep.subr.bf16.mxu0 0
        %2068 = vmatpush2.bf16.msra.mxu0 %v984
        %2069 = vmatprep.subr.bf16.mxu0 0
        %2070 = vmatpush2.bf16.msra.mxu0 %v983
        %2071 = vmatprep.subr.bf16.mxu0 0
        %2072 = vmatpush2.bf16.msra.mxu0 %v982
        %2073 = vmatprep.subr.bf16.mxu0 0
        %2074 = vmatpush2.bf16.msra.mxu0 %v981
        %2075 = vmatprep.subr.bf16.mxu0 0
        %2076 = vmatpush2.bf16.msra.mxu0 %v980
        %2077 = vmatprep.subr.bf16.mxu0 0
        %2078 = vmatpush2.bf16.msra.mxu0 %v979
        %2079 = vmatprep.mubr.bf16.mxu0 %v2032
        %2080 = vmatmul.mubr.bf16.gmra.mxu0 %v2031
        %v2081 = vpop.f32.mrf.mxu0
        %v2082 = vadd.f32 0.0, %v2081
        %v2083 = vpop.f32.mrf.mxu0
        %v2084 = vpop.f32.mrf.mxu0
        %v2085 = vadd.f32 0.0, %v2084
        %v2086 = vpop.f32.mrf.mxu0
        %2087 = vmatprep.mubr.bf16.mxu0 %v2034
        %2088 = vmatmul.mubr.bf16.gmra.mxu0 %v2033
        %v2089 = vpop.f32.mrf.mxu0
        %v2090 = vadd.f32 0.0, %v2089
        %v2091 = vpop.f32.mrf.mxu0
        %v2092 = vpop.f32.mrf.mxu0
        %v2093 = vadd.f32 0.0, %v2092
        %v2094 = vpop.f32.mrf.mxu0
        %2095 = vmatprep.mubr.bf16.mxu0 %v2036
        %2096 = vmatmul.mubr.bf16.gmra.mxu0 %v2035
        %v2097 = vpop.f32.mrf.mxu0
        %v2098 = vadd.f32 0.0, %v2097
        %v2099 = vpop.f32.mrf.mxu0
        %v2100 = vpop.f32.mrf.mxu0
        %v2101 = vadd.f32 0.0, %v2100
        %v2102 = vpop.f32.mrf.mxu0
        %2103 = vmatprep.mubr.bf16.mxu0 %v2038
        %2104 = vmatmul.mubr.bf16.gmra.mxu0 %v2037
        %v2105 = vpop.f32.mrf.mxu0
        %v2106 = vadd.f32 0.0, %v2105
        %v2107 = vpop.f32.mrf.mxu0
        %v2108 = vpop.f32.mrf.mxu0
        %v2109 = vadd.f32 0.0, %v2108
        %v2110 = vpop.f32.mrf.mxu0
        %2111 = vdwg.mxu0
        %v2112 = vpack.c.bf16 %v2085, %v2082
        %v2113 = vpack.c.bf16 %v2093, %v2090
        %v2114 = vpack.c.bf16 %v2101, %v2098
        %v2115 = vpack.c.bf16 %v2109, %v2106
        %s2116 = scalar_lea.vmem [#allocation7], 40
        %v2117 = vld [vmem:[%s2116] sm:$0xf]
        %v2118 = vld [vmem:[%s2116 + $0x4] sm:$0xf]
        %v2121 = vunpack.c.l.b16 %v2117
        %v2122 = vunpack.c.l.b16 %v2118
        %v2123 = vpack.c.b16 %v2122, %v2121
        %v2126 = vsel %vm1201, %v2112, 0
        %v2129 = vsel %vm1201, %v2113, 0
        %v2132 = vsel %vm1201, %v2114, 0
        %v2135 = vsel %vm1201, %v2115, 0
        %2137 = vmatprep.subr.bf16.mxu0 0
        %2138 = vmatpush1.bf16.msra.mxu0 0
        %2139 = vmatprep.subr.bf16.mxu0 0
        %2140 = vmatpush1.bf16.msra.mxu0 0
        %2141 = vmatprep.subr.bf16.mxu0 0
        %2142 = vmatpush1.bf16.msra.mxu0 0
        %2143 = vmatprep.subr.bf16.mxu0 0
        %2144 = vmatpush1.bf16.msra.mxu0 0
        %2145 = vmatprep.subr.bf16.mxu0 0
        %2146 = vmatpush1.bf16.msra.mxu0 0
        %2147 = vmatprep.subr.bf16.mxu0 0
        %2148 = vmatpush1.bf16.msra.mxu0 0
        %2149 = vmatprep.subr.bf16.mxu0 0
        %2150 = vmatpush1.bf16.msra.mxu0 0
        %2151 = vmatprep.subr.bf16.mxu0 0
        %2152 = vmatpush1.bf16.msra.mxu0 %v2123
        %2153 = vmatprep.subr.bf16.mxu0 0
        %2154 = vmatpush2.bf16.msra.mxu0 0
        %2155 = vmatprep.subr.bf16.mxu0 0
        %2156 = vmatpush2.bf16.msra.mxu0 0
        %2157 = vmatprep.subr.bf16.mxu0 0
        %2158 = vmatpush2.bf16.msra.mxu0 0
        %2159 = vmatprep.subr.bf16.mxu0 0
        %2160 = vmatpush2.bf16.msra.mxu0 0
        %2161 = vmatprep.subr.bf16.mxu0 0
        %2162 = vmatpush2.bf16.msra.mxu0 0
        %2163 = vmatprep.subr.bf16.mxu0 0
        %2164 = vmatpush2.bf16.msra.mxu0 0
        %2165 = vmatprep.subr.bf16.mxu0 0
        %2166 = vmatpush2.bf16.msra.mxu0 0
        %2167 = vmatprep.subr.bf16.mxu0 0
        %2168 = vmatpush2.bf16.msra.mxu0 0
        %2169 = vmatprep.mubr.bf16.mxu0 0
        %2170 = vmatmul.mubr.bf16.gmra.mxu0 %v2126
        %v2171 = vpop.f32.mrf.mxu0
        %v2172 = vadd.f32 0.0, %v2171
        %v2173 = vpop.f32.mrf.mxu0
        %v2174 = vpop.f32.mrf.mxu0
        %v2175 = vadd.f32 0.0, %v2174
        %v2176 = vpop.f32.mrf.mxu0
        %2177 = vmatprep.mubr.bf16.mxu0 0
        %2178 = vmatmul.mubr.bf16.gmra.mxu0 %v2129
        %v2179 = vpop.f32.mrf.mxu0
        %v2180 = vadd.f32 0.0, %v2179
        %v2181 = vpop.f32.mrf.mxu0
        %v2182 = vpop.f32.mrf.mxu0
        %v2183 = vadd.f32 0.0, %v2182
        %v2184 = vpop.f32.mrf.mxu0
        %2185 = vmatprep.mubr.bf16.mxu0 0
        %2186 = vmatmul.mubr.bf16.gmra.mxu0 %v2132
        %v2187 = vpop.f32.mrf.mxu0
        %v2188 = vadd.f32 0.0, %v2187
        %v2189 = vpop.f32.mrf.mxu0
        %v2190 = vpop.f32.mrf.mxu0
        %v2191 = vadd.f32 0.0, %v2190
        %v2192 = vpop.f32.mrf.mxu0
        %2193 = vmatprep.mubr.bf16.mxu0 0
        %2194 = vmatmul.mubr.bf16.gmra.mxu0 %v2135
        %v2195 = vpop.f32.mrf.mxu0
        %v2196 = vadd.f32 0.0, %v2195
        %v2197 = vpop.f32.mrf.mxu0
        %v2198 = vpop.f32.mrf.mxu0
        %v2199 = vadd.f32 0.0, %v2198
        %v2200 = vpop.f32.mrf.mxu0
        %2201 = vdwg.mxu0
        %v2202 = vadd.f32 %v1990, %v2172
        %v2203 = vadd.f32 %v1991, %v2175
        %v2204 = vadd.f32 %v1992, %v2180
        %v2205 = vadd.f32 %v1993, %v2183
        %v2206 = vadd.f32 %v1994, %v2188
        %v2207 = vadd.f32 %v1995, %v2191
        %v2208 = vadd.f32 %v1996, %v2196
        %v2209 = vadd.f32 %v1997, %v2199
        %s2210 = scalar_lea.vmem %s3, 384
        %v2211 = vld [vmem:[%s2210] sm:$0xff]
        %v2212 = vld [vmem:[%s2210 + $0x8] sm:$0xff]
        %v2213 = vld [vmem:[%s2210 + $0x10] sm:$0xff]
        %v2214 = vld [vmem:[%s2210 + $0x18] sm:$0xff]
        %v2215 = vld [vmem:[%s2210 + $0x20] sm:$0xff]
        %v2216 = vld [vmem:[%s2210 + $0x28] sm:$0xff]
        %v2217 = vld [vmem:[%s2210 + $0x30] sm:$0xff]
        %v2218 = vld [vmem:[%s2210 + $0x38] sm:$0xff]
        %v2227 = vunpack.c.l.b16 %v2211
        %v2228 = vunpack.c.h.b16 %v2211
        %v2229 = vunpack.c.l.b16 %v2212
        %v2230 = vunpack.c.h.b16 %v2212
        %v2231 = vunpack.c.l.b16 %v2213
        %v2232 = vunpack.c.h.b16 %v2213
        %v2233 = vunpack.c.l.b16 %v2214
        %v2234 = vunpack.c.h.b16 %v2214
        %v2235 = vunpack.c.l.b16 %v2215
        %v2236 = vunpack.c.h.b16 %v2215
        %v2237 = vunpack.c.l.b16 %v2216
        %v2238 = vunpack.c.h.b16 %v2216
        %v2239 = vunpack.c.l.b16 %v2217
        %v2240 = vunpack.c.h.b16 %v2217
        %v2241 = vunpack.c.l.b16 %v2218
        %v2242 = vunpack.c.h.b16 %v2218
        %v2243 = vpack.c.b16 %v2229, %v2227
        %v2244 = vpack.c.b16 %v2230, %v2228
        %v2245 = vpack.c.b16 %v2233, %v2231
        %v2246 = vpack.c.b16 %v2234, %v2232
        %v2247 = vpack.c.b16 %v2237, %v2235
        %v2248 = vpack.c.b16 %v2238, %v2236
        %v2249 = vpack.c.b16 %v2241, %v2239
        %v2250 = vpack.c.b16 %v2242, %v2240
        %2259 = vmatprep.subr.bf16.mxu0 0
        %2260 = vmatpush1.bf16.msra.mxu0 %v978
        %2261 = vmatprep.subr.bf16.mxu0 0
        %2262 = vmatpush1.bf16.msra.mxu0 %v977
        %2263 = vmatprep.subr.bf16.mxu0 0
        %2264 = vmatpush1.bf16.msra.mxu0 %v976
        %2265 = vmatprep.subr.bf16.mxu0 0
        %2266 = vmatpush1.bf16.msra.mxu0 %v975
        %2267 = vmatprep.subr.bf16.mxu0 0
        %2268 = vmatpush1.bf16.msra.mxu0 %v974
        %2269 = vmatprep.subr.bf16.mxu0 0
        %2270 = vmatpush1.bf16.msra.mxu0 %v973
        %2271 = vmatprep.subr.bf16.mxu0 0
        %2272 = vmatpush1.bf16.msra.mxu0 %v972
        %2273 = vmatprep.subr.bf16.mxu0 0
        %2274 = vmatpush1.bf16.msra.mxu0 %v971
        %2275 = vmatprep.subr.bf16.mxu0 0
        %2276 = vmatpush2.bf16.msra.mxu0 %v986
        %2277 = vmatprep.subr.bf16.mxu0 0
        %2278 = vmatpush2.bf16.msra.mxu0 %v985
        %2279 = vmatprep.subr.bf16.mxu0 0
        %2280 = vmatpush2.bf16.msra.mxu0 %v984
        %2281 = vmatprep.subr.bf16.mxu0 0
        %2282 = vmatpush2.bf16.msra.mxu0 %v983
        %2283 = vmatprep.subr.bf16.mxu0 0
        %2284 = vmatpush2.bf16.msra.mxu0 %v982
        %2285 = vmatprep.subr.bf16.mxu0 0
        %2286 = vmatpush2.bf16.msra.mxu0 %v981
        %2287 = vmatprep.subr.bf16.mxu0 0
        %2288 = vmatpush2.bf16.msra.mxu0 %v980
        %2289 = vmatprep.subr.bf16.mxu0 0
        %2290 = vmatpush2.bf16.msra.mxu0 %v979
        %2291 = vmatprep.mubr.bf16.mxu0 %v2244
        %2292 = vmatmul.mubr.bf16.gmra.mxu0 %v2243
        %v2293 = vpop.f32.mrf.mxu0
        %v2294 = vadd.f32 0.0, %v2293
        %v2295 = vpop.f32.mrf.mxu0
        %v2296 = vpop.f32.mrf.mxu0
        %v2297 = vadd.f32 0.0, %v2296
        %v2298 = vpop.f32.mrf.mxu0
        %2299 = vmatprep.mubr.bf16.mxu0 %v2246
        %2300 = vmatmul.mubr.bf16.gmra.mxu0 %v2245
        %v2301 = vpop.f32.mrf.mxu0
        %v2302 = vadd.f32 0.0, %v2301
        %v2303 = vpop.f32.mrf.mxu0
        %v2304 = vpop.f32.mrf.mxu0
        %v2305 = vadd.f32 0.0, %v2304
        %v2306 = vpop.f32.mrf.mxu0
        %2307 = vmatprep.mubr.bf16.mxu0 %v2248
        %2308 = vmatmul.mubr.bf16.gmra.mxu0 %v2247
        %v2309 = vpop.f32.mrf.mxu0
        %v2310 = vadd.f32 0.0, %v2309
        %v2311 = vpop.f32.mrf.mxu0
        %v2312 = vpop.f32.mrf.mxu0
        %v2313 = vadd.f32 0.0, %v2312
        %v2314 = vpop.f32.mrf.mxu0
        %2315 = vmatprep.mubr.bf16.mxu0 %v2250
        %2316 = vmatmul.mubr.bf16.gmra.mxu0 %v2249
        %v2317 = vpop.f32.mrf.mxu0
        %v2318 = vadd.f32 0.0, %v2317
        %v2319 = vpop.f32.mrf.mxu0
        %v2320 = vpop.f32.mrf.mxu0
        %v2321 = vadd.f32 0.0, %v2320
        %v2322 = vpop.f32.mrf.mxu0
        %2323 = vdwg.mxu0
        %v2324 = vpack.c.bf16 %v2297, %v2294
        %v2325 = vpack.c.bf16 %v2305, %v2302
        %v2326 = vpack.c.bf16 %v2313, %v2310
        %v2327 = vpack.c.bf16 %v2321, %v2318
        %s2328 = scalar_lea.vmem [#allocation7], 48
        %v2329 = vld [vmem:[%s2328] sm:$0xf]
        %v2330 = vld [vmem:[%s2328 + $0x4] sm:$0xf]
        %v2333 = vunpack.c.l.b16 %v2329
        %v2334 = vunpack.c.l.b16 %v2330
        %v2335 = vpack.c.b16 %v2334, %v2333
        %v2338 = vsel %vm1201, %v2324, 0
        %v2341 = vsel %vm1201, %v2325, 0
        %v2344 = vsel %vm1201, %v2326, 0
        %v2347 = vsel %vm1201, %v2327, 0
        %2349 = vmatprep.subr.bf16.mxu0 0
        %2350 = vmatpush1.bf16.msra.mxu0 0
        %2351 = vmatprep.subr.bf16.mxu0 0
        %2352 = vmatpush1.bf16.msra.mxu0 0
        %2353 = vmatprep.subr.bf16.mxu0 0
        %2354 = vmatpush1.bf16.msra.mxu0 0
        %2355 = vmatprep.subr.bf16.mxu0 0
        %2356 = vmatpush1.bf16.msra.mxu0 0
        %2357 = vmatprep.subr.bf16.mxu0 0
        %2358 = vmatpush1.bf16.msra.mxu0 0
        %2359 = vmatprep.subr.bf16.mxu0 0
        %2360 = vmatpush1.bf16.msra.mxu0 0
        %2361 = vmatprep.subr.bf16.mxu0 0
        %2362 = vmatpush1.bf16.msra.mxu0 0
        %2363 = vmatprep.subr.bf16.mxu0 0
        %2364 = vmatpush1.bf16.msra.mxu0 %v2335
        %2365 = vmatprep.subr.bf16.mxu0 0
        %2366 = vmatpush2.bf16.msra.mxu0 0
        %2367 = vmatprep.subr.bf16.mxu0 0
        %2368 = vmatpush2.bf16.msra.mxu0 0
        %2369 = vmatprep.subr.bf16.mxu0 0
        %2370 = vmatpush2.bf16.msra.mxu0 0
        %2371 = vmatprep.subr.bf16.mxu0 0
        %2372 = vmatpush2.bf16.msra.mxu0 0
        %2373 = vmatprep.subr.bf16.mxu0 0
        %2374 = vmatpush2.bf16.msra.mxu0 0
        %2375 = vmatprep.subr.bf16.mxu0 0
        %2376 = vmatpush2.bf16.msra.mxu0 0
        %2377 = vmatprep.subr.bf16.mxu0 0
        %2378 = vmatpush2.bf16.msra.mxu0 0
        %2379 = vmatprep.subr.bf16.mxu0 0
        %2380 = vmatpush2.bf16.msra.mxu0 0
        %2381 = vmatprep.mubr.bf16.mxu0 0
        %2382 = vmatmul.mubr.bf16.gmra.mxu0 %v2338
        %v2383 = vpop.f32.mrf.mxu0
        %v2384 = vadd.f32 0.0, %v2383
        %v2385 = vpop.f32.mrf.mxu0
        %v2386 = vpop.f32.mrf.mxu0
        %v2387 = vadd.f32 0.0, %v2386
        %v2388 = vpop.f32.mrf.mxu0
        %2389 = vmatprep.mubr.bf16.mxu0 0
        %2390 = vmatmul.mubr.bf16.gmra.mxu0 %v2341
        %v2391 = vpop.f32.mrf.mxu0
        %v2392 = vadd.f32 0.0, %v2391
        %v2393 = vpop.f32.mrf.mxu0
        %v2394 = vpop.f32.mrf.mxu0
        %v2395 = vadd.f32 0.0, %v2394
        %v2396 = vpop.f32.mrf.mxu0
        %2397 = vmatprep.mubr.bf16.mxu0 0
        %2398 = vmatmul.mubr.bf16.gmra.mxu0 %v2344
        %v2399 = vpop.f32.mrf.mxu0
        %v2400 = vadd.f32 0.0, %v2399
        %v2401 = vpop.f32.mrf.mxu0
        %v2402 = vpop.f32.mrf.mxu0
        %v2403 = vadd.f32 0.0, %v2402
        %v2404 = vpop.f32.mrf.mxu0
        %2405 = vmatprep.mubr.bf16.mxu0 0
        %2406 = vmatmul.mubr.bf16.gmra.mxu0 %v2347
        %v2407 = vpop.f32.mrf.mxu0
        %v2408 = vadd.f32 0.0, %v2407
        %v2409 = vpop.f32.mrf.mxu0
        %v2410 = vpop.f32.mrf.mxu0
        %v2411 = vadd.f32 0.0, %v2410
        %v2412 = vpop.f32.mrf.mxu0
        %2413 = vdwg.mxu0
        %v2414 = vadd.f32 %v2202, %v2384
        %v2415 = vadd.f32 %v2203, %v2387
        %v2416 = vadd.f32 %v2204, %v2392
        %v2417 = vadd.f32 %v2205, %v2395
        %v2418 = vadd.f32 %v2206, %v2400
        %v2419 = vadd.f32 %v2207, %v2403
        %v2420 = vadd.f32 %v2208, %v2408
        %v2421 = vadd.f32 %v2209, %v2411
        %s2422 = scalar_lea.vmem %s3, 448
        %v2423 = vld [vmem:[%s2422] sm:$0xff]
        %v2424 = vld [vmem:[%s2422 + $0x8] sm:$0xff]
        %v2425 = vld [vmem:[%s2422 + $0x10] sm:$0xff]
        %v2426 = vld [vmem:[%s2422 + $0x18] sm:$0xff]
        %v2427 = vld [vmem:[%s2422 + $0x20] sm:$0xff]
        %v2428 = vld [vmem:[%s2422 + $0x28] sm:$0xff]
        %v2429 = vld [vmem:[%s2422 + $0x30] sm:$0xff]
        %v2430 = vld [vmem:[%s2422 + $0x38] sm:$0xff]
        %v2439 = vunpack.c.l.b16 %v2423
        %v2440 = vunpack.c.h.b16 %v2423
        %v2441 = vunpack.c.l.b16 %v2424
        %v2442 = vunpack.c.h.b16 %v2424
        %v2443 = vunpack.c.l.b16 %v2425
        %v2444 = vunpack.c.h.b16 %v2425
        %v2445 = vunpack.c.l.b16 %v2426
        %v2446 = vunpack.c.h.b16 %v2426
        %v2447 = vunpack.c.l.b16 %v2427
        %v2448 = vunpack.c.h.b16 %v2427
        %v2449 = vunpack.c.l.b16 %v2428
        %v2450 = vunpack.c.h.b16 %v2428
        %v2451 = vunpack.c.l.b16 %v2429
        %v2452 = vunpack.c.h.b16 %v2429
        %v2453 = vunpack.c.l.b16 %v2430
        %v2454 = vunpack.c.h.b16 %v2430
        %v2455 = vpack.c.b16 %v2441, %v2439
        %v2456 = vpack.c.b16 %v2442, %v2440
        %v2457 = vpack.c.b16 %v2445, %v2443
        %v2458 = vpack.c.b16 %v2446, %v2444
        %v2459 = vpack.c.b16 %v2449, %v2447
        %v2460 = vpack.c.b16 %v2450, %v2448
        %v2461 = vpack.c.b16 %v2453, %v2451
        %v2462 = vpack.c.b16 %v2454, %v2452
        %2471 = vmatprep.subr.bf16.mxu0 0
        %2472 = vmatpush1.bf16.msra.mxu0 %v978
        %2473 = vmatprep.subr.bf16.mxu0 0
        %2474 = vmatpush1.bf16.msra.mxu0 %v977
        %2475 = vmatprep.subr.bf16.mxu0 0
        %2476 = vmatpush1.bf16.msra.mxu0 %v976
        %2477 = vmatprep.subr.bf16.mxu0 0
        %2478 = vmatpush1.bf16.msra.mxu0 %v975
        %2479 = vmatprep.subr.bf16.mxu0 0
        %2480 = vmatpush1.bf16.msra.mxu0 %v974
        %2481 = vmatprep.subr.bf16.mxu0 0
        %2482 = vmatpush1.bf16.msra.mxu0 %v973
        %2483 = vmatprep.subr.bf16.mxu0 0
        %2484 = vmatpush1.bf16.msra.mxu0 %v972
        %2485 = vmatprep.subr.bf16.mxu0 0
        %2486 = vmatpush1.bf16.msra.mxu0 %v971
        %2487 = vmatprep.subr.bf16.mxu0 0
        %2488 = vmatpush2.bf16.msra.mxu0 %v986
        %2489 = vmatprep.subr.bf16.mxu0 0
        %2490 = vmatpush2.bf16.msra.mxu0 %v985
        %2491 = vmatprep.subr.bf16.mxu0 0
        %2492 = vmatpush2.bf16.msra.mxu0 %v984
        %2493 = vmatprep.subr.bf16.mxu0 0
        %2494 = vmatpush2.bf16.msra.mxu0 %v983
        %2495 = vmatprep.subr.bf16.mxu0 0
        %2496 = vmatpush2.bf16.msra.mxu0 %v982
        %2497 = vmatprep.subr.bf16.mxu0 0
        %2498 = vmatpush2.bf16.msra.mxu0 %v981
        %2499 = vmatprep.subr.bf16.mxu0 0
        %2500 = vmatpush2.bf16.msra.mxu0 %v980
        %2501 = vmatprep.subr.bf16.mxu0 0
        %2502 = vmatpush2.bf16.msra.mxu0 %v979
        %2503 = vmatprep.mubr.bf16.mxu0 %v2456
        %2504 = vmatmul.mubr.bf16.gmra.mxu0 %v2455
        %v2505 = vpop.f32.mrf.mxu0
        %v2506 = vadd.f32 0.0, %v2505
        %v2507 = vpop.f32.mrf.mxu0
        %v2508 = vpop.f32.mrf.mxu0
        %v2509 = vadd.f32 0.0, %v2508
        %v2510 = vpop.f32.mrf.mxu0
        %2511 = vmatprep.mubr.bf16.mxu0 %v2458
        %2512 = vmatmul.mubr.bf16.gmra.mxu0 %v2457
        %v2513 = vpop.f32.mrf.mxu0
        %v2514 = vadd.f32 0.0, %v2513
        %v2515 = vpop.f32.mrf.mxu0
        %v2516 = vpop.f32.mrf.mxu0
        %v2517 = vadd.f32 0.0, %v2516
        %v2518 = vpop.f32.mrf.mxu0
        %2519 = vmatprep.mubr.bf16.mxu0 %v2460
        %2520 = vmatmul.mubr.bf16.gmra.mxu0 %v2459
        %v2521 = vpop.f32.mrf.mxu0
        %v2522 = vadd.f32 0.0, %v2521
        %v2523 = vpop.f32.mrf.mxu0
        %v2524 = vpop.f32.mrf.mxu0
        %v2525 = vadd.f32 0.0, %v2524
        %v2526 = vpop.f32.mrf.mxu0
        %2527 = vmatprep.mubr.bf16.mxu0 %v2462
        %2528 = vmatmul.mubr.bf16.gmra.mxu0 %v2461
        %v2529 = vpop.f32.mrf.mxu0
        %v2530 = vadd.f32 0.0, %v2529
        %v2531 = vpop.f32.mrf.mxu0
        %v2532 = vpop.f32.mrf.mxu0
        %v2533 = vadd.f32 0.0, %v2532
        %v2534 = vpop.f32.mrf.mxu0
        %2535 = vdwg.mxu0
        %v2536 = vpack.c.bf16 %v2509, %v2506
        %v2537 = vpack.c.bf16 %v2517, %v2514
        %v2538 = vpack.c.bf16 %v2525, %v2522
        %v2539 = vpack.c.bf16 %v2533, %v2530
        %s2540 = scalar_lea.vmem [#allocation7], 56
        %v2541 = vld [vmem:[%s2540] sm:$0xf]
        %v2542 = vld [vmem:[%s2540 + $0x4] sm:$0xf]
        %v2545 = vunpack.c.l.b16 %v2541
        %v2546 = vunpack.c.l.b16 %v2542
        %v2547 = vpack.c.b16 %v2546, %v2545
        %v2550 = vsel %vm1201, %v2536, 0
        %v2553 = vsel %vm1201, %v2537, 0
        %v2556 = vsel %vm1201, %v2538, 0
        %v2559 = vsel %vm1201, %v2539, 0
        %2561 = vmatprep.subr.bf16.mxu0 0
        %2562 = vmatpush1.bf16.msra.mxu0 0
        %2563 = vmatprep.subr.bf16.mxu0 0
        %2564 = vmatpush1.bf16.msra.mxu0 0
        %2565 = vmatprep.subr.bf16.mxu0 0
        %2566 = vmatpush1.bf16.msra.mxu0 0
        %2567 = vmatprep.subr.bf16.mxu0 0
        %2568 = vmatpush1.bf16.msra.mxu0 0
        %2569 = vmatprep.subr.bf16.mxu0 0
        %2570 = vmatpush1.bf16.msra.mxu0 0
        %2571 = vmatprep.subr.bf16.mxu0 0
        %2572 = vmatpush1.bf16.msra.mxu0 0
        %2573 = vmatprep.subr.bf16.mxu0 0
        %2574 = vmatpush1.bf16.msra.mxu0 0
        %2575 = vmatprep.subr.bf16.mxu0 0
        %2576 = vmatpush1.bf16.msra.mxu0 %v2547
        %2577 = vmatprep.subr.bf16.mxu0 0
        %2578 = vmatpush2.bf16.msra.mxu0 0
        %2579 = vmatprep.subr.bf16.mxu0 0
        %2580 = vmatpush2.bf16.msra.mxu0 0
        %2581 = vmatprep.subr.bf16.mxu0 0
        %2582 = vmatpush2.bf16.msra.mxu0 0
        %2583 = vmatprep.subr.bf16.mxu0 0
        %2584 = vmatpush2.bf16.msra.mxu0 0
        %2585 = vmatprep.subr.bf16.mxu0 0
        %2586 = vmatpush2.bf16.msra.mxu0 0
        %2587 = vmatprep.subr.bf16.mxu0 0
        %2588 = vmatpush2.bf16.msra.mxu0 0
        %2589 = vmatprep.subr.bf16.mxu0 0
        %2590 = vmatpush2.bf16.msra.mxu0 0
        %2591 = vmatprep.subr.bf16.mxu0 0
        %2592 = vmatpush2.bf16.msra.mxu0 0
        %2593 = vmatprep.mubr.bf16.mxu0 0
        %2594 = vmatmul.mubr.bf16.gmra.mxu0 %v2550
        %v2595 = vpop.f32.mrf.mxu0
        %v2596 = vadd.f32 0.0, %v2595
        %v2597 = vpop.f32.mrf.mxu0
        %v2598 = vpop.f32.mrf.mxu0
        %v2599 = vadd.f32 0.0, %v2598
        %v2600 = vpop.f32.mrf.mxu0
        %2601 = vmatprep.mubr.bf16.mxu0 0
        %2602 = vmatmul.mubr.bf16.gmra.mxu0 %v2553
        %v2603 = vpop.f32.mrf.mxu0
        %v2604 = vadd.f32 0.0, %v2603
        %v2605 = vpop.f32.mrf.mxu0
        %v2606 = vpop.f32.mrf.mxu0
        %v2607 = vadd.f32 0.0, %v2606
        %v2608 = vpop.f32.mrf.mxu0
        %2609 = vmatprep.mubr.bf16.mxu0 0
        %2610 = vmatmul.mubr.bf16.gmra.mxu0 %v2556
        %v2611 = vpop.f32.mrf.mxu0
        %v2612 = vadd.f32 0.0, %v2611
        %v2613 = vpop.f32.mrf.mxu0
        %v2614 = vpop.f32.mrf.mxu0
        %v2615 = vadd.f32 0.0, %v2614
        %v2616 = vpop.f32.mrf.mxu0
        %2617 = vmatprep.mubr.bf16.mxu0 0
        %2618 = vmatmul.mubr.bf16.gmra.mxu0 %v2559
        %v2619 = vpop.f32.mrf.mxu0
        %v2620 = vadd.f32 0.0, %v2619
        %v2621 = vpop.f32.mrf.mxu0
        %v2622 = vpop.f32.mrf.mxu0
        %v2623 = vadd.f32 0.0, %v2622
        %v2624 = vpop.f32.mrf.mxu0
        %2625 = vdwg.mxu0
        %v2626 = vadd.f32 %v2414, %v2596
        %v2627 = vadd.f32 %v2415, %v2599
        %v2628 = vadd.f32 %v2416, %v2604
        %v2629 = vadd.f32 %v2417, %v2607
        %v2630 = vadd.f32 %v2418, %v2612
        %v2631 = vadd.f32 %v2419, %v2615
        %v2632 = vadd.f32 %v2420, %v2620
        %v2633 = vadd.f32 %v2421, %v2623
        %s2634 = scalar_lea.vmem %s3, 512
        %v2635 = vld [vmem:[%s2634] sm:$0xff]
        %v2636 = vld [vmem:[%s2634 + $0x8] sm:$0xff]
        %v2637 = vld [vmem:[%s2634 + $0x10] sm:$0xff]
        %v2638 = vld [vmem:[%s2634 + $0x18] sm:$0xff]
        %v2639 = vld [vmem:[%s2634 + $0x20] sm:$0xff]
        %v2640 = vld [vmem:[%s2634 + $0x28] sm:$0xff]
        %v2641 = vld [vmem:[%s2634 + $0x30] sm:$0xff]
        %v2642 = vld [vmem:[%s2634 + $0x38] sm:$0xff]
        %v2651 = vunpack.c.l.b16 %v2635
        %v2652 = vunpack.c.h.b16 %v2635
        %v2653 = vunpack.c.l.b16 %v2636
        %v2654 = vunpack.c.h.b16 %v2636
        %v2655 = vunpack.c.l.b16 %v2637
        %v2656 = vunpack.c.h.b16 %v2637
        %v2657 = vunpack.c.l.b16 %v2638
        %v2658 = vunpack.c.h.b16 %v2638
        %v2659 = vunpack.c.l.b16 %v2639
        %v2660 = vunpack.c.h.b16 %v2639
        %v2661 = vunpack.c.l.b16 %v2640
        %v2662 = vunpack.c.h.b16 %v2640
        %v2663 = vunpack.c.l.b16 %v2641
        %v2664 = vunpack.c.h.b16 %v2641
        %v2665 = vunpack.c.l.b16 %v2642
        %v2666 = vunpack.c.h.b16 %v2642
        %v2667 = vpack.c.b16 %v2653, %v2651
        %v2668 = vpack.c.b16 %v2654, %v2652
        %v2669 = vpack.c.b16 %v2657, %v2655
        %v2670 = vpack.c.b16 %v2658, %v2656
        %v2671 = vpack.c.b16 %v2661, %v2659
        %v2672 = vpack.c.b16 %v2662, %v2660
        %v2673 = vpack.c.b16 %v2665, %v2663
        %v2674 = vpack.c.b16 %v2666, %v2664
        %2683 = vmatprep.subr.bf16.mxu0 0
        %2684 = vmatpush1.bf16.msra.mxu0 %v978
        %2685 = vmatprep.subr.bf16.mxu0 0
        %2686 = vmatpush1.bf16.msra.mxu0 %v977
        %2687 = vmatprep.subr.bf16.mxu0 0
        %2688 = vmatpush1.bf16.msra.mxu0 %v976
        %2689 = vmatprep.subr.bf16.mxu0 0
        %2690 = vmatpush1.bf16.msra.mxu0 %v975
        %2691 = vmatprep.subr.bf16.mxu0 0
        %2692 = vmatpush1.bf16.msra.mxu0 %v974
        %2693 = vmatprep.subr.bf16.mxu0 0
        %2694 = vmatpush1.bf16.msra.mxu0 %v973
        %2695 = vmatprep.subr.bf16.mxu0 0
        %2696 = vmatpush1.bf16.msra.mxu0 %v972
        %2697 = vmatprep.subr.bf16.mxu0 0
        %2698 = vmatpush1.bf16.msra.mxu0 %v971
        %2699 = vmatprep.subr.bf16.mxu0 0
        %2700 = vmatpush2.bf16.msra.mxu0 %v986
        %2701 = vmatprep.subr.bf16.mxu0 0
        %2702 = vmatpush2.bf16.msra.mxu0 %v985
        %2703 = vmatprep.subr.bf16.mxu0 0
        %2704 = vmatpush2.bf16.msra.mxu0 %v984
        %2705 = vmatprep.subr.bf16.mxu0 0
        %2706 = vmatpush2.bf16.msra.mxu0 %v983
        %2707 = vmatprep.subr.bf16.mxu0 0
        %2708 = vmatpush2.bf16.msra.mxu0 %v982
        %2709 = vmatprep.subr.bf16.mxu0 0
        %2710 = vmatpush2.bf16.msra.mxu0 %v981
        %2711 = vmatprep.subr.bf16.mxu0 0
        %2712 = vmatpush2.bf16.msra.mxu0 %v980
        %2713 = vmatprep.subr.bf16.mxu0 0
        %2714 = vmatpush2.bf16.msra.mxu0 %v979
        %2715 = vmatprep.mubr.bf16.mxu0 %v2668
        %2716 = vmatmul.mubr.bf16.gmra.mxu0 %v2667
        %v2717 = vpop.f32.mrf.mxu0
        %v2718 = vadd.f32 0.0, %v2717
        %v2719 = vpop.f32.mrf.mxu0
        %v2720 = vpop.f32.mrf.mxu0
        %v2721 = vadd.f32 0.0, %v2720
        %v2722 = vpop.f32.mrf.mxu0
        %2723 = vmatprep.mubr.bf16.mxu0 %v2670
        %2724 = vmatmul.mubr.bf16.gmra.mxu0 %v2669
        %v2725 = vpop.f32.mrf.mxu0
        %v2726 = vadd.f32 0.0, %v2725
        %v2727 = vpop.f32.mrf.mxu0
        %v2728 = vpop.f32.mrf.mxu0
        %v2729 = vadd.f32 0.0, %v2728
        %v2730 = vpop.f32.mrf.mxu0
        %2731 = vmatprep.mubr.bf16.mxu0 %v2672
        %2732 = vmatmul.mubr.bf16.gmra.mxu0 %v2671
        %v2733 = vpop.f32.mrf.mxu0
        %v2734 = vadd.f32 0.0, %v2733
        %v2735 = vpop.f32.mrf.mxu0
        %v2736 = vpop.f32.mrf.mxu0
        %v2737 = vadd.f32 0.0, %v2736
        %v2738 = vpop.f32.mrf.mxu0
        %2739 = vmatprep.mubr.bf16.mxu0 %v2674
        %2740 = vmatmul.mubr.bf16.gmra.mxu0 %v2673
        %v2741 = vpop.f32.mrf.mxu0
        %v2742 = vadd.f32 0.0, %v2741
        %v2743 = vpop.f32.mrf.mxu0
        %v2744 = vpop.f32.mrf.mxu0
        %v2745 = vadd.f32 0.0, %v2744
        %v2746 = vpop.f32.mrf.mxu0
        %2747 = vdwg.mxu0
        %v2748 = vpack.c.bf16 %v2721, %v2718
        %v2749 = vpack.c.bf16 %v2729, %v2726
        %v2750 = vpack.c.bf16 %v2737, %v2734
        %v2751 = vpack.c.bf16 %v2745, %v2742
        %s2752 = scalar_lea.vmem [#allocation7], 64
        %v2753 = vld [vmem:[%s2752] sm:$0xf]
        %v2754 = vld [vmem:[%s2752 + $0x4] sm:$0xf]
        %v2757 = vunpack.c.l.b16 %v2753
        %v2758 = vunpack.c.l.b16 %v2754
        %v2759 = vpack.c.b16 %v2758, %v2757
        %v2762 = vsel %vm1201, %v2748, 0
        %v2765 = vsel %vm1201, %v2749, 0
        %v2768 = vsel %vm1201, %v2750, 0
        %v2771 = vsel %vm1201, %v2751, 0
        %2773 = vmatprep.subr.bf16.mxu0 0
        %2774 = vmatpush1.bf16.msra.mxu0 0
        %2775 = vmatprep.subr.bf16.mxu0 0
        %2776 = vmatpush1.bf16.msra.mxu0 0
        %2777 = vmatprep.subr.bf16.mxu0 0
        %2778 = vmatpush1.bf16.msra.mxu0 0
        %2779 = vmatprep.subr.bf16.mxu0 0
        %2780 = vmatpush1.bf16.msra.mxu0 0
        %2781 = vmatprep.subr.bf16.mxu0 0
        %2782 = vmatpush1.bf16.msra.mxu0 0
        %2783 = vmatprep.subr.bf16.mxu0 0
        %2784 = vmatpush1.bf16.msra.mxu0 0
        %2785 = vmatprep.subr.bf16.mxu0 0
        %2786 = vmatpush1.bf16.msra.mxu0 0
        %2787 = vmatprep.subr.bf16.mxu0 0
        %2788 = vmatpush1.bf16.msra.mxu0 %v2759
        %2789 = vmatprep.subr.bf16.mxu0 0
        %2790 = vmatpush2.bf16.msra.mxu0 0
        %2791 = vmatprep.subr.bf16.mxu0 0
        %2792 = vmatpush2.bf16.msra.mxu0 0
        %2793 = vmatprep.subr.bf16.mxu0 0
        %2794 = vmatpush2.bf16.msra.mxu0 0
        %2795 = vmatprep.subr.bf16.mxu0 0
        %2796 = vmatpush2.bf16.msra.mxu0 0
        %2797 = vmatprep.subr.bf16.mxu0 0
        %2798 = vmatpush2.bf16.msra.mxu0 0
        %2799 = vmatprep.subr.bf16.mxu0 0
        %2800 = vmatpush2.bf16.msra.mxu0 0
        %2801 = vmatprep.subr.bf16.mxu0 0
        %2802 = vmatpush2.bf16.msra.mxu0 0
        %2803 = vmatprep.subr.bf16.mxu0 0
        %2804 = vmatpush2.bf16.msra.mxu0 0
        %2805 = vmatprep.mubr.bf16.mxu0 0
        %2806 = vmatmul.mubr.bf16.gmra.mxu0 %v2762
        %v2807 = vpop.f32.mrf.mxu0
        %v2808 = vadd.f32 0.0, %v2807
        %v2809 = vpop.f32.mrf.mxu0
        %v2810 = vpop.f32.mrf.mxu0
        %v2811 = vadd.f32 0.0, %v2810
        %v2812 = vpop.f32.mrf.mxu0
        %2813 = vmatprep.mubr.bf16.mxu0 0
        %2814 = vmatmul.mubr.bf16.gmra.mxu0 %v2765
        %v2815 = vpop.f32.mrf.mxu0
        %v2816 = vadd.f32 0.0, %v2815
        %v2817 = vpop.f32.mrf.mxu0
        %v2818 = vpop.f32.mrf.mxu0
        %v2819 = vadd.f32 0.0, %v2818
        %v2820 = vpop.f32.mrf.mxu0
        %2821 = vmatprep.mubr.bf16.mxu0 0
        %2822 = vmatmul.mubr.bf16.gmra.mxu0 %v2768
        %v2823 = vpop.f32.mrf.mxu0
        %v2824 = vadd.f32 0.0, %v2823
        %v2825 = vpop.f32.mrf.mxu0
        %v2826 = vpop.f32.mrf.mxu0
        %v2827 = vadd.f32 0.0, %v2826
        %v2828 = vpop.f32.mrf.mxu0
        %2829 = vmatprep.mubr.bf16.mxu0 0
        %2830 = vmatmul.mubr.bf16.gmra.mxu0 %v2771
        %v2831 = vpop.f32.mrf.mxu0
        %v2832 = vadd.f32 0.0, %v2831
        %v2833 = vpop.f32.mrf.mxu0
        %v2834 = vpop.f32.mrf.mxu0
        %v2835 = vadd.f32 0.0, %v2834
        %v2836 = vpop.f32.mrf.mxu0
        %2837 = vdwg.mxu0
        %v2838 = vadd.f32 %v2626, %v2808
        %v2839 = vadd.f32 %v2627, %v2811
        %v2840 = vadd.f32 %v2628, %v2816
        %v2841 = vadd.f32 %v2629, %v2819
        %v2842 = vadd.f32 %v2630, %v2824
        %v2843 = vadd.f32 %v2631, %v2827
        %v2844 = vadd.f32 %v2632, %v2832
        %v2845 = vadd.f32 %v2633, %v2835
        %v2846 = vmax.f32 %v2838, 0.0
        %v2847 = vmax.f32 %v2839, 0.0
        %v2848 = vmax.f32 %v2840, 0.0
        %v2849 = vmax.f32 %v2841, 0.0
        %v2850 = vmax.f32 %v2842, 0.0
        %v2851 = vmax.f32 %v2843, 0.0
        %v2852 = vmax.f32 %v2844, 0.0
        %v2853 = vmax.f32 %v2845, 0.0
        %v2854 = vld [vmem:[%s820] sm:$0xf]
        %v2855 = vld [vmem:[%s820 + $0x4] sm:$0xf]
        %v2856 = vld [vmem:[%s820 + $0x8] sm:$0xf]
        %v2857 = vld [vmem:[%s820 + $0xc] sm:$0xf]
        %v2858 = vld [vmem:[%s820 + $0x10] sm:$0xf]
        %v2859 = vld [vmem:[%s820 + $0x14] sm:$0xf]
        %v2860 = vld [vmem:[%s820 + $0x18] sm:$0xf]
        %v2861 = vld [vmem:[%s820 + $0x1c] sm:$0xf]
        %v2862 = vld [vmem:[#allocation8] sm:$0xf]
        %v2863 = vld [vmem:[#allocation8 + $0x4] sm:$0xf]
        %v2864 = vld [vmem:[#allocation8 + $0x8] sm:$0xf]
        %v2865 = vld [vmem:[#allocation8 + $0xc] sm:$0xf]
        %v2866 = vld [vmem:[%s9] sm:$0x1]
        %v2868 = vlaneseq
        %v2869 = vshrl.u32 %v2868, 7
        %v2870 = vsub.s32 0, %v2869
        %v2871 = vrot.slane %v2866, %v2870
        %v2881 = vunpack.c.l.b16 %v2854
        %v2882 = vunpack.c.l.b16 %v2855
        %v2883 = vunpack.c.l.b16 %v2856
        %v2884 = vunpack.c.l.b16 %v2857
        %v2885 = vunpack.c.l.b16 %v2858
        %v2886 = vunpack.c.l.b16 %v2859
        %v2887 = vunpack.c.l.b16 %v2860
        %v2888 = vunpack.c.l.b16 %v2861
        %v2889 = vpack.c.b16 %v2882, %v2881
        %v2890 = vpack.c.b16 %v2884, %v2883
        %v2891 = vpack.c.b16 %v2886, %v2885
        %v2892 = vpack.c.b16 %v2888, %v2887
        %v2897 = vunpack.c.l.b16 %v2862
        %v2898 = vunpack.c.l.b16 %v2863
        %v2899 = vunpack.c.l.b16 %v2864
        %v2900 = vunpack.c.l.b16 %v2865
        %v2901 = vpack.c.b16 %v2898, %v2897
        %v2902 = vpack.c.b16 %v2900, %v2899
        %vm2905 = vcmask 261120
        %v2907 = vsel %vm2905, %v2889, 0
        %v2910 = vsel %vm2905, %v2890, 0
        %v2913 = vsel %vm2905, %v2891, 0
        %v2916 = vsel %vm2905, %v2892, 0
        %2918 = vmatprep.subr.bf16.mxu0 0
        %2919 = vmatpush1.bf16.msra.mxu0 0
        %2920 = vmatprep.subr.bf16.mxu0 0
        %2921 = vmatpush1.bf16.msra.mxu0 0
        %2922 = vmatprep.subr.bf16.mxu0 0
        %2923 = vmatpush1.bf16.msra.mxu0 0
        %2924 = vmatprep.subr.bf16.mxu0 0
        %2925 = vmatpush1.bf16.msra.mxu0 0
        %2926 = vmatprep.subr.bf16.mxu0 0
        %2927 = vmatpush1.bf16.msra.mxu0 0
        %2928 = vmatprep.subr.bf16.mxu0 0
        %2929 = vmatpush1.bf16.msra.mxu0 0
        %2930 = vmatprep.subr.bf16.mxu0 0
        %2931 = vmatpush1.bf16.msra.mxu0 %v2902
        %2932 = vmatprep.subr.bf16.mxu0 0
        %2933 = vmatpush1.bf16.msra.mxu0 %v2901
        %2934 = vmatprep.subr.bf16.mxu0 0
        %2935 = vmatpush2.bf16.msra.mxu0 0
        %2936 = vmatprep.subr.bf16.mxu0 0
        %2937 = vmatpush2.bf16.msra.mxu0 0
        %2938 = vmatprep.subr.bf16.mxu0 0
        %2939 = vmatpush2.bf16.msra.mxu0 0
        %2940 = vmatprep.subr.bf16.mxu0 0
        %2941 = vmatpush2.bf16.msra.mxu0 0
        %2942 = vmatprep.subr.bf16.mxu0 0
        %2943 = vmatpush2.bf16.msra.mxu0 0
        %2944 = vmatprep.subr.bf16.mxu0 0
        %2945 = vmatpush2.bf16.msra.mxu0 0
        %2946 = vmatprep.subr.bf16.mxu0 0
        %2947 = vmatpush2.bf16.msra.mxu0 0
        %2948 = vmatprep.subr.bf16.mxu0 0
        %2949 = vmatpush2.bf16.msra.mxu0 0
        %2950 = vmatprep.mubr.bf16.mxu0 0
        %2951 = vmatmul.mubr.bf16.gmra.mxu0 %v2907
        %v2952 = vpop.f32.mrf.mxu0
        %v2953 = vadd.f32 %v2871, %v2952
        %v2954 = vpop.f32.mrf.mxu0
        %v2955 = vpop.f32.mrf.mxu0
        %v2956 = vadd.f32 %v2871, %v2955
        %v2957 = vpop.f32.mrf.mxu0
        %2958 = vmatprep.mubr.bf16.mxu0 0
        %2959 = vmatmul.mubr.bf16.gmra.mxu0 %v2910
        %v2960 = vpop.f32.mrf.mxu0
        %v2961 = vadd.f32 %v2871, %v2960
        %v2962 = vpop.f32.mrf.mxu0
        %v2963 = vpop.f32.mrf.mxu0
        %v2964 = vadd.f32 %v2871, %v2963
        %v2965 = vpop.f32.mrf.mxu0
        %2966 = vmatprep.mubr.bf16.mxu0 0
        %2967 = vmatmul.mubr.bf16.gmra.mxu0 %v2913
        %v2968 = vpop.f32.mrf.mxu0
        %v2969 = vadd.f32 %v2871, %v2968
        %v2970 = vpop.f32.mrf.mxu0
        %v2971 = vpop.f32.mrf.mxu0
        %v2972 = vadd.f32 %v2871, %v2971
        %v2973 = vpop.f32.mrf.mxu0
        %2974 = vmatprep.mubr.bf16.mxu0 0
        %2975 = vmatmul.mubr.bf16.gmra.mxu0 %v2916
        %v2976 = vpop.f32.mrf.mxu0
        %v2977 = vadd.f32 %v2871, %v2976
        %v2978 = vpop.f32.mrf.mxu0
        %v2979 = vpop.f32.mrf.mxu0
        %v2980 = vadd.f32 %v2871, %v2979
        %v2981 = vpop.f32.mrf.mxu0
        %2982 = vdwg.mxu0
        %v2983 = vmax.f32 %v2953, 0.0
        %v2984 = vmax.f32 %v2956, 0.0
        %v2985 = vmax.f32 %v2961, 0.0
        %v2986 = vmax.f32 %v2964, 0.0
        %v2987 = vmax.f32 %v2969, 0.0
        %v2988 = vmax.f32 %v2972, 0.0
        %v2989 = vmax.f32 %v2977, 0.0
        %v2990 = vmax.f32 %v2980, 0.0
        %v2991 = vadd.f32 %v2983, %v2846
        %v2992 = vadd.f32 %v2984, %v2847
        %v2993 = vadd.f32 %v2985, %v2848
        %v2994 = vadd.f32 %v2986, %v2849
        %v2995 = vadd.f32 %v2987, %v2850
        %v2996 = vadd.f32 %v2988, %v2851
        %v2997 = vadd.f32 %v2989, %v2852
        %v2998 = vadd.f32 %v2990, %v2853
        %v2999 = vld [vmem:[%s825] sm:$0xf]
        %v3000 = vld [vmem:[%s825 + $0x4] sm:$0xf]
        %v3001 = vld [vmem:[#allocation11] sm:$0xf]
        %v3002 = vld [vmem:[#allocation11 + $0x4] sm:$0xf]
        %v3003 = vld [vmem:[#allocation11 + $0x8] sm:$0xf]
        %v3004 = vld [vmem:[#allocation11 + $0xc] sm:$0xf]
        %v3005 = vld [vmem:[#allocation11 + $0x10] sm:$0xf]
        %v3006 = vld [vmem:[#allocation11 + $0x14] sm:$0xf]
        %v3007 = vld [vmem:[#allocation11 + $0x18] sm:$0xf]
        %v3008 = vld [vmem:[#allocation11 + $0x1c] sm:$0xf]
        %v3009 = vld [vmem:[%s12] sm:$0x1]
        %v3011 = vlaneseq
        %v3012 = vshrl.u32 %v3011, 7
        %v3013 = vsub.s32 0, %v3012
        %v3014 = vrot.slane %v3009, %v3013
        %v3018 = vunpack.c.l.b16 %v2999
        %v3019 = vunpack.c.l.b16 %v3000
        %v3020 = vpack.c.b16 %v3019, %v3018
        %v3029 = vunpack.c.l.b16 %v3001
        %v3030 = vunpack.c.l.b16 %v3002
        %v3031 = vunpack.c.l.b16 %v3003
        %v3032 = vunpack.c.l.b16 %v3004
        %v3033 = vunpack.c.l.b16 %v3005
        %v3034 = vunpack.c.l.b16 %v3006
        %v3035 = vunpack.c.l.b16 %v3007
        %v3036 = vunpack.c.l.b16 %v3008
        %v3037 = vpack.c.b16 %v3030, %v3029
        %v3038 = vpack.c.b16 %v3032, %v3031
        %v3039 = vpack.c.b16 %v3034, %v3033
        %v3040 = vpack.c.b16 %v3036, %v3035
        %vm3045 = vcmask 523264
        %v3047 = vsel %vm3045, %v3020, 0
        %3049 = vmatprep.subr.bf16.mxu0 0
        %3050 = vmatpush1.bf16.msra.mxu0 0
        %3051 = vmatprep.subr.bf16.mxu0 0
        %3052 = vmatpush1.bf16.msra.mxu0 0
        %3053 = vmatprep.subr.bf16.mxu0 0
        %3054 = vmatpush1.bf16.msra.mxu0 0
        %3055 = vmatprep.subr.bf16.mxu0 0
        %3056 = vmatpush1.bf16.msra.mxu0 0
        %3057 = vmatprep.subr.bf16.mxu0 0
        %3058 = vmatpush1.bf16.msra.mxu0 %v3040
        %3059 = vmatprep.subr.bf16.mxu0 0
        %3060 = vmatpush1.bf16.msra.mxu0 %v3039
        %3061 = vmatprep.subr.bf16.mxu0 0
        %3062 = vmatpush1.bf16.msra.mxu0 %v3038
        %3063 = vmatprep.subr.bf16.mxu0 0
        %3064 = vmatpush1.bf16.msra.mxu0 %v3037
        %3065 = vmatprep.subr.bf16.mxu0 0
        %3066 = vmatpush2.bf16.msra.mxu0 0
        %3067 = vmatprep.subr.bf16.mxu0 0
        %3068 = vmatpush2.bf16.msra.mxu0 0
        %3069 = vmatprep.subr.bf16.mxu0 0
        %3070 = vmatpush2.bf16.msra.mxu0 0
        %3071 = vmatprep.subr.bf16.mxu0 0
        %3072 = vmatpush2.bf16.msra.mxu0 0
        %3073 = vmatprep.subr.bf16.mxu0 0
        %3074 = vmatpush2.bf16.msra.mxu0 0
        %3075 = vmatprep.subr.bf16.mxu0 0
        %3076 = vmatpush2.bf16.msra.mxu0 0
        %3077 = vmatprep.subr.bf16.mxu0 0
        %3078 = vmatpush2.bf16.msra.mxu0 0
        %3079 = vmatprep.subr.bf16.mxu0 0
        %3080 = vmatpush2.bf16.msra.mxu0 0
        %3081 = vmatprep.mubr.bf16.mxu0 0
        %3082 = vmatmul.mubr.bf16.gmra.mxu0 %v3047
        %v3083 = vpop.f32.mrf.mxu0
        %v3084 = vadd.f32 %v3014, %v3083
        %v3085 = vpop.f32.mrf.mxu0
        %v3086 = vpop.f32.mrf.mxu0
        %v3087 = vadd.f32 %v3014, %v3086
        %v3088 = vpop.f32.mrf.mxu0
        %3089 = vdwg.mxu0
        %v3090 = vmax.f32 %v3084, 0.0
        %v3091 = vmax.f32 %v3087, 0.0
        %v3092 = vpack.c.bf16 %v2992, %v2991
        %v3093 = vpack.c.bf16 %v2994, %v2993
        %v3094 = vpack.c.bf16 %v2996, %v2995
        %v3095 = vpack.c.bf16 %v2998, %v2997
        %v3096 = vld [vmem:[#allocation2] sm:$0xf]
        %v3097 = vld [vmem:[#allocation2 + $0x4] sm:$0xf]
        %v3100 = vunpack.c.l.b16 %v3096
        %v3101 = vunpack.c.l.b16 %v3097
        %v3102 = vpack.c.b16 %v3101, %v3100
        %v3104 = vsel %vm3045, %v3102, 0
        %3106 = vmatprep.subr.bf16.mxu0 0
        %3107 = vmatpush1.bf16.msra.mxu0 0
        %3108 = vmatprep.subr.bf16.mxu0 0
        %3109 = vmatpush1.bf16.msra.mxu0 0
        %3110 = vmatprep.subr.bf16.mxu0 0
        %3111 = vmatpush1.bf16.msra.mxu0 0
        %3112 = vmatprep.subr.bf16.mxu0 0
        %3113 = vmatpush1.bf16.msra.mxu0 0
        %3114 = vmatprep.subr.bf16.mxu0 0
        %3115 = vmatpush1.bf16.msra.mxu0 %v3095
        %3116 = vmatprep.subr.bf16.mxu0 0
        %3117 = vmatpush1.bf16.msra.mxu0 %v3094
        %3118 = vmatprep.subr.bf16.mxu0 0
        %3119 = vmatpush1.bf16.msra.mxu0 %v3093
        %3120 = vmatprep.subr.bf16.mxu0 0
        %3121 = vmatpush1.bf16.msra.mxu0 %v3092
        %3122 = vmatprep.subr.bf16.mxu0 0
        %3123 = vmatpush2.bf16.msra.mxu0 0
        %3124 = vmatprep.subr.bf16.mxu0 0
        %3125 = vmatpush2.bf16.msra.mxu0 0
        %3126 = vmatprep.subr.bf16.mxu0 0
        %3127 = vmatpush2.bf16.msra.mxu0 0
        %3128 = vmatprep.subr.bf16.mxu0 0
        %3129 = vmatpush2.bf16.msra.mxu0 0
        %3130 = vmatprep.subr.bf16.mxu0 0
        %3131 = vmatpush2.bf16.msra.mxu0 0
        %3132 = vmatprep.subr.bf16.mxu0 0
        %3133 = vmatpush2.bf16.msra.mxu0 0
        %3134 = vmatprep.subr.bf16.mxu0 0
        %3135 = vmatpush2.bf16.msra.mxu0 0
        %3136 = vmatprep.subr.bf16.mxu0 0
        %3137 = vmatpush2.bf16.msra.mxu0 0
        %3138 = vmatprep.mubr.bf16.mxu0 0
        %3139 = vmatmul.mubr.bf16.gmra.mxu0 %v3104
        %v3140 = vpop.f32.mrf.mxu0
        %v3141 = vadd.f32 0.0, %v3140
        %v3142 = vpop.f32.mrf.mxu0
        %v3143 = vpop.f32.mrf.mxu0
        %v3144 = vadd.f32 0.0, %v3143
        %v3145 = vpop.f32.mrf.mxu0
        %3146 = vdwg.mxu0
        %v3147 = vpack.c.bf16 %v3144, %v3141
        %v3148 = vld [vmem:[#allocation10] sm:$0xf]
        %v3149 = vld [vmem:[#allocation10 + $0x4] sm:$0xf]
        %v3150 = vld [vmem:[#allocation10 + $0x8] sm:$0xf]
        %v3151 = vld [vmem:[#allocation10 + $0xc] sm:$0xf]
        %s3152 = scalar_lea.vmem [#allocation2], 8
        %v3153 = vld [vmem:[%s3152] sm:$0xf]
        %v3154 = vld [vmem:[%s3152 + $0x4] sm:$0xf]
        %v3157 = vunpack.c.l.b16 %v3153
        %v3158 = vunpack.c.l.b16 %v3154
        %v3159 = vpack.c.b16 %v3158, %v3157
        %v3161 = vsel %vm3045, %v3159, 0
        %3163 = vmatprep.subr.bf16.mxu0 0
        %3164 = vmatpush1.bf16.msra.mxu0 0
        %3165 = vmatprep.subr.bf16.mxu0 0
        %3166 = vmatpush1.bf16.msra.mxu0 0
        %3167 = vmatprep.subr.bf16.mxu0 0
        %3168 = vmatpush1.bf16.msra.mxu0 0
        %3169 = vmatprep.subr.bf16.mxu0 0
        %3170 = vmatpush1.bf16.msra.mxu0 0
        %3171 = vmatprep.subr.bf16.mxu0 0
        %3172 = vmatpush1.bf16.msra.mxu0 %v3095
        %3173 = vmatprep.subr.bf16.mxu0 0
        %3174 = vmatpush1.bf16.msra.mxu0 %v3094
        %3175 = vmatprep.subr.bf16.mxu0 0
        %3176 = vmatpush1.bf16.msra.mxu0 %v3093
        %3177 = vmatprep.subr.bf16.mxu0 0
        %3178 = vmatpush1.bf16.msra.mxu0 %v3092
        %3179 = vmatprep.subr.bf16.mxu0 0
        %3180 = vmatpush2.bf16.msra.mxu0 0
        %3181 = vmatprep.subr.bf16.mxu0 0
        %3182 = vmatpush2.bf16.msra.mxu0 0
        %3183 = vmatprep.subr.bf16.mxu0 0
        %3184 = vmatpush2.bf16.msra.mxu0 0
        %3185 = vmatprep.subr.bf16.mxu0 0
        %3186 = vmatpush2.bf16.msra.mxu0 0
        %3187 = vmatprep.subr.bf16.mxu0 0
        %3188 = vmatpush2.bf16.msra.mxu0 0
        %3189 = vmatprep.subr.bf16.mxu0 0
        %3190 = vmatpush2.bf16.msra.mxu0 0
        %3191 = vmatprep.subr.bf16.mxu0 0
        %3192 = vmatpush2.bf16.msra.mxu0 0
        %3193 = vmatprep.subr.bf16.mxu0 0
        %3194 = vmatpush2.bf16.msra.mxu0 0
        %3195 = vmatprep.mubr.bf16.mxu0 0
        %3196 = vmatmul.mubr.bf16.gmra.mxu0 %v3161
        %v3197 = vpop.f32.mrf.mxu0
        %v3198 = vadd.f32 0.0, %v3197
        %v3199 = vpop.f32.mrf.mxu0
        %v3200 = vpop.f32.mrf.mxu0
        %v3201 = vadd.f32 0.0, %v3200
        %v3202 = vpop.f32.mrf.mxu0
        %3203 = vdwg.mxu0
        %v3204 = vpack.c.bf16 %v3201, %v3198
        %s3205 = scalar_lea.vmem [#allocation10], 16
        %v3206 = vld [vmem:[%s3205] sm:$0xf]
        %v3207 = vld [vmem:[%s3205 + $0x4] sm:$0xf]
        %v3208 = vld [vmem:[%s3205 + $0x8] sm:$0xf]
        %v3209 = vld [vmem:[%s3205 + $0xc] sm:$0xf]
        %v3214 = vunpack.c.l.b16 %v3206
        %v3215 = vunpack.c.l.b16 %v3207
        %v3216 = vunpack.c.l.b16 %v3208
        %v3217 = vunpack.c.l.b16 %v3209
        %v3218 = vpack.c.b16 %v3215, %v3214
        %v3219 = vpack.c.b16 %v3217, %v3216
        %v3223 = vsel %vm2905, %v3204, 0
        %3225 = vmatprep.subr.bf16.mxu0 0
        %3226 = vmatpush1.bf16.msra.mxu0 0
        %3227 = vmatprep.subr.bf16.mxu0 0
        %3228 = vmatpush1.bf16.msra.mxu0 0
        %3229 = vmatprep.subr.bf16.mxu0 0
        %3230 = vmatpush1.bf16.msra.mxu0 0
        %3231 = vmatprep.subr.bf16.mxu0 0
        %3232 = vmatpush1.bf16.msra.mxu0 0
        %3233 = vmatprep.subr.bf16.mxu0 0
        %3234 = vmatpush1.bf16.msra.mxu0 0
        %3235 = vmatprep.subr.bf16.mxu0 0
        %3236 = vmatpush1.bf16.msra.mxu0 0
        %3237 = vmatprep.subr.bf16.mxu0 0
        %3238 = vmatpush1.bf16.msra.mxu0 %v3219
        %3239 = vmatprep.subr.bf16.mxu0 0
        %3240 = vmatpush1.bf16.msra.mxu0 %v3218
        %3241 = vmatprep.subr.bf16.mxu0 0
        %3242 = vmatpush2.bf16.msra.mxu0 0
        %3243 = vmatprep.subr.bf16.mxu0 0
        %3244 = vmatpush2.bf16.msra.mxu0 0
        %3245 = vmatprep.subr.bf16.mxu0 0
        %3246 = vmatpush2.bf16.msra.mxu0 0
        %3247 = vmatprep.subr.bf16.mxu0 0
        %3248 = vmatpush2.bf16.msra.mxu0 0
        %3249 = vmatprep.subr.bf16.mxu0 0
        %3250 = vmatpush2.bf16.msra.mxu0 0
        %3251 = vmatprep.subr.bf16.mxu0 0
        %3252 = vmatpush2.bf16.msra.mxu0 0
        %3253 = vmatprep.subr.bf16.mxu0 0
        %3254 = vmatpush2.bf16.msra.mxu0 0
        %3255 = vmatprep.subr.bf16.mxu0 0
        %3256 = vmatpush2.bf16.msra.mxu0 0
        %3257 = vmatprep.mubr.bf16.mxu0 0
        %3258 = vmatmul.mubr.bf16.gmra.mxu0 %v3223
        %v3259 = vpop.f32.mrf.mxu0
        %v3260 = vadd.f32 0.0, %v3259
        %v3261 = vpop.f32.mrf.mxu0
        %v3262 = vpop.f32.mrf.mxu0
        %v3263 = vadd.f32 0.0, %v3262
        %v3264 = vpop.f32.mrf.mxu0
        %3265 = vdwg.mxu0
        %v3270 = vunpack.c.l.b16 %v3148
        %v3271 = vunpack.c.l.b16 %v3149
        %v3272 = vunpack.c.l.b16 %v3150
        %v3273 = vunpack.c.l.b16 %v3151
        %v3274 = vpack.c.b16 %v3271, %v3270
        %v3275 = vpack.c.b16 %v3273, %v3272
        %v3279 = vsel %vm2905, %v3147, 0
        %3281 = vmatprep.subr.bf16.mxu0 0
        %3282 = vmatpush1.bf16.msra.mxu0 0
        %3283 = vmatprep.subr.bf16.mxu0 0
        %3284 = vmatpush1.bf16.msra.mxu0 0
        %3285 = vmatprep.subr.bf16.mxu0 0
        %3286 = vmatpush1.bf16.msra.mxu0 0
        %3287 = vmatprep.subr.bf16.mxu0 0
        %3288 = vmatpush1.bf16.msra.mxu0 0
        %3289 = vmatprep.subr.bf16.mxu0 0
        %3290 = vmatpush1.bf16.msra.mxu0 0
        %3291 = vmatprep.subr.bf16.mxu0 0
        %3292 = vmatpush1.bf16.msra.mxu0 0
        %3293 = vmatprep.subr.bf16.mxu0 0
        %3294 = vmatpush1.bf16.msra.mxu0 %v3275
        %3295 = vmatprep.subr.bf16.mxu0 0
        %3296 = vmatpush1.bf16.msra.mxu0 %v3274
        %3297 = vmatprep.subr.bf16.mxu0 0
        %3298 = vmatpush2.bf16.msra.mxu0 0
        %3299 = vmatprep.subr.bf16.mxu0 0
        %3300 = vmatpush2.bf16.msra.mxu0 0
        %3301 = vmatprep.subr.bf16.mxu0 0
        %3302 = vmatpush2.bf16.msra.mxu0 0
        %3303 = vmatprep.subr.bf16.mxu0 0
        %3304 = vmatpush2.bf16.msra.mxu0 0
        %3305 = vmatprep.subr.bf16.mxu0 0
        %3306 = vmatpush2.bf16.msra.mxu0 0
        %3307 = vmatprep.subr.bf16.mxu0 0
        %3308 = vmatpush2.bf16.msra.mxu0 0
        %3309 = vmatprep.subr.bf16.mxu0 0
        %3310 = vmatpush2.bf16.msra.mxu0 0
        %3311 = vmatprep.subr.bf16.mxu0 0
        %3312 = vmatpush2.bf16.msra.mxu0 0
        %3313 = vmatprep.mubr.bf16.mxu0 0
        %3314 = vmatmul.mubr.bf16.gmra.mxu0 %v3279
        %v3315 = vpop.f32.mrf.mxu0
        %v3316 = vadd.f32 %v3260, %v3315
        %v3317 = vpop.f32.mrf.mxu0
        %v3318 = vpop.f32.mrf.mxu0
        %v3319 = vadd.f32 %v3263, %v3318
        %v3320 = vpop.f32.mrf.mxu0
        %3321 = vdwg.mxu0
        %s3322 = scalar_lea.vmem [#allocation2], 16
        %v3323 = vld [vmem:[%s3322] sm:$0xf]
        %v3324 = vld [vmem:[%s3322 + $0x4] sm:$0xf]
        %v3327 = vunpack.c.l.b16 %v3323
        %v3328 = vunpack.c.l.b16 %v3324
        %v3329 = vpack.c.b16 %v3328, %v3327
        %v3331 = vsel %vm3045, %v3329, 0
        %3333 = vmatprep.subr.bf16.mxu0 0
        %3334 = vmatpush1.bf16.msra.mxu0 0
        %3335 = vmatprep.subr.bf16.mxu0 0
        %3336 = vmatpush1.bf16.msra.mxu0 0
        %3337 = vmatprep.subr.bf16.mxu0 0
        %3338 = vmatpush1.bf16.msra.mxu0 0
        %3339 = vmatprep.subr.bf16.mxu0 0
        %3340 = vmatpush1.bf16.msra.mxu0 0
        %3341 = vmatprep.subr.bf16.mxu0 0
        %3342 = vmatpush1.bf16.msra.mxu0 %v3095
        %3343 = vmatprep.subr.bf16.mxu0 0
        %3344 = vmatpush1.bf16.msra.mxu0 %v3094
        %3345 = vmatprep.subr.bf16.mxu0 0
        %3346 = vmatpush1.bf16.msra.mxu0 %v3093
        %3347 = vmatprep.subr.bf16.mxu0 0
        %3348 = vmatpush1.bf16.msra.mxu0 %v3092
        %3349 = vmatprep.subr.bf16.mxu0 0
        %3350 = vmatpush2.bf16.msra.mxu0 0
        %3351 = vmatprep.subr.bf16.mxu0 0
        %3352 = vmatpush2.bf16.msra.mxu0 0
        %3353 = vmatprep.subr.bf16.mxu0 0
        %3354 = vmatpush2.bf16.msra.mxu0 0
        %3355 = vmatprep.subr.bf16.mxu0 0
        %3356 = vmatpush2.bf16.msra.mxu0 0
        %3357 = vmatprep.subr.bf16.mxu0 0
        %3358 = vmatpush2.bf16.msra.mxu0 0
        %3359 = vmatprep.subr.bf16.mxu0 0
        %3360 = vmatpush2.bf16.msra.mxu0 0
        %3361 = vmatprep.subr.bf16.mxu0 0
        %3362 = vmatpush2.bf16.msra.mxu0 0
        %3363 = vmatprep.subr.bf16.mxu0 0
        %3364 = vmatpush2.bf16.msra.mxu0 0
        %3365 = vmatprep.mubr.bf16.mxu0 0
        %3366 = vmatmul.mubr.bf16.gmra.mxu0 %v3331
        %v3367 = vpop.f32.mrf.mxu0
        %v3368 = vadd.f32 0.0, %v3367
        %v3369 = vpop.f32.mrf.mxu0
        %v3370 = vpop.f32.mrf.mxu0
        %v3371 = vadd.f32 0.0, %v3370
        %v3372 = vpop.f32.mrf.mxu0
        %3373 = vdwg.mxu0
        %v3374 = vpack.c.bf16 %v3371, %v3368
        %s3375 = scalar_lea.vmem [#allocation10], 32
        %v3376 = vld [vmem:[%s3375] sm:$0xf]
        %v3377 = vld [vmem:[%s3375 + $0x4] sm:$0xf]
        %v3378 = vld [vmem:[%s3375 + $0x8] sm:$0xf]
        %v3379 = vld [vmem:[%s3375 + $0xc] sm:$0xf]
        %v3384 = vunpack.c.l.b16 %v3376
        %v3385 = vunpack.c.l.b16 %v3377
        %v3386 = vunpack.c.l.b16 %v3378
        %v3387 = vunpack.c.l.b16 %v3379
        %v3388 = vpack.c.b16 %v3385, %v3384
        %v3389 = vpack.c.b16 %v3387, %v3386
        %v3393 = vsel %vm2905, %v3374, 0
        %3395 = vmatprep.subr.bf16.mxu0 0
        %3396 = vmatpush1.bf16.msra.mxu0 0
        %3397 = vmatprep.subr.bf16.mxu0 0
        %3398 = vmatpush1.bf16.msra.mxu0 0
        %3399 = vmatprep.subr.bf16.mxu0 0
        %3400 = vmatpush1.bf16.msra.mxu0 0
        %3401 = vmatprep.subr.bf16.mxu0 0
        %3402 = vmatpush1.bf16.msra.mxu0 0
        %3403 = vmatprep.subr.bf16.mxu0 0
        %3404 = vmatpush1.bf16.msra.mxu0 0
        %3405 = vmatprep.subr.bf16.mxu0 0
        %3406 = vmatpush1.bf16.msra.mxu0 0
        %3407 = vmatprep.subr.bf16.mxu0 0
        %3408 = vmatpush1.bf16.msra.mxu0 %v3389
        %3409 = vmatprep.subr.bf16.mxu0 0
        %3410 = vmatpush1.bf16.msra.mxu0 %v3388
        %3411 = vmatprep.subr.bf16.mxu0 0
        %3412 = vmatpush2.bf16.msra.mxu0 0
        %3413 = vmatprep.subr.bf16.mxu0 0
        %3414 = vmatpush2.bf16.msra.mxu0 0
        %3415 = vmatprep.subr.bf16.mxu0 0
        %3416 = vmatpush2.bf16.msra.mxu0 0
        %3417 = vmatprep.subr.bf16.mxu0 0
        %3418 = vmatpush2.bf16.msra.mxu0 0
        %3419 = vmatprep.subr.bf16.mxu0 0
        %3420 = vmatpush2.bf16.msra.mxu0 0
        %3421 = vmatprep.subr.bf16.mxu0 0
        %3422 = vmatpush2.bf16.msra.mxu0 0
        %3423 = vmatprep.subr.bf16.mxu0 0
        %3424 = vmatpush2.bf16.msra.mxu0 0
        %3425 = vmatprep.subr.bf16.mxu0 0
        %3426 = vmatpush2.bf16.msra.mxu0 0
        %3427 = vmatprep.mubr.bf16.mxu0 0
        %3428 = vmatmul.mubr.bf16.gmra.mxu0 %v3393
        %v3429 = vpop.f32.mrf.mxu0
        %v3430 = vadd.f32 0.0, %v3429
        %v3431 = vpop.f32.mrf.mxu0
        %v3432 = vpop.f32.mrf.mxu0
        %v3433 = vadd.f32 0.0, %v3432
        %v3434 = vpop.f32.mrf.mxu0
        %3435 = vdwg.mxu0
        %v3436 = vadd.f32 %v3316, %v3430
        %v3437 = vadd.f32 %v3319, %v3433
        %s3438 = scalar_lea.vmem [#allocation2], 24
        %v3439 = vld [vmem:[%s3438] sm:$0xf]
        %v3440 = vld [vmem:[%s3438 + $0x4] sm:$0xf]
        %v3443 = vunpack.c.l.b16 %v3439
        %v3444 = vunpack.c.l.b16 %v3440
        %v3445 = vpack.c.b16 %v3444, %v3443
        %v3447 = vsel %vm3045, %v3445, 0
        %3449 = vmatprep.subr.bf16.mxu0 0
        %3450 = vmatpush1.bf16.msra.mxu0 0
        %3451 = vmatprep.subr.bf16.mxu0 0
        %3452 = vmatpush1.bf16.msra.mxu0 0
        %3453 = vmatprep.subr.bf16.mxu0 0
        %3454 = vmatpush1.bf16.msra.mxu0 0
        %3455 = vmatprep.subr.bf16.mxu0 0
        %3456 = vmatpush1.bf16.msra.mxu0 0
        %3457 = vmatprep.subr.bf16.mxu0 0
        %3458 = vmatpush1.bf16.msra.mxu0 %v3095
        %3459 = vmatprep.subr.bf16.mxu0 0
        %3460 = vmatpush1.bf16.msra.mxu0 %v3094
        %3461 = vmatprep.subr.bf16.mxu0 0
        %3462 = vmatpush1.bf16.msra.mxu0 %v3093
        %3463 = vmatprep.subr.bf16.mxu0 0
        %3464 = vmatpush1.bf16.msra.mxu0 %v3092
        %3465 = vmatprep.subr.bf16.mxu0 0
        %3466 = vmatpush2.bf16.msra.mxu0 0
        %3467 = vmatprep.subr.bf16.mxu0 0
        %3468 = vmatpush2.bf16.msra.mxu0 0
        %3469 = vmatprep.subr.bf16.mxu0 0
        %3470 = vmatpush2.bf16.msra.mxu0 0
        %3471 = vmatprep.subr.bf16.mxu0 0
        %3472 = vmatpush2.bf16.msra.mxu0 0
        %3473 = vmatprep.subr.bf16.mxu0 0
        %3474 = vmatpush2.bf16.msra.mxu0 0
        %3475 = vmatprep.subr.bf16.mxu0 0
        %3476 = vmatpush2.bf16.msra.mxu0 0
        %3477 = vmatprep.subr.bf16.mxu0 0
        %3478 = vmatpush2.bf16.msra.mxu0 0
        %3479 = vmatprep.subr.bf16.mxu0 0
        %3480 = vmatpush2.bf16.msra.mxu0 0
        %3481 = vmatprep.mubr.bf16.mxu0 0
        %3482 = vmatmul.mubr.bf16.gmra.mxu0 %v3447
        %v3483 = vpop.f32.mrf.mxu0
        %v3484 = vadd.f32 0.0, %v3483
        %v3485 = vpop.f32.mrf.mxu0
        %v3486 = vpop.f32.mrf.mxu0
        %v3487 = vadd.f32 0.0, %v3486
        %v3488 = vpop.f32.mrf.mxu0
        %3489 = vdwg.mxu0
        %v3490 = vpack.c.bf16 %v3487, %v3484
        %s3491 = scalar_lea.vmem [#allocation10], 48
        %v3492 = vld [vmem:[%s3491] sm:$0xf]
        %v3493 = vld [vmem:[%s3491 + $0x4] sm:$0xf]
        %v3494 = vld [vmem:[%s3491 + $0x8] sm:$0xf]
        %v3495 = vld [vmem:[%s3491 + $0xc] sm:$0xf]
        %v3500 = vunpack.c.l.b16 %v3492
        %v3501 = vunpack.c.l.b16 %v3493
        %v3502 = vunpack.c.l.b16 %v3494
        %v3503 = vunpack.c.l.b16 %v3495
        %v3504 = vpack.c.b16 %v3501, %v3500
        %v3505 = vpack.c.b16 %v3503, %v3502
        %v3509 = vsel %vm2905, %v3490, 0
        %3511 = vmatprep.subr.bf16.mxu0 0
        %3512 = vmatpush1.bf16.msra.mxu0 0
        %3513 = vmatprep.subr.bf16.mxu0 0
        %3514 = vmatpush1.bf16.msra.mxu0 0
        %3515 = vmatprep.subr.bf16.mxu0 0
        %3516 = vmatpush1.bf16.msra.mxu0 0
        %3517 = vmatprep.subr.bf16.mxu0 0
        %3518 = vmatpush1.bf16.msra.mxu0 0
        %3519 = vmatprep.subr.bf16.mxu0 0
        %3520 = vmatpush1.bf16.msra.mxu0 0
        %3521 = vmatprep.subr.bf16.mxu0 0
        %3522 = vmatpush1.bf16.msra.mxu0 0
        %3523 = vmatprep.subr.bf16.mxu0 0
        %3524 = vmatpush1.bf16.msra.mxu0 %v3505
        %3525 = vmatprep.subr.bf16.mxu0 0
        %3526 = vmatpush1.bf16.msra.mxu0 %v3504
        %3527 = vmatprep.subr.bf16.mxu0 0
        %3528 = vmatpush2.bf16.msra.mxu0 0
        %3529 = vmatprep.subr.bf16.mxu0 0
        %3530 = vmatpush2.bf16.msra.mxu0 0
        %3531 = vmatprep.subr.bf16.mxu0 0
        %3532 = vmatpush2.bf16.msra.mxu0 0
        %3533 = vmatprep.subr.bf16.mxu0 0
        %3534 = vmatpush2.bf16.msra.mxu0 0
        %3535 = vmatprep.subr.bf16.mxu0 0
        %3536 = vmatpush2.bf16.msra.mxu0 0
        %3537 = vmatprep.subr.bf16.mxu0 0
        %3538 = vmatpush2.bf16.msra.mxu0 0
        %3539 = vmatprep.subr.bf16.mxu0 0
        %3540 = vmatpush2.bf16.msra.mxu0 0
        %3541 = vmatprep.subr.bf16.mxu0 0
        %3542 = vmatpush2.bf16.msra.mxu0 0
        %3543 = vmatprep.mubr.bf16.mxu0 0
        %3544 = vmatmul.mubr.bf16.gmra.mxu0 %v3509
        %v3545 = vpop.f32.mrf.mxu0
        %v3546 = vadd.f32 0.0, %v3545
        %v3547 = vpop.f32.mrf.mxu0
        %v3548 = vpop.f32.mrf.mxu0
        %v3549 = vadd.f32 0.0, %v3548
        %v3550 = vpop.f32.mrf.mxu0
        %3551 = vdwg.mxu0
        %v3552 = vadd.f32 %v3436, %v3546
        %v3553 = vadd.f32 %v3437, %v3549
        %s3554 = scalar_lea.vmem [#allocation2], 32
        %v3555 = vld [vmem:[%s3554] sm:$0xf]
        %v3556 = vld [vmem:[%s3554 + $0x4] sm:$0xf]
        %v3559 = vunpack.c.l.b16 %v3555
        %v3560 = vunpack.c.l.b16 %v3556
        %v3561 = vpack.c.b16 %v3560, %v3559
        %v3563 = vsel %vm3045, %v3561, 0
        %3565 = vmatprep.subr.bf16.mxu0 0
        %3566 = vmatpush1.bf16.msra.mxu0 0
        %3567 = vmatprep.subr.bf16.mxu0 0
        %3568 = vmatpush1.bf16.msra.mxu0 0
        %3569 = vmatprep.subr.bf16.mxu0 0
        %3570 = vmatpush1.bf16.msra.mxu0 0
        %3571 = vmatprep.subr.bf16.mxu0 0
        %3572 = vmatpush1.bf16.msra.mxu0 0
        %3573 = vmatprep.subr.bf16.mxu0 0
        %3574 = vmatpush1.bf16.msra.mxu0 %v3095
        %3575 = vmatprep.subr.bf16.mxu0 0
        %3576 = vmatpush1.bf16.msra.mxu0 %v3094
        %3577 = vmatprep.subr.bf16.mxu0 0
        %3578 = vmatpush1.bf16.msra.mxu0 %v3093
        %3579 = vmatprep.subr.bf16.mxu0 0
        %3580 = vmatpush1.bf16.msra.mxu0 %v3092
        %3581 = vmatprep.subr.bf16.mxu0 0
        %3582 = vmatpush2.bf16.msra.mxu0 0
        %3583 = vmatprep.subr.bf16.mxu0 0
        %3584 = vmatpush2.bf16.msra.mxu0 0
        %3585 = vmatprep.subr.bf16.mxu0 0
        %3586 = vmatpush2.bf16.msra.mxu0 0
        %3587 = vmatprep.subr.bf16.mxu0 0
        %3588 = vmatpush2.bf16.msra.mxu0 0
        %3589 = vmatprep.subr.bf16.mxu0 0
        %3590 = vmatpush2.bf16.msra.mxu0 0
        %3591 = vmatprep.subr.bf16.mxu0 0
        %3592 = vmatpush2.bf16.msra.mxu0 0
        %3593 = vmatprep.subr.bf16.mxu0 0
        %3594 = vmatpush2.bf16.msra.mxu0 0
        %3595 = vmatprep.subr.bf16.mxu0 0
        %3596 = vmatpush2.bf16.msra.mxu0 0
        %3597 = vmatprep.mubr.bf16.mxu0 0
        %3598 = vmatmul.mubr.bf16.gmra.mxu0 %v3563
        %v3599 = vpop.f32.mrf.mxu0
        %v3600 = vadd.f32 0.0, %v3599
        %v3601 = vpop.f32.mrf.mxu0
        %v3602 = vpop.f32.mrf.mxu0
        %v3603 = vadd.f32 0.0, %v3602
        %v3604 = vpop.f32.mrf.mxu0
        %3605 = vdwg.mxu0
        %v3606 = vpack.c.bf16 %v3603, %v3600
        %s3607 = scalar_lea.vmem [#allocation10], 64
        %v3608 = vld [vmem:[%s3607] sm:$0xf]
        %v3609 = vld [vmem:[%s3607 + $0x4] sm:$0xf]
        %v3610 = vld [vmem:[%s3607 + $0x8] sm:$0xf]
        %v3611 = vld [vmem:[%s3607 + $0xc] sm:$0xf]
        %v3616 = vunpack.c.l.b16 %v3608
        %v3617 = vunpack.c.l.b16 %v3609
        %v3618 = vunpack.c.l.b16 %v3610
        %v3619 = vunpack.c.l.b16 %v3611
        %v3620 = vpack.c.b16 %v3617, %v3616
        %v3621 = vpack.c.b16 %v3619, %v3618
        %v3625 = vsel %vm2905, %v3606, 0
        %3627 = vmatprep.subr.bf16.mxu0 0
        %3628 = vmatpush1.bf16.msra.mxu0 0
        %3629 = vmatprep.subr.bf16.mxu0 0
        %3630 = vmatpush1.bf16.msra.mxu0 0
        %3631 = vmatprep.subr.bf16.mxu0 0
        %3632 = vmatpush1.bf16.msra.mxu0 0
        %3633 = vmatprep.subr.bf16.mxu0 0
        %3634 = vmatpush1.bf16.msra.mxu0 0
        %3635 = vmatprep.subr.bf16.mxu0 0
        %3636 = vmatpush1.bf16.msra.mxu0 0
        %3637 = vmatprep.subr.bf16.mxu0 0
        %3638 = vmatpush1.bf16.msra.mxu0 0
        %3639 = vmatprep.subr.bf16.mxu0 0
        %3640 = vmatpush1.bf16.msra.mxu0 %v3621
        %3641 = vmatprep.subr.bf16.mxu0 0
        %3642 = vmatpush1.bf16.msra.mxu0 %v3620
        %3643 = vmatprep.subr.bf16.mxu0 0
        %3644 = vmatpush2.bf16.msra.mxu0 0
        %3645 = vmatprep.subr.bf16.mxu0 0
        %3646 = vmatpush2.bf16.msra.mxu0 0
        %3647 = vmatprep.subr.bf16.mxu0 0
        %3648 = vmatpush2.bf16.msra.mxu0 0
        %3649 = vmatprep.subr.bf16.mxu0 0
        %3650 = vmatpush2.bf16.msra.mxu0 0
        %3651 = vmatprep.subr.bf16.mxu0 0
        %3652 = vmatpush2.bf16.msra.mxu0 0
        %3653 = vmatprep.subr.bf16.mxu0 0
        %3654 = vmatpush2.bf16.msra.mxu0 0
        %3655 = vmatprep.subr.bf16.mxu0 0
        %3656 = vmatpush2.bf16.msra.mxu0 0
        %3657 = vmatprep.subr.bf16.mxu0 0
        %3658 = vmatpush2.bf16.msra.mxu0 0
        %3659 = vmatprep.mubr.bf16.mxu0 0
        %3660 = vmatmul.mubr.bf16.gmra.mxu0 %v3625
        %v3661 = vpop.f32.mrf.mxu0
        %v3662 = vadd.f32 0.0, %v3661
        %v3663 = vpop.f32.mrf.mxu0
        %v3664 = vpop.f32.mrf.mxu0
        %v3665 = vadd.f32 0.0, %v3664
        %v3666 = vpop.f32.mrf.mxu0
        %3667 = vdwg.mxu0
        %v3668 = vadd.f32 %v3552, %v3662
        %v3669 = vadd.f32 %v3553, %v3665
        %s3670 = scalar_lea.vmem [#allocation2], 40
        %v3671 = vld [vmem:[%s3670] sm:$0xf]
        %v3672 = vld [vmem:[%s3670 + $0x4] sm:$0xf]
        %v3675 = vunpack.c.l.b16 %v3671
        %v3676 = vunpack.c.l.b16 %v3672
        %v3677 = vpack.c.b16 %v3676, %v3675
        %v3679 = vsel %vm3045, %v3677, 0
        %3681 = vmatprep.subr.bf16.mxu0 0
        %3682 = vmatpush1.bf16.msra.mxu0 0
        %3683 = vmatprep.subr.bf16.mxu0 0
        %3684 = vmatpush1.bf16.msra.mxu0 0
        %3685 = vmatprep.subr.bf16.mxu0 0
        %3686 = vmatpush1.bf16.msra.mxu0 0
        %3687 = vmatprep.subr.bf16.mxu0 0
        %3688 = vmatpush1.bf16.msra.mxu0 0
        %3689 = vmatprep.subr.bf16.mxu0 0
        %3690 = vmatpush1.bf16.msra.mxu0 %v3095
        %3691 = vmatprep.subr.bf16.mxu0 0
        %3692 = vmatpush1.bf16.msra.mxu0 %v3094
        %3693 = vmatprep.subr.bf16.mxu0 0
        %3694 = vmatpush1.bf16.msra.mxu0 %v3093
        %3695 = vmatprep.subr.bf16.mxu0 0
        %3696 = vmatpush1.bf16.msra.mxu0 %v3092
        %3697 = vmatprep.subr.bf16.mxu0 0
        %3698 = vmatpush2.bf16.msra.mxu0 0
        %3699 = vmatprep.subr.bf16.mxu0 0
        %3700 = vmatpush2.bf16.msra.mxu0 0
        %3701 = vmatprep.subr.bf16.mxu0 0
        %3702 = vmatpush2.bf16.msra.mxu0 0
        %3703 = vmatprep.subr.bf16.mxu0 0
        %3704 = vmatpush2.bf16.msra.mxu0 0
        %3705 = vmatprep.subr.bf16.mxu0 0
        %3706 = vmatpush2.bf16.msra.mxu0 0
        %3707 = vmatprep.subr.bf16.mxu0 0
        %3708 = vmatpush2.bf16.msra.mxu0 0
        %3709 = vmatprep.subr.bf16.mxu0 0
        %3710 = vmatpush2.bf16.msra.mxu0 0
        %3711 = vmatprep.subr.bf16.mxu0 0
        %3712 = vmatpush2.bf16.msra.mxu0 0
        %3713 = vmatprep.mubr.bf16.mxu0 0
        %3714 = vmatmul.mubr.bf16.gmra.mxu0 %v3679
        %v3715 = vpop.f32.mrf.mxu0
        %v3716 = vadd.f32 0.0, %v3715
        %v3717 = vpop.f32.mrf.mxu0
        %v3718 = vpop.f32.mrf.mxu0
        %v3719 = vadd.f32 0.0, %v3718
        %v3720 = vpop.f32.mrf.mxu0
        %3721 = vdwg.mxu0
        %v3722 = vpack.c.bf16 %v3719, %v3716
        %s3723 = scalar_lea.vmem [#allocation10], 80
        %v3724 = vld [vmem:[%s3723] sm:$0xf]
        %v3725 = vld [vmem:[%s3723 + $0x4] sm:$0xf]
        %v3726 = vld [vmem:[%s3723 + $0x8] sm:$0xf]
        %v3727 = vld [vmem:[%s3723 + $0xc] sm:$0xf]
        %v3732 = vunpack.c.l.b16 %v3724
        %v3733 = vunpack.c.l.b16 %v3725
        %v3734 = vunpack.c.l.b16 %v3726
        %v3735 = vunpack.c.l.b16 %v3727
        %v3736 = vpack.c.b16 %v3733, %v3732
        %v3737 = vpack.c.b16 %v3735, %v3734
        %v3741 = vsel %vm2905, %v3722, 0
        %3743 = vmatprep.subr.bf16.mxu0 0
        %3744 = vmatpush1.bf16.msra.mxu0 0
        %3745 = vmatprep.subr.bf16.mxu0 0
        %3746 = vmatpush1.bf16.msra.mxu0 0
        %3747 = vmatprep.subr.bf16.mxu0 0
        %3748 = vmatpush1.bf16.msra.mxu0 0
        %3749 = vmatprep.subr.bf16.mxu0 0
        %3750 = vmatpush1.bf16.msra.mxu0 0
        %3751 = vmatprep.subr.bf16.mxu0 0
        %3752 = vmatpush1.bf16.msra.mxu0 0
        %3753 = vmatprep.subr.bf16.mxu0 0
        %3754 = vmatpush1.bf16.msra.mxu0 0
        %3755 = vmatprep.subr.bf16.mxu0 0
        %3756 = vmatpush1.bf16.msra.mxu0 %v3737
        %3757 = vmatprep.subr.bf16.mxu0 0
        %3758 = vmatpush1.bf16.msra.mxu0 %v3736
        %3759 = vmatprep.subr.bf16.mxu0 0
        %3760 = vmatpush2.bf16.msra.mxu0 0
        %3761 = vmatprep.subr.bf16.mxu0 0
        %3762 = vmatpush2.bf16.msra.mxu0 0
        %3763 = vmatprep.subr.bf16.mxu0 0
        %3764 = vmatpush2.bf16.msra.mxu0 0
        %3765 = vmatprep.subr.bf16.mxu0 0
        %3766 = vmatpush2.bf16.msra.mxu0 0
        %3767 = vmatprep.subr.bf16.mxu0 0
        %3768 = vmatpush2.bf16.msra.mxu0 0
        %3769 = vmatprep.subr.bf16.mxu0 0
        %3770 = vmatpush2.bf16.msra.mxu0 0
        %3771 = vmatprep.subr.bf16.mxu0 0
        %3772 = vmatpush2.bf16.msra.mxu0 0
        %3773 = vmatprep.subr.bf16.mxu0 0
        %3774 = vmatpush2.bf16.msra.mxu0 0
        %3775 = vmatprep.mubr.bf16.mxu0 0
        %3776 = vmatmul.mubr.bf16.gmra.mxu0 %v3741
        %v3777 = vpop.f32.mrf.mxu0
        %v3778 = vadd.f32 0.0, %v3777
        %v3779 = vpop.f32.mrf.mxu0
        %v3780 = vpop.f32.mrf.mxu0
        %v3781 = vadd.f32 0.0, %v3780
        %v3782 = vpop.f32.mrf.mxu0
        %3783 = vdwg.mxu0
        %v3784 = vadd.f32 %v3668, %v3778
        %v3785 = vadd.f32 %v3669, %v3781
        %s3786 = scalar_lea.vmem [#allocation2], 48
        %v3787 = vld [vmem:[%s3786] sm:$0xf]
        %v3788 = vld [vmem:[%s3786 + $0x4] sm:$0xf]
        %v3791 = vunpack.c.l.b16 %v3787
        %v3792 = vunpack.c.l.b16 %v3788
        %v3793 = vpack.c.b16 %v3792, %v3791
        %v3795 = vsel %vm3045, %v3793, 0
        %3797 = vmatprep.subr.bf16.mxu0 0
        %3798 = vmatpush1.bf16.msra.mxu0 0
        %3799 = vmatprep.subr.bf16.mxu0 0
        %3800 = vmatpush1.bf16.msra.mxu0 0
        %3801 = vmatprep.subr.bf16.mxu0 0
        %3802 = vmatpush1.bf16.msra.mxu0 0
        %3803 = vmatprep.subr.bf16.mxu0 0
        %3804 = vmatpush1.bf16.msra.mxu0 0
        %3805 = vmatprep.subr.bf16.mxu0 0
        %3806 = vmatpush1.bf16.msra.mxu0 %v3095
        %3807 = vmatprep.subr.bf16.mxu0 0
        %3808 = vmatpush1.bf16.msra.mxu0 %v3094
        %3809 = vmatprep.subr.bf16.mxu0 0
        %3810 = vmatpush1.bf16.msra.mxu0 %v3093
        %3811 = vmatprep.subr.bf16.mxu0 0
        %3812 = vmatpush1.bf16.msra.mxu0 %v3092
        %3813 = vmatprep.subr.bf16.mxu0 0
        %3814 = vmatpush2.bf16.msra.mxu0 0
        %3815 = vmatprep.subr.bf16.mxu0 0
        %3816 = vmatpush2.bf16.msra.mxu0 0
        %3817 = vmatprep.subr.bf16.mxu0 0
        %3818 = vmatpush2.bf16.msra.mxu0 0
        %3819 = vmatprep.subr.bf16.mxu0 0
        %3820 = vmatpush2.bf16.msra.mxu0 0
        %3821 = vmatprep.subr.bf16.mxu0 0
        %3822 = vmatpush2.bf16.msra.mxu0 0
        %3823 = vmatprep.subr.bf16.mxu0 0
        %3824 = vmatpush2.bf16.msra.mxu0 0
        %3825 = vmatprep.subr.bf16.mxu0 0
        %3826 = vmatpush2.bf16.msra.mxu0 0
        %3827 = vmatprep.subr.bf16.mxu0 0
        %3828 = vmatpush2.bf16.msra.mxu0 0
        %3829 = vmatprep.mubr.bf16.mxu0 0
        %3830 = vmatmul.mubr.bf16.gmra.mxu0 %v3795
        %v3831 = vpop.f32.mrf.mxu0
        %v3832 = vadd.f32 0.0, %v3831
        %v3833 = vpop.f32.mrf.mxu0
        %v3834 = vpop.f32.mrf.mxu0
        %v3835 = vadd.f32 0.0, %v3834
        %v3836 = vpop.f32.mrf.mxu0
        %3837 = vdwg.mxu0
        %v3838 = vpack.c.bf16 %v3835, %v3832
        %s3839 = scalar_lea.vmem [#allocation10], 96
        %v3840 = vld [vmem:[%s3839] sm:$0xf]
        %v3841 = vld [vmem:[%s3839 + $0x4] sm:$0xf]
        %v3842 = vld [vmem:[%s3839 + $0x8] sm:$0xf]
        %v3843 = vld [vmem:[%s3839 + $0xc] sm:$0xf]
        %v3848 = vunpack.c.l.b16 %v3840
        %v3849 = vunpack.c.l.b16 %v3841
        %v3850 = vunpack.c.l.b16 %v3842
        %v3851 = vunpack.c.l.b16 %v3843
        %v3852 = vpack.c.b16 %v3849, %v3848
        %v3853 = vpack.c.b16 %v3851, %v3850
        %v3857 = vsel %vm2905, %v3838, 0
        %3859 = vmatprep.subr.bf16.mxu0 0
        %3860 = vmatpush1.bf16.msra.mxu0 0
        %3861 = vmatprep.subr.bf16.mxu0 0
        %3862 = vmatpush1.bf16.msra.mxu0 0
        %3863 = vmatprep.subr.bf16.mxu0 0
        %3864 = vmatpush1.bf16.msra.mxu0 0
        %3865 = vmatprep.subr.bf16.mxu0 0
        %3866 = vmatpush1.bf16.msra.mxu0 0
        %3867 = vmatprep.subr.bf16.mxu0 0
        %3868 = vmatpush1.bf16.msra.mxu0 0
        %3869 = vmatprep.subr.bf16.mxu0 0
        %3870 = vmatpush1.bf16.msra.mxu0 0
        %3871 = vmatprep.subr.bf16.mxu0 0
        %3872 = vmatpush1.bf16.msra.mxu0 %v3853
        %3873 = vmatprep.subr.bf16.mxu0 0
        %3874 = vmatpush1.bf16.msra.mxu0 %v3852
        %3875 = vmatprep.subr.bf16.mxu0 0
        %3876 = vmatpush2.bf16.msra.mxu0 0
        %3877 = vmatprep.subr.bf16.mxu0 0
        %3878 = vmatpush2.bf16.msra.mxu0 0
        %3879 = vmatprep.subr.bf16.mxu0 0
        %3880 = vmatpush2.bf16.msra.mxu0 0
        %3881 = vmatprep.subr.bf16.mxu0 0
        %3882 = vmatpush2.bf16.msra.mxu0 0
        %3883 = vmatprep.subr.bf16.mxu0 0
        %3884 = vmatpush2.bf16.msra.mxu0 0
        %3885 = vmatprep.subr.bf16.mxu0 0
        %3886 = vmatpush2.bf16.msra.mxu0 0
        %3887 = vmatprep.subr.bf16.mxu0 0
        %3888 = vmatpush2.bf16.msra.mxu0 0
        %3889 = vmatprep.subr.bf16.mxu0 0
        %3890 = vmatpush2.bf16.msra.mxu0 0
        %3891 = vmatprep.mubr.bf16.mxu0 0
        %3892 = vmatmul.mubr.bf16.gmra.mxu0 %v3857
        %v3893 = vpop.f32.mrf.mxu0
        %v3894 = vadd.f32 0.0, %v3893
        %v3895 = vpop.f32.mrf.mxu0
        %v3896 = vpop.f32.mrf.mxu0
        %v3897 = vadd.f32 0.0, %v3896
        %v3898 = vpop.f32.mrf.mxu0
        %3899 = vdwg.mxu0
        %v3900 = vadd.f32 %v3784, %v3894
        %v3901 = vadd.f32 %v3785, %v3897
        %s3902 = scalar_lea.vmem [#allocation2], 56
        %v3903 = vld [vmem:[%s3902] sm:$0xf]
        %v3904 = vld [vmem:[%s3902 + $0x4] sm:$0xf]
        %v3907 = vunpack.c.l.b16 %v3903
        %v3908 = vunpack.c.l.b16 %v3904
        %v3909 = vpack.c.b16 %v3908, %v3907
        %v3911 = vsel %vm3045, %v3909, 0
        %3913 = vmatprep.subr.bf16.mxu0 0
        %3914 = vmatpush1.bf16.msra.mxu0 0
        %3915 = vmatprep.subr.bf16.mxu0 0
        %3916 = vmatpush1.bf16.msra.mxu0 0
        %3917 = vmatprep.subr.bf16.mxu0 0
        %3918 = vmatpush1.bf16.msra.mxu0 0
        %3919 = vmatprep.subr.bf16.mxu0 0
        %3920 = vmatpush1.bf16.msra.mxu0 0
        %3921 = vmatprep.subr.bf16.mxu0 0
        %3922 = vmatpush1.bf16.msra.mxu0 %v3095
        %3923 = vmatprep.subr.bf16.mxu0 0
        %3924 = vmatpush1.bf16.msra.mxu0 %v3094
        %3925 = vmatprep.subr.bf16.mxu0 0
        %3926 = vmatpush1.bf16.msra.mxu0 %v3093
        %3927 = vmatprep.subr.bf16.mxu0 0
        %3928 = vmatpush1.bf16.msra.mxu0 %v3092
        %3929 = vmatprep.subr.bf16.mxu0 0
        %3930 = vmatpush2.bf16.msra.mxu0 0
        %3931 = vmatprep.subr.bf16.mxu0 0
        %3932 = vmatpush2.bf16.msra.mxu0 0
        %3933 = vmatprep.subr.bf16.mxu0 0
        %3934 = vmatpush2.bf16.msra.mxu0 0
        %3935 = vmatprep.subr.bf16.mxu0 0
        %3936 = vmatpush2.bf16.msra.mxu0 0
        %3937 = vmatprep.subr.bf16.mxu0 0
        %3938 = vmatpush2.bf16.msra.mxu0 0
        %3939 = vmatprep.subr.bf16.mxu0 0
        %3940 = vmatpush2.bf16.msra.mxu0 0
        %3941 = vmatprep.subr.bf16.mxu0 0
        %3942 = vmatpush2.bf16.msra.mxu0 0
        %3943 = vmatprep.subr.bf16.mxu0 0
        %3944 = vmatpush2.bf16.msra.mxu0 0
        %3945 = vmatprep.mubr.bf16.mxu0 0
        %3946 = vmatmul.mubr.bf16.gmra.mxu0 %v3911
        %v3947 = vpop.f32.mrf.mxu0
        %v3948 = vadd.f32 0.0, %v3947
        %v3949 = vpop.f32.mrf.mxu0
        %v3950 = vpop.f32.mrf.mxu0
        %v3951 = vadd.f32 0.0, %v3950
        %v3952 = vpop.f32.mrf.mxu0
        %3953 = vdwg.mxu0
        %v3954 = vpack.c.bf16 %v3951, %v3948
        %s3955 = scalar_lea.vmem [#allocation10], 112
        %v3956 = vld [vmem:[%s3955] sm:$0xf]
        %v3957 = vld [vmem:[%s3955 + $0x4] sm:$0xf]
        %v3958 = vld [vmem:[%s3955 + $0x8] sm:$0xf]
        %v3959 = vld [vmem:[%s3955 + $0xc] sm:$0xf]
        %v3964 = vunpack.c.l.b16 %v3956
        %v3965 = vunpack.c.l.b16 %v3957
        %v3966 = vunpack.c.l.b16 %v3958
        %v3967 = vunpack.c.l.b16 %v3959
        %v3968 = vpack.c.b16 %v3965, %v3964
        %v3969 = vpack.c.b16 %v3967, %v3966
        %v3973 = vsel %vm2905, %v3954, 0
        %3975 = vmatprep.subr.bf16.mxu0 0
        %3976 = vmatpush1.bf16.msra.mxu0 0
        %3977 = vmatprep.subr.bf16.mxu0 0
        %3978 = vmatpush1.bf16.msra.mxu0 0
        %3979 = vmatprep.subr.bf16.mxu0 0
        %3980 = vmatpush1.bf16.msra.mxu0 0
        %3981 = vmatprep.subr.bf16.mxu0 0
        %3982 = vmatpush1.bf16.msra.mxu0 0
        %3983 = vmatprep.subr.bf16.mxu0 0
        %3984 = vmatpush1.bf16.msra.mxu0 0
        %3985 = vmatprep.subr.bf16.mxu0 0
        %3986 = vmatpush1.bf16.msra.mxu0 0
        %3987 = vmatprep.subr.bf16.mxu0 0
        %3988 = vmatpush1.bf16.msra.mxu0 %v3969
        %3989 = vmatprep.subr.bf16.mxu0 0
        %3990 = vmatpush1.bf16.msra.mxu0 %v3968
        %3991 = vmatprep.subr.bf16.mxu0 0
        %3992 = vmatpush2.bf16.msra.mxu0 0
        %3993 = vmatprep.subr.bf16.mxu0 0
        %3994 = vmatpush2.bf16.msra.mxu0 0
        %3995 = vmatprep.subr.bf16.mxu0 0
        %3996 = vmatpush2.bf16.msra.mxu0 0
        %3997 = vmatprep.subr.bf16.mxu0 0
        %3998 = vmatpush2.bf16.msra.mxu0 0
        %3999 = vmatprep.subr.bf16.mxu0 0
        %4000 = vmatpush2.bf16.msra.mxu0 0
        %4001 = vmatprep.subr.bf16.mxu0 0
        %4002 = vmatpush2.bf16.msra.mxu0 0
        %4003 = vmatprep.subr.bf16.mxu0 0
        %4004 = vmatpush2.bf16.msra.mxu0 0
        %4005 = vmatprep.subr.bf16.mxu0 0
        %4006 = vmatpush2.bf16.msra.mxu0 0
        %4007 = vmatprep.mubr.bf16.mxu0 0
        %4008 = vmatmul.mubr.bf16.gmra.mxu0 %v3973
        %v4009 = vpop.f32.mrf.mxu0
        %v4010 = vadd.f32 0.0, %v4009
        %v4011 = vpop.f32.mrf.mxu0
        %v4012 = vpop.f32.mrf.mxu0
        %v4013 = vadd.f32 0.0, %v4012
        %v4014 = vpop.f32.mrf.mxu0
        %4015 = vdwg.mxu0
        %v4016 = vadd.f32 %v3900, %v4010
        %v4017 = vadd.f32 %v3901, %v4013
        %s4018 = scalar_lea.vmem [#allocation2], 64
        %v4019 = vld [vmem:[%s4018] sm:$0xf]
        %v4020 = vld [vmem:[%s4018 + $0x4] sm:$0xf]
        %v4023 = vunpack.c.l.b16 %v4019
        %v4024 = vunpack.c.l.b16 %v4020
        %v4025 = vpack.c.b16 %v4024, %v4023
        %v4027 = vsel %vm3045, %v4025, 0
        %4029 = vmatprep.subr.bf16.mxu0 0
        %4030 = vmatpush1.bf16.msra.mxu0 0
        %4031 = vmatprep.subr.bf16.mxu0 0
        %4032 = vmatpush1.bf16.msra.mxu0 0
        %4033 = vmatprep.subr.bf16.mxu0 0
        %4034 = vmatpush1.bf16.msra.mxu0 0
        %4035 = vmatprep.subr.bf16.mxu0 0
        %4036 = vmatpush1.bf16.msra.mxu0 0
        %4037 = vmatprep.subr.bf16.mxu0 0
        %4038 = vmatpush1.bf16.msra.mxu0 %v3095
        %4039 = vmatprep.subr.bf16.mxu0 0
        %4040 = vmatpush1.bf16.msra.mxu0 %v3094
        %4041 = vmatprep.subr.bf16.mxu0 0
        %4042 = vmatpush1.bf16.msra.mxu0 %v3093
        %4043 = vmatprep.subr.bf16.mxu0 0
        %4044 = vmatpush1.bf16.msra.mxu0 %v3092
        %4045 = vmatprep.subr.bf16.mxu0 0
        %4046 = vmatpush2.bf16.msra.mxu0 0
        %4047 = vmatprep.subr.bf16.mxu0 0
        %4048 = vmatpush2.bf16.msra.mxu0 0
        %4049 = vmatprep.subr.bf16.mxu0 0
        %4050 = vmatpush2.bf16.msra.mxu0 0
        %4051 = vmatprep.subr.bf16.mxu0 0
        %4052 = vmatpush2.bf16.msra.mxu0 0
        %4053 = vmatprep.subr.bf16.mxu0 0
        %4054 = vmatpush2.bf16.msra.mxu0 0
        %4055 = vmatprep.subr.bf16.mxu0 0
        %4056 = vmatpush2.bf16.msra.mxu0 0
        %4057 = vmatprep.subr.bf16.mxu0 0
        %4058 = vmatpush2.bf16.msra.mxu0 0
        %4059 = vmatprep.subr.bf16.mxu0 0
        %4060 = vmatpush2.bf16.msra.mxu0 0
        %4061 = vmatprep.mubr.bf16.mxu0 0
        %4062 = vmatmul.mubr.bf16.gmra.mxu0 %v4027
        %v4063 = vpop.f32.mrf.mxu0
        %v4064 = vadd.f32 0.0, %v4063
        %v4065 = vpop.f32.mrf.mxu0
        %v4066 = vpop.f32.mrf.mxu0
        %v4067 = vadd.f32 0.0, %v4066
        %v4068 = vpop.f32.mrf.mxu0
        %4069 = vdwg.mxu0
        %v4070 = vpack.c.bf16 %v4067, %v4064
        %s4071 = scalar_lea.vmem [#allocation10], 128
        %v4072 = vld [vmem:[%s4071] sm:$0xf]
        %v4073 = vld [vmem:[%s4071 + $0x4] sm:$0xf]
        %v4074 = vld [vmem:[%s4071 + $0x8] sm:$0xf]
        %v4075 = vld [vmem:[%s4071 + $0xc] sm:$0xf]
        %v4080 = vunpack.c.l.b16 %v4072
        %v4081 = vunpack.c.l.b16 %v4073
        %v4082 = vunpack.c.l.b16 %v4074
        %v4083 = vunpack.c.l.b16 %v4075
        %v4084 = vpack.c.b16 %v4081, %v4080
        %v4085 = vpack.c.b16 %v4083, %v4082
        %v4089 = vsel %vm2905, %v4070, 0
        %4091 = vmatprep.subr.bf16.mxu0 0
        %4092 = vmatpush1.bf16.msra.mxu0 0
        %4093 = vmatprep.subr.bf16.mxu0 0
        %4094 = vmatpush1.bf16.msra.mxu0 0
        %4095 = vmatprep.subr.bf16.mxu0 0
        %4096 = vmatpush1.bf16.msra.mxu0 0
        %4097 = vmatprep.subr.bf16.mxu0 0
        %4098 = vmatpush1.bf16.msra.mxu0 0
        %4099 = vmatprep.subr.bf16.mxu0 0
        %4100 = vmatpush1.bf16.msra.mxu0 0
        %4101 = vmatprep.subr.bf16.mxu0 0
        %4102 = vmatpush1.bf16.msra.mxu0 0
        %4103 = vmatprep.subr.bf16.mxu0 0
        %4104 = vmatpush1.bf16.msra.mxu0 %v4085
        %4105 = vmatprep.subr.bf16.mxu0 0
        %4106 = vmatpush1.bf16.msra.mxu0 %v4084
        %4107 = vmatprep.subr.bf16.mxu0 0
        %4108 = vmatpush2.bf16.msra.mxu0 0
        %4109 = vmatprep.subr.bf16.mxu0 0
        %4110 = vmatpush2.bf16.msra.mxu0 0
        %4111 = vmatprep.subr.bf16.mxu0 0
        %4112 = vmatpush2.bf16.msra.mxu0 0
        %4113 = vmatprep.subr.bf16.mxu0 0
        %4114 = vmatpush2.bf16.msra.mxu0 0
        %4115 = vmatprep.subr.bf16.mxu0 0
        %4116 = vmatpush2.bf16.msra.mxu0 0
        %4117 = vmatprep.subr.bf16.mxu0 0
        %4118 = vmatpush2.bf16.msra.mxu0 0
        %4119 = vmatprep.subr.bf16.mxu0 0
        %4120 = vmatpush2.bf16.msra.mxu0 0
        %4121 = vmatprep.subr.bf16.mxu0 0
        %4122 = vmatpush2.bf16.msra.mxu0 0
        %4123 = vmatprep.mubr.bf16.mxu0 0
        %4124 = vmatmul.mubr.bf16.gmra.mxu0 %v4089
        %v4125 = vpop.f32.mrf.mxu0
        %v4126 = vadd.f32 0.0, %v4125
        %v4127 = vpop.f32.mrf.mxu0
        %v4128 = vpop.f32.mrf.mxu0
        %v4129 = vadd.f32 0.0, %v4128
        %v4130 = vpop.f32.mrf.mxu0
        %4131 = vdwg.mxu0
        %v4132 = vadd.f32 %v4016, %v4126
        %v4133 = vadd.f32 %v4017, %v4129
        %v4134 = vmax.f32 %v4132, 0.0
        %v4135 = vmax.f32 %v4133, 0.0
        %v4136 = vadd.f32 %v4134, %v3090
        %v4137 = vadd.f32 %v4135, %v3091
        %v4138 = vld [vmem:[#allocation13] sm:$0xf]
        %v4139 = vld [vmem:[#allocation13 + $0x4] sm:$0xf]
        %v4140 = vld [vmem:[#allocation13 + $0x8] sm:$0xf]
        %v4141 = vld [vmem:[#allocation13 + $0xc] sm:$0xf]
        %v4142 = vld [vmem:[#allocation13 + $0x10] sm:$0xf]
        %v4143 = vld [vmem:[#allocation13 + $0x14] sm:$0xf]
        %v4144 = vld [vmem:[#allocation13 + $0x18] sm:$0xf]
        %v4145 = vld [vmem:[#allocation13 + $0x1c] sm:$0xf]
        %v4146 = vpack.c.bf16 %v4137, %v4136
        %v4147 = vld [vmem:[#allocation14] sm:$0x1]
        %v4149 = vlaneseq
        %v4150 = vshrl.u32 %v4149, 7
        %v4151 = vsub.s32 0, %v4150
        %v4152 = vrot.slane %v4147, %v4151
        %v4162 = vunpack.c.l.b16 %v4138
        %v4163 = vunpack.c.l.b16 %v4139
        %v4164 = vunpack.c.l.b16 %v4140
        %v4165 = vunpack.c.l.b16 %v4141
        %v4166 = vunpack.c.l.b16 %v4142
        %v4167 = vunpack.c.l.b16 %v4143
        %v4168 = vunpack.c.l.b16 %v4144
        %v4169 = vunpack.c.l.b16 %v4145
        %v4170 = vpack.c.b16 %v4163, %v4162
        %v4171 = vpack.c.b16 %v4165, %v4164
        %v4172 = vpack.c.b16 %v4167, %v4166
        %v4173 = vpack.c.b16 %v4169, %v4168
        %v4179 = vsel %vm3045, %v4146, 0
        %4181 = vmatprep.subr.bf16.mxu0 0
        %4182 = vmatpush1.bf16.msra.mxu0 0
        %4183 = vmatprep.subr.bf16.mxu0 0
        %4184 = vmatpush1.bf16.msra.mxu0 0
        %4185 = vmatprep.subr.bf16.mxu0 0
        %4186 = vmatpush1.bf16.msra.mxu0 0
        %4187 = vmatprep.subr.bf16.mxu0 0
        %4188 = vmatpush1.bf16.msra.mxu0 0
        %4189 = vmatprep.subr.bf16.mxu0 0
        %4190 = vmatpush1.bf16.msra.mxu0 %v4173
        %4191 = vmatprep.subr.bf16.mxu0 0
        %4192 = vmatpush1.bf16.msra.mxu0 %v4172
        %4193 = vmatprep.subr.bf16.mxu0 0
        %4194 = vmatpush1.bf16.msra.mxu0 %v4171
        %4195 = vmatprep.subr.bf16.mxu0 0
        %4196 = vmatpush1.bf16.msra.mxu0 %v4170
        %4197 = vmatprep.subr.bf16.mxu0 0
        %4198 = vmatpush2.bf16.msra.mxu0 0
        %4199 = vmatprep.subr.bf16.mxu0 0
        %4200 = vmatpush2.bf16.msra.mxu0 0
        %4201 = vmatprep.subr.bf16.mxu0 0
        %4202 = vmatpush2.bf16.msra.mxu0 0
        %4203 = vmatprep.subr.bf16.mxu0 0
        %4204 = vmatpush2.bf16.msra.mxu0 0
        %4205 = vmatprep.subr.bf16.mxu0 0
        %4206 = vmatpush2.bf16.msra.mxu0 0
        %4207 = vmatprep.subr.bf16.mxu0 0
        %4208 = vmatpush2.bf16.msra.mxu0 0
        %4209 = vmatprep.subr.bf16.mxu0 0
        %4210 = vmatpush2.bf16.msra.mxu0 0
        %4211 = vmatprep.subr.bf16.mxu0 0
        %4212 = vmatpush2.bf16.msra.mxu0 0
        %4213 = vmatprep.mubr.bf16.mxu0 0
        %4214 = vmatmul.mubr.bf16.gmra.mxu0 %v4179
        %v4215 = vpop.f32.mrf.mxu0
        %v4216 = vadd.f32 %v4152, %v4215
        %v4217 = vpop.f32.mrf.mxu0
        %v4218 = vpop.f32.mrf.mxu0
        %v4219 = vadd.f32 %v4152, %v4218
        %v4220 = vpop.f32.mrf.mxu0
        %4221 = vdwg.mxu0
        %v4222 = vmax.f32 %v4216, 0.0
        %v4223 = vmax.f32 %v4219, 0.0
        %v4224 = vpack.c.bf16 %v4223, %v4222
        %v4225 = vld [vmem:[#allocation5] sm:$0x3]
        %v4227 = vsel %vm1201, %v4225, 0
        %4229 = vmatprep.subr.bf16.mxu0 0
        %4230 = vmatpush1.bf16.msra.mxu0 0
        %4231 = vmatprep.subr.bf16.mxu0 0
        %4232 = vmatpush1.bf16.msra.mxu0 0
        %4233 = vmatprep.subr.bf16.mxu0 0
        %4234 = vmatpush1.bf16.msra.mxu0 0
        %4235 = vmatprep.subr.bf16.mxu0 0
        %4236 = vmatpush1.bf16.msra.mxu0 0
        %4237 = vmatprep.subr.bf16.mxu0 0
        %4238 = vmatpush1.bf16.msra.mxu0 0
        %4239 = vmatprep.subr.bf16.mxu0 0
        %4240 = vmatpush1.bf16.msra.mxu0 0
        %4241 = vmatprep.subr.bf16.mxu0 0
        %4242 = vmatpush1.bf16.msra.mxu0 0
        %4243 = vmatprep.subr.bf16.mxu0 0
        %4244 = vmatpush1.bf16.msra.mxu0 %v4224
        %4245 = vmatprep.subr.bf16.mxu0 0
        %4246 = vmatpush2.bf16.msra.mxu0 0
        %4247 = vmatprep.subr.bf16.mxu0 0
        %4248 = vmatpush2.bf16.msra.mxu0 0
        %4249 = vmatprep.subr.bf16.mxu0 0
        %4250 = vmatpush2.bf16.msra.mxu0 0
        %4251 = vmatprep.subr.bf16.mxu0 0
        %4252 = vmatpush2.bf16.msra.mxu0 0
        %4253 = vmatprep.subr.bf16.mxu0 0
        %4254 = vmatpush2.bf16.msra.mxu0 0
        %4255 = vmatprep.subr.bf16.mxu0 0
        %4256 = vmatpush2.bf16.msra.mxu0 0
        %4257 = vmatprep.subr.bf16.mxu0 0
        %4258 = vmatpush2.bf16.msra.mxu0 0
        %4259 = vmatprep.subr.bf16.mxu0 0
        %4260 = vmatpush2.bf16.msra.mxu0 0
        %4261 = vmatprep.mubr.bf16.mxu0 0
        %4262 = vmatmul.mubr.bf16.gmra.mxu0 %v4227
        %v4263 = vpop.f32.mrf.mxu0
        %v4264 = vadd.f32 0.0, %v4263
        %v4265 = vpop.f32.mrf.mxu0
        %v4266 = vpop.f32.mrf.mxu0
        %v4267 = vpop.f32.mrf.mxu0
        %4268 = vdwg.mxu0
        %v4269 = vpack.c.bf16 %v4264, %v4264
        %v4270 = vld [vmem:[%s15] sm:$0xf]
        %v4271 = vld [vmem:[%s15 + $0x4] sm:$0xf]
        %v4272 = vld [vmem:[%s15 + $0x8] sm:$0xf]
        %v4273 = vld [vmem:[%s15 + $0xc] sm:$0xf]
        %v4274 = vld [vmem:[%s15 + $0x10] sm:$0xf]
        %v4275 = vld [vmem:[%s15 + $0x14] sm:$0xf]
        %v4276 = vld [vmem:[%s15 + $0x18] sm:$0xf]
        %v4277 = vld [vmem:[%s15 + $0x1c] sm:$0xf]
        %s4278 = scalar_lea.vmem [#allocation5], 2
        %v4279 = vld [vmem:[%s4278] sm:$0x3]
        %v4281 = vsel %vm1201, %v4279, 0
        %4283 = vmatprep.subr.bf16.mxu0 0
        %4284 = vmatpush1.bf16.msra.mxu0 0
        %4285 = vmatprep.subr.bf16.mxu0 0
        %4286 = vmatpush1.bf16.msra.mxu0 0
        %4287 = vmatprep.subr.bf16.mxu0 0
        %4288 = vmatpush1.bf16.msra.mxu0 0
        %4289 = vmatprep.subr.bf16.mxu0 0
        %4290 = vmatpush1.bf16.msra.mxu0 0
        %4291 = vmatprep.subr.bf16.mxu0 0
        %4292 = vmatpush1.bf16.msra.mxu0 0
        %4293 = vmatprep.subr.bf16.mxu0 0
        %4294 = vmatpush1.bf16.msra.mxu0 0
        %4295 = vmatprep.subr.bf16.mxu0 0
        %4296 = vmatpush1.bf16.msra.mxu0 0
        %4297 = vmatprep.subr.bf16.mxu0 0
        %4298 = vmatpush1.bf16.msra.mxu0 %v4224
        %4299 = vmatprep.subr.bf16.mxu0 0
        %4300 = vmatpush2.bf16.msra.mxu0 0
        %4301 = vmatprep.subr.bf16.mxu0 0
        %4302 = vmatpush2.bf16.msra.mxu0 0
        %4303 = vmatprep.subr.bf16.mxu0 0
        %4304 = vmatpush2.bf16.msra.mxu0 0
        %4305 = vmatprep.subr.bf16.mxu0 0
        %4306 = vmatpush2.bf16.msra.mxu0 0
        %4307 = vmatprep.subr.bf16.mxu0 0
        %4308 = vmatpush2.bf16.msra.mxu0 0
        %4309 = vmatprep.subr.bf16.mxu0 0
        %4310 = vmatpush2.bf16.msra.mxu0 0
        %4311 = vmatprep.subr.bf16.mxu0 0
        %4312 = vmatpush2.bf16.msra.mxu0 0
        %4313 = vmatprep.subr.bf16.mxu0 0
        %4314 = vmatpush2.bf16.msra.mxu0 0
        %4315 = vmatprep.mubr.bf16.mxu0 0
        %4316 = vmatmul.mubr.bf16.gmra.mxu0 %v4281
        %v4317 = vpop.f32.mrf.mxu0
        %v4318 = vadd.f32 0.0, %v4317
        %v4319 = vpop.f32.mrf.mxu0
        %v4320 = vpop.f32.mrf.mxu0
        %v4321 = vpop.f32.mrf.mxu0
        %4322 = vdwg.mxu0
        %v4323 = vpack.c.bf16 %v4318, %v4318
        %s4324 = scalar_lea.vmem %s15, 32
        %v4325 = vld [vmem:[%s4324] sm:$0xf]
        %v4326 = vld [vmem:[%s4324 + $0x4] sm:$0xf]
        %v4327 = vld [vmem:[%s4324 + $0x8] sm:$0xf]
        %v4328 = vld [vmem:[%s4324 + $0xc] sm:$0xf]
        %v4329 = vld [vmem:[%s4324 + $0x10] sm:$0xf]
        %v4330 = vld [vmem:[%s4324 + $0x14] sm:$0xf]
        %v4331 = vld [vmem:[%s4324 + $0x18] sm:$0xf]
        %v4332 = vld [vmem:[%s4324 + $0x1c] sm:$0xf]
        %v4341 = vunpack.c.l.b16 %v4325
        %v4342 = vunpack.c.l.b16 %v4326
        %v4343 = vunpack.c.l.b16 %v4327
        %v4344 = vunpack.c.l.b16 %v4328
        %v4345 = vunpack.c.l.b16 %v4329
        %v4346 = vunpack.c.l.b16 %v4330
        %v4347 = vunpack.c.l.b16 %v4331
        %v4348 = vunpack.c.l.b16 %v4332
        %v4349 = vpack.c.b16 %v4342, %v4341
        %v4350 = vpack.c.b16 %v4344, %v4343
        %v4351 = vpack.c.b16 %v4346, %v4345
        %v4352 = vpack.c.b16 %v4348, %v4347
        %v4358 = vsel %vm3045, %v4323, 0
        %4360 = vmatprep.subr.bf16.mxu0 0
        %4361 = vmatpush1.bf16.msra.mxu0 0
        %4362 = vmatprep.subr.bf16.mxu0 0
        %4363 = vmatpush1.bf16.msra.mxu0 0
        %4364 = vmatprep.subr.bf16.mxu0 0
        %4365 = vmatpush1.bf16.msra.mxu0 0
        %4366 = vmatprep.subr.bf16.mxu0 0
        %4367 = vmatpush1.bf16.msra.mxu0 0
        %4368 = vmatprep.subr.bf16.mxu0 0
        %4369 = vmatpush1.bf16.msra.mxu0 %v4352
        %4370 = vmatprep.subr.bf16.mxu0 0
        %4371 = vmatpush1.bf16.msra.mxu0 %v4351
        %4372 = vmatprep.subr.bf16.mxu0 0
        %4373 = vmatpush1.bf16.msra.mxu0 %v4350
        %4374 = vmatprep.subr.bf16.mxu0 0
        %4375 = vmatpush1.bf16.msra.mxu0 %v4349
        %4376 = vmatprep.subr.bf16.mxu0 0
        %4377 = vmatpush2.bf16.msra.mxu0 0
        %4378 = vmatprep.subr.bf16.mxu0 0
        %4379 = vmatpush2.bf16.msra.mxu0 0
        %4380 = vmatprep.subr.bf16.mxu0 0
        %4381 = vmatpush2.bf16.msra.mxu0 0
        %4382 = vmatprep.subr.bf16.mxu0 0
        %4383 = vmatpush2.bf16.msra.mxu0 0
        %4384 = vmatprep.subr.bf16.mxu0 0
        %4385 = vmatpush2.bf16.msra.mxu0 0
        %4386 = vmatprep.subr.bf16.mxu0 0
        %4387 = vmatpush2.bf16.msra.mxu0 0
        %4388 = vmatprep.subr.bf16.mxu0 0
        %4389 = vmatpush2.bf16.msra.mxu0 0
        %4390 = vmatprep.subr.bf16.mxu0 0
        %4391 = vmatpush2.bf16.msra.mxu0 0
        %4392 = vmatprep.mubr.bf16.mxu0 0
        %4393 = vmatmul.mubr.bf16.gmra.mxu0 %v4358
        %v4394 = vpop.f32.mrf.mxu0
        %v4395 = vadd.f32 0.0, %v4394
        %v4396 = vpop.f32.mrf.mxu0
        %v4397 = vpop.f32.mrf.mxu0
        %v4398 = vpop.f32.mrf.mxu0
        %4399 = vdwg.mxu0
        %v4408 = vunpack.c.l.b16 %v4270
        %v4409 = vunpack.c.l.b16 %v4271
        %v4410 = vunpack.c.l.b16 %v4272
        %v4411 = vunpack.c.l.b16 %v4273
        %v4412 = vunpack.c.l.b16 %v4274
        %v4413 = vunpack.c.l.b16 %v4275
        %v4414 = vunpack.c.l.b16 %v4276
        %v4415 = vunpack.c.l.b16 %v4277
        %v4416 = vpack.c.b16 %v4409, %v4408
        %v4417 = vpack.c.b16 %v4411, %v4410
        %v4418 = vpack.c.b16 %v4413, %v4412
        %v4419 = vpack.c.b16 %v4415, %v4414
        %v4425 = vsel %vm3045, %v4269, 0
        %4427 = vmatprep.subr.bf16.mxu0 0
        %4428 = vmatpush1.bf16.msra.mxu0 0
        %4429 = vmatprep.subr.bf16.mxu0 0
        %4430 = vmatpush1.bf16.msra.mxu0 0
        %4431 = vmatprep.subr.bf16.mxu0 0
        %4432 = vmatpush1.bf16.msra.mxu0 0
        %4433 = vmatprep.subr.bf16.mxu0 0
        %4434 = vmatpush1.bf16.msra.mxu0 0
        %4435 = vmatprep.subr.bf16.mxu0 0
        %4436 = vmatpush1.bf16.msra.mxu0 %v4419
        %4437 = vmatprep.subr.bf16.mxu0 0
        %4438 = vmatpush1.bf16.msra.mxu0 %v4418
        %4439 = vmatprep.subr.bf16.mxu0 0
        %4440 = vmatpush1.bf16.msra.mxu0 %v4417
        %4441 = vmatprep.subr.bf16.mxu0 0
        %4442 = vmatpush1.bf16.msra.mxu0 %v4416
        %4443 = vmatprep.subr.bf16.mxu0 0
        %4444 = vmatpush2.bf16.msra.mxu0 0
        %4445 = vmatprep.subr.bf16.mxu0 0
        %4446 = vmatpush2.bf16.msra.mxu0 0
        %4447 = vmatprep.subr.bf16.mxu0 0
        %4448 = vmatpush2.bf16.msra.mxu0 0
        %4449 = vmatprep.subr.bf16.mxu0 0
        %4450 = vmatpush2.bf16.msra.mxu0 0
        %4451 = vmatprep.subr.bf16.mxu0 0
        %4452 = vmatpush2.bf16.msra.mxu0 0
        %4453 = vmatprep.subr.bf16.mxu0 0
        %4454 = vmatpush2.bf16.msra.mxu0 0
        %4455 = vmatprep.subr.bf16.mxu0 0
        %4456 = vmatpush2.bf16.msra.mxu0 0
        %4457 = vmatprep.subr.bf16.mxu0 0
        %4458 = vmatpush2.bf16.msra.mxu0 0
        %4459 = vmatprep.mubr.bf16.mxu0 0
        %4460 = vmatmul.mubr.bf16.gmra.mxu0 %v4425
        %v4461 = vpop.f32.mrf.mxu0
        %v4462 = vadd.f32 %v4395, %v4461
        %v4463 = vpop.f32.mrf.mxu0
        %v4464 = vpop.f32.mrf.mxu0
        %v4465 = vpop.f32.mrf.mxu0
        %4466 = vdwg.mxu0
        %s4467 = scalar_lea.vmem [#allocation5], 4
        %v4468 = vld [vmem:[%s4467] sm:$0x3]
        %v4470 = vsel %vm1201, %v4468, 0
        %4472 = vmatprep.subr.bf16.mxu0 0
        %4473 = vmatpush1.bf16.msra.mxu0 0
        %4474 = vmatprep.subr.bf16.mxu0 0
        %4475 = vmatpush1.bf16.msra.mxu0 0
        %4476 = vmatprep.subr.bf16.mxu0 0
        %4477 = vmatpush1.bf16.msra.mxu0 0
        %4478 = vmatprep.subr.bf16.mxu0 0
        %4479 = vmatpush1.bf16.msra.mxu0 0
        %4480 = vmatprep.subr.bf16.mxu0 0
        %4481 = vmatpush1.bf16.msra.mxu0 0
        %4482 = vmatprep.subr.bf16.mxu0 0
        %4483 = vmatpush1.bf16.msra.mxu0 0
        %4484 = vmatprep.subr.bf16.mxu0 0
        %4485 = vmatpush1.bf16.msra.mxu0 0
        %4486 = vmatprep.subr.bf16.mxu0 0
        %4487 = vmatpush1.bf16.msra.mxu0 %v4224
        %4488 = vmatprep.subr.bf16.mxu0 0
        %4489 = vmatpush2.bf16.msra.mxu0 0
        %4490 = vmatprep.subr.bf16.mxu0 0
        %4491 = vmatpush2.bf16.msra.mxu0 0
        %4492 = vmatprep.subr.bf16.mxu0 0
        %4493 = vmatpush2.bf16.msra.mxu0 0
        %4494 = vmatprep.subr.bf16.mxu0 0
        %4495 = vmatpush2.bf16.msra.mxu0 0
        %4496 = vmatprep.subr.bf16.mxu0 0
        %4497 = vmatpush2.bf16.msra.mxu0 0
        %4498 = vmatprep.subr.bf16.mxu0 0
        %4499 = vmatpush2.bf16.msra.mxu0 0
        %4500 = vmatprep.subr.bf16.mxu0 0
        %4501 = vmatpush2.bf16.msra.mxu0 0
        %4502 = vmatprep.subr.bf16.mxu0 0
        %4503 = vmatpush2.bf16.msra.mxu0 0
        %4504 = vmatprep.mubr.bf16.mxu0 0
        %4505 = vmatmul.mubr.bf16.gmra.mxu0 %v4470
        %v4506 = vpop.f32.mrf.mxu0
        %v4507 = vadd.f32 0.0, %v4506
        %v4508 = vpop.f32.mrf.mxu0
        %v4509 = vpop.f32.mrf.mxu0
        %v4510 = vpop.f32.mrf.mxu0
        %4511 = vdwg.mxu0
        %v4512 = vpack.c.bf16 %v4507, %v4507
        %s4513 = scalar_lea.vmem %s15, 64
        %v4514 = vld [vmem:[%s4513] sm:$0xf]
        %v4515 = vld [vmem:[%s4513 + $0x4] sm:$0xf]
        %v4516 = vld [vmem:[%s4513 + $0x8] sm:$0xf]
        %v4517 = vld [vmem:[%s4513 + $0xc] sm:$0xf]
        %v4518 = vld [vmem:[%s4513 + $0x10] sm:$0xf]
        %v4519 = vld [vmem:[%s4513 + $0x14] sm:$0xf]
        %v4520 = vld [vmem:[%s4513 + $0x18] sm:$0xf]
        %v4521 = vld [vmem:[%s4513 + $0x1c] sm:$0xf]
        %v4530 = vunpack.c.l.b16 %v4514
        %v4531 = vunpack.c.l.b16 %v4515
        %v4532 = vunpack.c.l.b16 %v4516
        %v4533 = vunpack.c.l.b16 %v4517
        %v4534 = vunpack.c.l.b16 %v4518
        %v4535 = vunpack.c.l.b16 %v4519
        %v4536 = vunpack.c.l.b16 %v4520
        %v4537 = vunpack.c.l.b16 %v4521
        %v4538 = vpack.c.b16 %v4531, %v4530
        %v4539 = vpack.c.b16 %v4533, %v4532
        %v4540 = vpack.c.b16 %v4535, %v4534
        %v4541 = vpack.c.b16 %v4537, %v4536
        %v4547 = vsel %vm3045, %v4512, 0
        %4549 = vmatprep.subr.bf16.mxu0 0
        %4550 = vmatpush1.bf16.msra.mxu0 0
        %4551 = vmatprep.subr.bf16.mxu0 0
        %4552 = vmatpush1.bf16.msra.mxu0 0
        %4553 = vmatprep.subr.bf16.mxu0 0
        %4554 = vmatpush1.bf16.msra.mxu0 0
        %4555 = vmatprep.subr.bf16.mxu0 0
        %4556 = vmatpush1.bf16.msra.mxu0 0
        %4557 = vmatprep.subr.bf16.mxu0 0
        %4558 = vmatpush1.bf16.msra.mxu0 %v4541
        %4559 = vmatprep.subr.bf16.mxu0 0
        %4560 = vmatpush1.bf16.msra.mxu0 %v4540
        %4561 = vmatprep.subr.bf16.mxu0 0
        %4562 = vmatpush1.bf16.msra.mxu0 %v4539
        %4563 = vmatprep.subr.bf16.mxu0 0
        %4564 = vmatpush1.bf16.msra.mxu0 %v4538
        %4565 = vmatprep.subr.bf16.mxu0 0
        %4566 = vmatpush2.bf16.msra.mxu0 0
        %4567 = vmatprep.subr.bf16.mxu0 0
        %4568 = vmatpush2.bf16.msra.mxu0 0
        %4569 = vmatprep.subr.bf16.mxu0 0
        %4570 = vmatpush2.bf16.msra.mxu0 0
        %4571 = vmatprep.subr.bf16.mxu0 0
        %4572 = vmatpush2.bf16.msra.mxu0 0
        %4573 = vmatprep.subr.bf16.mxu0 0
        %4574 = vmatpush2.bf16.msra.mxu0 0
        %4575 = vmatprep.subr.bf16.mxu0 0
        %4576 = vmatpush2.bf16.msra.mxu0 0
        %4577 = vmatprep.subr.bf16.mxu0 0
        %4578 = vmatpush2.bf16.msra.mxu0 0
        %4579 = vmatprep.subr.bf16.mxu0 0
        %4580 = vmatpush2.bf16.msra.mxu0 0
        %4581 = vmatprep.mubr.bf16.mxu0 0
        %4582 = vmatmul.mubr.bf16.gmra.mxu0 %v4547
        %v4583 = vpop.f32.mrf.mxu0
        %v4584 = vadd.f32 0.0, %v4583
        %v4585 = vpop.f32.mrf.mxu0
        %v4586 = vpop.f32.mrf.mxu0
        %v4587 = vpop.f32.mrf.mxu0
        %4588 = vdwg.mxu0
        %v4589 = vadd.f32 %v4462, %v4584
        %s4590 = scalar_lea.vmem [#allocation5], 6
        %v4591 = vld [vmem:[%s4590] sm:$0x3]
        %v4593 = vsel %vm1201, %v4591, 0
        %4595 = vmatprep.subr.bf16.mxu0 0
        %4596 = vmatpush1.bf16.msra.mxu0 0
        %4597 = vmatprep.subr.bf16.mxu0 0
        %4598 = vmatpush1.bf16.msra.mxu0 0
        %4599 = vmatprep.subr.bf16.mxu0 0
        %4600 = vmatpush1.bf16.msra.mxu0 0
        %4601 = vmatprep.subr.bf16.mxu0 0
        %4602 = vmatpush1.bf16.msra.mxu0 0
        %4603 = vmatprep.subr.bf16.mxu0 0
        %4604 = vmatpush1.bf16.msra.mxu0 0
        %4605 = vmatprep.subr.bf16.mxu0 0
        %4606 = vmatpush1.bf16.msra.mxu0 0
        %4607 = vmatprep.subr.bf16.mxu0 0
        %4608 = vmatpush1.bf16.msra.mxu0 0
        %4609 = vmatprep.subr.bf16.mxu0 0
        %4610 = vmatpush1.bf16.msra.mxu0 %v4224
        %4611 = vmatprep.subr.bf16.mxu0 0
        %4612 = vmatpush2.bf16.msra.mxu0 0
        %4613 = vmatprep.subr.bf16.mxu0 0
        %4614 = vmatpush2.bf16.msra.mxu0 0
        %4615 = vmatprep.subr.bf16.mxu0 0
        %4616 = vmatpush2.bf16.msra.mxu0 0
        %4617 = vmatprep.subr.bf16.mxu0 0
        %4618 = vmatpush2.bf16.msra.mxu0 0
        %4619 = vmatprep.subr.bf16.mxu0 0
        %4620 = vmatpush2.bf16.msra.mxu0 0
        %4621 = vmatprep.subr.bf16.mxu0 0
        %4622 = vmatpush2.bf16.msra.mxu0 0
        %4623 = vmatprep.subr.bf16.mxu0 0
        %4624 = vmatpush2.bf16.msra.mxu0 0
        %4625 = vmatprep.subr.bf16.mxu0 0
        %4626 = vmatpush2.bf16.msra.mxu0 0
        %4627 = vmatprep.mubr.bf16.mxu0 0
        %4628 = vmatmul.mubr.bf16.gmra.mxu0 %v4593
        %v4629 = vpop.f32.mrf.mxu0
        %v4630 = vadd.f32 0.0, %v4629
        %v4631 = vpop.f32.mrf.mxu0
        %v4632 = vpop.f32.mrf.mxu0
        %v4633 = vpop.f32.mrf.mxu0
        %4634 = vdwg.mxu0
        %v4635 = vpack.c.bf16 %v4630, %v4630
        %s4636 = scalar_lea.vmem %s15, 96
        %v4637 = vld [vmem:[%s4636] sm:$0xf]
        %v4638 = vld [vmem:[%s4636 + $0x4] sm:$0xf]
        %v4639 = vld [vmem:[%s4636 + $0x8] sm:$0xf]
        %v4640 = vld [vmem:[%s4636 + $0xc] sm:$0xf]
        %v4641 = vld [vmem:[%s4636 + $0x10] sm:$0xf]
        %v4642 = vld [vmem:[%s4636 + $0x14] sm:$0xf]
        %v4643 = vld [vmem:[%s4636 + $0x18] sm:$0xf]
        %v4644 = vld [vmem:[%s4636 + $0x1c] sm:$0xf]
        %v4653 = vunpack.c.l.b16 %v4637
        %v4654 = vunpack.c.l.b16 %v4638
        %v4655 = vunpack.c.l.b16 %v4639
        %v4656 = vunpack.c.l.b16 %v4640
        %v4657 = vunpack.c.l.b16 %v4641
        %v4658 = vunpack.c.l.b16 %v4642
        %v4659 = vunpack.c.l.b16 %v4643
        %v4660 = vunpack.c.l.b16 %v4644
        %v4661 = vpack.c.b16 %v4654, %v4653
        %v4662 = vpack.c.b16 %v4656, %v4655
        %v4663 = vpack.c.b16 %v4658, %v4657
        %v4664 = vpack.c.b16 %v4660, %v4659
        %v4670 = vsel %vm3045, %v4635, 0
        %4672 = vmatprep.subr.bf16.mxu0 0
        %4673 = vmatpush1.bf16.msra.mxu0 0
        %4674 = vmatprep.subr.bf16.mxu0 0
        %4675 = vmatpush1.bf16.msra.mxu0 0
        %4676 = vmatprep.subr.bf16.mxu0 0
        %4677 = vmatpush1.bf16.msra.mxu0 0
        %4678 = vmatprep.subr.bf16.mxu0 0
        %4679 = vmatpush1.bf16.msra.mxu0 0
        %4680 = vmatprep.subr.bf16.mxu0 0
        %4681 = vmatpush1.bf16.msra.mxu0 %v4664
        %4682 = vmatprep.subr.bf16.mxu0 0
        %4683 = vmatpush1.bf16.msra.mxu0 %v4663
        %4684 = vmatprep.subr.bf16.mxu0 0
        %4685 = vmatpush1.bf16.msra.mxu0 %v4662
        %4686 = vmatprep.subr.bf16.mxu0 0
        %4687 = vmatpush1.bf16.msra.mxu0 %v4661
        %4688 = vmatprep.subr.bf16.mxu0 0
        %4689 = vmatpush2.bf16.msra.mxu0 0
        %4690 = vmatprep.subr.bf16.mxu0 0
        %4691 = vmatpush2.bf16.msra.mxu0 0
        %4692 = vmatprep.subr.bf16.mxu0 0
        %4693 = vmatpush2.bf16.msra.mxu0 0
        %4694 = vmatprep.subr.bf16.mxu0 0
        %4695 = vmatpush2.bf16.msra.mxu0 0
        %4696 = vmatprep.subr.bf16.mxu0 0
        %4697 = vmatpush2.bf16.msra.mxu0 0
        %4698 = vmatprep.subr.bf16.mxu0 0
        %4699 = vmatpush2.bf16.msra.mxu0 0
        %4700 = vmatprep.subr.bf16.mxu0 0
        %4701 = vmatpush2.bf16.msra.mxu0 0
        %4702 = vmatprep.subr.bf16.mxu0 0
        %4703 = vmatpush2.bf16.msra.mxu0 0
        %4704 = vmatprep.mubr.bf16.mxu0 0
        %4705 = vmatmul.mubr.bf16.gmra.mxu0 %v4670
        %v4706 = vpop.f32.mrf.mxu0
        %v4707 = vadd.f32 0.0, %v4706
        %v4708 = vpop.f32.mrf.mxu0
        %v4709 = vpop.f32.mrf.mxu0
        %v4710 = vpop.f32.mrf.mxu0
        %4711 = vdwg.mxu0
        %v4712 = vadd.f32 %v4589, %v4707
        %s4713 = scalar_lea.vmem [#allocation5], 8
        %v4714 = vld [vmem:[%s4713] sm:$0x3]
        %v4716 = vsel %vm1201, %v4714, 0
        %4718 = vmatprep.subr.bf16.mxu0 0
        %4719 = vmatpush1.bf16.msra.mxu0 0
        %4720 = vmatprep.subr.bf16.mxu0 0
        %4721 = vmatpush1.bf16.msra.mxu0 0
        %4722 = vmatprep.subr.bf16.mxu0 0
        %4723 = vmatpush1.bf16.msra.mxu0 0
        %4724 = vmatprep.subr.bf16.mxu0 0
        %4725 = vmatpush1.bf16.msra.mxu0 0
        %4726 = vmatprep.subr.bf16.mxu0 0
        %4727 = vmatpush1.bf16.msra.mxu0 0
        %4728 = vmatprep.subr.bf16.mxu0 0
        %4729 = vmatpush1.bf16.msra.mxu0 0
        %4730 = vmatprep.subr.bf16.mxu0 0
        %4731 = vmatpush1.bf16.msra.mxu0 0
        %4732 = vmatprep.subr.bf16.mxu0 0
        %4733 = vmatpush1.bf16.msra.mxu0 %v4224
        %4734 = vmatprep.subr.bf16.mxu0 0
        %4735 = vmatpush2.bf16.msra.mxu0 0
        %4736 = vmatprep.subr.bf16.mxu0 0
        %4737 = vmatpush2.bf16.msra.mxu0 0
        %4738 = vmatprep.subr.bf16.mxu0 0
        %4739 = vmatpush2.bf16.msra.mxu0 0
        %4740 = vmatprep.subr.bf16.mxu0 0
        %4741 = vmatpush2.bf16.msra.mxu0 0
        %4742 = vmatprep.subr.bf16.mxu0 0
        %4743 = vmatpush2.bf16.msra.mxu0 0
        %4744 = vmatprep.subr.bf16.mxu0 0
        %4745 = vmatpush2.bf16.msra.mxu0 0
        %4746 = vmatprep.subr.bf16.mxu0 0
        %4747 = vmatpush2.bf16.msra.mxu0 0
        %4748 = vmatprep.subr.bf16.mxu0 0
        %4749 = vmatpush2.bf16.msra.mxu0 0
        %4750 = vmatprep.mubr.bf16.mxu0 0
        %4751 = vmatmul.mubr.bf16.gmra.mxu0 %v4716
        %v4752 = vpop.f32.mrf.mxu0
        %v4753 = vadd.f32 0.0, %v4752
        %v4754 = vpop.f32.mrf.mxu0
        %v4755 = vpop.f32.mrf.mxu0
        %v4756 = vpop.f32.mrf.mxu0
        %4757 = vdwg.mxu0
        %v4758 = vpack.c.bf16 %v4753, %v4753
        %s4759 = scalar_lea.vmem %s15, 128
        %v4760 = vld [vmem:[%s4759] sm:$0xf]
        %v4761 = vld [vmem:[%s4759 + $0x4] sm:$0xf]
        %v4762 = vld [vmem:[%s4759 + $0x8] sm:$0xf]
        %v4763 = vld [vmem:[%s4759 + $0xc] sm:$0xf]
        %v4764 = vld [vmem:[%s4759 + $0x10] sm:$0xf]
        %v4765 = vld [vmem:[%s4759 + $0x14] sm:$0xf]
        %v4766 = vld [vmem:[%s4759 + $0x18] sm:$0xf]
        %v4767 = vld [vmem:[%s4759 + $0x1c] sm:$0xf]
        %v4776 = vunpack.c.l.b16 %v4760
        %v4777 = vunpack.c.l.b16 %v4761
        %v4778 = vunpack.c.l.b16 %v4762
        %v4779 = vunpack.c.l.b16 %v4763
        %v4780 = vunpack.c.l.b16 %v4764
        %v4781 = vunpack.c.l.b16 %v4765
        %v4782 = vunpack.c.l.b16 %v4766
        %v4783 = vunpack.c.l.b16 %v4767
        %v4784 = vpack.c.b16 %v4777, %v4776
        %v4785 = vpack.c.b16 %v4779, %v4778
        %v4786 = vpack.c.b16 %v4781, %v4780
        %v4787 = vpack.c.b16 %v4783, %v4782
        %v4793 = vsel %vm3045, %v4758, 0
        %4795 = vmatprep.subr.bf16.mxu0 0
        %4796 = vmatpush1.bf16.msra.mxu0 0
        %4797 = vmatprep.subr.bf16.mxu0 0
        %4798 = vmatpush1.bf16.msra.mxu0 0
        %4799 = vmatprep.subr.bf16.mxu0 0
        %4800 = vmatpush1.bf16.msra.mxu0 0
        %4801 = vmatprep.subr.bf16.mxu0 0
        %4802 = vmatpush1.bf16.msra.mxu0 0
        %4803 = vmatprep.subr.bf16.mxu0 0
        %4804 = vmatpush1.bf16.msra.mxu0 %v4787
        %4805 = vmatprep.subr.bf16.mxu0 0
        %4806 = vmatpush1.bf16.msra.mxu0 %v4786
        %4807 = vmatprep.subr.bf16.mxu0 0
        %4808 = vmatpush1.bf16.msra.mxu0 %v4785
        %4809 = vmatprep.subr.bf16.mxu0 0
        %4810 = vmatpush1.bf16.msra.mxu0 %v4784
        %4811 = vmatprep.subr.bf16.mxu0 0
        %4812 = vmatpush2.bf16.msra.mxu0 0
        %4813 = vmatprep.subr.bf16.mxu0 0
        %4814 = vmatpush2.bf16.msra.mxu0 0
        %4815 = vmatprep.subr.bf16.mxu0 0
        %4816 = vmatpush2.bf16.msra.mxu0 0
        %4817 = vmatprep.subr.bf16.mxu0 0
        %4818 = vmatpush2.bf16.msra.mxu0 0
        %4819 = vmatprep.subr.bf16.mxu0 0
        %4820 = vmatpush2.bf16.msra.mxu0 0
        %4821 = vmatprep.subr.bf16.mxu0 0
        %4822 = vmatpush2.bf16.msra.mxu0 0
        %4823 = vmatprep.subr.bf16.mxu0 0
        %4824 = vmatpush2.bf16.msra.mxu0 0
        %4825 = vmatprep.subr.bf16.mxu0 0
        %4826 = vmatpush2.bf16.msra.mxu0 0
        %4827 = vmatprep.mubr.bf16.mxu0 0
        %4828 = vmatmul.mubr.bf16.gmra.mxu0 %v4793
        %v4829 = vpop.f32.mrf.mxu0
        %v4830 = vadd.f32 0.0, %v4829
        %v4831 = vpop.f32.mrf.mxu0
        %v4832 = vpop.f32.mrf.mxu0
        %v4833 = vpop.f32.mrf.mxu0
        %4834 = vdwg.mxu0
        %v4835 = vadd.f32 %v4712, %v4830
        %s4836 = scalar_lea.vmem [#allocation5], 10
        %v4837 = vld [vmem:[%s4836] sm:$0x3]
        %v4839 = vsel %vm1201, %v4837, 0
        %4841 = vmatprep.subr.bf16.mxu0 0
        %4842 = vmatpush1.bf16.msra.mxu0 0
        %4843 = vmatprep.subr.bf16.mxu0 0
        %4844 = vmatpush1.bf16.msra.mxu0 0
        %4845 = vmatprep.subr.bf16.mxu0 0
        %4846 = vmatpush1.bf16.msra.mxu0 0
        %4847 = vmatprep.subr.bf16.mxu0 0
        %4848 = vmatpush1.bf16.msra.mxu0 0
        %4849 = vmatprep.subr.bf16.mxu0 0
        %4850 = vmatpush1.bf16.msra.mxu0 0
        %4851 = vmatprep.subr.bf16.mxu0 0
        %4852 = vmatpush1.bf16.msra.mxu0 0
        %4853 = vmatprep.subr.bf16.mxu0 0
        %4854 = vmatpush1.bf16.msra.mxu0 0
        %4855 = vmatprep.subr.bf16.mxu0 0
        %4856 = vmatpush1.bf16.msra.mxu0 %v4224
        %4857 = vmatprep.subr.bf16.mxu0 0
        %4858 = vmatpush2.bf16.msra.mxu0 0
        %4859 = vmatprep.subr.bf16.mxu0 0
        %4860 = vmatpush2.bf16.msra.mxu0 0
        %4861 = vmatprep.subr.bf16.mxu0 0
        %4862 = vmatpush2.bf16.msra.mxu0 0
        %4863 = vmatprep.subr.bf16.mxu0 0
        %4864 = vmatpush2.bf16.msra.mxu0 0
        %4865 = vmatprep.subr.bf16.mxu0 0
        %4866 = vmatpush2.bf16.msra.mxu0 0
        %4867 = vmatprep.subr.bf16.mxu0 0
        %4868 = vmatpush2.bf16.msra.mxu0 0
        %4869 = vmatprep.subr.bf16.mxu0 0
        %4870 = vmatpush2.bf16.msra.mxu0 0
        %4871 = vmatprep.subr.bf16.mxu0 0
        %4872 = vmatpush2.bf16.msra.mxu0 0
        %4873 = vmatprep.mubr.bf16.mxu0 0
        %4874 = vmatmul.mubr.bf16.gmra.mxu0 %v4839
        %v4875 = vpop.f32.mrf.mxu0
        %v4876 = vadd.f32 0.0, %v4875
        %v4877 = vpop.f32.mrf.mxu0
        %v4878 = vpop.f32.mrf.mxu0
        %v4879 = vpop.f32.mrf.mxu0
        %4880 = vdwg.mxu0
        %v4881 = vpack.c.bf16 %v4876, %v4876
        %s4882 = scalar_lea.vmem %s15, 160
        %v4883 = vld [vmem:[%s4882] sm:$0xf]
        %v4884 = vld [vmem:[%s4882 + $0x4] sm:$0xf]
        %v4885 = vld [vmem:[%s4882 + $0x8] sm:$0xf]
        %v4886 = vld [vmem:[%s4882 + $0xc] sm:$0xf]
        %v4887 = vld [vmem:[%s4882 + $0x10] sm:$0xf]
        %v4888 = vld [vmem:[%s4882 + $0x14] sm:$0xf]
        %v4889 = vld [vmem:[%s4882 + $0x18] sm:$0xf]
        %v4890 = vld [vmem:[%s4882 + $0x1c] sm:$0xf]
        %v4899 = vunpack.c.l.b16 %v4883
        %v4900 = vunpack.c.l.b16 %v4884
        %v4901 = vunpack.c.l.b16 %v4885
        %v4902 = vunpack.c.l.b16 %v4886
        %v4903 = vunpack.c.l.b16 %v4887
        %v4904 = vunpack.c.l.b16 %v4888
        %v4905 = vunpack.c.l.b16 %v4889
        %v4906 = vunpack.c.l.b16 %v4890
        %v4907 = vpack.c.b16 %v4900, %v4899
        %v4908 = vpack.c.b16 %v4902, %v4901
        %v4909 = vpack.c.b16 %v4904, %v4903
        %v4910 = vpack.c.b16 %v4906, %v4905
        %v4916 = vsel %vm3045, %v4881, 0
        %4918 = vmatprep.subr.bf16.mxu0 0
        %4919 = vmatpush1.bf16.msra.mxu0 0
        %4920 = vmatprep.subr.bf16.mxu0 0
        %4921 = vmatpush1.bf16.msra.mxu0 0
        %4922 = vmatprep.subr.bf16.mxu0 0
        %4923 = vmatpush1.bf16.msra.mxu0 0
        %4924 = vmatprep.subr.bf16.mxu0 0
        %4925 = vmatpush1.bf16.msra.mxu0 0
        %4926 = vmatprep.subr.bf16.mxu0 0
        %4927 = vmatpush1.bf16.msra.mxu0 %v4910
        %4928 = vmatprep.subr.bf16.mxu0 0
        %4929 = vmatpush1.bf16.msra.mxu0 %v4909
        %4930 = vmatprep.subr.bf16.mxu0 0
        %4931 = vmatpush1.bf16.msra.mxu0 %v4908
        %4932 = vmatprep.subr.bf16.mxu0 0
        %4933 = vmatpush1.bf16.msra.mxu0 %v4907
        %4934 = vmatprep.subr.bf16.mxu0 0
        %4935 = vmatpush2.bf16.msra.mxu0 0
        %4936 = vmatprep.subr.bf16.mxu0 0
        %4937 = vmatpush2.bf16.msra.mxu0 0
        %4938 = vmatprep.subr.bf16.mxu0 0
        %4939 = vmatpush2.bf16.msra.mxu0 0
        %4940 = vmatprep.subr.bf16.mxu0 0
        %4941 = vmatpush2.bf16.msra.mxu0 0
        %4942 = vmatprep.subr.bf16.mxu0 0
        %4943 = vmatpush2.bf16.msra.mxu0 0
        %4944 = vmatprep.subr.bf16.mxu0 0
        %4945 = vmatpush2.bf16.msra.mxu0 0
        %4946 = vmatprep.subr.bf16.mxu0 0
        %4947 = vmatpush2.bf16.msra.mxu0 0
        %4948 = vmatprep.subr.bf16.mxu0 0
        %4949 = vmatpush2.bf16.msra.mxu0 0
        %4950 = vmatprep.mubr.bf16.mxu0 0
        %4951 = vmatmul.mubr.bf16.gmra.mxu0 %v4916
        %v4952 = vpop.f32.mrf.mxu0
        %v4953 = vadd.f32 0.0, %v4952
        %v4954 = vpop.f32.mrf.mxu0
        %v4955 = vpop.f32.mrf.mxu0
        %v4956 = vpop.f32.mrf.mxu0
        %4957 = vdwg.mxu0
        %v4958 = vadd.f32 %v4835, %v4953
        %s4959 = scalar_lea.vmem [#allocation5], 12
        %v4960 = vld [vmem:[%s4959] sm:$0x3]
        %v4962 = vsel %vm1201, %v4960, 0
        %4964 = vmatprep.subr.bf16.mxu0 0
        %4965 = vmatpush1.bf16.msra.mxu0 0
        %4966 = vmatprep.subr.bf16.mxu0 0
        %4967 = vmatpush1.bf16.msra.mxu0 0
        %4968 = vmatprep.subr.bf16.mxu0 0
        %4969 = vmatpush1.bf16.msra.mxu0 0
        %4970 = vmatprep.subr.bf16.mxu0 0
        %4971 = vmatpush1.bf16.msra.mxu0 0
        %4972 = vmatprep.subr.bf16.mxu0 0
        %4973 = vmatpush1.bf16.msra.mxu0 0
        %4974 = vmatprep.subr.bf16.mxu0 0
        %4975 = vmatpush1.bf16.msra.mxu0 0
        %4976 = vmatprep.subr.bf16.mxu0 0
        %4977 = vmatpush1.bf16.msra.mxu0 0
        %4978 = vmatprep.subr.bf16.mxu0 0
        %4979 = vmatpush1.bf16.msra.mxu0 %v4224
        %4980 = vmatprep.subr.bf16.mxu0 0
        %4981 = vmatpush2.bf16.msra.mxu0 0
        %4982 = vmatprep.subr.bf16.mxu0 0
        %4983 = vmatpush2.bf16.msra.mxu0 0
        %4984 = vmatprep.subr.bf16.mxu0 0
        %4985 = vmatpush2.bf16.msra.mxu0 0
        %4986 = vmatprep.subr.bf16.mxu0 0
        %4987 = vmatpush2.bf16.msra.mxu0 0
        %4988 = vmatprep.subr.bf16.mxu0 0
        %4989 = vmatpush2.bf16.msra.mxu0 0
        %4990 = vmatprep.subr.bf16.mxu0 0
        %4991 = vmatpush2.bf16.msra.mxu0 0
        %4992 = vmatprep.subr.bf16.mxu0 0
        %4993 = vmatpush2.bf16.msra.mxu0 0
        %4994 = vmatprep.subr.bf16.mxu0 0
        %4995 = vmatpush2.bf16.msra.mxu0 0
        %4996 = vmatprep.mubr.bf16.mxu0 0
        %4997 = vmatmul.mubr.bf16.gmra.mxu0 %v4962
        %v4998 = vpop.f32.mrf.mxu0
        %v4999 = vadd.f32 0.0, %v4998
        %v5000 = vpop.f32.mrf.mxu0
        %v5001 = vpop.f32.mrf.mxu0
        %v5002 = vpop.f32.mrf.mxu0
        %5003 = vdwg.mxu0
        %v5004 = vpack.c.bf16 %v4999, %v4999
        %s5005 = scalar_lea.vmem %s15, 192
        %v5006 = vld [vmem:[%s5005] sm:$0xf]
        %v5007 = vld [vmem:[%s5005 + $0x4] sm:$0xf]
        %v5008 = vld [vmem:[%s5005 + $0x8] sm:$0xf]
        %v5009 = vld [vmem:[%s5005 + $0xc] sm:$0xf]
        %v5010 = vld [vmem:[%s5005 + $0x10] sm:$0xf]
        %v5011 = vld [vmem:[%s5005 + $0x14] sm:$0xf]
        %v5012 = vld [vmem:[%s5005 + $0x18] sm:$0xf]
        %v5013 = vld [vmem:[%s5005 + $0x1c] sm:$0xf]
        %v5022 = vunpack.c.l.b16 %v5006
        %v5023 = vunpack.c.l.b16 %v5007
        %v5024 = vunpack.c.l.b16 %v5008
        %v5025 = vunpack.c.l.b16 %v5009
        %v5026 = vunpack.c.l.b16 %v5010
        %v5027 = vunpack.c.l.b16 %v5011
        %v5028 = vunpack.c.l.b16 %v5012
        %v5029 = vunpack.c.l.b16 %v5013
        %v5030 = vpack.c.b16 %v5023, %v5022
        %v5031 = vpack.c.b16 %v5025, %v5024
        %v5032 = vpack.c.b16 %v5027, %v5026
        %v5033 = vpack.c.b16 %v5029, %v5028
        %v5039 = vsel %vm3045, %v5004, 0
        %5041 = vmatprep.subr.bf16.mxu0 0
        %5042 = vmatpush1.bf16.msra.mxu0 0
        %5043 = vmatprep.subr.bf16.mxu0 0
        %5044 = vmatpush1.bf16.msra.mxu0 0
        %5045 = vmatprep.subr.bf16.mxu0 0
        %5046 = vmatpush1.bf16.msra.mxu0 0
        %5047 = vmatprep.subr.bf16.mxu0 0
        %5048 = vmatpush1.bf16.msra.mxu0 0
        %5049 = vmatprep.subr.bf16.mxu0 0
        %5050 = vmatpush1.bf16.msra.mxu0 %v5033
        %5051 = vmatprep.subr.bf16.mxu0 0
        %5052 = vmatpush1.bf16.msra.mxu0 %v5032
        %5053 = vmatprep.subr.bf16.mxu0 0
        %5054 = vmatpush1.bf16.msra.mxu0 %v5031
        %5055 = vmatprep.subr.bf16.mxu0 0
        %5056 = vmatpush1.bf16.msra.mxu0 %v5030
        %5057 = vmatprep.subr.bf16.mxu0 0
        %5058 = vmatpush2.bf16.msra.mxu0 0
        %5059 = vmatprep.subr.bf16.mxu0 0
        %5060 = vmatpush2.bf16.msra.mxu0 0
        %5061 = vmatprep.subr.bf16.mxu0 0
        %5062 = vmatpush2.bf16.msra.mxu0 0
        %5063 = vmatprep.subr.bf16.mxu0 0
        %5064 = vmatpush2.bf16.msra.mxu0 0
        %5065 = vmatprep.subr.bf16.mxu0 0
        %5066 = vmatpush2.bf16.msra.mxu0 0
        %5067 = vmatprep.subr.bf16.mxu0 0
        %5068 = vmatpush2.bf16.msra.mxu0 0
        %5069 = vmatprep.subr.bf16.mxu0 0
        %5070 = vmatpush2.bf16.msra.mxu0 0
        %5071 = vmatprep.subr.bf16.mxu0 0
        %5072 = vmatpush2.bf16.msra.mxu0 0
        %5073 = vmatprep.mubr.bf16.mxu0 0
        %5074 = vmatmul.mubr.bf16.gmra.mxu0 %v5039
        %v5075 = vpop.f32.mrf.mxu0
        %v5076 = vadd.f32 0.0, %v5075
        %v5077 = vpop.f32.mrf.mxu0
        %v5078 = vpop.f32.mrf.mxu0
        %v5079 = vpop.f32.mrf.mxu0
        %5080 = vdwg.mxu0
        %v5081 = vadd.f32 %v4958, %v5076
        %s5082 = scalar_lea.vmem [#allocation5], 14
        %v5083 = vld [vmem:[%s5082] sm:$0x3]
        %v5085 = vsel %vm1201, %v5083, 0
        %5087 = vmatprep.subr.bf16.mxu0 0
        %5088 = vmatpush1.bf16.msra.mxu0 0
        %5089 = vmatprep.subr.bf16.mxu0 0
        %5090 = vmatpush1.bf16.msra.mxu0 0
        %5091 = vmatprep.subr.bf16.mxu0 0
        %5092 = vmatpush1.bf16.msra.mxu0 0
        %5093 = vmatprep.subr.bf16.mxu0 0
        %5094 = vmatpush1.bf16.msra.mxu0 0
        %5095 = vmatprep.subr.bf16.mxu0 0
        %5096 = vmatpush1.bf16.msra.mxu0 0
        %5097 = vmatprep.subr.bf16.mxu0 0
        %5098 = vmatpush1.bf16.msra.mxu0 0
        %5099 = vmatprep.subr.bf16.mxu0 0
        %5100 = vmatpush1.bf16.msra.mxu0 0
        %5101 = vmatprep.subr.bf16.mxu0 0
        %5102 = vmatpush1.bf16.msra.mxu0 %v4224
        %5103 = vmatprep.subr.bf16.mxu0 0
        %5104 = vmatpush2.bf16.msra.mxu0 0
        %5105 = vmatprep.subr.bf16.mxu0 0
        %5106 = vmatpush2.bf16.msra.mxu0 0
        %5107 = vmatprep.subr.bf16.mxu0 0
        %5108 = vmatpush2.bf16.msra.mxu0 0
        %5109 = vmatprep.subr.bf16.mxu0 0
        %5110 = vmatpush2.bf16.msra.mxu0 0
        %5111 = vmatprep.subr.bf16.mxu0 0
        %5112 = vmatpush2.bf16.msra.mxu0 0
        %5113 = vmatprep.subr.bf16.mxu0 0
        %5114 = vmatpush2.bf16.msra.mxu0 0
        %5115 = vmatprep.subr.bf16.mxu0 0
        %5116 = vmatpush2.bf16.msra.mxu0 0
        %5117 = vmatprep.subr.bf16.mxu0 0
        %5118 = vmatpush2.bf16.msra.mxu0 0
        %5119 = vmatprep.mubr.bf16.mxu0 0
        %5120 = vmatmul.mubr.bf16.gmra.mxu0 %v5085
        %v5121 = vpop.f32.mrf.mxu0
        %v5122 = vadd.f32 0.0, %v5121
        %v5123 = vpop.f32.mrf.mxu0
        %v5124 = vpop.f32.mrf.mxu0
        %v5125 = vpop.f32.mrf.mxu0
        %5126 = vdwg.mxu0
        %v5127 = vpack.c.bf16 %v5122, %v5122
        %s5128 = scalar_lea.vmem %s15, 224
        %v5129 = vld [vmem:[%s5128] sm:$0xf]
        %v5130 = vld [vmem:[%s5128 + $0x4] sm:$0xf]
        %v5131 = vld [vmem:[%s5128 + $0x8] sm:$0xf]
        %v5132 = vld [vmem:[%s5128 + $0xc] sm:$0xf]
        %v5133 = vld [vmem:[%s5128 + $0x10] sm:$0xf]
        %v5134 = vld [vmem:[%s5128 + $0x14] sm:$0xf]
        %v5135 = vld [vmem:[%s5128 + $0x18] sm:$0xf]
        %v5136 = vld [vmem:[%s5128 + $0x1c] sm:$0xf]
        %v5145 = vunpack.c.l.b16 %v5129
        %v5146 = vunpack.c.l.b16 %v5130
        %v5147 = vunpack.c.l.b16 %v5131
        %v5148 = vunpack.c.l.b16 %v5132
        %v5149 = vunpack.c.l.b16 %v5133
        %v5150 = vunpack.c.l.b16 %v5134
        %v5151 = vunpack.c.l.b16 %v5135
        %v5152 = vunpack.c.l.b16 %v5136
        %v5153 = vpack.c.b16 %v5146, %v5145
        %v5154 = vpack.c.b16 %v5148, %v5147
        %v5155 = vpack.c.b16 %v5150, %v5149
        %v5156 = vpack.c.b16 %v5152, %v5151
        %v5162 = vsel %vm3045, %v5127, 0
        %5164 = vmatprep.subr.bf16.mxu0 0
        %5165 = vmatpush1.bf16.msra.mxu0 0
        %5166 = vmatprep.subr.bf16.mxu0 0
        %5167 = vmatpush1.bf16.msra.mxu0 0
        %5168 = vmatprep.subr.bf16.mxu0 0
        %5169 = vmatpush1.bf16.msra.mxu0 0
        %5170 = vmatprep.subr.bf16.mxu0 0
        %5171 = vmatpush1.bf16.msra.mxu0 0
        %5172 = vmatprep.subr.bf16.mxu0 0
        %5173 = vmatpush1.bf16.msra.mxu0 %v5156
        %5174 = vmatprep.subr.bf16.mxu0 0
        %5175 = vmatpush1.bf16.msra.mxu0 %v5155
        %5176 = vmatprep.subr.bf16.mxu0 0
        %5177 = vmatpush1.bf16.msra.mxu0 %v5154
        %5178 = vmatprep.subr.bf16.mxu0 0
        %5179 = vmatpush1.bf16.msra.mxu0 %v5153
        %5180 = vmatprep.subr.bf16.mxu0 0
        %5181 = vmatpush2.bf16.msra.mxu0 0
        %5182 = vmatprep.subr.bf16.mxu0 0
        %5183 = vmatpush2.bf16.msra.mxu0 0
        %5184 = vmatprep.subr.bf16.mxu0 0
        %5185 = vmatpush2.bf16.msra.mxu0 0
        %5186 = vmatprep.subr.bf16.mxu0 0
        %5187 = vmatpush2.bf16.msra.mxu0 0
        %5188 = vmatprep.subr.bf16.mxu0 0
        %5189 = vmatpush2.bf16.msra.mxu0 0
        %5190 = vmatprep.subr.bf16.mxu0 0
        %5191 = vmatpush2.bf16.msra.mxu0 0
        %5192 = vmatprep.subr.bf16.mxu0 0
        %5193 = vmatpush2.bf16.msra.mxu0 0
        %5194 = vmatprep.subr.bf16.mxu0 0
        %5195 = vmatpush2.bf16.msra.mxu0 0
        %5196 = vmatprep.mubr.bf16.mxu0 0
        %5197 = vmatmul.mubr.bf16.gmra.mxu0 %v5162
        %v5198 = vpop.f32.mrf.mxu0
        %v5199 = vadd.f32 0.0, %v5198
        %v5200 = vpop.f32.mrf.mxu0
        %v5201 = vpop.f32.mrf.mxu0
        %v5202 = vpop.f32.mrf.mxu0
        %5203 = vdwg.mxu0
        %v5204 = vadd.f32 %v5081, %v5199
        %s5205 = scalar_lea.vmem [#allocation5], 16
        %v5206 = vld [vmem:[%s5205] sm:$0x3]
        %v5208 = vsel %vm1201, %v5206, 0
        %5210 = vmatprep.subr.bf16.mxu0 0
        %5211 = vmatpush1.bf16.msra.mxu0 0
        %5212 = vmatprep.subr.bf16.mxu0 0
        %5213 = vmatpush1.bf16.msra.mxu0 0
        %5214 = vmatprep.subr.bf16.mxu0 0
        %5215 = vmatpush1.bf16.msra.mxu0 0
        %5216 = vmatprep.subr.bf16.mxu0 0
        %5217 = vmatpush1.bf16.msra.mxu0 0
        %5218 = vmatprep.subr.bf16.mxu0 0
        %5219 = vmatpush1.bf16.msra.mxu0 0
        %5220 = vmatprep.subr.bf16.mxu0 0
        %5221 = vmatpush1.bf16.msra.mxu0 0
        %5222 = vmatprep.subr.bf16.mxu0 0
        %5223 = vmatpush1.bf16.msra.mxu0 0
        %5224 = vmatprep.subr.bf16.mxu0 0
        %5225 = vmatpush1.bf16.msra.mxu0 %v4224
        %5226 = vmatprep.subr.bf16.mxu0 0
        %5227 = vmatpush2.bf16.msra.mxu0 0
        %5228 = vmatprep.subr.bf16.mxu0 0
        %5229 = vmatpush2.bf16.msra.mxu0 0
        %5230 = vmatprep.subr.bf16.mxu0 0
        %5231 = vmatpush2.bf16.msra.mxu0 0
        %5232 = vmatprep.subr.bf16.mxu0 0
        %5233 = vmatpush2.bf16.msra.mxu0 0
        %5234 = vmatprep.subr.bf16.mxu0 0
        %5235 = vmatpush2.bf16.msra.mxu0 0
        %5236 = vmatprep.subr.bf16.mxu0 0
        %5237 = vmatpush2.bf16.msra.mxu0 0
        %5238 = vmatprep.subr.bf16.mxu0 0
        %5239 = vmatpush2.bf16.msra.mxu0 0
        %5240 = vmatprep.subr.bf16.mxu0 0
        %5241 = vmatpush2.bf16.msra.mxu0 0
        %5242 = vmatprep.mubr.bf16.mxu0 0
        %5243 = vmatmul.mubr.bf16.gmra.mxu0 %v5208
        %v5244 = vpop.f32.mrf.mxu0
        %v5245 = vadd.f32 0.0, %v5244
        %v5246 = vpop.f32.mrf.mxu0
        %v5247 = vpop.f32.mrf.mxu0
        %v5248 = vpop.f32.mrf.mxu0
        %5249 = vdwg.mxu0
        %v5250 = vpack.c.bf16 %v5245, %v5245
        %s5251 = scalar_lea.vmem %s15, 256
        %v5252 = vld [vmem:[%s5251] sm:$0xf]
        %v5253 = vld [vmem:[%s5251 + $0x4] sm:$0xf]
        %v5254 = vld [vmem:[%s5251 + $0x8] sm:$0xf]
        %v5255 = vld [vmem:[%s5251 + $0xc] sm:$0xf]
        %v5256 = vld [vmem:[%s5251 + $0x10] sm:$0xf]
        %v5257 = vld [vmem:[%s5251 + $0x14] sm:$0xf]
        %v5258 = vld [vmem:[%s5251 + $0x18] sm:$0xf]
        %v5259 = vld [vmem:[%s5251 + $0x1c] sm:$0xf]
        %v5268 = vunpack.c.l.b16 %v5252
        %v5269 = vunpack.c.l.b16 %v5253
        %v5270 = vunpack.c.l.b16 %v5254
        %v5271 = vunpack.c.l.b16 %v5255
        %v5272 = vunpack.c.l.b16 %v5256
        %v5273 = vunpack.c.l.b16 %v5257
        %v5274 = vunpack.c.l.b16 %v5258
        %v5275 = vunpack.c.l.b16 %v5259
        %v5276 = vpack.c.b16 %v5269, %v5268
        %v5277 = vpack.c.b16 %v5271, %v5270
        %v5278 = vpack.c.b16 %v5273, %v5272
        %v5279 = vpack.c.b16 %v5275, %v5274
        %v5285 = vsel %vm3045, %v5250, 0
        %5287 = vmatprep.subr.bf16.mxu0 0
        %5288 = vmatpush1.bf16.msra.mxu0 0
        %5289 = vmatprep.subr.bf16.mxu0 0
        %5290 = vmatpush1.bf16.msra.mxu0 0
        %5291 = vmatprep.subr.bf16.mxu0 0
        %5292 = vmatpush1.bf16.msra.mxu0 0
        %5293 = vmatprep.subr.bf16.mxu0 0
        %5294 = vmatpush1.bf16.msra.mxu0 0
        %5295 = vmatprep.subr.bf16.mxu0 0
        %5296 = vmatpush1.bf16.msra.mxu0 %v5279
        %5297 = vmatprep.subr.bf16.mxu0 0
        %5298 = vmatpush1.bf16.msra.mxu0 %v5278
        %5299 = vmatprep.subr.bf16.mxu0 0
        %5300 = vmatpush1.bf16.msra.mxu0 %v5277
        %5301 = vmatprep.subr.bf16.mxu0 0
        %5302 = vmatpush1.bf16.msra.mxu0 %v5276
        %5303 = vmatprep.subr.bf16.mxu0 0
        %5304 = vmatpush2.bf16.msra.mxu0 0
        %5305 = vmatprep.subr.bf16.mxu0 0
        %5306 = vmatpush2.bf16.msra.mxu0 0
        %5307 = vmatprep.subr.bf16.mxu0 0
        %5308 = vmatpush2.bf16.msra.mxu0 0
        %5309 = vmatprep.subr.bf16.mxu0 0
        %5310 = vmatpush2.bf16.msra.mxu0 0
        %5311 = vmatprep.subr.bf16.mxu0 0
        %5312 = vmatpush2.bf16.msra.mxu0 0
        %5313 = vmatprep.subr.bf16.mxu0 0
        %5314 = vmatpush2.bf16.msra.mxu0 0
        %5315 = vmatprep.subr.bf16.mxu0 0
        %5316 = vmatpush2.bf16.msra.mxu0 0
        %5317 = vmatprep.subr.bf16.mxu0 0
        %5318 = vmatpush2.bf16.msra.mxu0 0
        %5319 = vmatprep.mubr.bf16.mxu0 0
        %5320 = vmatmul.mubr.bf16.gmra.mxu0 %v5285
        %v5321 = vpop.f32.mrf.mxu0
        %v5322 = vadd.f32 0.0, %v5321
        %v5323 = vpop.f32.mrf.mxu0
        %v5324 = vpop.f32.mrf.mxu0
        %v5325 = vpop.f32.mrf.mxu0
        %5326 = vdwg.mxu0
        %v5327 = vadd.f32 %v5204, %v5322
        %v5328 = vmax.f32 %v5327, 0.0
        %v5329 = vpack.c.bf16 %v5328, %v5328
        %v5330 = vld [vmem:[%s6] sm:$0x3]
        %vm5331 = vcmask 31744
        %v5333 = vsel %vm5331, %v5330, 0
        %vm5335 = vcmask 1041408
        %v5337 = vsel %vm5335, %v5329, 0
        %5339 = vmatprep.subr.bf16.mxu0 0
        %5340 = vmatpush1.bf16.msra.mxu0 0
        %5341 = vmatprep.subr.bf16.mxu0 0
        %5342 = vmatpush1.bf16.msra.mxu0 0
        %5343 = vmatprep.subr.bf16.mxu0 0
        %5344 = vmatpush1.bf16.msra.mxu0 0
        %5345 = vmatprep.subr.bf16.mxu0 0
        %5346 = vmatpush1.bf16.msra.mxu0 0
        %5347 = vmatprep.subr.bf16.mxu0 0
        %5348 = vmatpush1.bf16.msra.mxu0 0
        %5349 = vmatprep.subr.bf16.mxu0 0
        %5350 = vmatpush1.bf16.msra.mxu0 0
        %5351 = vmatprep.subr.bf16.mxu0 0
        %5352 = vmatpush1.bf16.msra.mxu0 0
        %5353 = vmatprep.subr.bf16.mxu0 0
        %5354 = vmatpush1.bf16.msra.mxu0 %v5337
        %5355 = vmatprep.subr.bf16.mxu0 0
        %5356 = vmatpush2.bf16.msra.mxu0 0
        %5357 = vmatprep.subr.bf16.mxu0 0
        %5358 = vmatpush2.bf16.msra.mxu0 0
        %5359 = vmatprep.subr.bf16.mxu0 0
        %5360 = vmatpush2.bf16.msra.mxu0 0
        %5361 = vmatprep.subr.bf16.mxu0 0
        %5362 = vmatpush2.bf16.msra.mxu0 0
        %5363 = vmatprep.subr.bf16.mxu0 0
        %5364 = vmatpush2.bf16.msra.mxu0 0
        %5365 = vmatprep.subr.bf16.mxu0 0
        %5366 = vmatpush2.bf16.msra.mxu0 0
        %5367 = vmatprep.subr.bf16.mxu0 0
        %5368 = vmatpush2.bf16.msra.mxu0 0
        %5369 = vmatprep.subr.bf16.mxu0 0
        %5370 = vmatpush2.bf16.msra.mxu0 0
        %5371 = vmatprep.mubr.bf16.mxu0 0
        %5372 = vmatmul.mubr.bf16.gmra.mxu0 %v5333
        %v5373 = vpop.f32.mrf.mxu0
        %v5374 = vadd.f32 0.0, %v5373
        %v5375 = vpop.f32.mrf.mxu0
        %v5376 = vpop.f32.mrf.mxu0
        %v5377 = vpop.f32.mrf.mxu0
        %5378 = vdwg.mxu0
        %v5379 = vpack.c.bf16 %v5374, %v5374
        %v5380 = vld [vmem:[%s16] sm:$0xf]
        %v5381 = vld [vmem:[%s16 + $0x4] sm:$0xf]
        %v5382 = vld [vmem:[%s16 + $0x8] sm:$0xf]
        %v5383 = vld [vmem:[%s16 + $0xc] sm:$0xf]
        %v5384 = vld [vmem:[%s16 + $0x10] sm:$0xf]
        %v5385 = vld [vmem:[%s16 + $0x14] sm:$0xf]
        %v5386 = vld [vmem:[%s16 + $0x18] sm:$0xf]
        %v5387 = vld [vmem:[%s16 + $0x1c] sm:$0xf]
        %v5388 = vld [vmem:[%s16 + $0x20] sm:$0xf]
        %v5389 = vld [vmem:[%s16 + $0x24] sm:$0xf]
        %v5390 = vld [vmem:[%s16 + $0x28] sm:$0xf]
        %v5391 = vld [vmem:[%s16 + $0x2c] sm:$0xf]
        %v5392 = vld [vmem:[%s16 + $0x30] sm:$0xf]
        %v5393 = vld [vmem:[%s16 + $0x34] sm:$0xf]
        %v5394 = vld [vmem:[%s16 + $0x38] sm:$0xf]
        %v5395 = vld [vmem:[%s16 + $0x3c] sm:$0xf]
        %s5396 = scalar_lea.vmem %s6, 2
        %v5397 = vld [vmem:[%s5396] sm:$0x3]
        %v5399 = vsel %vm5331, %v5397, 0
        %5401 = vmatprep.subr.bf16.mxu0 0
        %5402 = vmatpush1.bf16.msra.mxu0 0
        %5403 = vmatprep.subr.bf16.mxu0 0
        %5404 = vmatpush1.bf16.msra.mxu0 0
        %5405 = vmatprep.subr.bf16.mxu0 0
        %5406 = vmatpush1.bf16.msra.mxu0 0
        %5407 = vmatprep.subr.bf16.mxu0 0
        %5408 = vmatpush1.bf16.msra.mxu0 0
        %5409 = vmatprep.subr.bf16.mxu0 0
        %5410 = vmatpush1.bf16.msra.mxu0 0
        %5411 = vmatprep.subr.bf16.mxu0 0
        %5412 = vmatpush1.bf16.msra.mxu0 0
        %5413 = vmatprep.subr.bf16.mxu0 0
        %5414 = vmatpush1.bf16.msra.mxu0 0
        %5415 = vmatprep.subr.bf16.mxu0 0
        %5416 = vmatpush1.bf16.msra.mxu0 %v5337
        %5417 = vmatprep.subr.bf16.mxu0 0
        %5418 = vmatpush2.bf16.msra.mxu0 0
        %5419 = vmatprep.subr.bf16.mxu0 0
        %5420 = vmatpush2.bf16.msra.mxu0 0
        %5421 = vmatprep.subr.bf16.mxu0 0
        %5422 = vmatpush2.bf16.msra.mxu0 0
        %5423 = vmatprep.subr.bf16.mxu0 0
        %5424 = vmatpush2.bf16.msra.mxu0 0
        %5425 = vmatprep.subr.bf16.mxu0 0
        %5426 = vmatpush2.bf16.msra.mxu0 0
        %5427 = vmatprep.subr.bf16.mxu0 0
        %5428 = vmatpush2.bf16.msra.mxu0 0
        %5429 = vmatprep.subr.bf16.mxu0 0
        %5430 = vmatpush2.bf16.msra.mxu0 0
        %5431 = vmatprep.subr.bf16.mxu0 0
        %5432 = vmatpush2.bf16.msra.mxu0 0
        %5433 = vmatprep.mubr.bf16.mxu0 0
        %5434 = vmatmul.mubr.bf16.gmra.mxu0 %v5399
        %v5435 = vpop.f32.mrf.mxu0
        %v5436 = vadd.f32 0.0, %v5435
        %v5437 = vpop.f32.mrf.mxu0
        %v5438 = vpop.f32.mrf.mxu0
        %v5439 = vpop.f32.mrf.mxu0
        %5440 = vdwg.mxu0
        %v5441 = vpack.c.bf16 %v5436, %v5436
        %s5442 = scalar_lea.vmem %s16, 64
        %v5443 = vld [vmem:[%s5442] sm:$0xf]
        %v5444 = vld [vmem:[%s5442 + $0x4] sm:$0xf]
        %v5445 = vld [vmem:[%s5442 + $0x8] sm:$0xf]
        %v5446 = vld [vmem:[%s5442 + $0xc] sm:$0xf]
        %v5447 = vld [vmem:[%s5442 + $0x10] sm:$0xf]
        %v5448 = vld [vmem:[%s5442 + $0x14] sm:$0xf]
        %v5449 = vld [vmem:[%s5442 + $0x18] sm:$0xf]
        %v5450 = vld [vmem:[%s5442 + $0x1c] sm:$0xf]
        %v5451 = vld [vmem:[%s5442 + $0x20] sm:$0xf]
        %v5452 = vld [vmem:[%s5442 + $0x24] sm:$0xf]
        %v5453 = vld [vmem:[%s5442 + $0x28] sm:$0xf]
        %v5454 = vld [vmem:[%s5442 + $0x2c] sm:$0xf]
        %v5455 = vld [vmem:[%s5442 + $0x30] sm:$0xf]
        %v5456 = vld [vmem:[%s5442 + $0x34] sm:$0xf]
        %v5457 = vld [vmem:[%s5442 + $0x38] sm:$0xf]
        %v5458 = vld [vmem:[%s5442 + $0x3c] sm:$0xf]
        %v5475 = vunpack.c.l.b16 %v5443
        %v5476 = vunpack.c.l.b16 %v5444
        %v5477 = vunpack.c.l.b16 %v5445
        %v5478 = vunpack.c.l.b16 %v5446
        %v5479 = vunpack.c.l.b16 %v5447
        %v5480 = vunpack.c.l.b16 %v5448
        %v5481 = vunpack.c.l.b16 %v5449
        %v5482 = vunpack.c.l.b16 %v5450
        %v5483 = vunpack.c.l.b16 %v5451
        %v5484 = vunpack.c.l.b16 %v5452
        %v5485 = vunpack.c.l.b16 %v5453
        %v5486 = vunpack.c.l.b16 %v5454
        %v5487 = vunpack.c.l.b16 %v5455
        %v5488 = vunpack.c.l.b16 %v5456
        %v5489 = vunpack.c.l.b16 %v5457
        %v5490 = vunpack.c.l.b16 %v5458
        %v5491 = vpack.c.b16 %v5476, %v5475
        %v5492 = vpack.c.b16 %v5478, %v5477
        %v5493 = vpack.c.b16 %v5480, %v5479
        %v5494 = vpack.c.b16 %v5482, %v5481
        %v5495 = vpack.c.b16 %v5484, %v5483
        %v5496 = vpack.c.b16 %v5486, %v5485
        %v5497 = vpack.c.b16 %v5488, %v5487
        %v5498 = vpack.c.b16 %v5490, %v5489
        %5507 = vmatprep.subr.bf16.mxu0 0
        %5508 = vmatpush1.bf16.msra.mxu0 %v5498
        %5509 = vmatprep.subr.bf16.mxu0 0
        %5510 = vmatpush1.bf16.msra.mxu0 %v5497
        %5511 = vmatprep.subr.bf16.mxu0 0
        %5512 = vmatpush1.bf16.msra.mxu0 %v5496
        %5513 = vmatprep.subr.bf16.mxu0 0
        %5514 = vmatpush1.bf16.msra.mxu0 %v5495
        %5515 = vmatprep.subr.bf16.mxu0 0
        %5516 = vmatpush1.bf16.msra.mxu0 %v5494
        %5517 = vmatprep.subr.bf16.mxu0 0
        %5518 = vmatpush1.bf16.msra.mxu0 %v5493
        %5519 = vmatprep.subr.bf16.mxu0 0
        %5520 = vmatpush1.bf16.msra.mxu0 %v5492
        %5521 = vmatprep.subr.bf16.mxu0 0
        %5522 = vmatpush1.bf16.msra.mxu0 %v5491
        %5523 = vmatprep.subr.bf16.mxu0 0
        %5524 = vmatpush2.bf16.msra.mxu0 0
        %5525 = vmatprep.subr.bf16.mxu0 0
        %5526 = vmatpush2.bf16.msra.mxu0 0
        %5527 = vmatprep.subr.bf16.mxu0 0
        %5528 = vmatpush2.bf16.msra.mxu0 0
        %5529 = vmatprep.subr.bf16.mxu0 0
        %5530 = vmatpush2.bf16.msra.mxu0 0
        %5531 = vmatprep.subr.bf16.mxu0 0
        %5532 = vmatpush2.bf16.msra.mxu0 0
        %5533 = vmatprep.subr.bf16.mxu0 0
        %5534 = vmatpush2.bf16.msra.mxu0 0
        %5535 = vmatprep.subr.bf16.mxu0 0
        %5536 = vmatpush2.bf16.msra.mxu0 0
        %5537 = vmatprep.subr.bf16.mxu0 0
        %5538 = vmatpush2.bf16.msra.mxu0 0
        %5539 = vmatprep.mubr.bf16.mxu0 0
        %5540 = vmatmul.mubr.bf16.gmra.mxu0 %v5441
        %v5541 = vpop.f32.mrf.mxu0
        %v5542 = vadd.f32 0.0, %v5541
        %v5543 = vpop.f32.mrf.mxu0
        %v5544 = vpop.f32.mrf.mxu0
        %v5545 = vpop.f32.mrf.mxu0
        %5546 = vdwg.mxu0
        %v5563 = vunpack.c.l.b16 %v5380
        %v5564 = vunpack.c.l.b16 %v5381
        %v5565 = vunpack.c.l.b16 %v5382
        %v5566 = vunpack.c.l.b16 %v5383
        %v5567 = vunpack.c.l.b16 %v5384
        %v5568 = vunpack.c.l.b16 %v5385
        %v5569 = vunpack.c.l.b16 %v5386
        %v5570 = vunpack.c.l.b16 %v5387
        %v5571 = vunpack.c.l.b16 %v5388
        %v5572 = vunpack.c.l.b16 %v5389
        %v5573 = vunpack.c.l.b16 %v5390
        %v5574 = vunpack.c.l.b16 %v5391
        %v5575 = vunpack.c.l.b16 %v5392
        %v5576 = vunpack.c.l.b16 %v5393
        %v5577 = vunpack.c.l.b16 %v5394
        %v5578 = vunpack.c.l.b16 %v5395
        %v5579 = vpack.c.b16 %v5564, %v5563
        %v5580 = vpack.c.b16 %v5566, %v5565
        %v5581 = vpack.c.b16 %v5568, %v5567
        %v5582 = vpack.c.b16 %v5570, %v5569
        %v5583 = vpack.c.b16 %v5572, %v5571
        %v5584 = vpack.c.b16 %v5574, %v5573
        %v5585 = vpack.c.b16 %v5576, %v5575
        %v5586 = vpack.c.b16 %v5578, %v5577
        %5595 = vmatprep.subr.bf16.mxu0 0
        %5596 = vmatpush1.bf16.msra.mxu0 %v5586
        %5597 = vmatprep.subr.bf16.mxu0 0
        %5598 = vmatpush1.bf16.msra.mxu0 %v5585
        %5599 = vmatprep.subr.bf16.mxu0 0
        %5600 = vmatpush1.bf16.msra.mxu0 %v5584
        %5601 = vmatprep.subr.bf16.mxu0 0
        %5602 = vmatpush1.bf16.msra.mxu0 %v5583
        %5603 = vmatprep.subr.bf16.mxu0 0
        %5604 = vmatpush1.bf16.msra.mxu0 %v5582
        %5605 = vmatprep.subr.bf16.mxu0 0
        %5606 = vmatpush1.bf16.msra.mxu0 %v5581
        %5607 = vmatprep.subr.bf16.mxu0 0
        %5608 = vmatpush1.bf16.msra.mxu0 %v5580
        %5609 = vmatprep.subr.bf16.mxu0 0
        %5610 = vmatpush1.bf16.msra.mxu0 %v5579
        %5611 = vmatprep.subr.bf16.mxu0 0
        %5612 = vmatpush2.bf16.msra.mxu0 0
        %5613 = vmatprep.subr.bf16.mxu0 0
        %5614 = vmatpush2.bf16.msra.mxu0 0
        %5615 = vmatprep.subr.bf16.mxu0 0
        %5616 = vmatpush2.bf16.msra.mxu0 0
        %5617 = vmatprep.subr.bf16.mxu0 0
        %5618 = vmatpush2.bf16.msra.mxu0 0
        %5619 = vmatprep.subr.bf16.mxu0 0
        %5620 = vmatpush2.bf16.msra.mxu0 0
        %5621 = vmatprep.subr.bf16.mxu0 0
        %5622 = vmatpush2.bf16.msra.mxu0 0
        %5623 = vmatprep.subr.bf16.mxu0 0
        %5624 = vmatpush2.bf16.msra.mxu0 0
        %5625 = vmatprep.subr.bf16.mxu0 0
        %5626 = vmatpush2.bf16.msra.mxu0 0
        %5627 = vmatprep.mubr.bf16.mxu0 0
        %5628 = vmatmul.mubr.bf16.gmra.mxu0 %v5379
        %v5629 = vpop.f32.mrf.mxu0
        %v5630 = vadd.f32 %v5542, %v5629
        %v5631 = vpop.f32.mrf.mxu0
        %v5632 = vpop.f32.mrf.mxu0
        %v5633 = vpop.f32.mrf.mxu0
        %5634 = vdwg.mxu0
        %s5635 = scalar_lea.vmem %s6, 4
        %v5636 = vld [vmem:[%s5635] sm:$0x3]
        %v5638 = vsel %vm5331, %v5636, 0
        %5640 = vmatprep.subr.bf16.mxu0 0
        %5641 = vmatpush1.bf16.msra.mxu0 0
        %5642 = vmatprep.subr.bf16.mxu0 0
        %5643 = vmatpush1.bf16.msra.mxu0 0
        %5644 = vmatprep.subr.bf16.mxu0 0
        %5645 = vmatpush1.bf16.msra.mxu0 0
        %5646 = vmatprep.subr.bf16.mxu0 0
        %5647 = vmatpush1.bf16.msra.mxu0 0
        %5648 = vmatprep.subr.bf16.mxu0 0
        %5649 = vmatpush1.bf16.msra.mxu0 0
        %5650 = vmatprep.subr.bf16.mxu0 0
        %5651 = vmatpush1.bf16.msra.mxu0 0
        %5652 = vmatprep.subr.bf16.mxu0 0
        %5653 = vmatpush1.bf16.msra.mxu0 0
        %5654 = vmatprep.subr.bf16.mxu0 0
        %5655 = vmatpush1.bf16.msra.mxu0 %v5337
        %5656 = vmatprep.subr.bf16.mxu0 0
        %5657 = vmatpush2.bf16.msra.mxu0 0
        %5658 = vmatprep.subr.bf16.mxu0 0
        %5659 = vmatpush2.bf16.msra.mxu0 0
        %5660 = vmatprep.subr.bf16.mxu0 0
        %5661 = vmatpush2.bf16.msra.mxu0 0
        %5662 = vmatprep.subr.bf16.mxu0 0
        %5663 = vmatpush2.bf16.msra.mxu0 0
        %5664 = vmatprep.subr.bf16.mxu0 0
        %5665 = vmatpush2.bf16.msra.mxu0 0
        %5666 = vmatprep.subr.bf16.mxu0 0
        %5667 = vmatpush2.bf16.msra.mxu0 0
        %5668 = vmatprep.subr.bf16.mxu0 0
        %5669 = vmatpush2.bf16.msra.mxu0 0
        %5670 = vmatprep.subr.bf16.mxu0 0
        %5671 = vmatpush2.bf16.msra.mxu0 0
        %5672 = vmatprep.mubr.bf16.mxu0 0
        %5673 = vmatmul.mubr.bf16.gmra.mxu0 %v5638
        %v5674 = vpop.f32.mrf.mxu0
        %v5675 = vadd.f32 0.0, %v5674
        %v5676 = vpop.f32.mrf.mxu0
        %v5677 = vpop.f32.mrf.mxu0
        %v5678 = vpop.f32.mrf.mxu0
        %5679 = vdwg.mxu0
        %v5680 = vpack.c.bf16 %v5675, %v5675
        %s5681 = scalar_lea.vmem %s16, 128
        %v5682 = vld [vmem:[%s5681] sm:$0xf]
        %v5683 = vld [vmem:[%s5681 + $0x4] sm:$0xf]
        %v5684 = vld [vmem:[%s5681 + $0x8] sm:$0xf]
        %v5685 = vld [vmem:[%s5681 + $0xc] sm:$0xf]
        %v5686 = vld [vmem:[%s5681 + $0x10] sm:$0xf]
        %v5687 = vld [vmem:[%s5681 + $0x14] sm:$0xf]
        %v5688 = vld [vmem:[%s5681 + $0x18] sm:$0xf]
        %v5689 = vld [vmem:[%s5681 + $0x1c] sm:$0xf]
        %v5690 = vld [vmem:[%s5681 + $0x20] sm:$0xf]
        %v5691 = vld [vmem:[%s5681 + $0x24] sm:$0xf]
        %v5692 = vld [vmem:[%s5681 + $0x28] sm:$0xf]
        %v5693 = vld [vmem:[%s5681 + $0x2c] sm:$0xf]
        %v5694 = vld [vmem:[%s5681 + $0x30] sm:$0xf]
        %v5695 = vld [vmem:[%s5681 + $0x34] sm:$0xf]
        %v5696 = vld [vmem:[%s5681 + $0x38] sm:$0xf]
        %v5697 = vld [vmem:[%s5681 + $0x3c] sm:$0xf]
        %v5714 = vunpack.c.l.b16 %v5682
        %v5715 = vunpack.c.l.b16 %v5683
        %v5716 = vunpack.c.l.b16 %v5684
        %v5717 = vunpack.c.l.b16 %v5685
        %v5718 = vunpack.c.l.b16 %v5686
        %v5719 = vunpack.c.l.b16 %v5687
        %v5720 = vunpack.c.l.b16 %v5688
        %v5721 = vunpack.c.l.b16 %v5689
        %v5722 = vunpack.c.l.b16 %v5690
        %v5723 = vunpack.c.l.b16 %v5691
        %v5724 = vunpack.c.l.b16 %v5692
        %v5725 = vunpack.c.l.b16 %v5693
        %v5726 = vunpack.c.l.b16 %v5694
        %v5727 = vunpack.c.l.b16 %v5695
        %v5728 = vunpack.c.l.b16 %v5696
        %v5729 = vunpack.c.l.b16 %v5697
        %v5730 = vpack.c.b16 %v5715, %v5714
        %v5731 = vpack.c.b16 %v5717, %v5716
        %v5732 = vpack.c.b16 %v5719, %v5718
        %v5733 = vpack.c.b16 %v5721, %v5720
        %v5734 = vpack.c.b16 %v5723, %v5722
        %v5735 = vpack.c.b16 %v5725, %v5724
        %v5736 = vpack.c.b16 %v5727, %v5726
        %v5737 = vpack.c.b16 %v5729, %v5728
        %5746 = vmatprep.subr.bf16.mxu0 0
        %5747 = vmatpush1.bf16.msra.mxu0 %v5737
        %5748 = vmatprep.subr.bf16.mxu0 0
        %5749 = vmatpush1.bf16.msra.mxu0 %v5736
        %5750 = vmatprep.subr.bf16.mxu0 0
        %5751 = vmatpush1.bf16.msra.mxu0 %v5735
        %5752 = vmatprep.subr.bf16.mxu0 0
        %5753 = vmatpush1.bf16.msra.mxu0 %v5734
        %5754 = vmatprep.subr.bf16.mxu0 0
        %5755 = vmatpush1.bf16.msra.mxu0 %v5733
        %5756 = vmatprep.subr.bf16.mxu0 0
        %5757 = vmatpush1.bf16.msra.mxu0 %v5732
        %5758 = vmatprep.subr.bf16.mxu0 0
        %5759 = vmatpush1.bf16.msra.mxu0 %v5731
        %5760 = vmatprep.subr.bf16.mxu0 0
        %5761 = vmatpush1.bf16.msra.mxu0 %v5730
        %5762 = vmatprep.subr.bf16.mxu0 0
        %5763 = vmatpush2.bf16.msra.mxu0 0
        %5764 = vmatprep.subr.bf16.mxu0 0
        %5765 = vmatpush2.bf16.msra.mxu0 0
        %5766 = vmatprep.subr.bf16.mxu0 0
        %5767 = vmatpush2.bf16.msra.mxu0 0
        %5768 = vmatprep.subr.bf16.mxu0 0
        %5769 = vmatpush2.bf16.msra.mxu0 0
        %5770 = vmatprep.subr.bf16.mxu0 0
        %5771 = vmatpush2.bf16.msra.mxu0 0
        %5772 = vmatprep.subr.bf16.mxu0 0
        %5773 = vmatpush2.bf16.msra.mxu0 0
        %5774 = vmatprep.subr.bf16.mxu0 0
        %5775 = vmatpush2.bf16.msra.mxu0 0
        %5776 = vmatprep.subr.bf16.mxu0 0
        %5777 = vmatpush2.bf16.msra.mxu0 0
        %5778 = vmatprep.mubr.bf16.mxu0 0
        %5779 = vmatmul.mubr.bf16.gmra.mxu0 %v5680
        %v5780 = vpop.f32.mrf.mxu0
        %v5781 = vadd.f32 0.0, %v5780
        %v5782 = vpop.f32.mrf.mxu0
        %v5783 = vpop.f32.mrf.mxu0
        %v5784 = vpop.f32.mrf.mxu0
        %5785 = vdwg.mxu0
        %v5786 = vadd.f32 %v5630, %v5781
        %s5787 = scalar_lea.vmem %s6, 6
        %v5788 = vld [vmem:[%s5787] sm:$0x3]
        %v5790 = vsel %vm5331, %v5788, 0
        %5792 = vmatprep.subr.bf16.mxu0 0
        %5793 = vmatpush1.bf16.msra.mxu0 0
        %5794 = vmatprep.subr.bf16.mxu0 0
        %5795 = vmatpush1.bf16.msra.mxu0 0
        %5796 = vmatprep.subr.bf16.mxu0 0
        %5797 = vmatpush1.bf16.msra.mxu0 0
        %5798 = vmatprep.subr.bf16.mxu0 0
        %5799 = vmatpush1.bf16.msra.mxu0 0
        %5800 = vmatprep.subr.bf16.mxu0 0
        %5801 = vmatpush1.bf16.msra.mxu0 0
        %5802 = vmatprep.subr.bf16.mxu0 0
        %5803 = vmatpush1.bf16.msra.mxu0 0
        %5804 = vmatprep.subr.bf16.mxu0 0
        %5805 = vmatpush1.bf16.msra.mxu0 0
        %5806 = vmatprep.subr.bf16.mxu0 0
        %5807 = vmatpush1.bf16.msra.mxu0 %v5337
        %5808 = vmatprep.subr.bf16.mxu0 0
        %5809 = vmatpush2.bf16.msra.mxu0 0
        %5810 = vmatprep.subr.bf16.mxu0 0
        %5811 = vmatpush2.bf16.msra.mxu0 0
        %5812 = vmatprep.subr.bf16.mxu0 0
        %5813 = vmatpush2.bf16.msra.mxu0 0
        %5814 = vmatprep.subr.bf16.mxu0 0
        %5815 = vmatpush2.bf16.msra.mxu0 0
        %5816 = vmatprep.subr.bf16.mxu0 0
        %5817 = vmatpush2.bf16.msra.mxu0 0
        %5818 = vmatprep.subr.bf16.mxu0 0
        %5819 = vmatpush2.bf16.msra.mxu0 0
        %5820 = vmatprep.subr.bf16.mxu0 0
        %5821 = vmatpush2.bf16.msra.mxu0 0
        %5822 = vmatprep.subr.bf16.mxu0 0
        %5823 = vmatpush2.bf16.msra.mxu0 0
        %5824 = vmatprep.mubr.bf16.mxu0 0
        %5825 = vmatmul.mubr.bf16.gmra.mxu0 %v5790
        %v5826 = vpop.f32.mrf.mxu0
        %v5827 = vadd.f32 0.0, %v5826
        %v5828 = vpop.f32.mrf.mxu0
        %v5829 = vpop.f32.mrf.mxu0
        %v5830 = vpop.f32.mrf.mxu0
        %5831 = vdwg.mxu0
        %v5832 = vpack.c.bf16 %v5827, %v5827
        %s5833 = scalar_lea.vmem %s16, 192
        %v5834 = vld [vmem:[%s5833] sm:$0xf]
        %v5835 = vld [vmem:[%s5833 + $0x4] sm:$0xf]
        %v5836 = vld [vmem:[%s5833 + $0x8] sm:$0xf]
        %v5837 = vld [vmem:[%s5833 + $0xc] sm:$0xf]
        %v5838 = vld [vmem:[%s5833 + $0x10] sm:$0xf]
        %v5839 = vld [vmem:[%s5833 + $0x14] sm:$0xf]
        %v5840 = vld [vmem:[%s5833 + $0x18] sm:$0xf]
        %v5841 = vld [vmem:[%s5833 + $0x1c] sm:$0xf]
        %v5842 = vld [vmem:[%s5833 + $0x20] sm:$0xf]
        %v5843 = vld [vmem:[%s5833 + $0x24] sm:$0xf]
        %v5844 = vld [vmem:[%s5833 + $0x28] sm:$0xf]
        %v5845 = vld [vmem:[%s5833 + $0x2c] sm:$0xf]
        %v5846 = vld [vmem:[%s5833 + $0x30] sm:$0xf]
        %v5847 = vld [vmem:[%s5833 + $0x34] sm:$0xf]
        %v5848 = vld [vmem:[%s5833 + $0x38] sm:$0xf]
        %v5849 = vld [vmem:[%s5833 + $0x3c] sm:$0xf]
        %v5866 = vunpack.c.l.b16 %v5834
        %v5867 = vunpack.c.l.b16 %v5835
        %v5868 = vunpack.c.l.b16 %v5836
        %v5869 = vunpack.c.l.b16 %v5837
        %v5870 = vunpack.c.l.b16 %v5838
        %v5871 = vunpack.c.l.b16 %v5839
        %v5872 = vunpack.c.l.b16 %v5840
        %v5873 = vunpack.c.l.b16 %v5841
        %v5874 = vunpack.c.l.b16 %v5842
        %v5875 = vunpack.c.l.b16 %v5843
        %v5876 = vunpack.c.l.b16 %v5844
        %v5877 = vunpack.c.l.b16 %v5845
        %v5878 = vunpack.c.l.b16 %v5846
        %v5879 = vunpack.c.l.b16 %v5847
        %v5880 = vunpack.c.l.b16 %v5848
        %v5881 = vunpack.c.l.b16 %v5849
        %v5882 = vpack.c.b16 %v5867, %v5866
        %v5883 = vpack.c.b16 %v5869, %v5868
        %v5884 = vpack.c.b16 %v5871, %v5870
        %v5885 = vpack.c.b16 %v5873, %v5872
        %v5886 = vpack.c.b16 %v5875, %v5874
        %v5887 = vpack.c.b16 %v5877, %v5876
        %v5888 = vpack.c.b16 %v5879, %v5878
        %v5889 = vpack.c.b16 %v5881, %v5880
        %5898 = vmatprep.subr.bf16.mxu0 0
        %5899 = vmatpush1.bf16.msra.mxu0 %v5889
        %5900 = vmatprep.subr.bf16.mxu0 0
        %5901 = vmatpush1.bf16.msra.mxu0 %v5888
        %5902 = vmatprep.subr.bf16.mxu0 0
        %5903 = vmatpush1.bf16.msra.mxu0 %v5887
        %5904 = vmatprep.subr.bf16.mxu0 0
        %5905 = vmatpush1.bf16.msra.mxu0 %v5886
        %5906 = vmatprep.subr.bf16.mxu0 0
        %5907 = vmatpush1.bf16.msra.mxu0 %v5885
        %5908 = vmatprep.subr.bf16.mxu0 0
        %5909 = vmatpush1.bf16.msra.mxu0 %v5884
        %5910 = vmatprep.subr.bf16.mxu0 0
        %5911 = vmatpush1.bf16.msra.mxu0 %v5883
        %5912 = vmatprep.subr.bf16.mxu0 0
        %5913 = vmatpush1.bf16.msra.mxu0 %v5882
        %5914 = vmatprep.subr.bf16.mxu0 0
        %5915 = vmatpush2.bf16.msra.mxu0 0
        %5916 = vmatprep.subr.bf16.mxu0 0
        %5917 = vmatpush2.bf16.msra.mxu0 0
        %5918 = vmatprep.subr.bf16.mxu0 0
        %5919 = vmatpush2.bf16.msra.mxu0 0
        %5920 = vmatprep.subr.bf16.mxu0 0
        %5921 = vmatpush2.bf16.msra.mxu0 0
        %5922 = vmatprep.subr.bf16.mxu0 0
        %5923 = vmatpush2.bf16.msra.mxu0 0
        %5924 = vmatprep.subr.bf16.mxu0 0
        %5925 = vmatpush2.bf16.msra.mxu0 0
        %5926 = vmatprep.subr.bf16.mxu0 0
        %5927 = vmatpush2.bf16.msra.mxu0 0
        %5928 = vmatprep.subr.bf16.mxu0 0
        %5929 = vmatpush2.bf16.msra.mxu0 0
        %5930 = vmatprep.mubr.bf16.mxu0 0
        %5931 = vmatmul.mubr.bf16.gmra.mxu0 %v5832
        %v5932 = vpop.f32.mrf.mxu0
        %v5933 = vadd.f32 0.0, %v5932
        %v5934 = vpop.f32.mrf.mxu0
        %v5935 = vpop.f32.mrf.mxu0
        %v5936 = vpop.f32.mrf.mxu0
        %5937 = vdwg.mxu0
        %v5938 = vadd.f32 %v5786, %v5933
        %s5939 = scalar_lea.vmem %s6, 8
        %v5940 = vld [vmem:[%s5939] sm:$0x3]
        %v5942 = vsel %vm5331, %v5940, 0
        %5944 = vmatprep.subr.bf16.mxu0 0
        %5945 = vmatpush1.bf16.msra.mxu0 0
        %5946 = vmatprep.subr.bf16.mxu0 0
        %5947 = vmatpush1.bf16.msra.mxu0 0
        %5948 = vmatprep.subr.bf16.mxu0 0
        %5949 = vmatpush1.bf16.msra.mxu0 0
        %5950 = vmatprep.subr.bf16.mxu0 0
        %5951 = vmatpush1.bf16.msra.mxu0 0
        %5952 = vmatprep.subr.bf16.mxu0 0
        %5953 = vmatpush1.bf16.msra.mxu0 0
        %5954 = vmatprep.subr.bf16.mxu0 0
        %5955 = vmatpush1.bf16.msra.mxu0 0
        %5956 = vmatprep.subr.bf16.mxu0 0
        %5957 = vmatpush1.bf16.msra.mxu0 0
        %5958 = vmatprep.subr.bf16.mxu0 0
        %5959 = vmatpush1.bf16.msra.mxu0 %v5337
        %5960 = vmatprep.subr.bf16.mxu0 0
        %5961 = vmatpush2.bf16.msra.mxu0 0
        %5962 = vmatprep.subr.bf16.mxu0 0
        %5963 = vmatpush2.bf16.msra.mxu0 0
        %5964 = vmatprep.subr.bf16.mxu0 0
        %5965 = vmatpush2.bf16.msra.mxu0 0
        %5966 = vmatprep.subr.bf16.mxu0 0
        %5967 = vmatpush2.bf16.msra.mxu0 0
        %5968 = vmatprep.subr.bf16.mxu0 0
        %5969 = vmatpush2.bf16.msra.mxu0 0
        %5970 = vmatprep.subr.bf16.mxu0 0
        %5971 = vmatpush2.bf16.msra.mxu0 0
        %5972 = vmatprep.subr.bf16.mxu0 0
        %5973 = vmatpush2.bf16.msra.mxu0 0
        %5974 = vmatprep.subr.bf16.mxu0 0
        %5975 = vmatpush2.bf16.msra.mxu0 0
        %5976 = vmatprep.mubr.bf16.mxu0 0
        %5977 = vmatmul.mubr.bf16.gmra.mxu0 %v5942
        %v5978 = vpop.f32.mrf.mxu0
        %v5979 = vadd.f32 0.0, %v5978
        %v5980 = vpop.f32.mrf.mxu0
        %v5981 = vpop.f32.mrf.mxu0
        %v5982 = vpop.f32.mrf.mxu0
        %5983 = vdwg.mxu0
        %v5984 = vpack.c.bf16 %v5979, %v5979
        %s5985 = scalar_lea.vmem %s16, 256
        %v5986 = vld [vmem:[%s5985] sm:$0xf]
        %v5987 = vld [vmem:[%s5985 + $0x4] sm:$0xf]
        %v5988 = vld [vmem:[%s5985 + $0x8] sm:$0xf]
        %v5989 = vld [vmem:[%s5985 + $0xc] sm:$0xf]
        %v5990 = vld [vmem:[%s5985 + $0x10] sm:$0xf]
        %v5991 = vld [vmem:[%s5985 + $0x14] sm:$0xf]
        %v5992 = vld [vmem:[%s5985 + $0x18] sm:$0xf]
        %v5993 = vld [vmem:[%s5985 + $0x1c] sm:$0xf]
        %v5994 = vld [vmem:[%s5985 + $0x20] sm:$0xf]
        %v5995 = vld [vmem:[%s5985 + $0x24] sm:$0xf]
        %v5996 = vld [vmem:[%s5985 + $0x28] sm:$0xf]
        %v5997 = vld [vmem:[%s5985 + $0x2c] sm:$0xf]
        %v5998 = vld [vmem:[%s5985 + $0x30] sm:$0xf]
        %v5999 = vld [vmem:[%s5985 + $0x34] sm:$0xf]
        %v6000 = vld [vmem:[%s5985 + $0x38] sm:$0xf]
        %v6001 = vld [vmem:[%s5985 + $0x3c] sm:$0xf]
        %v6018 = vunpack.c.l.b16 %v5986
        %v6019 = vunpack.c.l.b16 %v5987
        %v6020 = vunpack.c.l.b16 %v5988
        %v6021 = vunpack.c.l.b16 %v5989
        %v6022 = vunpack.c.l.b16 %v5990
        %v6023 = vunpack.c.l.b16 %v5991
        %v6024 = vunpack.c.l.b16 %v5992
        %v6025 = vunpack.c.l.b16 %v5993
        %v6026 = vunpack.c.l.b16 %v5994
        %v6027 = vunpack.c.l.b16 %v5995
        %v6028 = vunpack.c.l.b16 %v5996
        %v6029 = vunpack.c.l.b16 %v5997
        %v6030 = vunpack.c.l.b16 %v5998
        %v6031 = vunpack.c.l.b16 %v5999
        %v6032 = vunpack.c.l.b16 %v6000
        %v6033 = vunpack.c.l.b16 %v6001
        %v6034 = vpack.c.b16 %v6019, %v6018
        %v6035 = vpack.c.b16 %v6021, %v6020
        %v6036 = vpack.c.b16 %v6023, %v6022
        %v6037 = vpack.c.b16 %v6025, %v6024
        %v6038 = vpack.c.b16 %v6027, %v6026
        %v6039 = vpack.c.b16 %v6029, %v6028
        %v6040 = vpack.c.b16 %v6031, %v6030
        %v6041 = vpack.c.b16 %v6033, %v6032
        %6050 = vmatprep.subr.bf16.mxu0 0
        %6051 = vmatpush1.bf16.msra.mxu0 %v6041
        %6052 = vmatprep.subr.bf16.mxu0 0
        %6053 = vmatpush1.bf16.msra.mxu0 %v6040
        %6054 = vmatprep.subr.bf16.mxu0 0
        %6055 = vmatpush1.bf16.msra.mxu0 %v6039
        %6056 = vmatprep.subr.bf16.mxu0 0
        %6057 = vmatpush1.bf16.msra.mxu0 %v6038
        %6058 = vmatprep.subr.bf16.mxu0 0
        %6059 = vmatpush1.bf16.msra.mxu0 %v6037
        %6060 = vmatprep.subr.bf16.mxu0 0
        %6061 = vmatpush1.bf16.msra.mxu0 %v6036
        %6062 = vmatprep.subr.bf16.mxu0 0
        %6063 = vmatpush1.bf16.msra.mxu0 %v6035
        %6064 = vmatprep.subr.bf16.mxu0 0
        %6065 = vmatpush1.bf16.msra.mxu0 %v6034
        %6066 = vmatprep.subr.bf16.mxu0 0
        %6067 = vmatpush2.bf16.msra.mxu0 0
        %6068 = vmatprep.subr.bf16.mxu0 0
        %6069 = vmatpush2.bf16.msra.mxu0 0
        %6070 = vmatprep.subr.bf16.mxu0 0
        %6071 = vmatpush2.bf16.msra.mxu0 0
        %6072 = vmatprep.subr.bf16.mxu0 0
        %6073 = vmatpush2.bf16.msra.mxu0 0
        %6074 = vmatprep.subr.bf16.mxu0 0
        %6075 = vmatpush2.bf16.msra.mxu0 0
        %6076 = vmatprep.subr.bf16.mxu0 0
        %6077 = vmatpush2.bf16.msra.mxu0 0
        %6078 = vmatprep.subr.bf16.mxu0 0
        %6079 = vmatpush2.bf16.msra.mxu0 0
        %6080 = vmatprep.subr.bf16.mxu0 0
        %6081 = vmatpush2.bf16.msra.mxu0 0
        %6082 = vmatprep.mubr.bf16.mxu0 0
        %6083 = vmatmul.mubr.bf16.gmra.mxu0 %v5984
        %v6084 = vpop.f32.mrf.mxu0
        %v6085 = vadd.f32 0.0, %v6084
        %v6086 = vpop.f32.mrf.mxu0
        %v6087 = vpop.f32.mrf.mxu0
        %v6088 = vpop.f32.mrf.mxu0
        %6089 = vdwg.mxu0
        %v6090 = vadd.f32 %v5938, %v6085
        %s6091 = scalar_lea.vmem %s6, 10
        %v6092 = vld [vmem:[%s6091] sm:$0x3]
        %v6094 = vsel %vm5331, %v6092, 0
        %6096 = vmatprep.subr.bf16.mxu0 0
        %6097 = vmatpush1.bf16.msra.mxu0 0
        %6098 = vmatprep.subr.bf16.mxu0 0
        %6099 = vmatpush1.bf16.msra.mxu0 0
        %6100 = vmatprep.subr.bf16.mxu0 0
        %6101 = vmatpush1.bf16.msra.mxu0 0
        %6102 = vmatprep.subr.bf16.mxu0 0
        %6103 = vmatpush1.bf16.msra.mxu0 0
        %6104 = vmatprep.subr.bf16.mxu0 0
        %6105 = vmatpush1.bf16.msra.mxu0 0
        %6106 = vmatprep.subr.bf16.mxu0 0
        %6107 = vmatpush1.bf16.msra.mxu0 0
        %6108 = vmatprep.subr.bf16.mxu0 0
        %6109 = vmatpush1.bf16.msra.mxu0 0
        %6110 = vmatprep.subr.bf16.mxu0 0
        %6111 = vmatpush1.bf16.msra.mxu0 %v5337
        %6112 = vmatprep.subr.bf16.mxu0 0
        %6113 = vmatpush2.bf16.msra.mxu0 0
        %6114 = vmatprep.subr.bf16.mxu0 0
        %6115 = vmatpush2.bf16.msra.mxu0 0
        %6116 = vmatprep.subr.bf16.mxu0 0
        %6117 = vmatpush2.bf16.msra.mxu0 0
        %6118 = vmatprep.subr.bf16.mxu0 0
        %6119 = vmatpush2.bf16.msra.mxu0 0
        %6120 = vmatprep.subr.bf16.mxu0 0
        %6121 = vmatpush2.bf16.msra.mxu0 0
        %6122 = vmatprep.subr.bf16.mxu0 0
        %6123 = vmatpush2.bf16.msra.mxu0 0
        %6124 = vmatprep.subr.bf16.mxu0 0
        %6125 = vmatpush2.bf16.msra.mxu0 0
        %6126 = vmatprep.subr.bf16.mxu0 0
        %6127 = vmatpush2.bf16.msra.mxu0 0
        %6128 = vmatprep.mubr.bf16.mxu0 0
        %6129 = vmatmul.mubr.bf16.gmra.mxu0 %v6094
        %v6130 = vpop.f32.mrf.mxu0
        %v6131 = vadd.f32 0.0, %v6130
        %v6132 = vpop.f32.mrf.mxu0
        %v6133 = vpop.f32.mrf.mxu0
        %v6134 = vpop.f32.mrf.mxu0
        %6135 = vdwg.mxu0
        %v6136 = vpack.c.bf16 %v6131, %v6131
        %s6137 = scalar_lea.vmem %s16, 320
        %v6138 = vld [vmem:[%s6137] sm:$0xf]
        %v6139 = vld [vmem:[%s6137 + $0x4] sm:$0xf]
        %v6140 = vld [vmem:[%s6137 + $0x8] sm:$0xf]
        %v6141 = vld [vmem:[%s6137 + $0xc] sm:$0xf]
        %v6142 = vld [vmem:[%s6137 + $0x10] sm:$0xf]
        %v6143 = vld [vmem:[%s6137 + $0x14] sm:$0xf]
        %v6144 = vld [vmem:[%s6137 + $0x18] sm:$0xf]
        %v6145 = vld [vmem:[%s6137 + $0x1c] sm:$0xf]
        %v6146 = vld [vmem:[%s6137 + $0x20] sm:$0xf]
        %v6147 = vld [vmem:[%s6137 + $0x24] sm:$0xf]
        %v6148 = vld [vmem:[%s6137 + $0x28] sm:$0xf]
        %v6149 = vld [vmem:[%s6137 + $0x2c] sm:$0xf]
        %v6150 = vld [vmem:[%s6137 + $0x30] sm:$0xf]
        %v6151 = vld [vmem:[%s6137 + $0x34] sm:$0xf]
        %v6152 = vld [vmem:[%s6137 + $0x38] sm:$0xf]
        %v6153 = vld [vmem:[%s6137 + $0x3c] sm:$0xf]
        %v6170 = vunpack.c.l.b16 %v6138
        %v6171 = vunpack.c.l.b16 %v6139
        %v6172 = vunpack.c.l.b16 %v6140
        %v6173 = vunpack.c.l.b16 %v6141
        %v6174 = vunpack.c.l.b16 %v6142
        %v6175 = vunpack.c.l.b16 %v6143
        %v6176 = vunpack.c.l.b16 %v6144
        %v6177 = vunpack.c.l.b16 %v6145
        %v6178 = vunpack.c.l.b16 %v6146
        %v6179 = vunpack.c.l.b16 %v6147
        %v6180 = vunpack.c.l.b16 %v6148
        %v6181 = vunpack.c.l.b16 %v6149
        %v6182 = vunpack.c.l.b16 %v6150
        %v6183 = vunpack.c.l.b16 %v6151
        %v6184 = vunpack.c.l.b16 %v6152
        %v6185 = vunpack.c.l.b16 %v6153
        %v6186 = vpack.c.b16 %v6171, %v6170
        %v6187 = vpack.c.b16 %v6173, %v6172
        %v6188 = vpack.c.b16 %v6175, %v6174
        %v6189 = vpack.c.b16 %v6177, %v6176
        %v6190 = vpack.c.b16 %v6179, %v6178
        %v6191 = vpack.c.b16 %v6181, %v6180
        %v6192 = vpack.c.b16 %v6183, %v6182
        %v6193 = vpack.c.b16 %v6185, %v6184
        %6202 = vmatprep.subr.bf16.mxu0 0
        %6203 = vmatpush1.bf16.msra.mxu0 %v6193
        %6204 = vmatprep.subr.bf16.mxu0 0
        %6205 = vmatpush1.bf16.msra.mxu0 %v6192
        %6206 = vmatprep.subr.bf16.mxu0 0
        %6207 = vmatpush1.bf16.msra.mxu0 %v6191
        %6208 = vmatprep.subr.bf16.mxu0 0
        %6209 = vmatpush1.bf16.msra.mxu0 %v6190
        %6210 = vmatprep.subr.bf16.mxu0 0
        %6211 = vmatpush1.bf16.msra.mxu0 %v6189
        %6212 = vmatprep.subr.bf16.mxu0 0
        %6213 = vmatpush1.bf16.msra.mxu0 %v6188
        %6214 = vmatprep.subr.bf16.mxu0 0
        %6215 = vmatpush1.bf16.msra.mxu0 %v6187
        %6216 = vmatprep.subr.bf16.mxu0 0
        %6217 = vmatpush1.bf16.msra.mxu0 %v6186
        %6218 = vmatprep.subr.bf16.mxu0 0
        %6219 = vmatpush2.bf16.msra.mxu0 0
        %6220 = vmatprep.subr.bf16.mxu0 0
        %6221 = vmatpush2.bf16.msra.mxu0 0
        %6222 = vmatprep.subr.bf16.mxu0 0
        %6223 = vmatpush2.bf16.msra.mxu0 0
        %6224 = vmatprep.subr.bf16.mxu0 0
        %6225 = vmatpush2.bf16.msra.mxu0 0
        %6226 = vmatprep.subr.bf16.mxu0 0
        %6227 = vmatpush2.bf16.msra.mxu0 0
        %6228 = vmatprep.subr.bf16.mxu0 0
        %6229 = vmatpush2.bf16.msra.mxu0 0
        %6230 = vmatprep.subr.bf16.mxu0 0
        %6231 = vmatpush2.bf16.msra.mxu0 0
        %6232 = vmatprep.subr.bf16.mxu0 0
        %6233 = vmatpush2.bf16.msra.mxu0 0
        %6234 = vmatprep.mubr.bf16.mxu0 0
        %6235 = vmatmul.mubr.bf16.gmra.mxu0 %v6136
        %v6236 = vpop.f32.mrf.mxu0
        %v6237 = vadd.f32 0.0, %v6236
        %v6238 = vpop.f32.mrf.mxu0
        %v6239 = vpop.f32.mrf.mxu0
        %v6240 = vpop.f32.mrf.mxu0
        %6241 = vdwg.mxu0
        %v6242 = vadd.f32 %v6090, %v6237
        %s6243 = scalar_lea.vmem %s6, 12
        %v6244 = vld [vmem:[%s6243] sm:$0x3]
        %v6246 = vsel %vm5331, %v6244, 0
        %6248 = vmatprep.subr.bf16.mxu0 0
        %6249 = vmatpush1.bf16.msra.mxu0 0
        %6250 = vmatprep.subr.bf16.mxu0 0
        %6251 = vmatpush1.bf16.msra.mxu0 0
        %6252 = vmatprep.subr.bf16.mxu0 0
        %6253 = vmatpush1.bf16.msra.mxu0 0
        %6254 = vmatprep.subr.bf16.mxu0 0
        %6255 = vmatpush1.bf16.msra.mxu0 0
        %6256 = vmatprep.subr.bf16.mxu0 0
        %6257 = vmatpush1.bf16.msra.mxu0 0
        %6258 = vmatprep.subr.bf16.mxu0 0
        %6259 = vmatpush1.bf16.msra.mxu0 0
        %6260 = vmatprep.subr.bf16.mxu0 0
        %6261 = vmatpush1.bf16.msra.mxu0 0
        %6262 = vmatprep.subr.bf16.mxu0 0
        %6263 = vmatpush1.bf16.msra.mxu0 %v5337
        %6264 = vmatprep.subr.bf16.mxu0 0
        %6265 = vmatpush2.bf16.msra.mxu0 0
        %6266 = vmatprep.subr.bf16.mxu0 0
        %6267 = vmatpush2.bf16.msra.mxu0 0
        %6268 = vmatprep.subr.bf16.mxu0 0
        %6269 = vmatpush2.bf16.msra.mxu0 0
        %6270 = vmatprep.subr.bf16.mxu0 0
        %6271 = vmatpush2.bf16.msra.mxu0 0
        %6272 = vmatprep.subr.bf16.mxu0 0
        %6273 = vmatpush2.bf16.msra.mxu0 0
        %6274 = vmatprep.subr.bf16.mxu0 0
        %6275 = vmatpush2.bf16.msra.mxu0 0
        %6276 = vmatprep.subr.bf16.mxu0 0
        %6277 = vmatpush2.bf16.msra.mxu0 0
        %6278 = vmatprep.subr.bf16.mxu0 0
        %6279 = vmatpush2.bf16.msra.mxu0 0
        %6280 = vmatprep.mubr.bf16.mxu0 0
        %6281 = vmatmul.mubr.bf16.gmra.mxu0 %v6246
        %v6282 = vpop.f32.mrf.mxu0
        %v6283 = vadd.f32 0.0, %v6282
        %v6284 = vpop.f32.mrf.mxu0
        %v6285 = vpop.f32.mrf.mxu0
        %v6286 = vpop.f32.mrf.mxu0
        %6287 = vdwg.mxu0
        %v6288 = vpack.c.bf16 %v6283, %v6283
        %s6289 = scalar_lea.vmem %s16, 384
        %v6290 = vld [vmem:[%s6289] sm:$0xf]
        %v6291 = vld [vmem:[%s6289 + $0x4] sm:$0xf]
        %v6292 = vld [vmem:[%s6289 + $0x8] sm:$0xf]
        %v6293 = vld [vmem:[%s6289 + $0xc] sm:$0xf]
        %v6294 = vld [vmem:[%s6289 + $0x10] sm:$0xf]
        %v6295 = vld [vmem:[%s6289 + $0x14] sm:$0xf]
        %v6296 = vld [vmem:[%s6289 + $0x18] sm:$0xf]
        %v6297 = vld [vmem:[%s6289 + $0x1c] sm:$0xf]
        %v6298 = vld [vmem:[%s6289 + $0x20] sm:$0xf]
        %v6299 = vld [vmem:[%s6289 + $0x24] sm:$0xf]
        %v6300 = vld [vmem:[%s6289 + $0x28] sm:$0xf]
        %v6301 = vld [vmem:[%s6289 + $0x2c] sm:$0xf]
        %v6302 = vld [vmem:[%s6289 + $0x30] sm:$0xf]
        %v6303 = vld [vmem:[%s6289 + $0x34] sm:$0xf]
        %v6304 = vld [vmem:[%s6289 + $0x38] sm:$0xf]
        %v6305 = vld [vmem:[%s6289 + $0x3c] sm:$0xf]
        %v6322 = vunpack.c.l.b16 %v6290
        %v6323 = vunpack.c.l.b16 %v6291
        %v6324 = vunpack.c.l.b16 %v6292
        %v6325 = vunpack.c.l.b16 %v6293
        %v6326 = vunpack.c.l.b16 %v6294
        %v6327 = vunpack.c.l.b16 %v6295
        %v6328 = vunpack.c.l.b16 %v6296
        %v6329 = vunpack.c.l.b16 %v6297
        %v6330 = vunpack.c.l.b16 %v6298
        %v6331 = vunpack.c.l.b16 %v6299
        %v6332 = vunpack.c.l.b16 %v6300
        %v6333 = vunpack.c.l.b16 %v6301
        %v6334 = vunpack.c.l.b16 %v6302
        %v6335 = vunpack.c.l.b16 %v6303
        %v6336 = vunpack.c.l.b16 %v6304
        %v6337 = vunpack.c.l.b16 %v6305
        %v6338 = vpack.c.b16 %v6323, %v6322
        %v6339 = vpack.c.b16 %v6325, %v6324
        %v6340 = vpack.c.b16 %v6327, %v6326
        %v6341 = vpack.c.b16 %v6329, %v6328
        %v6342 = vpack.c.b16 %v6331, %v6330
        %v6343 = vpack.c.b16 %v6333, %v6332
        %v6344 = vpack.c.b16 %v6335, %v6334
        %v6345 = vpack.c.b16 %v6337, %v6336
        %6354 = vmatprep.subr.bf16.mxu0 0
        %6355 = vmatpush1.bf16.msra.mxu0 %v6345
        %6356 = vmatprep.subr.bf16.mxu0 0
        %6357 = vmatpush1.bf16.msra.mxu0 %v6344
        %6358 = vmatprep.subr.bf16.mxu0 0
        %6359 = vmatpush1.bf16.msra.mxu0 %v6343
        %6360 = vmatprep.subr.bf16.mxu0 0
        %6361 = vmatpush1.bf16.msra.mxu0 %v6342
        %6362 = vmatprep.subr.bf16.mxu0 0
        %6363 = vmatpush1.bf16.msra.mxu0 %v6341
        %6364 = vmatprep.subr.bf16.mxu0 0
        %6365 = vmatpush1.bf16.msra.mxu0 %v6340
        %6366 = vmatprep.subr.bf16.mxu0 0
        %6367 = vmatpush1.bf16.msra.mxu0 %v6339
        %6368 = vmatprep.subr.bf16.mxu0 0
        %6369 = vmatpush1.bf16.msra.mxu0 %v6338
        %6370 = vmatprep.subr.bf16.mxu0 0
        %6371 = vmatpush2.bf16.msra.mxu0 0
        %6372 = vmatprep.subr.bf16.mxu0 0
        %6373 = vmatpush2.bf16.msra.mxu0 0
        %6374 = vmatprep.subr.bf16.mxu0 0
        %6375 = vmatpush2.bf16.msra.mxu0 0
        %6376 = vmatprep.subr.bf16.mxu0 0
        %6377 = vmatpush2.bf16.msra.mxu0 0
        %6378 = vmatprep.subr.bf16.mxu0 0
        %6379 = vmatpush2.bf16.msra.mxu0 0
        %6380 = vmatprep.subr.bf16.mxu0 0
        %6381 = vmatpush2.bf16.msra.mxu0 0
        %6382 = vmatprep.subr.bf16.mxu0 0
        %6383 = vmatpush2.bf16.msra.mxu0 0
        %6384 = vmatprep.subr.bf16.mxu0 0
        %6385 = vmatpush2.bf16.msra.mxu0 0
        %6386 = vmatprep.mubr.bf16.mxu0 0
        %6387 = vmatmul.mubr.bf16.gmra.mxu0 %v6288
        %v6388 = vpop.f32.mrf.mxu0
        %v6389 = vadd.f32 0.0, %v6388
        %v6390 = vpop.f32.mrf.mxu0
        %v6391 = vpop.f32.mrf.mxu0
        %v6392 = vpop.f32.mrf.mxu0
        %6393 = vdwg.mxu0
        %v6394 = vadd.f32 %v6242, %v6389
        %s6395 = scalar_lea.vmem %s6, 14
        %v6396 = vld [vmem:[%s6395] sm:$0x3]
        %v6398 = vsel %vm5331, %v6396, 0
        %6400 = vmatprep.subr.bf16.mxu0 0
        %6401 = vmatpush1.bf16.msra.mxu0 0
        %6402 = vmatprep.subr.bf16.mxu0 0
        %6403 = vmatpush1.bf16.msra.mxu0 0
        %6404 = vmatprep.subr.bf16.mxu0 0
        %6405 = vmatpush1.bf16.msra.mxu0 0
        %6406 = vmatprep.subr.bf16.mxu0 0
        %6407 = vmatpush1.bf16.msra.mxu0 0
        %6408 = vmatprep.subr.bf16.mxu0 0
        %6409 = vmatpush1.bf16.msra.mxu0 0
        %6410 = vmatprep.subr.bf16.mxu0 0
        %6411 = vmatpush1.bf16.msra.mxu0 0
        %6412 = vmatprep.subr.bf16.mxu0 0
        %6413 = vmatpush1.bf16.msra.mxu0 0
        %6414 = vmatprep.subr.bf16.mxu0 0
        %6415 = vmatpush1.bf16.msra.mxu0 %v5337
        %6416 = vmatprep.subr.bf16.mxu0 0
        %6417 = vmatpush2.bf16.msra.mxu0 0
        %6418 = vmatprep.subr.bf16.mxu0 0
        %6419 = vmatpush2.bf16.msra.mxu0 0
        %6420 = vmatprep.subr.bf16.mxu0 0
        %6421 = vmatpush2.bf16.msra.mxu0 0
        %6422 = vmatprep.subr.bf16.mxu0 0
        %6423 = vmatpush2.bf16.msra.mxu0 0
        %6424 = vmatprep.subr.bf16.mxu0 0
        %6425 = vmatpush2.bf16.msra.mxu0 0
        %6426 = vmatprep.subr.bf16.mxu0 0
        %6427 = vmatpush2.bf16.msra.mxu0 0
        %6428 = vmatprep.subr.bf16.mxu0 0
        %6429 = vmatpush2.bf16.msra.mxu0 0
        %6430 = vmatprep.subr.bf16.mxu0 0
        %6431 = vmatpush2.bf16.msra.mxu0 0
        %6432 = vmatprep.mubr.bf16.mxu0 0
        %6433 = vmatmul.mubr.bf16.gmra.mxu0 %v6398
        %v6434 = vpop.f32.mrf.mxu0
        %v6435 = vadd.f32 0.0, %v6434
        %v6436 = vpop.f32.mrf.mxu0
        %v6437 = vpop.f32.mrf.mxu0
        %v6438 = vpop.f32.mrf.mxu0
        %6439 = vdwg.mxu0
        %v6440 = vpack.c.bf16 %v6435, %v6435
        %s6441 = scalar_lea.vmem %s16, 448
        %v6442 = vld [vmem:[%s6441] sm:$0xf]
        %v6443 = vld [vmem:[%s6441 + $0x4] sm:$0xf]
        %v6444 = vld [vmem:[%s6441 + $0x8] sm:$0xf]
        %v6445 = vld [vmem:[%s6441 + $0xc] sm:$0xf]
        %v6446 = vld [vmem:[%s6441 + $0x10] sm:$0xf]
        %v6447 = vld [vmem:[%s6441 + $0x14] sm:$0xf]
        %v6448 = vld [vmem:[%s6441 + $0x18] sm:$0xf]
        %v6449 = vld [vmem:[%s6441 + $0x1c] sm:$0xf]
        %v6450 = vld [vmem:[%s6441 + $0x20] sm:$0xf]
        %v6451 = vld [vmem:[%s6441 + $0x24] sm:$0xf]
        %v6452 = vld [vmem:[%s6441 + $0x28] sm:$0xf]
        %v6453 = vld [vmem:[%s6441 + $0x2c] sm:$0xf]
        %v6454 = vld [vmem:[%s6441 + $0x30] sm:$0xf]
        %v6455 = vld [vmem:[%s6441 + $0x34] sm:$0xf]
        %v6456 = vld [vmem:[%s6441 + $0x38] sm:$0xf]
        %v6457 = vld [vmem:[%s6441 + $0x3c] sm:$0xf]
        %v6474 = vunpack.c.l.b16 %v6442
        %v6475 = vunpack.c.l.b16 %v6443
        %v6476 = vunpack.c.l.b16 %v6444
        %v6477 = vunpack.c.l.b16 %v6445
        %v6478 = vunpack.c.l.b16 %v6446
        %v6479 = vunpack.c.l.b16 %v6447
        %v6480 = vunpack.c.l.b16 %v6448
        %v6481 = vunpack.c.l.b16 %v6449
        %v6482 = vunpack.c.l.b16 %v6450
        %v6483 = vunpack.c.l.b16 %v6451
        %v6484 = vunpack.c.l.b16 %v6452
        %v6485 = vunpack.c.l.b16 %v6453
        %v6486 = vunpack.c.l.b16 %v6454
        %v6487 = vunpack.c.l.b16 %v6455
        %v6488 = vunpack.c.l.b16 %v6456
        %v6489 = vunpack.c.l.b16 %v6457
        %v6490 = vpack.c.b16 %v6475, %v6474
        %v6491 = vpack.c.b16 %v6477, %v6476
        %v6492 = vpack.c.b16 %v6479, %v6478
        %v6493 = vpack.c.b16 %v6481, %v6480
        %v6494 = vpack.c.b16 %v6483, %v6482
        %v6495 = vpack.c.b16 %v6485, %v6484
        %v6496 = vpack.c.b16 %v6487, %v6486
        %v6497 = vpack.c.b16 %v6489, %v6488
        %6506 = vmatprep.subr.bf16.mxu0 0
        %6507 = vmatpush1.bf16.msra.mxu0 %v6497
        %6508 = vmatprep.subr.bf16.mxu0 0
        %6509 = vmatpush1.bf16.msra.mxu0 %v6496
        %6510 = vmatprep.subr.bf16.mxu0 0
        %6511 = vmatpush1.bf16.msra.mxu0 %v6495
        %6512 = vmatprep.subr.bf16.mxu0 0
        %6513 = vmatpush1.bf16.msra.mxu0 %v6494
        %6514 = vmatprep.subr.bf16.mxu0 0
        %6515 = vmatpush1.bf16.msra.mxu0 %v6493
        %6516 = vmatprep.subr.bf16.mxu0 0
        %6517 = vmatpush1.bf16.msra.mxu0 %v6492
        %6518 = vmatprep.subr.bf16.mxu0 0
        %6519 = vmatpush1.bf16.msra.mxu0 %v6491
        %6520 = vmatprep.subr.bf16.mxu0 0
        %6521 = vmatpush1.bf16.msra.mxu0 %v6490
        %6522 = vmatprep.subr.bf16.mxu0 0
        %6523 = vmatpush2.bf16.msra.mxu0 0
        %6524 = vmatprep.subr.bf16.mxu0 0
        %6525 = vmatpush2.bf16.msra.mxu0 0
        %6526 = vmatprep.subr.bf16.mxu0 0
        %6527 = vmatpush2.bf16.msra.mxu0 0
        %6528 = vmatprep.subr.bf16.mxu0 0
        %6529 = vmatpush2.bf16.msra.mxu0 0
        %6530 = vmatprep.subr.bf16.mxu0 0
        %6531 = vmatpush2.bf16.msra.mxu0 0
        %6532 = vmatprep.subr.bf16.mxu0 0
        %6533 = vmatpush2.bf16.msra.mxu0 0
        %6534 = vmatprep.subr.bf16.mxu0 0
        %6535 = vmatpush2.bf16.msra.mxu0 0
        %6536 = vmatprep.subr.bf16.mxu0 0
        %6537 = vmatpush2.bf16.msra.mxu0 0
        %6538 = vmatprep.mubr.bf16.mxu0 0
        %6539 = vmatmul.mubr.bf16.gmra.mxu0 %v6440
        %v6540 = vpop.f32.mrf.mxu0
        %v6541 = vadd.f32 0.0, %v6540
        %v6542 = vpop.f32.mrf.mxu0
        %v6543 = vpop.f32.mrf.mxu0
        %v6544 = vpop.f32.mrf.mxu0
        %6545 = vdwg.mxu0
        %v6546 = vadd.f32 %v6394, %v6541
        %s6547 = scalar_lea.vmem %s6, 16
        %v6548 = vld [vmem:[%s6547] sm:$0x3]
        %v6550 = vsel %vm5331, %v6548, 0
        %6552 = vmatprep.subr.bf16.mxu0 0
        %6553 = vmatpush1.bf16.msra.mxu0 0
        %6554 = vmatprep.subr.bf16.mxu0 0
        %6555 = vmatpush1.bf16.msra.mxu0 0
        %6556 = vmatprep.subr.bf16.mxu0 0
        %6557 = vmatpush1.bf16.msra.mxu0 0
        %6558 = vmatprep.subr.bf16.mxu0 0
        %6559 = vmatpush1.bf16.msra.mxu0 0
        %6560 = vmatprep.subr.bf16.mxu0 0
        %6561 = vmatpush1.bf16.msra.mxu0 0
        %6562 = vmatprep.subr.bf16.mxu0 0
        %6563 = vmatpush1.bf16.msra.mxu0 0
        %6564 = vmatprep.subr.bf16.mxu0 0
        %6565 = vmatpush1.bf16.msra.mxu0 0
        %6566 = vmatprep.subr.bf16.mxu0 0
        %6567 = vmatpush1.bf16.msra.mxu0 %v5337
        %6568 = vmatprep.subr.bf16.mxu0 0
        %6569 = vmatpush2.bf16.msra.mxu0 0
        %6570 = vmatprep.subr.bf16.mxu0 0
        %6571 = vmatpush2.bf16.msra.mxu0 0
        %6572 = vmatprep.subr.bf16.mxu0 0
        %6573 = vmatpush2.bf16.msra.mxu0 0
        %6574 = vmatprep.subr.bf16.mxu0 0
        %6575 = vmatpush2.bf16.msra.mxu0 0
        %6576 = vmatprep.subr.bf16.mxu0 0
        %6577 = vmatpush2.bf16.msra.mxu0 0
        %6578 = vmatprep.subr.bf16.mxu0 0
        %6579 = vmatpush2.bf16.msra.mxu0 0
        %6580 = vmatprep.subr.bf16.mxu0 0
        %6581 = vmatpush2.bf16.msra.mxu0 0
        %6582 = vmatprep.subr.bf16.mxu0 0
        %6583 = vmatpush2.bf16.msra.mxu0 0
        %6584 = vmatprep.mubr.bf16.mxu0 0
        %6585 = vmatmul.mubr.bf16.gmra.mxu0 %v6550
        %v6586 = vpop.f32.mrf.mxu0
        %v6587 = vadd.f32 0.0, %v6586
        %v6588 = vpop.f32.mrf.mxu0
        %v6589 = vpop.f32.mrf.mxu0
        %v6590 = vpop.f32.mrf.mxu0
        %6591 = vdwg.mxu0
        %v6592 = vpack.c.bf16 %v6587, %v6587
        %s6593 = scalar_lea.vmem %s16, 512
        %v6594 = vld [vmem:[%s6593] sm:$0xf]
        %v6595 = vld [vmem:[%s6593 + $0x4] sm:$0xf]
        %v6596 = vld [vmem:[%s6593 + $0x8] sm:$0xf]
        %v6597 = vld [vmem:[%s6593 + $0xc] sm:$0xf]
        %v6598 = vld [vmem:[%s6593 + $0x10] sm:$0xf]
        %v6599 = vld [vmem:[%s6593 + $0x14] sm:$0xf]
        %v6600 = vld [vmem:[%s6593 + $0x18] sm:$0xf]
        %v6601 = vld [vmem:[%s6593 + $0x1c] sm:$0xf]
        %v6602 = vld [vmem:[%s6593 + $0x20] sm:$0xf]
        %v6603 = vld [vmem:[%s6593 + $0x24] sm:$0xf]
        %v6604 = vld [vmem:[%s6593 + $0x28] sm:$0xf]
        %v6605 = vld [vmem:[%s6593 + $0x2c] sm:$0xf]
        %v6606 = vld [vmem:[%s6593 + $0x30] sm:$0xf]
        %v6607 = vld [vmem:[%s6593 + $0x34] sm:$0xf]
        %v6608 = vld [vmem:[%s6593 + $0x38] sm:$0xf]
        %v6609 = vld [vmem:[%s6593 + $0x3c] sm:$0xf]
        %v6626 = vunpack.c.l.b16 %v6594
        %v6627 = vunpack.c.l.b16 %v6595
        %v6628 = vunpack.c.l.b16 %v6596
        %v6629 = vunpack.c.l.b16 %v6597
        %v6630 = vunpack.c.l.b16 %v6598
        %v6631 = vunpack.c.l.b16 %v6599
        %v6632 = vunpack.c.l.b16 %v6600
        %v6633 = vunpack.c.l.b16 %v6601
        %v6634 = vunpack.c.l.b16 %v6602
        %v6635 = vunpack.c.l.b16 %v6603
        %v6636 = vunpack.c.l.b16 %v6604
        %v6637 = vunpack.c.l.b16 %v6605
        %v6638 = vunpack.c.l.b16 %v6606
        %v6639 = vunpack.c.l.b16 %v6607
        %v6640 = vunpack.c.l.b16 %v6608
        %v6641 = vunpack.c.l.b16 %v6609
        %v6642 = vpack.c.b16 %v6627, %v6626
        %v6643 = vpack.c.b16 %v6629, %v6628
        %v6644 = vpack.c.b16 %v6631, %v6630
        %v6645 = vpack.c.b16 %v6633, %v6632
        %v6646 = vpack.c.b16 %v6635, %v6634
        %v6647 = vpack.c.b16 %v6637, %v6636
        %v6648 = vpack.c.b16 %v6639, %v6638
        %v6649 = vpack.c.b16 %v6641, %v6640
        %6658 = vmatprep.subr.bf16.mxu0 0
        %6659 = vmatpush1.bf16.msra.mxu0 %v6649
        %6660 = vmatprep.subr.bf16.mxu0 0
        %6661 = vmatpush1.bf16.msra.mxu0 %v6648
        %6662 = vmatprep.subr.bf16.mxu0 0
        %6663 = vmatpush1.bf16.msra.mxu0 %v6647
        %6664 = vmatprep.subr.bf16.mxu0 0
        %6665 = vmatpush1.bf16.msra.mxu0 %v6646
        %6666 = vmatprep.subr.bf16.mxu0 0
        %6667 = vmatpush1.bf16.msra.mxu0 %v6645
        %6668 = vmatprep.subr.bf16.mxu0 0
        %6669 = vmatpush1.bf16.msra.mxu0 %v6644
        %6670 = vmatprep.subr.bf16.mxu0 0
        %6671 = vmatpush1.bf16.msra.mxu0 %v6643
        %6672 = vmatprep.subr.bf16.mxu0 0
        %6673 = vmatpush1.bf16.msra.mxu0 %v6642
        %6674 = vmatprep.subr.bf16.mxu0 0
        %6675 = vmatpush2.bf16.msra.mxu0 0
        %6676 = vmatprep.subr.bf16.mxu0 0
        %6677 = vmatpush2.bf16.msra.mxu0 0
        %6678 = vmatprep.subr.bf16.mxu0 0
        %6679 = vmatpush2.bf16.msra.mxu0 0
        %6680 = vmatprep.subr.bf16.mxu0 0
        %6681 = vmatpush2.bf16.msra.mxu0 0
        %6682 = vmatprep.subr.bf16.mxu0 0
        %6683 = vmatpush2.bf16.msra.mxu0 0
        %6684 = vmatprep.subr.bf16.mxu0 0
        %6685 = vmatpush2.bf16.msra.mxu0 0
        %6686 = vmatprep.subr.bf16.mxu0 0
        %6687 = vmatpush2.bf16.msra.mxu0 0
        %6688 = vmatprep.subr.bf16.mxu0 0
        %6689 = vmatpush2.bf16.msra.mxu0 0
        %6690 = vmatprep.mubr.bf16.mxu0 0
        %6691 = vmatmul.mubr.bf16.gmra.mxu0 %v6592
        %v6692 = vpop.f32.mrf.mxu0
        %v6693 = vadd.f32 0.0, %v6692
        %v6694 = vpop.f32.mrf.mxu0
        %v6695 = vpop.f32.mrf.mxu0
        %v6696 = vpop.f32.mrf.mxu0
        %6697 = vdwg.mxu0
        %v6698 = vadd.f32 %v6546, %v6693
        %v6699 = vld [vmem:[#allocation16] sm:$0xf]
        %v6700 = vld [vmem:[#allocation16 + $0x4] sm:$0xf]
        %v6701 = vld [vmem:[#allocation16 + $0x8] sm:$0xf]
        %v6702 = vld [vmem:[#allocation16 + $0xc] sm:$0xf]
        %v6703 = vld [vmem:[#allocation16 + $0x10] sm:$0xf]
        %v6704 = vld [vmem:[#allocation16 + $0x14] sm:$0xf]
        %v6705 = vld [vmem:[#allocation16 + $0x18] sm:$0xf]
        %v6706 = vld [vmem:[#allocation16 + $0x1c] sm:$0xf]
        %v6715 = vunpack.c.l.b16 %v6699
        %v6716 = vunpack.c.l.b16 %v6700
        %v6717 = vunpack.c.l.b16 %v6701
        %v6718 = vunpack.c.l.b16 %v6702
        %v6719 = vunpack.c.l.b16 %v6703
        %v6720 = vunpack.c.l.b16 %v6704
        %v6721 = vunpack.c.l.b16 %v6705
        %v6722 = vunpack.c.l.b16 %v6706
        %v6723 = vpack.c.b16 %v6716, %v6715
        %v6724 = vpack.c.b16 %v6718, %v6717
        %v6725 = vpack.c.b16 %v6720, %v6719
        %v6726 = vpack.c.b16 %v6722, %v6721
        %6731 = vmatprep.subr.bf16.mxu0 0
        %6732 = vmatpush1.bf16.msra.mxu0 0
        %6733 = vmatprep.subr.bf16.mxu0 0
        %6734 = vmatpush1.bf16.msra.mxu0 0
        %6735 = vmatprep.subr.bf16.mxu0 0
        %6736 = vmatpush1.bf16.msra.mxu0 0
        %6737 = vmatprep.subr.bf16.mxu0 0
        %6738 = vmatpush1.bf16.msra.mxu0 0
        %6739 = vmatprep.subr.bf16.mxu0 0
        %6740 = vmatpush1.bf16.msra.mxu0 %v6726
        %6741 = vmatprep.subr.bf16.mxu0 0
        %6742 = vmatpush1.bf16.msra.mxu0 %v6725
        %6743 = vmatprep.subr.bf16.mxu0 0
        %6744 = vmatpush1.bf16.msra.mxu0 %v6724
        %6745 = vmatprep.subr.bf16.mxu0 0
        %6746 = vmatpush1.bf16.msra.mxu0 %v6723
        %6747 = vmatprep.subr.bf16.mxu0 0
        %6748 = vmatpush2.bf16.msra.mxu0 0
        %6749 = vmatprep.subr.bf16.mxu0 0
        %6750 = vmatpush2.bf16.msra.mxu0 0
        %6751 = vmatprep.subr.bf16.mxu0 0
        %6752 = vmatpush2.bf16.msra.mxu0 0
        %6753 = vmatprep.subr.bf16.mxu0 0
        %6754 = vmatpush2.bf16.msra.mxu0 0
        %6755 = vmatprep.subr.bf16.mxu0 0
        %6756 = vmatpush2.bf16.msra.mxu0 0
        %6757 = vmatprep.subr.bf16.mxu0 0
        %6758 = vmatpush2.bf16.msra.mxu0 0
        %6759 = vmatprep.subr.bf16.mxu0 0
        %6760 = vmatpush2.bf16.msra.mxu0 0
        %6761 = vmatprep.subr.bf16.mxu0 0
        %6762 = vmatpush2.bf16.msra.mxu0 0
        %6763 = vmatprep.mubr.bf16.mxu0 0
        %6764 = vmatmul.mubr.bf16.gmra.mxu0 %v4793
        %v6765 = vpop.f32.mrf.mxu0
        %v6766 = vadd.f32 0.0, %v6765
        %v6767 = vpop.f32.mrf.mxu0
        %v6768 = vpop.f32.mrf.mxu0
        %v6769 = vpop.f32.mrf.mxu0
        %6770 = vdwg.mxu0
        %v6771 = vadd.f32 %v6698, %v6766
        %v6772 = vmax.f32 %v6771, 0.0
        %v6773 = vpack.c.bf16 %v6772, %v6772
        %v6775 = vsel %vm5335, %v6773, 0
        %6777 = vmatprep.subr.bf16.mxu0 0
        %6778 = vmatpush1.bf16.msra.mxu0 0
        %6779 = vmatprep.subr.bf16.mxu0 0
        %6780 = vmatpush1.bf16.msra.mxu0 0
        %6781 = vmatprep.subr.bf16.mxu0 0
        %6782 = vmatpush1.bf16.msra.mxu0 0
        %6783 = vmatprep.subr.bf16.mxu0 0
        %6784 = vmatpush1.bf16.msra.mxu0 0
        %6785 = vmatprep.subr.bf16.mxu0 0
        %6786 = vmatpush1.bf16.msra.mxu0 0
        %6787 = vmatprep.subr.bf16.mxu0 0
        %6788 = vmatpush1.bf16.msra.mxu0 0
        %6789 = vmatprep.subr.bf16.mxu0 0
        %6790 = vmatpush1.bf16.msra.mxu0 0
        %6791 = vmatprep.subr.bf16.mxu0 0
        %6792 = vmatpush1.bf16.msra.mxu0 %v6775
        %6793 = vmatprep.subr.bf16.mxu0 0
        %6794 = vmatpush2.bf16.msra.mxu0 0
        %6795 = vmatprep.subr.bf16.mxu0 0
        %6796 = vmatpush2.bf16.msra.mxu0 0
        %6797 = vmatprep.subr.bf16.mxu0 0
        %6798 = vmatpush2.bf16.msra.mxu0 0
        %6799 = vmatprep.subr.bf16.mxu0 0
        %6800 = vmatpush2.bf16.msra.mxu0 0
        %6801 = vmatprep.subr.bf16.mxu0 0
        %6802 = vmatpush2.bf16.msra.mxu0 0
        %6803 = vmatprep.subr.bf16.mxu0 0
        %6804 = vmatpush2.bf16.msra.mxu0 0
        %6805 = vmatprep.subr.bf16.mxu0 0
        %6806 = vmatpush2.bf16.msra.mxu0 0
        %6807 = vmatprep.subr.bf16.mxu0 0
        %6808 = vmatpush2.bf16.msra.mxu0 0
        %6809 = vmatprep.mubr.bf16.mxu0 0
        %6810 = vmatmul.mubr.bf16.gmra.mxu0 %v5333
        %v6811 = vpop.f32.mrf.mxu0
        %v6812 = vadd.f32 0.0, %v6811
        %v6813 = vpop.f32.mrf.mxu0
        %v6814 = vpop.f32.mrf.mxu0
        %v6815 = vpop.f32.mrf.mxu0
        %6816 = vdwg.mxu0
        %v6817 = vpack.c.bf16 %v6812, %v6812
        %v6818 = vld [vmem:[#allocation17] sm:$0xf]
        %v6819 = vld [vmem:[#allocation17 + $0x4] sm:$0xf]
        %v6820 = vld [vmem:[#allocation17 + $0x8] sm:$0xf]
        %v6821 = vld [vmem:[#allocation17 + $0xc] sm:$0xf]
        %v6822 = vld [vmem:[#allocation17 + $0x10] sm:$0xf]
        %v6823 = vld [vmem:[#allocation17 + $0x14] sm:$0xf]
        %v6824 = vld [vmem:[#allocation17 + $0x18] sm:$0xf]
        %v6825 = vld [vmem:[#allocation17 + $0x1c] sm:$0xf]
        %v6826 = vld [vmem:[#allocation17 + $0x20] sm:$0xf]
        %v6827 = vld [vmem:[#allocation17 + $0x24] sm:$0xf]
        %v6828 = vld [vmem:[#allocation17 + $0x28] sm:$0xf]
        %v6829 = vld [vmem:[#allocation17 + $0x2c] sm:$0xf]
        %v6830 = vld [vmem:[#allocation17 + $0x30] sm:$0xf]
        %v6831 = vld [vmem:[#allocation17 + $0x34] sm:$0xf]
        %v6832 = vld [vmem:[#allocation17 + $0x38] sm:$0xf]
        %v6833 = vld [vmem:[#allocation17 + $0x3c] sm:$0xf]
        %6834 = vmatprep.subr.bf16.mxu0 0
        %6835 = vmatpush1.bf16.msra.mxu0 0
        %6836 = vmatprep.subr.bf16.mxu0 0
        %6837 = vmatpush1.bf16.msra.mxu0 0
        %6838 = vmatprep.subr.bf16.mxu0 0
        %6839 = vmatpush1.bf16.msra.mxu0 0
        %6840 = vmatprep.subr.bf16.mxu0 0
        %6841 = vmatpush1.bf16.msra.mxu0 0
        %6842 = vmatprep.subr.bf16.mxu0 0
        %6843 = vmatpush1.bf16.msra.mxu0 0
        %6844 = vmatprep.subr.bf16.mxu0 0
        %6845 = vmatpush1.bf16.msra.mxu0 0
        %6846 = vmatprep.subr.bf16.mxu0 0
        %6847 = vmatpush1.bf16.msra.mxu0 0
        %6848 = vmatprep.subr.bf16.mxu0 0
        %6849 = vmatpush1.bf16.msra.mxu0 %v6775
        %6850 = vmatprep.subr.bf16.mxu0 0
        %6851 = vmatpush2.bf16.msra.mxu0 0
        %6852 = vmatprep.subr.bf16.mxu0 0
        %6853 = vmatpush2.bf16.msra.mxu0 0
        %6854 = vmatprep.subr.bf16.mxu0 0
        %6855 = vmatpush2.bf16.msra.mxu0 0
        %6856 = vmatprep.subr.bf16.mxu0 0
        %6857 = vmatpush2.bf16.msra.mxu0 0
        %6858 = vmatprep.subr.bf16.mxu0 0
        %6859 = vmatpush2.bf16.msra.mxu0 0
        %6860 = vmatprep.subr.bf16.mxu0 0
        %6861 = vmatpush2.bf16.msra.mxu0 0
        %6862 = vmatprep.subr.bf16.mxu0 0
        %6863 = vmatpush2.bf16.msra.mxu0 0
        %6864 = vmatprep.subr.bf16.mxu0 0
        %6865 = vmatpush2.bf16.msra.mxu0 0
        %6866 = vmatprep.mubr.bf16.mxu0 0
        %6867 = vmatmul.mubr.bf16.gmra.mxu0 %v5399
        %v6868 = vpop.f32.mrf.mxu0
        %v6869 = vadd.f32 0.0, %v6868
        %v6870 = vpop.f32.mrf.mxu0
        %v6871 = vpop.f32.mrf.mxu0
        %v6872 = vpop.f32.mrf.mxu0
        %6873 = vdwg.mxu0
        %v6874 = vpack.c.bf16 %v6869, %v6869
        %s6875 = scalar_lea.vmem [#allocation17], 64
        %v6876 = vld [vmem:[%s6875] sm:$0xf]
        %v6877 = vld [vmem:[%s6875 + $0x4] sm:$0xf]
        %v6878 = vld [vmem:[%s6875 + $0x8] sm:$0xf]
        %v6879 = vld [vmem:[%s6875 + $0xc] sm:$0xf]
        %v6880 = vld [vmem:[%s6875 + $0x10] sm:$0xf]
        %v6881 = vld [vmem:[%s6875 + $0x14] sm:$0xf]
        %v6882 = vld [vmem:[%s6875 + $0x18] sm:$0xf]
        %v6883 = vld [vmem:[%s6875 + $0x1c] sm:$0xf]
        %v6884 = vld [vmem:[%s6875 + $0x20] sm:$0xf]
        %v6885 = vld [vmem:[%s6875 + $0x24] sm:$0xf]
        %v6886 = vld [vmem:[%s6875 + $0x28] sm:$0xf]
        %v6887 = vld [vmem:[%s6875 + $0x2c] sm:$0xf]
        %v6888 = vld [vmem:[%s6875 + $0x30] sm:$0xf]
        %v6889 = vld [vmem:[%s6875 + $0x34] sm:$0xf]
        %v6890 = vld [vmem:[%s6875 + $0x38] sm:$0xf]
        %v6891 = vld [vmem:[%s6875 + $0x3c] sm:$0xf]
        %v6908 = vunpack.c.l.b16 %v6876
        %v6909 = vunpack.c.l.b16 %v6877
        %v6910 = vunpack.c.l.b16 %v6878
        %v6911 = vunpack.c.l.b16 %v6879
        %v6912 = vunpack.c.l.b16 %v6880
        %v6913 = vunpack.c.l.b16 %v6881
        %v6914 = vunpack.c.l.b16 %v6882
        %v6915 = vunpack.c.l.b16 %v6883
        %v6916 = vunpack.c.l.b16 %v6884
        %v6917 = vunpack.c.l.b16 %v6885
        %v6918 = vunpack.c.l.b16 %v6886
        %v6919 = vunpack.c.l.b16 %v6887
        %v6920 = vunpack.c.l.b16 %v6888
        %v6921 = vunpack.c.l.b16 %v6889
        %v6922 = vunpack.c.l.b16 %v6890
        %v6923 = vunpack.c.l.b16 %v6891
        %v6924 = vpack.c.b16 %v6909, %v6908
        %v6925 = vpack.c.b16 %v6911, %v6910
        %v6926 = vpack.c.b16 %v6913, %v6912
        %v6927 = vpack.c.b16 %v6915, %v6914
        %v6928 = vpack.c.b16 %v6917, %v6916
        %v6929 = vpack.c.b16 %v6919, %v6918
        %v6930 = vpack.c.b16 %v6921, %v6920
        %v6931 = vpack.c.b16 %v6923, %v6922
        %6940 = vmatprep.subr.bf16.mxu0 0
        %6941 = vmatpush1.bf16.msra.mxu0 %v6931
        %6942 = vmatprep.subr.bf16.mxu0 0
        %6943 = vmatpush1.bf16.msra.mxu0 %v6930
        %6944 = vmatprep.subr.bf16.mxu0 0
        %6945 = vmatpush1.bf16.msra.mxu0 %v6929
        %6946 = vmatprep.subr.bf16.mxu0 0
        %6947 = vmatpush1.bf16.msra.mxu0 %v6928
        %6948 = vmatprep.subr.bf16.mxu0 0
        %6949 = vmatpush1.bf16.msra.mxu0 %v6927
        %6950 = vmatprep.subr.bf16.mxu0 0
        %6951 = vmatpush1.bf16.msra.mxu0 %v6926
        %6952 = vmatprep.subr.bf16.mxu0 0
        %6953 = vmatpush1.bf16.msra.mxu0 %v6925
        %6954 = vmatprep.subr.bf16.mxu0 0
        %6955 = vmatpush1.bf16.msra.mxu0 %v6924
        %6956 = vmatprep.subr.bf16.mxu0 0
        %6957 = vmatpush2.bf16.msra.mxu0 0
        %6958 = vmatprep.subr.bf16.mxu0 0
        %6959 = vmatpush2.bf16.msra.mxu0 0
        %6960 = vmatprep.subr.bf16.mxu0 0
        %6961 = vmatpush2.bf16.msra.mxu0 0
        %6962 = vmatprep.subr.bf16.mxu0 0
        %6963 = vmatpush2.bf16.msra.mxu0 0
        %6964 = vmatprep.subr.bf16.mxu0 0
        %6965 = vmatpush2.bf16.msra.mxu0 0
        %6966 = vmatprep.subr.bf16.mxu0 0
        %6967 = vmatpush2.bf16.msra.mxu0 0
        %6968 = vmatprep.subr.bf16.mxu0 0
        %6969 = vmatpush2.bf16.msra.mxu0 0
        %6970 = vmatprep.subr.bf16.mxu0 0
        %6971 = vmatpush2.bf16.msra.mxu0 0
        %6972 = vmatprep.mubr.bf16.mxu0 0
        %6973 = vmatmul.mubr.bf16.gmra.mxu0 %v6874
        %v6974 = vpop.f32.mrf.mxu0
        %v6975 = vadd.f32 0.0, %v6974
        %v6976 = vpop.f32.mrf.mxu0
        %v6977 = vpop.f32.mrf.mxu0
        %v6978 = vpop.f32.mrf.mxu0
        %6979 = vdwg.mxu0
        %v6996 = vunpack.c.l.b16 %v6818
        %v6997 = vunpack.c.l.b16 %v6819
        %v6998 = vunpack.c.l.b16 %v6820
        %v6999 = vunpack.c.l.b16 %v6821
        %v7000 = vunpack.c.l.b16 %v6822
        %v7001 = vunpack.c.l.b16 %v6823
        %v7002 = vunpack.c.l.b16 %v6824
        %v7003 = vunpack.c.l.b16 %v6825
        %v7004 = vunpack.c.l.b16 %v6826
        %v7005 = vunpack.c.l.b16 %v6827
        %v7006 = vunpack.c.l.b16 %v6828
        %v7007 = vunpack.c.l.b16 %v6829
        %v7008 = vunpack.c.l.b16 %v6830
        %v7009 = vunpack.c.l.b16 %v6831
        %v7010 = vunpack.c.l.b16 %v6832
        %v7011 = vunpack.c.l.b16 %v6833
        %v7012 = vpack.c.b16 %v6997, %v6996
        %v7013 = vpack.c.b16 %v6999, %v6998
        %v7014 = vpack.c.b16 %v7001, %v7000
        %v7015 = vpack.c.b16 %v7003, %v7002
        %v7016 = vpack.c.b16 %v7005, %v7004
        %v7017 = vpack.c.b16 %v7007, %v7006
        %v7018 = vpack.c.b16 %v7009, %v7008
        %v7019 = vpack.c.b16 %v7011, %v7010
        %7028 = vmatprep.subr.bf16.mxu0 0
        %7029 = vmatpush1.bf16.msra.mxu0 %v7019
        %7030 = vmatprep.subr.bf16.mxu0 0
        %7031 = vmatpush1.bf16.msra.mxu0 %v7018
        %7032 = vmatprep.subr.bf16.mxu0 0
        %7033 = vmatpush1.bf16.msra.mxu0 %v7017
        %7034 = vmatprep.subr.bf16.mxu0 0
        %7035 = vmatpush1.bf16.msra.mxu0 %v7016
        %7036 = vmatprep.subr.bf16.mxu0 0
        %7037 = vmatpush1.bf16.msra.mxu0 %v7015
        %7038 = vmatprep.subr.bf16.mxu0 0
        %7039 = vmatpush1.bf16.msra.mxu0 %v7014
        %7040 = vmatprep.subr.bf16.mxu0 0
        %7041 = vmatpush1.bf16.msra.mxu0 %v7013
        %7042 = vmatprep.subr.bf16.mxu0 0
        %7043 = vmatpush1.bf16.msra.mxu0 %v7012
        %7044 = vmatprep.subr.bf16.mxu0 0
        %7045 = vmatpush2.bf16.msra.mxu0 0
        %7046 = vmatprep.subr.bf16.mxu0 0
        %7047 = vmatpush2.bf16.msra.mxu0 0
        %7048 = vmatprep.subr.bf16.mxu0 0
        %7049 = vmatpush2.bf16.msra.mxu0 0
        %7050 = vmatprep.subr.bf16.mxu0 0
        %7051 = vmatpush2.bf16.msra.mxu0 0
        %7052 = vmatprep.subr.bf16.mxu0 0
        %7053 = vmatpush2.bf16.msra.mxu0 0
        %7054 = vmatprep.subr.bf16.mxu0 0
        %7055 = vmatpush2.bf16.msra.mxu0 0
        %7056 = vmatprep.subr.bf16.mxu0 0
        %7057 = vmatpush2.bf16.msra.mxu0 0
        %7058 = vmatprep.subr.bf16.mxu0 0
        %7059 = vmatpush2.bf16.msra.mxu0 0
        %7060 = vmatprep.mubr.bf16.mxu0 0
        %7061 = vmatmul.mubr.bf16.gmra.mxu0 %v6817
        %v7062 = vpop.f32.mrf.mxu0
        %v7063 = vadd.f32 %v6975, %v7062
        %v7064 = vpop.f32.mrf.mxu0
        %v7065 = vpop.f32.mrf.mxu0
        %v7066 = vpop.f32.mrf.mxu0
        %7067 = vdwg.mxu0
        %7068 = vmatprep.subr.bf16.mxu0 0
        %7069 = vmatpush1.bf16.msra.mxu0 0
        %7070 = vmatprep.subr.bf16.mxu0 0
        %7071 = vmatpush1.bf16.msra.mxu0 0
        %7072 = vmatprep.subr.bf16.mxu0 0
        %7073 = vmatpush1.bf16.msra.mxu0 0
        %7074 = vmatprep.subr.bf16.mxu0 0
        %7075 = vmatpush1.bf16.msra.mxu0 0
        %7076 = vmatprep.subr.bf16.mxu0 0
        %7077 = vmatpush1.bf16.msra.mxu0 0
        %7078 = vmatprep.subr.bf16.mxu0 0
        %7079 = vmatpush1.bf16.msra.mxu0 0
        %7080 = vmatprep.subr.bf16.mxu0 0
        %7081 = vmatpush1.bf16.msra.mxu0 0
        %7082 = vmatprep.subr.bf16.mxu0 0
        %7083 = vmatpush1.bf16.msra.mxu0 %v6775
        %7084 = vmatprep.subr.bf16.mxu0 0
        %7085 = vmatpush2.bf16.msra.mxu0 0
        %7086 = vmatprep.subr.bf16.mxu0 0
        %7087 = vmatpush2.bf16.msra.mxu0 0
        %7088 = vmatprep.subr.bf16.mxu0 0
        %7089 = vmatpush2.bf16.msra.mxu0 0
        %7090 = vmatprep.subr.bf16.mxu0 0
        %7091 = vmatpush2.bf16.msra.mxu0 0
        %7092 = vmatprep.subr.bf16.mxu0 0
        %7093 = vmatpush2.bf16.msra.mxu0 0
        %7094 = vmatprep.subr.bf16.mxu0 0
        %7095 = vmatpush2.bf16.msra.mxu0 0
        %7096 = vmatprep.subr.bf16.mxu0 0
        %7097 = vmatpush2.bf16.msra.mxu0 0
        %7098 = vmatprep.subr.bf16.mxu0 0
        %7099 = vmatpush2.bf16.msra.mxu0 0
        %7100 = vmatprep.mubr.bf16.mxu0 0
        %7101 = vmatmul.mubr.bf16.gmra.mxu0 %v5638
        %v7102 = vpop.f32.mrf.mxu0
        %v7103 = vadd.f32 0.0, %v7102
        %v7104 = vpop.f32.mrf.mxu0
        %v7105 = vpop.f32.mrf.mxu0
        %v7106 = vpop.f32.mrf.mxu0
        %7107 = vdwg.mxu0
        %v7108 = vpack.c.bf16 %v7103, %v7103
        %s7109 = scalar_lea.vmem [#allocation17], 128
        %v7110 = vld [vmem:[%s7109] sm:$0xf]
        %v7111 = vld [vmem:[%s7109 + $0x4] sm:$0xf]
        %v7112 = vld [vmem:[%s7109 + $0x8] sm:$0xf]
        %v7113 = vld [vmem:[%s7109 + $0xc] sm:$0xf]
        %v7114 = vld [vmem:[%s7109 + $0x10] sm:$0xf]
        %v7115 = vld [vmem:[%s7109 + $0x14] sm:$0xf]
        %v7116 = vld [vmem:[%s7109 + $0x18] sm:$0xf]
        %v7117 = vld [vmem:[%s7109 + $0x1c] sm:$0xf]
        %v7118 = vld [vmem:[%s7109 + $0x20] sm:$0xf]
        %v7119 = vld [vmem:[%s7109 + $0x24] sm:$0xf]
        %v7120 = vld [vmem:[%s7109 + $0x28] sm:$0xf]
        %v7121 = vld [vmem:[%s7109 + $0x2c] sm:$0xf]
        %v7122 = vld [vmem:[%s7109 + $0x30] sm:$0xf]
        %v7123 = vld [vmem:[%s7109 + $0x34] sm:$0xf]
        %v7124 = vld [vmem:[%s7109 + $0x38] sm:$0xf]
        %v7125 = vld [vmem:[%s7109 + $0x3c] sm:$0xf]
        %v7142 = vunpack.c.l.b16 %v7110
        %v7143 = vunpack.c.l.b16 %v7111
        %v7144 = vunpack.c.l.b16 %v7112
        %v7145 = vunpack.c.l.b16 %v7113
        %v7146 = vunpack.c.l.b16 %v7114
        %v7147 = vunpack.c.l.b16 %v7115
        %v7148 = vunpack.c.l.b16 %v7116
        %v7149 = vunpack.c.l.b16 %v7117
        %v7150 = vunpack.c.l.b16 %v7118
        %v7151 = vunpack.c.l.b16 %v7119
        %v7152 = vunpack.c.l.b16 %v7120
        %v7153 = vunpack.c.l.b16 %v7121
        %v7154 = vunpack.c.l.b16 %v7122
        %v7155 = vunpack.c.l.b16 %v7123
        %v7156 = vunpack.c.l.b16 %v7124
        %v7157 = vunpack.c.l.b16 %v7125
        %v7158 = vpack.c.b16 %v7143, %v7142
        %v7159 = vpack.c.b16 %v7145, %v7144
        %v7160 = vpack.c.b16 %v7147, %v7146
        %v7161 = vpack.c.b16 %v7149, %v7148
        %v7162 = vpack.c.b16 %v7151, %v7150
        %v7163 = vpack.c.b16 %v7153, %v7152
        %v7164 = vpack.c.b16 %v7155, %v7154
        %v7165 = vpack.c.b16 %v7157, %v7156
        %7174 = vmatprep.subr.bf16.mxu0 0
        %7175 = vmatpush1.bf16.msra.mxu0 %v7165
        %7176 = vmatprep.subr.bf16.mxu0 0
        %7177 = vmatpush1.bf16.msra.mxu0 %v7164
        %7178 = vmatprep.subr.bf16.mxu0 0
        %7179 = vmatpush1.bf16.msra.mxu0 %v7163
        %7180 = vmatprep.subr.bf16.mxu0 0
        %7181 = vmatpush1.bf16.msra.mxu0 %v7162
        %7182 = vmatprep.subr.bf16.mxu0 0
        %7183 = vmatpush1.bf16.msra.mxu0 %v7161
        %7184 = vmatprep.subr.bf16.mxu0 0
        %7185 = vmatpush1.bf16.msra.mxu0 %v7160
        %7186 = vmatprep.subr.bf16.mxu0 0
        %7187 = vmatpush1.bf16.msra.mxu0 %v7159
        %7188 = vmatprep.subr.bf16.mxu0 0
        %7189 = vmatpush1.bf16.msra.mxu0 %v7158
        %7190 = vmatprep.subr.bf16.mxu0 0
        %7191 = vmatpush2.bf16.msra.mxu0 0
        %7192 = vmatprep.subr.bf16.mxu0 0
        %7193 = vmatpush2.bf16.msra.mxu0 0
        %7194 = vmatprep.subr.bf16.mxu0 0
        %7195 = vmatpush2.bf16.msra.mxu0 0
        %7196 = vmatprep.subr.bf16.mxu0 0
        %7197 = vmatpush2.bf16.msra.mxu0 0
        %7198 = vmatprep.subr.bf16.mxu0 0
        %7199 = vmatpush2.bf16.msra.mxu0 0
        %7200 = vmatprep.subr.bf16.mxu0 0
        %7201 = vmatpush2.bf16.msra.mxu0 0
        %7202 = vmatprep.subr.bf16.mxu0 0
        %7203 = vmatpush2.bf16.msra.mxu0 0
        %7204 = vmatprep.subr.bf16.mxu0 0
        %7205 = vmatpush2.bf16.msra.mxu0 0
        %7206 = vmatprep.mubr.bf16.mxu0 0
        %7207 = vmatmul.mubr.bf16.gmra.mxu0 %v7108
        %v7208 = vpop.f32.mrf.mxu0
        %v7209 = vadd.f32 0.0, %v7208
        %v7210 = vpop.f32.mrf.mxu0
        %v7211 = vpop.f32.mrf.mxu0
        %v7212 = vpop.f32.mrf.mxu0
        %7213 = vdwg.mxu0
        %v7214 = vadd.f32 %v7063, %v7209
        %7215 = vmatprep.subr.bf16.mxu0 0
        %7216 = vmatpush1.bf16.msra.mxu0 0
        %7217 = vmatprep.subr.bf16.mxu0 0
        %7218 = vmatpush1.bf16.msra.mxu0 0
        %7219 = vmatprep.subr.bf16.mxu0 0
        %7220 = vmatpush1.bf16.msra.mxu0 0
        %7221 = vmatprep.subr.bf16.mxu0 0
        %7222 = vmatpush1.bf16.msra.mxu0 0
        %7223 = vmatprep.subr.bf16.mxu0 0
        %7224 = vmatpush1.bf16.msra.mxu0 0
        %7225 = vmatprep.subr.bf16.mxu0 0
        %7226 = vmatpush1.bf16.msra.mxu0 0
        %7227 = vmatprep.subr.bf16.mxu0 0
        %7228 = vmatpush1.bf16.msra.mxu0 0
        %7229 = vmatprep.subr.bf16.mxu0 0
        %7230 = vmatpush1.bf16.msra.mxu0 %v6775
        %7231 = vmatprep.subr.bf16.mxu0 0
        %7232 = vmatpush2.bf16.msra.mxu0 0
        %7233 = vmatprep.subr.bf16.mxu0 0
        %7234 = vmatpush2.bf16.msra.mxu0 0
        %7235 = vmatprep.subr.bf16.mxu0 0
        %7236 = vmatpush2.bf16.msra.mxu0 0
        %7237 = vmatprep.subr.bf16.mxu0 0
        %7238 = vmatpush2.bf16.msra.mxu0 0
        %7239 = vmatprep.subr.bf16.mxu0 0
        %7240 = vmatpush2.bf16.msra.mxu0 0
        %7241 = vmatprep.subr.bf16.mxu0 0
        %7242 = vmatpush2.bf16.msra.mxu0 0
        %7243 = vmatprep.subr.bf16.mxu0 0
        %7244 = vmatpush2.bf16.msra.mxu0 0
        %7245 = vmatprep.subr.bf16.mxu0 0
        %7246 = vmatpush2.bf16.msra.mxu0 0
        %7247 = vmatprep.mubr.bf16.mxu0 0
        %7248 = vmatmul.mubr.bf16.gmra.mxu0 %v5790
        %v7249 = vpop.f32.mrf.mxu0
        %v7250 = vadd.f32 0.0, %v7249
        %v7251 = vpop.f32.mrf.mxu0
        %v7252 = vpop.f32.mrf.mxu0
        %v7253 = vpop.f32.mrf.mxu0
        %7254 = vdwg.mxu0
        %v7255 = vpack.c.bf16 %v7250, %v7250
        %s7256 = scalar_lea.vmem [#allocation17], 192
        %v7257 = vld [vmem:[%s7256] sm:$0xf]
        %v7258 = vld [vmem:[%s7256 + $0x4] sm:$0xf]
        %v7259 = vld [vmem:[%s7256 + $0x8] sm:$0xf]
        %v7260 = vld [vmem:[%s7256 + $0xc] sm:$0xf]
        %v7261 = vld [vmem:[%s7256 + $0x10] sm:$0xf]
        %v7262 = vld [vmem:[%s7256 + $0x14] sm:$0xf]
        %v7263 = vld [vmem:[%s7256 + $0x18] sm:$0xf]
        %v7264 = vld [vmem:[%s7256 + $0x1c] sm:$0xf]
        %v7265 = vld [vmem:[%s7256 + $0x20] sm:$0xf]
        %v7266 = vld [vmem:[%s7256 + $0x24] sm:$0xf]
        %v7267 = vld [vmem:[%s7256 + $0x28] sm:$0xf]
        %v7268 = vld [vmem:[%s7256 + $0x2c] sm:$0xf]
        %v7269 = vld [vmem:[%s7256 + $0x30] sm:$0xf]
        %v7270 = vld [vmem:[%s7256 + $0x34] sm:$0xf]
        %v7271 = vld [vmem:[%s7256 + $0x38] sm:$0xf]
        %v7272 = vld [vmem:[%s7256 + $0x3c] sm:$0xf]
        %v7289 = vunpack.c.l.b16 %v7257
        %v7290 = vunpack.c.l.b16 %v7258
        %v7291 = vunpack.c.l.b16 %v7259
        %v7292 = vunpack.c.l.b16 %v7260
        %v7293 = vunpack.c.l.b16 %v7261
        %v7294 = vunpack.c.l.b16 %v7262
        %v7295 = vunpack.c.l.b16 %v7263
        %v7296 = vunpack.c.l.b16 %v7264
        %v7297 = vunpack.c.l.b16 %v7265
        %v7298 = vunpack.c.l.b16 %v7266
        %v7299 = vunpack.c.l.b16 %v7267
        %v7300 = vunpack.c.l.b16 %v7268
        %v7301 = vunpack.c.l.b16 %v7269
        %v7302 = vunpack.c.l.b16 %v7270
        %v7303 = vunpack.c.l.b16 %v7271
        %v7304 = vunpack.c.l.b16 %v7272
        %v7305 = vpack.c.b16 %v7290, %v7289
        %v7306 = vpack.c.b16 %v7292, %v7291
        %v7307 = vpack.c.b16 %v7294, %v7293
        %v7308 = vpack.c.b16 %v7296, %v7295
        %v7309 = vpack.c.b16 %v7298, %v7297
        %v7310 = vpack.c.b16 %v7300, %v7299
        %v7311 = vpack.c.b16 %v7302, %v7301
        %v7312 = vpack.c.b16 %v7304, %v7303
        %7321 = vmatprep.subr.bf16.mxu0 0
        %7322 = vmatpush1.bf16.msra.mxu0 %v7312
        %7323 = vmatprep.subr.bf16.mxu0 0
        %7324 = vmatpush1.bf16.msra.mxu0 %v7311
        %7325 = vmatprep.subr.bf16.mxu0 0
        %7326 = vmatpush1.bf16.msra.mxu0 %v7310
        %7327 = vmatprep.subr.bf16.mxu0 0
        %7328 = vmatpush1.bf16.msra.mxu0 %v7309
        %7329 = vmatprep.subr.bf16.mxu0 0
        %7330 = vmatpush1.bf16.msra.mxu0 %v7308
        %7331 = vmatprep.subr.bf16.mxu0 0
        %7332 = vmatpush1.bf16.msra.mxu0 %v7307
        %7333 = vmatprep.subr.bf16.mxu0 0
        %7334 = vmatpush1.bf16.msra.mxu0 %v7306
        %7335 = vmatprep.subr.bf16.mxu0 0
        %7336 = vmatpush1.bf16.msra.mxu0 %v7305
        %7337 = vmatprep.subr.bf16.mxu0 0
        %7338 = vmatpush2.bf16.msra.mxu0 0
        %7339 = vmatprep.subr.bf16.mxu0 0
        %7340 = vmatpush2.bf16.msra.mxu0 0
        %7341 = vmatprep.subr.bf16.mxu0 0
        %7342 = vmatpush2.bf16.msra.mxu0 0
        %7343 = vmatprep.subr.bf16.mxu0 0
        %7344 = vmatpush2.bf16.msra.mxu0 0
        %7345 = vmatprep.subr.bf16.mxu0 0
        %7346 = vmatpush2.bf16.msra.mxu0 0
        %7347 = vmatprep.subr.bf16.mxu0 0
        %7348 = vmatpush2.bf16.msra.mxu0 0
        %7349 = vmatprep.subr.bf16.mxu0 0
        %7350 = vmatpush2.bf16.msra.mxu0 0
        %7351 = vmatprep.subr.bf16.mxu0 0
        %7352 = vmatpush2.bf16.msra.mxu0 0
        %7353 = vmatprep.mubr.bf16.mxu0 0
        %7354 = vmatmul.mubr.bf16.gmra.mxu0 %v7255
        %v7355 = vpop.f32.mrf.mxu0
        %v7356 = vadd.f32 0.0, %v7355
        %v7357 = vpop.f32.mrf.mxu0
        %v7358 = vpop.f32.mrf.mxu0
        %v7359 = vpop.f32.mrf.mxu0
        %7360 = vdwg.mxu0
        %v7361 = vadd.f32 %v7214, %v7356
        %7362 = vmatprep.subr.bf16.mxu0 0
        %7363 = vmatpush1.bf16.msra.mxu0 0
        %7364 = vmatprep.subr.bf16.mxu0 0
        %7365 = vmatpush1.bf16.msra.mxu0 0
        %7366 = vmatprep.subr.bf16.mxu0 0
        %7367 = vmatpush1.bf16.msra.mxu0 0
        %7368 = vmatprep.subr.bf16.mxu0 0
        %7369 = vmatpush1.bf16.msra.mxu0 0
        %7370 = vmatprep.subr.bf16.mxu0 0
        %7371 = vmatpush1.bf16.msra.mxu0 0
        %7372 = vmatprep.subr.bf16.mxu0 0
        %7373 = vmatpush1.bf16.msra.mxu0 0
        %7374 = vmatprep.subr.bf16.mxu0 0
        %7375 = vmatpush1.bf16.msra.mxu0 0
        %7376 = vmatprep.subr.bf16.mxu0 0
        %7377 = vmatpush1.bf16.msra.mxu0 %v6775
        %7378 = vmatprep.subr.bf16.mxu0 0
        %7379 = vmatpush2.bf16.msra.mxu0 0
        %7380 = vmatprep.subr.bf16.mxu0 0
        %7381 = vmatpush2.bf16.msra.mxu0 0
        %7382 = vmatprep.subr.bf16.mxu0 0
        %7383 = vmatpush2.bf16.msra.mxu0 0
        %7384 = vmatprep.subr.bf16.mxu0 0
        %7385 = vmatpush2.bf16.msra.mxu0 0
        %7386 = vmatprep.subr.bf16.mxu0 0
        %7387 = vmatpush2.bf16.msra.mxu0 0
        %7388 = vmatprep.subr.bf16.mxu0 0
        %7389 = vmatpush2.bf16.msra.mxu0 0
        %7390 = vmatprep.subr.bf16.mxu0 0
        %7391 = vmatpush2.bf16.msra.mxu0 0
        %7392 = vmatprep.subr.bf16.mxu0 0
        %7393 = vmatpush2.bf16.msra.mxu0 0
        %7394 = vmatprep.mubr.bf16.mxu0 0
        %7395 = vmatmul.mubr.bf16.gmra.mxu0 %v5942
        %v7396 = vpop.f32.mrf.mxu0
        %v7397 = vadd.f32 0.0, %v7396
        %v7398 = vpop.f32.mrf.mxu0
        %v7399 = vpop.f32.mrf.mxu0
        %v7400 = vpop.f32.mrf.mxu0
        %7401 = vdwg.mxu0
        %v7402 = vpack.c.bf16 %v7397, %v7397
        %s7403 = scalar_lea.vmem [#allocation17], 256
        %v7404 = vld [vmem:[%s7403] sm:$0xf]
        %v7405 = vld [vmem:[%s7403 + $0x4] sm:$0xf]
        %v7406 = vld [vmem:[%s7403 + $0x8] sm:$0xf]
        %v7407 = vld [vmem:[%s7403 + $0xc] sm:$0xf]
        %v7408 = vld [vmem:[%s7403 + $0x10] sm:$0xf]
        %v7409 = vld [vmem:[%s7403 + $0x14] sm:$0xf]
        %v7410 = vld [vmem:[%s7403 + $0x18] sm:$0xf]
        %v7411 = vld [vmem:[%s7403 + $0x1c] sm:$0xf]
        %v7412 = vld [vmem:[%s7403 + $0x20] sm:$0xf]
        %v7413 = vld [vmem:[%s7403 + $0x24] sm:$0xf]
        %v7414 = vld [vmem:[%s7403 + $0x28] sm:$0xf]
        %v7415 = vld [vmem:[%s7403 + $0x2c] sm:$0xf]
        %v7416 = vld [vmem:[%s7403 + $0x30] sm:$0xf]
        %v7417 = vld [vmem:[%s7403 + $0x34] sm:$0xf]
        %v7418 = vld [vmem:[%s7403 + $0x38] sm:$0xf]
        %v7419 = vld [vmem:[%s7403 + $0x3c] sm:$0xf]
        %v7436 = vunpack.c.l.b16 %v7404
        %v7437 = vunpack.c.l.b16 %v7405
        %v7438 = vunpack.c.l.b16 %v7406
        %v7439 = vunpack.c.l.b16 %v7407
        %v7440 = vunpack.c.l.b16 %v7408
        %v7441 = vunpack.c.l.b16 %v7409
        %v7442 = vunpack.c.l.b16 %v7410
        %v7443 = vunpack.c.l.b16 %v7411
        %v7444 = vunpack.c.l.b16 %v7412
        %v7445 = vunpack.c.l.b16 %v7413
        %v7446 = vunpack.c.l.b16 %v7414
        %v7447 = vunpack.c.l.b16 %v7415
        %v7448 = vunpack.c.l.b16 %v7416
        %v7449 = vunpack.c.l.b16 %v7417
        %v7450 = vunpack.c.l.b16 %v7418
        %v7451 = vunpack.c.l.b16 %v7419
        %v7452 = vpack.c.b16 %v7437, %v7436
        %v7453 = vpack.c.b16 %v7439, %v7438
        %v7454 = vpack.c.b16 %v7441, %v7440
        %v7455 = vpack.c.b16 %v7443, %v7442
        %v7456 = vpack.c.b16 %v7445, %v7444
        %v7457 = vpack.c.b16 %v7447, %v7446
        %v7458 = vpack.c.b16 %v7449, %v7448
        %v7459 = vpack.c.b16 %v7451, %v7450
        %7468 = vmatprep.subr.bf16.mxu0 0
        %7469 = vmatpush1.bf16.msra.mxu0 %v7459
        %7470 = vmatprep.subr.bf16.mxu0 0
        %7471 = vmatpush1.bf16.msra.mxu0 %v7458
        %7472 = vmatprep.subr.bf16.mxu0 0
        %7473 = vmatpush1.bf16.msra.mxu0 %v7457
        %7474 = vmatprep.subr.bf16.mxu0 0
        %7475 = vmatpush1.bf16.msra.mxu0 %v7456
        %7476 = vmatprep.subr.bf16.mxu0 0
        %7477 = vmatpush1.bf16.msra.mxu0 %v7455
        %7478 = vmatprep.subr.bf16.mxu0 0
        %7479 = vmatpush1.bf16.msra.mxu0 %v7454
        %7480 = vmatprep.subr.bf16.mxu0 0
        %7481 = vmatpush1.bf16.msra.mxu0 %v7453
        %7482 = vmatprep.subr.bf16.mxu0 0
        %7483 = vmatpush1.bf16.msra.mxu0 %v7452
        %7484 = vmatprep.subr.bf16.mxu0 0
        %7485 = vmatpush2.bf16.msra.mxu0 0
        %7486 = vmatprep.subr.bf16.mxu0 0
        %7487 = vmatpush2.bf16.msra.mxu0 0
        %7488 = vmatprep.subr.bf16.mxu0 0
        %7489 = vmatpush2.bf16.msra.mxu0 0
        %7490 = vmatprep.subr.bf16.mxu0 0
        %7491 = vmatpush2.bf16.msra.mxu0 0
        %7492 = vmatprep.subr.bf16.mxu0 0
        %7493 = vmatpush2.bf16.msra.mxu0 0
        %7494 = vmatprep.subr.bf16.mxu0 0
        %7495 = vmatpush2.bf16.msra.mxu0 0
        %7496 = vmatprep.subr.bf16.mxu0 0
        %7497 = vmatpush2.bf16.msra.mxu0 0
        %7498 = vmatprep.subr.bf16.mxu0 0
        %7499 = vmatpush2.bf16.msra.mxu0 0
        %7500 = vmatprep.mubr.bf16.mxu0 0
        %7501 = vmatmul.mubr.bf16.gmra.mxu0 %v7402
        %v7502 = vpop.f32.mrf.mxu0
        %v7503 = vadd.f32 0.0, %v7502
        %v7504 = vpop.f32.mrf.mxu0
        %v7505 = vpop.f32.mrf.mxu0
        %v7506 = vpop.f32.mrf.mxu0
        %7507 = vdwg.mxu0
        %v7508 = vadd.f32 %v7361, %v7503
        %7509 = vmatprep.subr.bf16.mxu0 0
        %7510 = vmatpush1.bf16.msra.mxu0 0
        %7511 = vmatprep.subr.bf16.mxu0 0
        %7512 = vmatpush1.bf16.msra.mxu0 0
        %7513 = vmatprep.subr.bf16.mxu0 0
        %7514 = vmatpush1.bf16.msra.mxu0 0
        %7515 = vmatprep.subr.bf16.mxu0 0
        %7516 = vmatpush1.bf16.msra.mxu0 0
        %7517 = vmatprep.subr.bf16.mxu0 0
        %7518 = vmatpush1.bf16.msra.mxu0 0
        %7519 = vmatprep.subr.bf16.mxu0 0
        %7520 = vmatpush1.bf16.msra.mxu0 0
        %7521 = vmatprep.subr.bf16.mxu0 0
        %7522 = vmatpush1.bf16.msra.mxu0 0
        %7523 = vmatprep.subr.bf16.mxu0 0
        %7524 = vmatpush1.bf16.msra.mxu0 %v6775
        %7525 = vmatprep.subr.bf16.mxu0 0
        %7526 = vmatpush2.bf16.msra.mxu0 0
        %7527 = vmatprep.subr.bf16.mxu0 0
        %7528 = vmatpush2.bf16.msra.mxu0 0
        %7529 = vmatprep.subr.bf16.mxu0 0
        %7530 = vmatpush2.bf16.msra.mxu0 0
        %7531 = vmatprep.subr.bf16.mxu0 0
        %7532 = vmatpush2.bf16.msra.mxu0 0
        %7533 = vmatprep.subr.bf16.mxu0 0
        %7534 = vmatpush2.bf16.msra.mxu0 0
        %7535 = vmatprep.subr.bf16.mxu0 0
        %7536 = vmatpush2.bf16.msra.mxu0 0
        %7537 = vmatprep.subr.bf16.mxu0 0
        %7538 = vmatpush2.bf16.msra.mxu0 0
        %7539 = vmatprep.subr.bf16.mxu0 0
        %7540 = vmatpush2.bf16.msra.mxu0 0
        %7541 = vmatprep.mubr.bf16.mxu0 0
        %7542 = vmatmul.mubr.bf16.gmra.mxu0 %v6094
        %v7543 = vpop.f32.mrf.mxu0
        %v7544 = vadd.f32 0.0, %v7543
        %v7545 = vpop.f32.mrf.mxu0
        %v7546 = vpop.f32.mrf.mxu0
        %v7547 = vpop.f32.mrf.mxu0
        %7548 = vdwg.mxu0
        %v7549 = vpack.c.bf16 %v7544, %v7544
        %s7550 = scalar_lea.vmem [#allocation17], 320
        %v7551 = vld [vmem:[%s7550] sm:$0xf]
        %v7552 = vld [vmem:[%s7550 + $0x4] sm:$0xf]
        %v7553 = vld [vmem:[%s7550 + $0x8] sm:$0xf]
        %v7554 = vld [vmem:[%s7550 + $0xc] sm:$0xf]
        %v7555 = vld [vmem:[%s7550 + $0x10] sm:$0xf]
        %v7556 = vld [vmem:[%s7550 + $0x14] sm:$0xf]
        %v7557 = vld [vmem:[%s7550 + $0x18] sm:$0xf]
        %v7558 = vld [vmem:[%s7550 + $0x1c] sm:$0xf]
        %v7559 = vld [vmem:[%s7550 + $0x20] sm:$0xf]
        %v7560 = vld [vmem:[%s7550 + $0x24] sm:$0xf]
        %v7561 = vld [vmem:[%s7550 + $0x28] sm:$0xf]
        %v7562 = vld [vmem:[%s7550 + $0x2c] sm:$0xf]
        %v7563 = vld [vmem:[%s7550 + $0x30] sm:$0xf]
        %v7564 = vld [vmem:[%s7550 + $0x34] sm:$0xf]
        %v7565 = vld [vmem:[%s7550 + $0x38] sm:$0xf]
        %v7566 = vld [vmem:[%s7550 + $0x3c] sm:$0xf]
        %v7583 = vunpack.c.l.b16 %v7551
        %v7584 = vunpack.c.l.b16 %v7552
        %v7585 = vunpack.c.l.b16 %v7553
        %v7586 = vunpack.c.l.b16 %v7554
        %v7587 = vunpack.c.l.b16 %v7555
        %v7588 = vunpack.c.l.b16 %v7556
        %v7589 = vunpack.c.l.b16 %v7557
        %v7590 = vunpack.c.l.b16 %v7558
        %v7591 = vunpack.c.l.b16 %v7559
        %v7592 = vunpack.c.l.b16 %v7560
        %v7593 = vunpack.c.l.b16 %v7561
        %v7594 = vunpack.c.l.b16 %v7562
        %v7595 = vunpack.c.l.b16 %v7563
        %v7596 = vunpack.c.l.b16 %v7564
        %v7597 = vunpack.c.l.b16 %v7565
        %v7598 = vunpack.c.l.b16 %v7566
        %v7599 = vpack.c.b16 %v7584, %v7583
        %v7600 = vpack.c.b16 %v7586, %v7585
        %v7601 = vpack.c.b16 %v7588, %v7587
        %v7602 = vpack.c.b16 %v7590, %v7589
        %v7603 = vpack.c.b16 %v7592, %v7591
        %v7604 = vpack.c.b16 %v7594, %v7593
        %v7605 = vpack.c.b16 %v7596, %v7595
        %v7606 = vpack.c.b16 %v7598, %v7597
        %7615 = vmatprep.subr.bf16.mxu0 0
        %7616 = vmatpush1.bf16.msra.mxu0 %v7606
        %7617 = vmatprep.subr.bf16.mxu0 0
        %7618 = vmatpush1.bf16.msra.mxu0 %v7605
        %7619 = vmatprep.subr.bf16.mxu0 0
        %7620 = vmatpush1.bf16.msra.mxu0 %v7604
        %7621 = vmatprep.subr.bf16.mxu0 0
        %7622 = vmatpush1.bf16.msra.mxu0 %v7603
        %7623 = vmatprep.subr.bf16.mxu0 0
        %7624 = vmatpush1.bf16.msra.mxu0 %v7602
        %7625 = vmatprep.subr.bf16.mxu0 0
        %7626 = vmatpush1.bf16.msra.mxu0 %v7601
        %7627 = vmatprep.subr.bf16.mxu0 0
        %7628 = vmatpush1.bf16.msra.mxu0 %v7600
        %7629 = vmatprep.subr.bf16.mxu0 0
        %7630 = vmatpush1.bf16.msra.mxu0 %v7599
        %7631 = vmatprep.subr.bf16.mxu0 0
        %7632 = vmatpush2.bf16.msra.mxu0 0
        %7633 = vmatprep.subr.bf16.mxu0 0
        %7634 = vmatpush2.bf16.msra.mxu0 0
        %7635 = vmatprep.subr.bf16.mxu0 0
        %7636 = vmatpush2.bf16.msra.mxu0 0
        %7637 = vmatprep.subr.bf16.mxu0 0
        %7638 = vmatpush2.bf16.msra.mxu0 0
        %7639 = vmatprep.subr.bf16.mxu0 0
        %7640 = vmatpush2.bf16.msra.mxu0 0
        %7641 = vmatprep.subr.bf16.mxu0 0
        %7642 = vmatpush2.bf16.msra.mxu0 0
        %7643 = vmatprep.subr.bf16.mxu0 0
        %7644 = vmatpush2.bf16.msra.mxu0 0
        %7645 = vmatprep.subr.bf16.mxu0 0
        %7646 = vmatpush2.bf16.msra.mxu0 0
        %7647 = vmatprep.mubr.bf16.mxu0 0
        %7648 = vmatmul.mubr.bf16.gmra.mxu0 %v7549
        %v7649 = vpop.f32.mrf.mxu0
        %v7650 = vadd.f32 0.0, %v7649
        %v7651 = vpop.f32.mrf.mxu0
        %v7652 = vpop.f32.mrf.mxu0
        %v7653 = vpop.f32.mrf.mxu0
        %7654 = vdwg.mxu0
        %v7655 = vadd.f32 %v7508, %v7650
        %7656 = vmatprep.subr.bf16.mxu0 0
        %7657 = vmatpush1.bf16.msra.mxu0 0
        %7658 = vmatprep.subr.bf16.mxu0 0
        %7659 = vmatpush1.bf16.msra.mxu0 0
        %7660 = vmatprep.subr.bf16.mxu0 0
        %7661 = vmatpush1.bf16.msra.mxu0 0
        %7662 = vmatprep.subr.bf16.mxu0 0
        %7663 = vmatpush1.bf16.msra.mxu0 0
        %7664 = vmatprep.subr.bf16.mxu0 0
        %7665 = vmatpush1.bf16.msra.mxu0 0
        %7666 = vmatprep.subr.bf16.mxu0 0
        %7667 = vmatpush1.bf16.msra.mxu0 0
        %7668 = vmatprep.subr.bf16.mxu0 0
        %7669 = vmatpush1.bf16.msra.mxu0 0
        %7670 = vmatprep.subr.bf16.mxu0 0
        %7671 = vmatpush1.bf16.msra.mxu0 %v6775
        %7672 = vmatprep.subr.bf16.mxu0 0
        %7673 = vmatpush2.bf16.msra.mxu0 0
        %7674 = vmatprep.subr.bf16.mxu0 0
        %7675 = vmatpush2.bf16.msra.mxu0 0
        %7676 = vmatprep.subr.bf16.mxu0 0
        %7677 = vmatpush2.bf16.msra.mxu0 0
        %7678 = vmatprep.subr.bf16.mxu0 0
        %7679 = vmatpush2.bf16.msra.mxu0 0
        %7680 = vmatprep.subr.bf16.mxu0 0
        %7681 = vmatpush2.bf16.msra.mxu0 0
        %7682 = vmatprep.subr.bf16.mxu0 0
        %7683 = vmatpush2.bf16.msra.mxu0 0
        %7684 = vmatprep.subr.bf16.mxu0 0
        %7685 = vmatpush2.bf16.msra.mxu0 0
        %7686 = vmatprep.subr.bf16.mxu0 0
        %7687 = vmatpush2.bf16.msra.mxu0 0
        %7688 = vmatprep.mubr.bf16.mxu0 0
        %7689 = vmatmul.mubr.bf16.gmra.mxu0 %v6246
        %v7690 = vpop.f32.mrf.mxu0
        %v7691 = vadd.f32 0.0, %v7690
        %v7692 = vpop.f32.mrf.mxu0
        %v7693 = vpop.f32.mrf.mxu0
        %v7694 = vpop.f32.mrf.mxu0
        %7695 = vdwg.mxu0
        %v7696 = vpack.c.bf16 %v7691, %v7691
        %s7697 = scalar_lea.vmem [#allocation17], 384
        %v7698 = vld [vmem:[%s7697] sm:$0xf]
        %v7699 = vld [vmem:[%s7697 + $0x4] sm:$0xf]
        %v7700 = vld [vmem:[%s7697 + $0x8] sm:$0xf]
        %v7701 = vld [vmem:[%s7697 + $0xc] sm:$0xf]
        %v7702 = vld [vmem:[%s7697 + $0x10] sm:$0xf]
        %v7703 = vld [vmem:[%s7697 + $0x14] sm:$0xf]
        %v7704 = vld [vmem:[%s7697 + $0x18] sm:$0xf]
        %v7705 = vld [vmem:[%s7697 + $0x1c] sm:$0xf]
        %v7706 = vld [vmem:[%s7697 + $0x20] sm:$0xf]
        %v7707 = vld [vmem:[%s7697 + $0x24] sm:$0xf]
        %v7708 = vld [vmem:[%s7697 + $0x28] sm:$0xf]
        %v7709 = vld [vmem:[%s7697 + $0x2c] sm:$0xf]
        %v7710 = vld [vmem:[%s7697 + $0x30] sm:$0xf]
        %v7711 = vld [vmem:[%s7697 + $0x34] sm:$0xf]
        %v7712 = vld [vmem:[%s7697 + $0x38] sm:$0xf]
        %v7713 = vld [vmem:[%s7697 + $0x3c] sm:$0xf]
        %v7730 = vunpack.c.l.b16 %v7698
        %v7731 = vunpack.c.l.b16 %v7699
        %v7732 = vunpack.c.l.b16 %v7700
        %v7733 = vunpack.c.l.b16 %v7701
        %v7734 = vunpack.c.l.b16 %v7702
        %v7735 = vunpack.c.l.b16 %v7703
        %v7736 = vunpack.c.l.b16 %v7704
        %v7737 = vunpack.c.l.b16 %v7705
        %v7738 = vunpack.c.l.b16 %v7706
        %v7739 = vunpack.c.l.b16 %v7707
        %v7740 = vunpack.c.l.b16 %v7708
        %v7741 = vunpack.c.l.b16 %v7709
        %v7742 = vunpack.c.l.b16 %v7710
        %v7743 = vunpack.c.l.b16 %v7711
        %v7744 = vunpack.c.l.b16 %v7712
        %v7745 = vunpack.c.l.b16 %v7713
        %v7746 = vpack.c.b16 %v7731, %v7730
        %v7747 = vpack.c.b16 %v7733, %v7732
        %v7748 = vpack.c.b16 %v7735, %v7734
        %v7749 = vpack.c.b16 %v7737, %v7736
        %v7750 = vpack.c.b16 %v7739, %v7738
        %v7751 = vpack.c.b16 %v7741, %v7740
        %v7752 = vpack.c.b16 %v7743, %v7742
        %v7753 = vpack.c.b16 %v7745, %v7744
        %7762 = vmatprep.subr.bf16.mxu0 0
        %7763 = vmatpush1.bf16.msra.mxu0 %v7753
        %7764 = vmatprep.subr.bf16.mxu0 0
        %7765 = vmatpush1.bf16.msra.mxu0 %v7752
        %7766 = vmatprep.subr.bf16.mxu0 0
        %7767 = vmatpush1.bf16.msra.mxu0 %v7751
        %7768 = vmatprep.subr.bf16.mxu0 0
        %7769 = vmatpush1.bf16.msra.mxu0 %v7750
        %7770 = vmatprep.subr.bf16.mxu0 0
        %7771 = vmatpush1.bf16.msra.mxu0 %v7749
        %7772 = vmatprep.subr.bf16.mxu0 0
        %7773 = vmatpush1.bf16.msra.mxu0 %v7748
        %7774 = vmatprep.subr.bf16.mxu0 0
        %7775 = vmatpush1.bf16.msra.mxu0 %v7747
        %7776 = vmatprep.subr.bf16.mxu0 0
        %7777 = vmatpush1.bf16.msra.mxu0 %v7746
        %7778 = vmatprep.subr.bf16.mxu0 0
        %7779 = vmatpush2.bf16.msra.mxu0 0
        %7780 = vmatprep.subr.bf16.mxu0 0
        %7781 = vmatpush2.bf16.msra.mxu0 0
        %7782 = vmatprep.subr.bf16.mxu0 0
        %7783 = vmatpush2.bf16.msra.mxu0 0
        %7784 = vmatprep.subr.bf16.mxu0 0
        %7785 = vmatpush2.bf16.msra.mxu0 0
        %7786 = vmatprep.subr.bf16.mxu0 0
        %7787 = vmatpush2.bf16.msra.mxu0 0
        %7788 = vmatprep.subr.bf16.mxu0 0
        %7789 = vmatpush2.bf16.msra.mxu0 0
        %7790 = vmatprep.subr.bf16.mxu0 0
        %7791 = vmatpush2.bf16.msra.mxu0 0
        %7792 = vmatprep.subr.bf16.mxu0 0
        %7793 = vmatpush2.bf16.msra.mxu0 0
        %7794 = vmatprep.mubr.bf16.mxu0 0
        %7795 = vmatmul.mubr.bf16.gmra.mxu0 %v7696
        %v7796 = vpop.f32.mrf.mxu0
        %v7797 = vadd.f32 0.0, %v7796
        %v7798 = vpop.f32.mrf.mxu0
        %v7799 = vpop.f32.mrf.mxu0
        %v7800 = vpop.f32.mrf.mxu0
        %7801 = vdwg.mxu0
        %v7802 = vadd.f32 %v7655, %v7797
        %7803 = vmatprep.subr.bf16.mxu0 0
        %7804 = vmatpush1.bf16.msra.mxu0 0
        %7805 = vmatprep.subr.bf16.mxu0 0
        %7806 = vmatpush1.bf16.msra.mxu0 0
        %7807 = vmatprep.subr.bf16.mxu0 0
        %7808 = vmatpush1.bf16.msra.mxu0 0
        %7809 = vmatprep.subr.bf16.mxu0 0
        %7810 = vmatpush1.bf16.msra.mxu0 0
        %7811 = vmatprep.subr.bf16.mxu0 0
        %7812 = vmatpush1.bf16.msra.mxu0 0
        %7813 = vmatprep.subr.bf16.mxu0 0
        %7814 = vmatpush1.bf16.msra.mxu0 0
        %7815 = vmatprep.subr.bf16.mxu0 0
        %7816 = vmatpush1.bf16.msra.mxu0 0
        %7817 = vmatprep.subr.bf16.mxu0 0
        %7818 = vmatpush1.bf16.msra.mxu0 %v6775
        %7819 = vmatprep.subr.bf16.mxu0 0
        %7820 = vmatpush2.bf16.msra.mxu0 0
        %7821 = vmatprep.subr.bf16.mxu0 0
        %7822 = vmatpush2.bf16.msra.mxu0 0
        %7823 = vmatprep.subr.bf16.mxu0 0
        %7824 = vmatpush2.bf16.msra.mxu0 0
        %7825 = vmatprep.subr.bf16.mxu0 0
        %7826 = vmatpush2.bf16.msra.mxu0 0
        %7827 = vmatprep.subr.bf16.mxu0 0
        %7828 = vmatpush2.bf16.msra.mxu0 0
        %7829 = vmatprep.subr.bf16.mxu0 0
        %7830 = vmatpush2.bf16.msra.mxu0 0
        %7831 = vmatprep.subr.bf16.mxu0 0
        %7832 = vmatpush2.bf16.msra.mxu0 0
        %7833 = vmatprep.subr.bf16.mxu0 0
        %7834 = vmatpush2.bf16.msra.mxu0 0
        %7835 = vmatprep.mubr.bf16.mxu0 0
        %7836 = vmatmul.mubr.bf16.gmra.mxu0 %v6398
        %v7837 = vpop.f32.mrf.mxu0
        %v7838 = vadd.f32 0.0, %v7837
        %v7839 = vpop.f32.mrf.mxu0
        %v7840 = vpop.f32.mrf.mxu0
        %v7841 = vpop.f32.mrf.mxu0
        %7842 = vdwg.mxu0
        %v7843 = vpack.c.bf16 %v7838, %v7838
        %s7844 = scalar_lea.vmem [#allocation17], 448
        %v7845 = vld [vmem:[%s7844] sm:$0xf]
        %v7846 = vld [vmem:[%s7844 + $0x4] sm:$0xf]
        %v7847 = vld [vmem:[%s7844 + $0x8] sm:$0xf]
        %v7848 = vld [vmem:[%s7844 + $0xc] sm:$0xf]
        %v7849 = vld [vmem:[%s7844 + $0x10] sm:$0xf]
        %v7850 = vld [vmem:[%s7844 + $0x14] sm:$0xf]
        %v7851 = vld [vmem:[%s7844 + $0x18] sm:$0xf]
        %v7852 = vld [vmem:[%s7844 + $0x1c] sm:$0xf]
        %v7853 = vld [vmem:[%s7844 + $0x20] sm:$0xf]
        %v7854 = vld [vmem:[%s7844 + $0x24] sm:$0xf]
        %v7855 = vld [vmem:[%s7844 + $0x28] sm:$0xf]
        %v7856 = vld [vmem:[%s7844 + $0x2c] sm:$0xf]
        %v7857 = vld [vmem:[%s7844 + $0x30] sm:$0xf]
        %v7858 = vld [vmem:[%s7844 + $0x34] sm:$0xf]
        %v7859 = vld [vmem:[%s7844 + $0x38] sm:$0xf]
        %v7860 = vld [vmem:[%s7844 + $0x3c] sm:$0xf]
        %v7877 = vunpack.c.l.b16 %v7845
        %v7878 = vunpack.c.l.b16 %v7846
        %v7879 = vunpack.c.l.b16 %v7847
        %v7880 = vunpack.c.l.b16 %v7848
        %v7881 = vunpack.c.l.b16 %v7849
        %v7882 = vunpack.c.l.b16 %v7850
        %v7883 = vunpack.c.l.b16 %v7851
        %v7884 = vunpack.c.l.b16 %v7852
        %v7885 = vunpack.c.l.b16 %v7853
        %v7886 = vunpack.c.l.b16 %v7854
        %v7887 = vunpack.c.l.b16 %v7855
        %v7888 = vunpack.c.l.b16 %v7856
        %v7889 = vunpack.c.l.b16 %v7857
        %v7890 = vunpack.c.l.b16 %v7858
        %v7891 = vunpack.c.l.b16 %v7859
        %v7892 = vunpack.c.l.b16 %v7860
        %v7893 = vpack.c.b16 %v7878, %v7877
        %v7894 = vpack.c.b16 %v7880, %v7879
        %v7895 = vpack.c.b16 %v7882, %v7881
        %v7896 = vpack.c.b16 %v7884, %v7883
        %v7897 = vpack.c.b16 %v7886, %v7885
        %v7898 = vpack.c.b16 %v7888, %v7887
        %v7899 = vpack.c.b16 %v7890, %v7889
        %v7900 = vpack.c.b16 %v7892, %v7891
        %7909 = vmatprep.subr.bf16.mxu0 0
        %7910 = vmatpush1.bf16.msra.mxu0 %v7900
        %7911 = vmatprep.subr.bf16.mxu0 0
        %7912 = vmatpush1.bf16.msra.mxu0 %v7899
        %7913 = vmatprep.subr.bf16.mxu0 0
        %7914 = vmatpush1.bf16.msra.mxu0 %v7898
        %7915 = vmatprep.subr.bf16.mxu0 0
        %7916 = vmatpush1.bf16.msra.mxu0 %v7897
        %7917 = vmatprep.subr.bf16.mxu0 0
        %7918 = vmatpush1.bf16.msra.mxu0 %v7896
        %7919 = vmatprep.subr.bf16.mxu0 0
        %7920 = vmatpush1.bf16.msra.mxu0 %v7895
        %7921 = vmatprep.subr.bf16.mxu0 0
        %7922 = vmatpush1.bf16.msra.mxu0 %v7894
        %7923 = vmatprep.subr.bf16.mxu0 0
        %7924 = vmatpush1.bf16.msra.mxu0 %v7893
        %7925 = vmatprep.subr.bf16.mxu0 0
        %7926 = vmatpush2.bf16.msra.mxu0 0
        %7927 = vmatprep.subr.bf16.mxu0 0
        %7928 = vmatpush2.bf16.msra.mxu0 0
        %7929 = vmatprep.subr.bf16.mxu0 0
        %7930 = vmatpush2.bf16.msra.mxu0 0
        %7931 = vmatprep.subr.bf16.mxu0 0
        %7932 = vmatpush2.bf16.msra.mxu0 0
        %7933 = vmatprep.subr.bf16.mxu0 0
        %7934 = vmatpush2.bf16.msra.mxu0 0
        %7935 = vmatprep.subr.bf16.mxu0 0
        %7936 = vmatpush2.bf16.msra.mxu0 0
        %7937 = vmatprep.subr.bf16.mxu0 0
        %7938 = vmatpush2.bf16.msra.mxu0 0
        %7939 = vmatprep.subr.bf16.mxu0 0
        %7940 = vmatpush2.bf16.msra.mxu0 0
        %7941 = vmatprep.mubr.bf16.mxu0 0
        %7942 = vmatmul.mubr.bf16.gmra.mxu0 %v7843
        %v7943 = vpop.f32.mrf.mxu0
        %v7944 = vadd.f32 0.0, %v7943
        %v7945 = vpop.f32.mrf.mxu0
        %v7946 = vpop.f32.mrf.mxu0
        %v7947 = vpop.f32.mrf.mxu0
        %7948 = vdwg.mxu0
        %v7949 = vadd.f32 %v7802, %v7944
        %7950 = vmatprep.subr.bf16.mxu0 0
        %7951 = vmatpush1.bf16.msra.mxu0 0
        %7952 = vmatprep.subr.bf16.mxu0 0
        %7953 = vmatpush1.bf16.msra.mxu0 0
        %7954 = vmatprep.subr.bf16.mxu0 0
        %7955 = vmatpush1.bf16.msra.mxu0 0
        %7956 = vmatprep.subr.bf16.mxu0 0
        %7957 = vmatpush1.bf16.msra.mxu0 0
        %7958 = vmatprep.subr.bf16.mxu0 0
        %7959 = vmatpush1.bf16.msra.mxu0 0
        %7960 = vmatprep.subr.bf16.mxu0 0
        %7961 = vmatpush1.bf16.msra.mxu0 0
        %7962 = vmatprep.subr.bf16.mxu0 0
        %7963 = vmatpush1.bf16.msra.mxu0 0
        %7964 = vmatprep.subr.bf16.mxu0 0
        %7965 = vmatpush1.bf16.msra.mxu0 %v6775
        %7966 = vmatprep.subr.bf16.mxu0 0
        %7967 = vmatpush2.bf16.msra.mxu0 0
        %7968 = vmatprep.subr.bf16.mxu0 0
        %7969 = vmatpush2.bf16.msra.mxu0 0
        %7970 = vmatprep.subr.bf16.mxu0 0
        %7971 = vmatpush2.bf16.msra.mxu0 0
        %7972 = vmatprep.subr.bf16.mxu0 0
        %7973 = vmatpush2.bf16.msra.mxu0 0
        %7974 = vmatprep.subr.bf16.mxu0 0
        %7975 = vmatpush2.bf16.msra.mxu0 0
        %7976 = vmatprep.subr.bf16.mxu0 0
        %7977 = vmatpush2.bf16.msra.mxu0 0
        %7978 = vmatprep.subr.bf16.mxu0 0
        %7979 = vmatpush2.bf16.msra.mxu0 0
        %7980 = vmatprep.subr.bf16.mxu0 0
        %7981 = vmatpush2.bf16.msra.mxu0 0
        %7982 = vmatprep.mubr.bf16.mxu0 0
        %7983 = vmatmul.mubr.bf16.gmra.mxu0 %v6550
        %v7984 = vpop.f32.mrf.mxu0
        %v7985 = vadd.f32 0.0, %v7984
        %v7986 = vpop.f32.mrf.mxu0
        %v7987 = vpop.f32.mrf.mxu0
        %v7988 = vpop.f32.mrf.mxu0
        %7989 = vdwg.mxu0
        %v7990 = vpack.c.bf16 %v7985, %v7985
        %s7991 = scalar_lea.vmem [#allocation17], 512
        %v7992 = vld [vmem:[%s7991] sm:$0xf]
        %v7993 = vld [vmem:[%s7991 + $0x4] sm:$0xf]
        %v7994 = vld [vmem:[%s7991 + $0x8] sm:$0xf]
        %v7995 = vld [vmem:[%s7991 + $0xc] sm:$0xf]
        %v7996 = vld [vmem:[%s7991 + $0x10] sm:$0xf]
        %v7997 = vld [vmem:[%s7991 + $0x14] sm:$0xf]
        %v7998 = vld [vmem:[%s7991 + $0x18] sm:$0xf]
        %v7999 = vld [vmem:[%s7991 + $0x1c] sm:$0xf]
        %v8000 = vld [vmem:[%s7991 + $0x20] sm:$0xf]
        %v8001 = vld [vmem:[%s7991 + $0x24] sm:$0xf]
        %v8002 = vld [vmem:[%s7991 + $0x28] sm:$0xf]
        %v8003 = vld [vmem:[%s7991 + $0x2c] sm:$0xf]
        %v8004 = vld [vmem:[%s7991 + $0x30] sm:$0xf]
        %v8005 = vld [vmem:[%s7991 + $0x34] sm:$0xf]
        %v8006 = vld [vmem:[%s7991 + $0x38] sm:$0xf]
        %v8007 = vld [vmem:[%s7991 + $0x3c] sm:$0xf]
        %v8024 = vunpack.c.l.b16 %v7992
        %v8025 = vunpack.c.l.b16 %v7993
        %v8026 = vunpack.c.l.b16 %v7994
        %v8027 = vunpack.c.l.b16 %v7995
        %v8028 = vunpack.c.l.b16 %v7996
        %v8029 = vunpack.c.l.b16 %v7997
        %v8030 = vunpack.c.l.b16 %v7998
        %v8031 = vunpack.c.l.b16 %v7999
        %v8032 = vunpack.c.l.b16 %v8000
        %v8033 = vunpack.c.l.b16 %v8001
        %v8034 = vunpack.c.l.b16 %v8002
        %v8035 = vunpack.c.l.b16 %v8003
        %v8036 = vunpack.c.l.b16 %v8004
        %v8037 = vunpack.c.l.b16 %v8005
        %v8038 = vunpack.c.l.b16 %v8006
        %v8039 = vunpack.c.l.b16 %v8007
        %v8040 = vpack.c.b16 %v8025, %v8024
        %v8041 = vpack.c.b16 %v8027, %v8026
        %v8042 = vpack.c.b16 %v8029, %v8028
        %v8043 = vpack.c.b16 %v8031, %v8030
        %v8044 = vpack.c.b16 %v8033, %v8032
        %v8045 = vpack.c.b16 %v8035, %v8034
        %v8046 = vpack.c.b16 %v8037, %v8036
        %v8047 = vpack.c.b16 %v8039, %v8038
        %8056 = vmatprep.subr.bf16.mxu0 0
        %8057 = vmatpush1.bf16.msra.mxu0 %v8047
        %8058 = vmatprep.subr.bf16.mxu0 0
        %8059 = vmatpush1.bf16.msra.mxu0 %v8046
        %8060 = vmatprep.subr.bf16.mxu0 0
        %8061 = vmatpush1.bf16.msra.mxu0 %v8045
        %8062 = vmatprep.subr.bf16.mxu0 0
        %8063 = vmatpush1.bf16.msra.mxu0 %v8044
        %8064 = vmatprep.subr.bf16.mxu0 0
        %8065 = vmatpush1.bf16.msra.mxu0 %v8043
        %8066 = vmatprep.subr.bf16.mxu0 0
        %8067 = vmatpush1.bf16.msra.mxu0 %v8042
        %8068 = vmatprep.subr.bf16.mxu0 0
        %8069 = vmatpush1.bf16.msra.mxu0 %v8041
        %8070 = vmatprep.subr.bf16.mxu0 0
        %8071 = vmatpush1.bf16.msra.mxu0 %v8040
        %8072 = vmatprep.subr.bf16.mxu0 0
        %8073 = vmatpush2.bf16.msra.mxu0 0
        %8074 = vmatprep.subr.bf16.mxu0 0
        %8075 = vmatpush2.bf16.msra.mxu0 0
        %8076 = vmatprep.subr.bf16.mxu0 0
        %8077 = vmatpush2.bf16.msra.mxu0 0
        %8078 = vmatprep.subr.bf16.mxu0 0
        %8079 = vmatpush2.bf16.msra.mxu0 0
        %8080 = vmatprep.subr.bf16.mxu0 0
        %8081 = vmatpush2.bf16.msra.mxu0 0
        %8082 = vmatprep.subr.bf16.mxu0 0
        %8083 = vmatpush2.bf16.msra.mxu0 0
        %8084 = vmatprep.subr.bf16.mxu0 0
        %8085 = vmatpush2.bf16.msra.mxu0 0
        %8086 = vmatprep.subr.bf16.mxu0 0
        %8087 = vmatpush2.bf16.msra.mxu0 0
        %8088 = vmatprep.mubr.bf16.mxu0 0
        %8089 = vmatmul.mubr.bf16.gmra.mxu0 %v7990
        %v8090 = vpop.f32.mrf.mxu0
        %v8091 = vadd.f32 0.0, %v8090
        %v8092 = vpop.f32.mrf.mxu0
        %v8093 = vpop.f32.mrf.mxu0
        %v8094 = vpop.f32.mrf.mxu0
        %8095 = vdwg.mxu0
        %v8096 = vadd.f32 %v7949, %v8091
        %v8097 = vmax.f32 %v8096, 0.0
        %v8098 = vpack.c.bf16 %v8097, %v8097
        %v8100 = vsel %vm5335, %v8098, 0
        %8102 = vmatprep.subr.bf16.mxu0 0
        %8103 = vmatpush1.bf16.msra.mxu0 0
        %8104 = vmatprep.subr.bf16.mxu0 0
        %8105 = vmatpush1.bf16.msra.mxu0 0
        %8106 = vmatprep.subr.bf16.mxu0 0
        %8107 = vmatpush1.bf16.msra.mxu0 0
        %8108 = vmatprep.subr.bf16.mxu0 0
        %8109 = vmatpush1.bf16.msra.mxu0 0
        %8110 = vmatprep.subr.bf16.mxu0 0
        %8111 = vmatpush1.bf16.msra.mxu0 0
        %8112 = vmatprep.subr.bf16.mxu0 0
        %8113 = vmatpush1.bf16.msra.mxu0 0
        %8114 = vmatprep.subr.bf16.mxu0 0
        %8115 = vmatpush1.bf16.msra.mxu0 0
        %8116 = vmatprep.subr.bf16.mxu0 0
        %8117 = vmatpush1.bf16.msra.mxu0 %v8100
        %8118 = vmatprep.subr.bf16.mxu0 0
        %8119 = vmatpush2.bf16.msra.mxu0 0
        %8120 = vmatprep.subr.bf16.mxu0 0
        %8121 = vmatpush2.bf16.msra.mxu0 0
        %8122 = vmatprep.subr.bf16.mxu0 0
        %8123 = vmatpush2.bf16.msra.mxu0 0
        %8124 = vmatprep.subr.bf16.mxu0 0
        %8125 = vmatpush2.bf16.msra.mxu0 0
        %8126 = vmatprep.subr.bf16.mxu0 0
        %8127 = vmatpush2.bf16.msra.mxu0 0
        %8128 = vmatprep.subr.bf16.mxu0 0
        %8129 = vmatpush2.bf16.msra.mxu0 0
        %8130 = vmatprep.subr.bf16.mxu0 0
        %8131 = vmatpush2.bf16.msra.mxu0 0
        %8132 = vmatprep.subr.bf16.mxu0 0
        %8133 = vmatpush2.bf16.msra.mxu0 0
        %8134 = vmatprep.mubr.bf16.mxu0 0
        %8135 = vmatmul.mubr.bf16.gmra.mxu0 %v5333
        %v8136 = vpop.f32.mrf.mxu0
        %v8137 = vadd.f32 0.0, %v8136
        %v8138 = vpop.f32.mrf.mxu0
        %v8139 = vpop.f32.mrf.mxu0
        %v8140 = vpop.f32.mrf.mxu0
        %8141 = vdwg.mxu0
        %v8142 = vpack.c.bf16 %v8137, %v8137
        %v8143 = vld [vmem:[#allocation19] sm:$0xf]
        %v8144 = vld [vmem:[#allocation19 + $0x4] sm:$0xf]
        %v8145 = vld [vmem:[#allocation19 + $0x8] sm:$0xf]
        %v8146 = vld [vmem:[#allocation19 + $0xc] sm:$0xf]
        %v8147 = vld [vmem:[#allocation19 + $0x10] sm:$0xf]
        %v8148 = vld [vmem:[#allocation19 + $0x14] sm:$0xf]
        %v8149 = vld [vmem:[#allocation19 + $0x18] sm:$0xf]
        %v8150 = vld [vmem:[#allocation19 + $0x1c] sm:$0xf]
        %v8151 = vld [vmem:[#allocation19 + $0x20] sm:$0xf]
        %v8152 = vld [vmem:[#allocation19 + $0x24] sm:$0xf]
        %v8153 = vld [vmem:[#allocation19 + $0x28] sm:$0xf]
        %v8154 = vld [vmem:[#allocation19 + $0x2c] sm:$0xf]
        %v8155 = vld [vmem:[#allocation19 + $0x30] sm:$0xf]
        %v8156 = vld [vmem:[#allocation19 + $0x34] sm:$0xf]
        %v8157 = vld [vmem:[#allocation19 + $0x38] sm:$0xf]
        %v8158 = vld [vmem:[#allocation19 + $0x3c] sm:$0xf]
        %8159 = vmatprep.subr.bf16.mxu0 0
        %8160 = vmatpush1.bf16.msra.mxu0 0
        %8161 = vmatprep.subr.bf16.mxu0 0
        %8162 = vmatpush1.bf16.msra.mxu0 0
        %8163 = vmatprep.subr.bf16.mxu0 0
        %8164 = vmatpush1.bf16.msra.mxu0 0
        %8165 = vmatprep.subr.bf16.mxu0 0
        %8166 = vmatpush1.bf16.msra.mxu0 0
        %8167 = vmatprep.subr.bf16.mxu0 0
        %8168 = vmatpush1.bf16.msra.mxu0 0
        %8169 = vmatprep.subr.bf16.mxu0 0
        %8170 = vmatpush1.bf16.msra.mxu0 0
        %8171 = vmatprep.subr.bf16.mxu0 0
        %8172 = vmatpush1.bf16.msra.mxu0 0
        %8173 = vmatprep.subr.bf16.mxu0 0
        %8174 = vmatpush1.bf16.msra.mxu0 %v8100
        %8175 = vmatprep.subr.bf16.mxu0 0
        %8176 = vmatpush2.bf16.msra.mxu0 0
        %8177 = vmatprep.subr.bf16.mxu0 0
        %8178 = vmatpush2.bf16.msra.mxu0 0
        %8179 = vmatprep.subr.bf16.mxu0 0
        %8180 = vmatpush2.bf16.msra.mxu0 0
        %8181 = vmatprep.subr.bf16.mxu0 0
        %8182 = vmatpush2.bf16.msra.mxu0 0
        %8183 = vmatprep.subr.bf16.mxu0 0
        %8184 = vmatpush2.bf16.msra.mxu0 0
        %8185 = vmatprep.subr.bf16.mxu0 0
        %8186 = vmatpush2.bf16.msra.mxu0 0
        %8187 = vmatprep.subr.bf16.mxu0 0
        %8188 = vmatpush2.bf16.msra.mxu0 0
        %8189 = vmatprep.subr.bf16.mxu0 0
        %8190 = vmatpush2.bf16.msra.mxu0 0
        %8191 = vmatprep.mubr.bf16.mxu0 0
        %8192 = vmatmul.mubr.bf16.gmra.mxu0 %v5399
        %v8193 = vpop.f32.mrf.mxu0
        %v8194 = vadd.f32 0.0, %v8193
        %v8195 = vpop.f32.mrf.mxu0
        %v8196 = vpop.f32.mrf.mxu0
        %v8197 = vpop.f32.mrf.mxu0
        %8198 = vdwg.mxu0
        %v8199 = vpack.c.bf16 %v8194, %v8194
        %s8200 = scalar_lea.vmem [#allocation19], 64
        %v8201 = vld [vmem:[%s8200] sm:$0xf]
        %v8202 = vld [vmem:[%s8200 + $0x4] sm:$0xf]
        %v8203 = vld [vmem:[%s8200 + $0x8] sm:$0xf]
        %v8204 = vld [vmem:[%s8200 + $0xc] sm:$0xf]
        %v8205 = vld [vmem:[%s8200 + $0x10] sm:$0xf]
        %v8206 = vld [vmem:[%s8200 + $0x14] sm:$0xf]
        %v8207 = vld [vmem:[%s8200 + $0x18] sm:$0xf]
        %v8208 = vld [vmem:[%s8200 + $0x1c] sm:$0xf]
        %v8209 = vld [vmem:[%s8200 + $0x20] sm:$0xf]
        %v8210 = vld [vmem:[%s8200 + $0x24] sm:$0xf]
        %v8211 = vld [vmem:[%s8200 + $0x28] sm:$0xf]
        %v8212 = vld [vmem:[%s8200 + $0x2c] sm:$0xf]
        %v8213 = vld [vmem:[%s8200 + $0x30] sm:$0xf]
        %v8214 = vld [vmem:[%s8200 + $0x34] sm:$0xf]
        %v8215 = vld [vmem:[%s8200 + $0x38] sm:$0xf]
        %v8216 = vld [vmem:[%s8200 + $0x3c] sm:$0xf]
        %v8233 = vunpack.c.l.b16 %v8201
        %v8234 = vunpack.c.l.b16 %v8202
        %v8235 = vunpack.c.l.b16 %v8203
        %v8236 = vunpack.c.l.b16 %v8204
        %v8237 = vunpack.c.l.b16 %v8205
        %v8238 = vunpack.c.l.b16 %v8206
        %v8239 = vunpack.c.l.b16 %v8207
        %v8240 = vunpack.c.l.b16 %v8208
        %v8241 = vunpack.c.l.b16 %v8209
        %v8242 = vunpack.c.l.b16 %v8210
        %v8243 = vunpack.c.l.b16 %v8211
        %v8244 = vunpack.c.l.b16 %v8212
        %v8245 = vunpack.c.l.b16 %v8213
        %v8246 = vunpack.c.l.b16 %v8214
        %v8247 = vunpack.c.l.b16 %v8215
        %v8248 = vunpack.c.l.b16 %v8216
        %v8249 = vpack.c.b16 %v8234, %v8233
        %v8250 = vpack.c.b16 %v8236, %v8235
        %v8251 = vpack.c.b16 %v8238, %v8237
        %v8252 = vpack.c.b16 %v8240, %v8239
        %v8253 = vpack.c.b16 %v8242, %v8241
        %v8254 = vpack.c.b16 %v8244, %v8243
        %v8255 = vpack.c.b16 %v8246, %v8245
        %v8256 = vpack.c.b16 %v8248, %v8247
        %8265 = vmatprep.subr.bf16.mxu0 0
        %8266 = vmatpush1.bf16.msra.mxu0 %v8256
        %8267 = vmatprep.subr.bf16.mxu0 0
        %8268 = vmatpush1.bf16.msra.mxu0 %v8255
        %8269 = vmatprep.subr.bf16.mxu0 0
        %8270 = vmatpush1.bf16.msra.mxu0 %v8254
        %8271 = vmatprep.subr.bf16.mxu0 0
        %8272 = vmatpush1.bf16.msra.mxu0 %v8253
        %8273 = vmatprep.subr.bf16.mxu0 0
        %8274 = vmatpush1.bf16.msra.mxu0 %v8252
        %8275 = vmatprep.subr.bf16.mxu0 0
        %8276 = vmatpush1.bf16.msra.mxu0 %v8251
        %8277 = vmatprep.subr.bf16.mxu0 0
        %8278 = vmatpush1.bf16.msra.mxu0 %v8250
        %8279 = vmatprep.subr.bf16.mxu0 0
        %8280 = vmatpush1.bf16.msra.mxu0 %v8249
        %8281 = vmatprep.subr.bf16.mxu0 0
        %8282 = vmatpush2.bf16.msra.mxu0 0
        %8283 = vmatprep.subr.bf16.mxu0 0
        %8284 = vmatpush2.bf16.msra.mxu0 0
        %8285 = vmatprep.subr.bf16.mxu0 0
        %8286 = vmatpush2.bf16.msra.mxu0 0
        %8287 = vmatprep.subr.bf16.mxu0 0
        %8288 = vmatpush2.bf16.msra.mxu0 0
        %8289 = vmatprep.subr.bf16.mxu0 0
        %8290 = vmatpush2.bf16.msra.mxu0 0
        %8291 = vmatprep.subr.bf16.mxu0 0
        %8292 = vmatpush2.bf16.msra.mxu0 0
        %8293 = vmatprep.subr.bf16.mxu0 0
        %8294 = vmatpush2.bf16.msra.mxu0 0
        %8295 = vmatprep.subr.bf16.mxu0 0
        %8296 = vmatpush2.bf16.msra.mxu0 0
        %8297 = vmatprep.mubr.bf16.mxu0 0
        %8298 = vmatmul.mubr.bf16.gmra.mxu0 %v8199
        %v8299 = vpop.f32.mrf.mxu0
        %v8300 = vadd.f32 0.0, %v8299
        %v8301 = vpop.f32.mrf.mxu0
        %v8302 = vpop.f32.mrf.mxu0
        %v8303 = vpop.f32.mrf.mxu0
        %8304 = vdwg.mxu0
        %v8321 = vunpack.c.l.b16 %v8143
        %v8322 = vunpack.c.l.b16 %v8144
        %v8323 = vunpack.c.l.b16 %v8145
        %v8324 = vunpack.c.l.b16 %v8146
        %v8325 = vunpack.c.l.b16 %v8147
        %v8326 = vunpack.c.l.b16 %v8148
        %v8327 = vunpack.c.l.b16 %v8149
        %v8328 = vunpack.c.l.b16 %v8150
        %v8329 = vunpack.c.l.b16 %v8151
        %v8330 = vunpack.c.l.b16 %v8152
        %v8331 = vunpack.c.l.b16 %v8153
        %v8332 = vunpack.c.l.b16 %v8154
        %v8333 = vunpack.c.l.b16 %v8155
        %v8334 = vunpack.c.l.b16 %v8156
        %v8335 = vunpack.c.l.b16 %v8157
        %v8336 = vunpack.c.l.b16 %v8158
        %v8337 = vpack.c.b16 %v8322, %v8321
        %v8338 = vpack.c.b16 %v8324, %v8323
        %v8339 = vpack.c.b16 %v8326, %v8325
        %v8340 = vpack.c.b16 %v8328, %v8327
        %v8341 = vpack.c.b16 %v8330, %v8329
        %v8342 = vpack.c.b16 %v8332, %v8331
        %v8343 = vpack.c.b16 %v8334, %v8333
        %v8344 = vpack.c.b16 %v8336, %v8335
        %8353 = vmatprep.subr.bf16.mxu0 0
        %8354 = vmatpush1.bf16.msra.mxu0 %v8344
        %8355 = vmatprep.subr.bf16.mxu0 0
        %8356 = vmatpush1.bf16.msra.mxu0 %v8343
        %8357 = vmatprep.subr.bf16.mxu0 0
        %8358 = vmatpush1.bf16.msra.mxu0 %v8342
        %8359 = vmatprep.subr.bf16.mxu0 0
        %8360 = vmatpush1.bf16.msra.mxu0 %v8341
        %8361 = vmatprep.subr.bf16.mxu0 0
        %8362 = vmatpush1.bf16.msra.mxu0 %v8340
        %8363 = vmatprep.subr.bf16.mxu0 0
        %8364 = vmatpush1.bf16.msra.mxu0 %v8339
        %8365 = vmatprep.subr.bf16.mxu0 0
        %8366 = vmatpush1.bf16.msra.mxu0 %v8338
        %8367 = vmatprep.subr.bf16.mxu0 0
        %8368 = vmatpush1.bf16.msra.mxu0 %v8337
        %8369 = vmatprep.subr.bf16.mxu0 0
        %8370 = vmatpush2.bf16.msra.mxu0 0
        %8371 = vmatprep.subr.bf16.mxu0 0
        %8372 = vmatpush2.bf16.msra.mxu0 0
        %8373 = vmatprep.subr.bf16.mxu0 0
        %8374 = vmatpush2.bf16.msra.mxu0 0
        %8375 = vmatprep.subr.bf16.mxu0 0
        %8376 = vmatpush2.bf16.msra.mxu0 0
        %8377 = vmatprep.subr.bf16.mxu0 0
        %8378 = vmatpush2.bf16.msra.mxu0 0
        %8379 = vmatprep.subr.bf16.mxu0 0
        %8380 = vmatpush2.bf16.msra.mxu0 0
        %8381 = vmatprep.subr.bf16.mxu0 0
        %8382 = vmatpush2.bf16.msra.mxu0 0
        %8383 = vmatprep.subr.bf16.mxu0 0
        %8384 = vmatpush2.bf16.msra.mxu0 0
        %8385 = vmatprep.mubr.bf16.mxu0 0
        %8386 = vmatmul.mubr.bf16.gmra.mxu0 %v8142
        %v8387 = vpop.f32.mrf.mxu0
        %v8388 = vadd.f32 %v8300, %v8387
        %v8389 = vpop.f32.mrf.mxu0
        %v8390 = vpop.f32.mrf.mxu0
        %v8391 = vpop.f32.mrf.mxu0
        %8392 = vdwg.mxu0
        %8393 = vmatprep.subr.bf16.mxu0 0
        %8394 = vmatpush1.bf16.msra.mxu0 0
        %8395 = vmatprep.subr.bf16.mxu0 0
        %8396 = vmatpush1.bf16.msra.mxu0 0
        %8397 = vmatprep.subr.bf16.mxu0 0
        %8398 = vmatpush1.bf16.msra.mxu0 0
        %8399 = vmatprep.subr.bf16.mxu0 0
        %8400 = vmatpush1.bf16.msra.mxu0 0
        %8401 = vmatprep.subr.bf16.mxu0 0
        %8402 = vmatpush1.bf16.msra.mxu0 0
        %8403 = vmatprep.subr.bf16.mxu0 0
        %8404 = vmatpush1.bf16.msra.mxu0 0
        %8405 = vmatprep.subr.bf16.mxu0 0
        %8406 = vmatpush1.bf16.msra.mxu0 0
        %8407 = vmatprep.subr.bf16.mxu0 0
        %8408 = vmatpush1.bf16.msra.mxu0 %v8100
        %8409 = vmatprep.subr.bf16.mxu0 0
        %8410 = vmatpush2.bf16.msra.mxu0 0
        %8411 = vmatprep.subr.bf16.mxu0 0
        %8412 = vmatpush2.bf16.msra.mxu0 0
        %8413 = vmatprep.subr.bf16.mxu0 0
        %8414 = vmatpush2.bf16.msra.mxu0 0
        %8415 = vmatprep.subr.bf16.mxu0 0
        %8416 = vmatpush2.bf16.msra.mxu0 0
        %8417 = vmatprep.subr.bf16.mxu0 0
        %8418 = vmatpush2.bf16.msra.mxu0 0
        %8419 = vmatprep.subr.bf16.mxu0 0
        %8420 = vmatpush2.bf16.msra.mxu0 0
        %8421 = vmatprep.subr.bf16.mxu0 0
        %8422 = vmatpush2.bf16.msra.mxu0 0
        %8423 = vmatprep.subr.bf16.mxu0 0
        %8424 = vmatpush2.bf16.msra.mxu0 0
        %8425 = vmatprep.mubr.bf16.mxu0 0
        %8426 = vmatmul.mubr.bf16.gmra.mxu0 %v5638
        %v8427 = vpop.f32.mrf.mxu0
        %v8428 = vadd.f32 0.0, %v8427
        %v8429 = vpop.f32.mrf.mxu0
        %v8430 = vpop.f32.mrf.mxu0
        %v8431 = vpop.f32.mrf.mxu0
        %8432 = vdwg.mxu0
        %v8433 = vpack.c.bf16 %v8428, %v8428
        %s8434 = scalar_lea.vmem [#allocation19], 128
        %v8435 = vld [vmem:[%s8434] sm:$0xf]
        %v8436 = vld [vmem:[%s8434 + $0x4] sm:$0xf]
        %v8437 = vld [vmem:[%s8434 + $0x8] sm:$0xf]
        %v8438 = vld [vmem:[%s8434 + $0xc] sm:$0xf]
        %v8439 = vld [vmem:[%s8434 + $0x10] sm:$0xf]
        %v8440 = vld [vmem:[%s8434 + $0x14] sm:$0xf]
        %v8441 = vld [vmem:[%s8434 + $0x18] sm:$0xf]
        %v8442 = vld [vmem:[%s8434 + $0x1c] sm:$0xf]
        %v8443 = vld [vmem:[%s8434 + $0x20] sm:$0xf]
        %v8444 = vld [vmem:[%s8434 + $0x24] sm:$0xf]
        %v8445 = vld [vmem:[%s8434 + $0x28] sm:$0xf]
        %v8446 = vld [vmem:[%s8434 + $0x2c] sm:$0xf]
        %v8447 = vld [vmem:[%s8434 + $0x30] sm:$0xf]
        %v8448 = vld [vmem:[%s8434 + $0x34] sm:$0xf]
        %v8449 = vld [vmem:[%s8434 + $0x38] sm:$0xf]
        %v8450 = vld [vmem:[%s8434 + $0x3c] sm:$0xf]
        %v8467 = vunpack.c.l.b16 %v8435
        %v8468 = vunpack.c.l.b16 %v8436
        %v8469 = vunpack.c.l.b16 %v8437
        %v8470 = vunpack.c.l.b16 %v8438
        %v8471 = vunpack.c.l.b16 %v8439
        %v8472 = vunpack.c.l.b16 %v8440
        %v8473 = vunpack.c.l.b16 %v8441
        %v8474 = vunpack.c.l.b16 %v8442
        %v8475 = vunpack.c.l.b16 %v8443
        %v8476 = vunpack.c.l.b16 %v8444
        %v8477 = vunpack.c.l.b16 %v8445
        %v8478 = vunpack.c.l.b16 %v8446
        %v8479 = vunpack.c.l.b16 %v8447
        %v8480 = vunpack.c.l.b16 %v8448
        %v8481 = vunpack.c.l.b16 %v8449
        %v8482 = vunpack.c.l.b16 %v8450
        %v8483 = vpack.c.b16 %v8468, %v8467
        %v8484 = vpack.c.b16 %v8470, %v8469
        %v8485 = vpack.c.b16 %v8472, %v8471
        %v8486 = vpack.c.b16 %v8474, %v8473
        %v8487 = vpack.c.b16 %v8476, %v8475
        %v8488 = vpack.c.b16 %v8478, %v8477
        %v8489 = vpack.c.b16 %v8480, %v8479
        %v8490 = vpack.c.b16 %v8482, %v8481
        %8499 = vmatprep.subr.bf16.mxu0 0
        %8500 = vmatpush1.bf16.msra.mxu0 %v8490
        %8501 = vmatprep.subr.bf16.mxu0 0
        %8502 = vmatpush1.bf16.msra.mxu0 %v8489
        %8503 = vmatprep.subr.bf16.mxu0 0
        %8504 = vmatpush1.bf16.msra.mxu0 %v8488
        %8505 = vmatprep.subr.bf16.mxu0 0
        %8506 = vmatpush1.bf16.msra.mxu0 %v8487
        %8507 = vmatprep.subr.bf16.mxu0 0
        %8508 = vmatpush1.bf16.msra.mxu0 %v8486
        %8509 = vmatprep.subr.bf16.mxu0 0
        %8510 = vmatpush1.bf16.msra.mxu0 %v8485
        %8511 = vmatprep.subr.bf16.mxu0 0
        %8512 = vmatpush1.bf16.msra.mxu0 %v8484
        %8513 = vmatprep.subr.bf16.mxu0 0
        %8514 = vmatpush1.bf16.msra.mxu0 %v8483
        %8515 = vmatprep.subr.bf16.mxu0 0
        %8516 = vmatpush2.bf16.msra.mxu0 0
        %8517 = vmatprep.subr.bf16.mxu0 0
        %8518 = vmatpush2.bf16.msra.mxu0 0
        %8519 = vmatprep.subr.bf16.mxu0 0
        %8520 = vmatpush2.bf16.msra.mxu0 0
        %8521 = vmatprep.subr.bf16.mxu0 0
        %8522 = vmatpush2.bf16.msra.mxu0 0
        %8523 = vmatprep.subr.bf16.mxu0 0
        %8524 = vmatpush2.bf16.msra.mxu0 0
        %8525 = vmatprep.subr.bf16.mxu0 0
        %8526 = vmatpush2.bf16.msra.mxu0 0
        %8527 = vmatprep.subr.bf16.mxu0 0
        %8528 = vmatpush2.bf16.msra.mxu0 0
        %8529 = vmatprep.subr.bf16.mxu0 0
        %8530 = vmatpush2.bf16.msra.mxu0 0
        %8531 = vmatprep.mubr.bf16.mxu0 0
        %8532 = vmatmul.mubr.bf16.gmra.mxu0 %v8433
        %v8533 = vpop.f32.mrf.mxu0
        %v8534 = vadd.f32 0.0, %v8533
        %v8535 = vpop.f32.mrf.mxu0
        %v8536 = vpop.f32.mrf.mxu0
        %v8537 = vpop.f32.mrf.mxu0
        %8538 = vdwg.mxu0
        %v8539 = vadd.f32 %v8388, %v8534
        %8540 = vmatprep.subr.bf16.mxu0 0
        %8541 = vmatpush1.bf16.msra.mxu0 0
        %8542 = vmatprep.subr.bf16.mxu0 0
        %8543 = vmatpush1.bf16.msra.mxu0 0
        %8544 = vmatprep.subr.bf16.mxu0 0
        %8545 = vmatpush1.bf16.msra.mxu0 0
        %8546 = vmatprep.subr.bf16.mxu0 0
        %8547 = vmatpush1.bf16.msra.mxu0 0
        %8548 = vmatprep.subr.bf16.mxu0 0
        %8549 = vmatpush1.bf16.msra.mxu0 0
        %8550 = vmatprep.subr.bf16.mxu0 0
        %8551 = vmatpush1.bf16.msra.mxu0 0
        %8552 = vmatprep.subr.bf16.mxu0 0
        %8553 = vmatpush1.bf16.msra.mxu0 0
        %8554 = vmatprep.subr.bf16.mxu0 0
        %8555 = vmatpush1.bf16.msra.mxu0 %v8100
        %8556 = vmatprep.subr.bf16.mxu0 0
        %8557 = vmatpush2.bf16.msra.mxu0 0
        %8558 = vmatprep.subr.bf16.mxu0 0
        %8559 = vmatpush2.bf16.msra.mxu0 0
        %8560 = vmatprep.subr.bf16.mxu0 0
        %8561 = vmatpush2.bf16.msra.mxu0 0
        %8562 = vmatprep.subr.bf16.mxu0 0
        %8563 = vmatpush2.bf16.msra.mxu0 0
        %8564 = vmatprep.subr.bf16.mxu0 0
        %8565 = vmatpush2.bf16.msra.mxu0 0
        %8566 = vmatprep.subr.bf16.mxu0 0
        %8567 = vmatpush2.bf16.msra.mxu0 0
        %8568 = vmatprep.subr.bf16.mxu0 0
        %8569 = vmatpush2.bf16.msra.mxu0 0
        %8570 = vmatprep.subr.bf16.mxu0 0
        %8571 = vmatpush2.bf16.msra.mxu0 0
        %8572 = vmatprep.mubr.bf16.mxu0 0
        %8573 = vmatmul.mubr.bf16.gmra.mxu0 %v5790
        %v8574 = vpop.f32.mrf.mxu0
        %v8575 = vadd.f32 0.0, %v8574
        %v8576 = vpop.f32.mrf.mxu0
        %v8577 = vpop.f32.mrf.mxu0
        %v8578 = vpop.f32.mrf.mxu0
        %8579 = vdwg.mxu0
        %v8580 = vpack.c.bf16 %v8575, %v8575
        %s8581 = scalar_lea.vmem [#allocation19], 192
        %v8582 = vld [vmem:[%s8581] sm:$0xf]
        %v8583 = vld [vmem:[%s8581 + $0x4] sm:$0xf]
        %v8584 = vld [vmem:[%s8581 + $0x8] sm:$0xf]
        %v8585 = vld [vmem:[%s8581 + $0xc] sm:$0xf]
        %v8586 = vld [vmem:[%s8581 + $0x10] sm:$0xf]
        %v8587 = vld [vmem:[%s8581 + $0x14] sm:$0xf]
        %v8588 = vld [vmem:[%s8581 + $0x18] sm:$0xf]
        %v8589 = vld [vmem:[%s8581 + $0x1c] sm:$0xf]
        %v8590 = vld [vmem:[%s8581 + $0x20] sm:$0xf]
        %v8591 = vld [vmem:[%s8581 + $0x24] sm:$0xf]
        %v8592 = vld [vmem:[%s8581 + $0x28] sm:$0xf]
        %v8593 = vld [vmem:[%s8581 + $0x2c] sm:$0xf]
        %v8594 = vld [vmem:[%s8581 + $0x30] sm:$0xf]
        %v8595 = vld [vmem:[%s8581 + $0x34] sm:$0xf]
        %v8596 = vld [vmem:[%s8581 + $0x38] sm:$0xf]
        %v8597 = vld [vmem:[%s8581 + $0x3c] sm:$0xf]
        %v8614 = vunpack.c.l.b16 %v8582
        %v8615 = vunpack.c.l.b16 %v8583
        %v8616 = vunpack.c.l.b16 %v8584
        %v8617 = vunpack.c.l.b16 %v8585
        %v8618 = vunpack.c.l.b16 %v8586
        %v8619 = vunpack.c.l.b16 %v8587
        %v8620 = vunpack.c.l.b16 %v8588
        %v8621 = vunpack.c.l.b16 %v8589
        %v8622 = vunpack.c.l.b16 %v8590
        %v8623 = vunpack.c.l.b16 %v8591
        %v8624 = vunpack.c.l.b16 %v8592
        %v8625 = vunpack.c.l.b16 %v8593
        %v8626 = vunpack.c.l.b16 %v8594
        %v8627 = vunpack.c.l.b16 %v8595
        %v8628 = vunpack.c.l.b16 %v8596
        %v8629 = vunpack.c.l.b16 %v8597
        %v8630 = vpack.c.b16 %v8615, %v8614
        %v8631 = vpack.c.b16 %v8617, %v8616
        %v8632 = vpack.c.b16 %v8619, %v8618
        %v8633 = vpack.c.b16 %v8621, %v8620
        %v8634 = vpack.c.b16 %v8623, %v8622
        %v8635 = vpack.c.b16 %v8625, %v8624
        %v8636 = vpack.c.b16 %v8627, %v8626
        %v8637 = vpack.c.b16 %v8629, %v8628
        %8646 = vmatprep.subr.bf16.mxu0 0
        %8647 = vmatpush1.bf16.msra.mxu0 %v8637
        %8648 = vmatprep.subr.bf16.mxu0 0
        %8649 = vmatpush1.bf16.msra.mxu0 %v8636
        %8650 = vmatprep.subr.bf16.mxu0 0
        %8651 = vmatpush1.bf16.msra.mxu0 %v8635
        %8652 = vmatprep.subr.bf16.mxu0 0
        %8653 = vmatpush1.bf16.msra.mxu0 %v8634
        %8654 = vmatprep.subr.bf16.mxu0 0
        %8655 = vmatpush1.bf16.msra.mxu0 %v8633
        %8656 = vmatprep.subr.bf16.mxu0 0
        %8657 = vmatpush1.bf16.msra.mxu0 %v8632
        %8658 = vmatprep.subr.bf16.mxu0 0
        %8659 = vmatpush1.bf16.msra.mxu0 %v8631
        %8660 = vmatprep.subr.bf16.mxu0 0
        %8661 = vmatpush1.bf16.msra.mxu0 %v8630
        %8662 = vmatprep.subr.bf16.mxu0 0
        %8663 = vmatpush2.bf16.msra.mxu0 0
        %8664 = vmatprep.subr.bf16.mxu0 0
        %8665 = vmatpush2.bf16.msra.mxu0 0
        %8666 = vmatprep.subr.bf16.mxu0 0
        %8667 = vmatpush2.bf16.msra.mxu0 0
        %8668 = vmatprep.subr.bf16.mxu0 0
        %8669 = vmatpush2.bf16.msra.mxu0 0
        %8670 = vmatprep.subr.bf16.mxu0 0
        %8671 = vmatpush2.bf16.msra.mxu0 0
        %8672 = vmatprep.subr.bf16.mxu0 0
        %8673 = vmatpush2.bf16.msra.mxu0 0
        %8674 = vmatprep.subr.bf16.mxu0 0
        %8675 = vmatpush2.bf16.msra.mxu0 0
        %8676 = vmatprep.subr.bf16.mxu0 0
        %8677 = vmatpush2.bf16.msra.mxu0 0
        %8678 = vmatprep.mubr.bf16.mxu0 0
        %8679 = vmatmul.mubr.bf16.gmra.mxu0 %v8580
        %v8680 = vpop.f32.mrf.mxu0
        %v8681 = vadd.f32 0.0, %v8680
        %v8682 = vpop.f32.mrf.mxu0
        %v8683 = vpop.f32.mrf.mxu0
        %v8684 = vpop.f32.mrf.mxu0
        %8685 = vdwg.mxu0
        %v8686 = vadd.f32 %v8539, %v8681
        %8687 = vmatprep.subr.bf16.mxu0 0
        %8688 = vmatpush1.bf16.msra.mxu0 0
        %8689 = vmatprep.subr.bf16.mxu0 0
        %8690 = vmatpush1.bf16.msra.mxu0 0
        %8691 = vmatprep.subr.bf16.mxu0 0
        %8692 = vmatpush1.bf16.msra.mxu0 0
        %8693 = vmatprep.subr.bf16.mxu0 0
        %8694 = vmatpush1.bf16.msra.mxu0 0
        %8695 = vmatprep.subr.bf16.mxu0 0
        %8696 = vmatpush1.bf16.msra.mxu0 0
        %8697 = vmatprep.subr.bf16.mxu0 0
        %8698 = vmatpush1.bf16.msra.mxu0 0
        %8699 = vmatprep.subr.bf16.mxu0 0
        %8700 = vmatpush1.bf16.msra.mxu0 0
        %8701 = vmatprep.subr.bf16.mxu0 0
        %8702 = vmatpush1.bf16.msra.mxu0 %v8100
        %8703 = vmatprep.subr.bf16.mxu0 0
        %8704 = vmatpush2.bf16.msra.mxu0 0
        %8705 = vmatprep.subr.bf16.mxu0 0
        %8706 = vmatpush2.bf16.msra.mxu0 0
        %8707 = vmatprep.subr.bf16.mxu0 0
        %8708 = vmatpush2.bf16.msra.mxu0 0
        %8709 = vmatprep.subr.bf16.mxu0 0
        %8710 = vmatpush2.bf16.msra.mxu0 0
        %8711 = vmatprep.subr.bf16.mxu0 0
        %8712 = vmatpush2.bf16.msra.mxu0 0
        %8713 = vmatprep.subr.bf16.mxu0 0
        %8714 = vmatpush2.bf16.msra.mxu0 0
        %8715 = vmatprep.subr.bf16.mxu0 0
        %8716 = vmatpush2.bf16.msra.mxu0 0
        %8717 = vmatprep.subr.bf16.mxu0 0
        %8718 = vmatpush2.bf16.msra.mxu0 0
        %8719 = vmatprep.mubr.bf16.mxu0 0
        %8720 = vmatmul.mubr.bf16.gmra.mxu0 %v5942
        %v8721 = vpop.f32.mrf.mxu0
        %v8722 = vadd.f32 0.0, %v8721
        %v8723 = vpop.f32.mrf.mxu0
        %v8724 = vpop.f32.mrf.mxu0
        %v8725 = vpop.f32.mrf.mxu0
        %8726 = vdwg.mxu0
        %v8727 = vpack.c.bf16 %v8722, %v8722
        %s8728 = scalar_lea.vmem [#allocation19], 256
        %v8729 = vld [vmem:[%s8728] sm:$0xf]
        %v8730 = vld [vmem:[%s8728 + $0x4] sm:$0xf]
        %v8731 = vld [vmem:[%s8728 + $0x8] sm:$0xf]
        %v8732 = vld [vmem:[%s8728 + $0xc] sm:$0xf]
        %v8733 = vld [vmem:[%s8728 + $0x10] sm:$0xf]
        %v8734 = vld [vmem:[%s8728 + $0x14] sm:$0xf]
        %v8735 = vld [vmem:[%s8728 + $0x18] sm:$0xf]
        %v8736 = vld [vmem:[%s8728 + $0x1c] sm:$0xf]
        %v8737 = vld [vmem:[%s8728 + $0x20] sm:$0xf]
        %v8738 = vld [vmem:[%s8728 + $0x24] sm:$0xf]
        %v8739 = vld [vmem:[%s8728 + $0x28] sm:$0xf]
        %v8740 = vld [vmem:[%s8728 + $0x2c] sm:$0xf]
        %v8741 = vld [vmem:[%s8728 + $0x30] sm:$0xf]
        %v8742 = vld [vmem:[%s8728 + $0x34] sm:$0xf]
        %v8743 = vld [vmem:[%s8728 + $0x38] sm:$0xf]
        %v8744 = vld [vmem:[%s8728 + $0x3c] sm:$0xf]
        %v8761 = vunpack.c.l.b16 %v8729
        %v8762 = vunpack.c.l.b16 %v8730
        %v8763 = vunpack.c.l.b16 %v8731
        %v8764 = vunpack.c.l.b16 %v8732
        %v8765 = vunpack.c.l.b16 %v8733
        %v8766 = vunpack.c.l.b16 %v8734
        %v8767 = vunpack.c.l.b16 %v8735
        %v8768 = vunpack.c.l.b16 %v8736
        %v8769 = vunpack.c.l.b16 %v8737
        %v8770 = vunpack.c.l.b16 %v8738
        %v8771 = vunpack.c.l.b16 %v8739
        %v8772 = vunpack.c.l.b16 %v8740
        %v8773 = vunpack.c.l.b16 %v8741
        %v8774 = vunpack.c.l.b16 %v8742
        %v8775 = vunpack.c.l.b16 %v8743
        %v8776 = vunpack.c.l.b16 %v8744
        %v8777 = vpack.c.b16 %v8762, %v8761
        %v8778 = vpack.c.b16 %v8764, %v8763
        %v8779 = vpack.c.b16 %v8766, %v8765
        %v8780 = vpack.c.b16 %v8768, %v8767
        %v8781 = vpack.c.b16 %v8770, %v8769
        %v8782 = vpack.c.b16 %v8772, %v8771
        %v8783 = vpack.c.b16 %v8774, %v8773
        %v8784 = vpack.c.b16 %v8776, %v8775
        %8793 = vmatprep.subr.bf16.mxu0 0
        %8794 = vmatpush1.bf16.msra.mxu0 %v8784
        %8795 = vmatprep.subr.bf16.mxu0 0
        %8796 = vmatpush1.bf16.msra.mxu0 %v8783
        %8797 = vmatprep.subr.bf16.mxu0 0
        %8798 = vmatpush1.bf16.msra.mxu0 %v8782
        %8799 = vmatprep.subr.bf16.mxu0 0
        %8800 = vmatpush1.bf16.msra.mxu0 %v8781
        %8801 = vmatprep.subr.bf16.mxu0 0
        %8802 = vmatpush1.bf16.msra.mxu0 %v8780
        %8803 = vmatprep.subr.bf16.mxu0 0
        %8804 = vmatpush1.bf16.msra.mxu0 %v8779
        %8805 = vmatprep.subr.bf16.mxu0 0
        %8806 = vmatpush1.bf16.msra.mxu0 %v8778
        %8807 = vmatprep.subr.bf16.mxu0 0
        %8808 = vmatpush1.bf16.msra.mxu0 %v8777
        %8809 = vmatprep.subr.bf16.mxu0 0
        %8810 = vmatpush2.bf16.msra.mxu0 0
        %8811 = vmatprep.subr.bf16.mxu0 0
        %8812 = vmatpush2.bf16.msra.mxu0 0
        %8813 = vmatprep.subr.bf16.mxu0 0
        %8814 = vmatpush2.bf16.msra.mxu0 0
        %8815 = vmatprep.subr.bf16.mxu0 0
        %8816 = vmatpush2.bf16.msra.mxu0 0
        %8817 = vmatprep.subr.bf16.mxu0 0
        %8818 = vmatpush2.bf16.msra.mxu0 0
        %8819 = vmatprep.subr.bf16.mxu0 0
        %8820 = vmatpush2.bf16.msra.mxu0 0
        %8821 = vmatprep.subr.bf16.mxu0 0
        %8822 = vmatpush2.bf16.msra.mxu0 0
        %8823 = vmatprep.subr.bf16.mxu0 0
        %8824 = vmatpush2.bf16.msra.mxu0 0
        %8825 = vmatprep.mubr.bf16.mxu0 0
        %8826 = vmatmul.mubr.bf16.gmra.mxu0 %v8727
        %v8827 = vpop.f32.mrf.mxu0
        %v8828 = vadd.f32 0.0, %v8827
        %v8829 = vpop.f32.mrf.mxu0
        %v8830 = vpop.f32.mrf.mxu0
        %v8831 = vpop.f32.mrf.mxu0
        %8832 = vdwg.mxu0
        %v8833 = vadd.f32 %v8686, %v8828
        %8834 = vmatprep.subr.bf16.mxu0 0
        %8835 = vmatpush1.bf16.msra.mxu0 0
        %8836 = vmatprep.subr.bf16.mxu0 0
        %8837 = vmatpush1.bf16.msra.mxu0 0
        %8838 = vmatprep.subr.bf16.mxu0 0
        %8839 = vmatpush1.bf16.msra.mxu0 0
        %8840 = vmatprep.subr.bf16.mxu0 0
        %8841 = vmatpush1.bf16.msra.mxu0 0
        %8842 = vmatprep.subr.bf16.mxu0 0
        %8843 = vmatpush1.bf16.msra.mxu0 0
        %8844 = vmatprep.subr.bf16.mxu0 0
        %8845 = vmatpush1.bf16.msra.mxu0 0
        %8846 = vmatprep.subr.bf16.mxu0 0
        %8847 = vmatpush1.bf16.msra.mxu0 0
        %8848 = vmatprep.subr.bf16.mxu0 0
        %8849 = vmatpush1.bf16.msra.mxu0 %v8100
        %8850 = vmatprep.subr.bf16.mxu0 0
        %8851 = vmatpush2.bf16.msra.mxu0 0
        %8852 = vmatprep.subr.bf16.mxu0 0
        %8853 = vmatpush2.bf16.msra.mxu0 0
        %8854 = vmatprep.subr.bf16.mxu0 0
        %8855 = vmatpush2.bf16.msra.mxu0 0
        %8856 = vmatprep.subr.bf16.mxu0 0
        %8857 = vmatpush2.bf16.msra.mxu0 0
        %8858 = vmatprep.subr.bf16.mxu0 0
        %8859 = vmatpush2.bf16.msra.mxu0 0
        %8860 = vmatprep.subr.bf16.mxu0 0
        %8861 = vmatpush2.bf16.msra.mxu0 0
        %8862 = vmatprep.subr.bf16.mxu0 0
        %8863 = vmatpush2.bf16.msra.mxu0 0
        %8864 = vmatprep.subr.bf16.mxu0 0
        %8865 = vmatpush2.bf16.msra.mxu0 0
        %8866 = vmatprep.mubr.bf16.mxu0 0
        %8867 = vmatmul.mubr.bf16.gmra.mxu0 %v6094
        %v8868 = vpop.f32.mrf.mxu0
        %v8869 = vadd.f32 0.0, %v8868
        %v8870 = vpop.f32.mrf.mxu0
        %v8871 = vpop.f32.mrf.mxu0
        %v8872 = vpop.f32.mrf.mxu0
        %8873 = vdwg.mxu0
        %v8874 = vpack.c.bf16 %v8869, %v8869
        %s8875 = scalar_lea.vmem [#allocation19], 320
        %v8876 = vld [vmem:[%s8875] sm:$0xf]
        %v8877 = vld [vmem:[%s8875 + $0x4] sm:$0xf]
        %v8878 = vld [vmem:[%s8875 + $0x8] sm:$0xf]
        %v8879 = vld [vmem:[%s8875 + $0xc] sm:$0xf]
        %v8880 = vld [vmem:[%s8875 + $0x10] sm:$0xf]
        %v8881 = vld [vmem:[%s8875 + $0x14] sm:$0xf]
        %v8882 = vld [vmem:[%s8875 + $0x18] sm:$0xf]
        %v8883 = vld [vmem:[%s8875 + $0x1c] sm:$0xf]
        %v8884 = vld [vmem:[%s8875 + $0x20] sm:$0xf]
        %v8885 = vld [vmem:[%s8875 + $0x24] sm:$0xf]
        %v8886 = vld [vmem:[%s8875 + $0x28] sm:$0xf]
        %v8887 = vld [vmem:[%s8875 + $0x2c] sm:$0xf]
        %v8888 = vld [vmem:[%s8875 + $0x30] sm:$0xf]
        %v8889 = vld [vmem:[%s8875 + $0x34] sm:$0xf]
        %v8890 = vld [vmem:[%s8875 + $0x38] sm:$0xf]
        %v8891 = vld [vmem:[%s8875 + $0x3c] sm:$0xf]
        %v8908 = vunpack.c.l.b16 %v8876
        %v8909 = vunpack.c.l.b16 %v8877
        %v8910 = vunpack.c.l.b16 %v8878
        %v8911 = vunpack.c.l.b16 %v8879
        %v8912 = vunpack.c.l.b16 %v8880
        %v8913 = vunpack.c.l.b16 %v8881
        %v8914 = vunpack.c.l.b16 %v8882
        %v8915 = vunpack.c.l.b16 %v8883
        %v8916 = vunpack.c.l.b16 %v8884
        %v8917 = vunpack.c.l.b16 %v8885
        %v8918 = vunpack.c.l.b16 %v8886
        %v8919 = vunpack.c.l.b16 %v8887
        %v8920 = vunpack.c.l.b16 %v8888
        %v8921 = vunpack.c.l.b16 %v8889
        %v8922 = vunpack.c.l.b16 %v8890
        %v8923 = vunpack.c.l.b16 %v8891
        %v8924 = vpack.c.b16 %v8909, %v8908
        %v8925 = vpack.c.b16 %v8911, %v8910
        %v8926 = vpack.c.b16 %v8913, %v8912
        %v8927 = vpack.c.b16 %v8915, %v8914
        %v8928 = vpack.c.b16 %v8917, %v8916
        %v8929 = vpack.c.b16 %v8919, %v8918
        %v8930 = vpack.c.b16 %v8921, %v8920
        %v8931 = vpack.c.b16 %v8923, %v8922
        %8940 = vmatprep.subr.bf16.mxu0 0
        %8941 = vmatpush1.bf16.msra.mxu0 %v8931
        %8942 = vmatprep.subr.bf16.mxu0 0
        %8943 = vmatpush1.bf16.msra.mxu0 %v8930
        %8944 = vmatprep.subr.bf16.mxu0 0
        %8945 = vmatpush1.bf16.msra.mxu0 %v8929
        %8946 = vmatprep.subr.bf16.mxu0 0
        %8947 = vmatpush1.bf16.msra.mxu0 %v8928
        %8948 = vmatprep.subr.bf16.mxu0 0
        %8949 = vmatpush1.bf16.msra.mxu0 %v8927
        %8950 = vmatprep.subr.bf16.mxu0 0
        %8951 = vmatpush1.bf16.msra.mxu0 %v8926
        %8952 = vmatprep.subr.bf16.mxu0 0
        %8953 = vmatpush1.bf16.msra.mxu0 %v8925
        %8954 = vmatprep.subr.bf16.mxu0 0
        %8955 = vmatpush1.bf16.msra.mxu0 %v8924
        %8956 = vmatprep.subr.bf16.mxu0 0
        %8957 = vmatpush2.bf16.msra.mxu0 0
        %8958 = vmatprep.subr.bf16.mxu0 0
        %8959 = vmatpush2.bf16.msra.mxu0 0
        %8960 = vmatprep.subr.bf16.mxu0 0
        %8961 = vmatpush2.bf16.msra.mxu0 0
        %8962 = vmatprep.subr.bf16.mxu0 0
        %8963 = vmatpush2.bf16.msra.mxu0 0
        %8964 = vmatprep.subr.bf16.mxu0 0
        %8965 = vmatpush2.bf16.msra.mxu0 0
        %8966 = vmatprep.subr.bf16.mxu0 0
        %8967 = vmatpush2.bf16.msra.mxu0 0
        %8968 = vmatprep.subr.bf16.mxu0 0
        %8969 = vmatpush2.bf16.msra.mxu0 0
        %8970 = vmatprep.subr.bf16.mxu0 0
        %8971 = vmatpush2.bf16.msra.mxu0 0
        %8972 = vmatprep.mubr.bf16.mxu0 0
        %8973 = vmatmul.mubr.bf16.gmra.mxu0 %v8874
        %v8974 = vpop.f32.mrf.mxu0
        %v8975 = vadd.f32 0.0, %v8974
        %v8976 = vpop.f32.mrf.mxu0
        %v8977 = vpop.f32.mrf.mxu0
        %v8978 = vpop.f32.mrf.mxu0
        %8979 = vdwg.mxu0
        %v8980 = vadd.f32 %v8833, %v8975
        %8981 = vmatprep.subr.bf16.mxu0 0
        %8982 = vmatpush1.bf16.msra.mxu0 0
        %8983 = vmatprep.subr.bf16.mxu0 0
        %8984 = vmatpush1.bf16.msra.mxu0 0
        %8985 = vmatprep.subr.bf16.mxu0 0
        %8986 = vmatpush1.bf16.msra.mxu0 0
        %8987 = vmatprep.subr.bf16.mxu0 0
        %8988 = vmatpush1.bf16.msra.mxu0 0
        %8989 = vmatprep.subr.bf16.mxu0 0
        %8990 = vmatpush1.bf16.msra.mxu0 0
        %8991 = vmatprep.subr.bf16.mxu0 0
        %8992 = vmatpush1.bf16.msra.mxu0 0
        %8993 = vmatprep.subr.bf16.mxu0 0
        %8994 = vmatpush1.bf16.msra.mxu0 0
        %8995 = vmatprep.subr.bf16.mxu0 0
        %8996 = vmatpush1.bf16.msra.mxu0 %v8100
        %8997 = vmatprep.subr.bf16.mxu0 0
        %8998 = vmatpush2.bf16.msra.mxu0 0
        %8999 = vmatprep.subr.bf16.mxu0 0
        %9000 = vmatpush2.bf16.msra.mxu0 0
        %9001 = vmatprep.subr.bf16.mxu0 0
        %9002 = vmatpush2.bf16.msra.mxu0 0
        %9003 = vmatprep.subr.bf16.mxu0 0
        %9004 = vmatpush2.bf16.msra.mxu0 0
        %9005 = vmatprep.subr.bf16.mxu0 0
        %9006 = vmatpush2.bf16.msra.mxu0 0
        %9007 = vmatprep.subr.bf16.mxu0 0
        %9008 = vmatpush2.bf16.msra.mxu0 0
        %9009 = vmatprep.subr.bf16.mxu0 0
        %9010 = vmatpush2.bf16.msra.mxu0 0
        %9011 = vmatprep.subr.bf16.mxu0 0
        %9012 = vmatpush2.bf16.msra.mxu0 0
        %9013 = vmatprep.mubr.bf16.mxu0 0
        %9014 = vmatmul.mubr.bf16.gmra.mxu0 %v6246
        %v9015 = vpop.f32.mrf.mxu0
        %v9016 = vadd.f32 0.0, %v9015
        %v9017 = vpop.f32.mrf.mxu0
        %v9018 = vpop.f32.mrf.mxu0
        %v9019 = vpop.f32.mrf.mxu0
        %9020 = vdwg.mxu0
        %v9021 = vpack.c.bf16 %v9016, %v9016
        %s9022 = scalar_lea.vmem [#allocation19], 384
        %v9023 = vld [vmem:[%s9022] sm:$0xf]
        %v9024 = vld [vmem:[%s9022 + $0x4] sm:$0xf]
        %v9025 = vld [vmem:[%s9022 + $0x8] sm:$0xf]
        %v9026 = vld [vmem:[%s9022 + $0xc] sm:$0xf]
        %v9027 = vld [vmem:[%s9022 + $0x10] sm:$0xf]
        %v9028 = vld [vmem:[%s9022 + $0x14] sm:$0xf]
        %v9029 = vld [vmem:[%s9022 + $0x18] sm:$0xf]
        %v9030 = vld [vmem:[%s9022 + $0x1c] sm:$0xf]
        %v9031 = vld [vmem:[%s9022 + $0x20] sm:$0xf]
        %v9032 = vld [vmem:[%s9022 + $0x24] sm:$0xf]
        %v9033 = vld [vmem:[%s9022 + $0x28] sm:$0xf]
        %v9034 = vld [vmem:[%s9022 + $0x2c] sm:$0xf]
        %v9035 = vld [vmem:[%s9022 + $0x30] sm:$0xf]
        %v9036 = vld [vmem:[%s9022 + $0x34] sm:$0xf]
        %v9037 = vld [vmem:[%s9022 + $0x38] sm:$0xf]
        %v9038 = vld [vmem:[%s9022 + $0x3c] sm:$0xf]
        %v9055 = vunpack.c.l.b16 %v9023
        %v9056 = vunpack.c.l.b16 %v9024
        %v9057 = vunpack.c.l.b16 %v9025
        %v9058 = vunpack.c.l.b16 %v9026
        %v9059 = vunpack.c.l.b16 %v9027
        %v9060 = vunpack.c.l.b16 %v9028
        %v9061 = vunpack.c.l.b16 %v9029
        %v9062 = vunpack.c.l.b16 %v9030
        %v9063 = vunpack.c.l.b16 %v9031
        %v9064 = vunpack.c.l.b16 %v9032
        %v9065 = vunpack.c.l.b16 %v9033
        %v9066 = vunpack.c.l.b16 %v9034
        %v9067 = vunpack.c.l.b16 %v9035
        %v9068 = vunpack.c.l.b16 %v9036
        %v9069 = vunpack.c.l.b16 %v9037
        %v9070 = vunpack.c.l.b16 %v9038
        %v9071 = vpack.c.b16 %v9056, %v9055
        %v9072 = vpack.c.b16 %v9058, %v9057
        %v9073 = vpack.c.b16 %v9060, %v9059
        %v9074 = vpack.c.b16 %v9062, %v9061
        %v9075 = vpack.c.b16 %v9064, %v9063
        %v9076 = vpack.c.b16 %v9066, %v9065
        %v9077 = vpack.c.b16 %v9068, %v9067
        %v9078 = vpack.c.b16 %v9070, %v9069
        %9087 = vmatprep.subr.bf16.mxu0 0
        %9088 = vmatpush1.bf16.msra.mxu0 %v9078
        %9089 = vmatprep.subr.bf16.mxu0 0
        %9090 = vmatpush1.bf16.msra.mxu0 %v9077
        %9091 = vmatprep.subr.bf16.mxu0 0
        %9092 = vmatpush1.bf16.msra.mxu0 %v9076
        %9093 = vmatprep.subr.bf16.mxu0 0
        %9094 = vmatpush1.bf16.msra.mxu0 %v9075
        %9095 = vmatprep.subr.bf16.mxu0 0
        %9096 = vmatpush1.bf16.msra.mxu0 %v9074
        %9097 = vmatprep.subr.bf16.mxu0 0
        %9098 = vmatpush1.bf16.msra.mxu0 %v9073
        %9099 = vmatprep.subr.bf16.mxu0 0
        %9100 = vmatpush1.bf16.msra.mxu0 %v9072
        %9101 = vmatprep.subr.bf16.mxu0 0
        %9102 = vmatpush1.bf16.msra.mxu0 %v9071
        %9103 = vmatprep.subr.bf16.mxu0 0
        %9104 = vmatpush2.bf16.msra.mxu0 0
        %9105 = vmatprep.subr.bf16.mxu0 0
        %9106 = vmatpush2.bf16.msra.mxu0 0
        %9107 = vmatprep.subr.bf16.mxu0 0
        %9108 = vmatpush2.bf16.msra.mxu0 0
        %9109 = vmatprep.subr.bf16.mxu0 0
        %9110 = vmatpush2.bf16.msra.mxu0 0
        %9111 = vmatprep.subr.bf16.mxu0 0
        %9112 = vmatpush2.bf16.msra.mxu0 0
        %9113 = vmatprep.subr.bf16.mxu0 0
        %9114 = vmatpush2.bf16.msra.mxu0 0
        %9115 = vmatprep.subr.bf16.mxu0 0
        %9116 = vmatpush2.bf16.msra.mxu0 0
        %9117 = vmatprep.subr.bf16.mxu0 0
        %9118 = vmatpush2.bf16.msra.mxu0 0
        %9119 = vmatprep.mubr.bf16.mxu0 0
        %9120 = vmatmul.mubr.bf16.gmra.mxu0 %v9021
        %v9121 = vpop.f32.mrf.mxu0
        %v9122 = vadd.f32 0.0, %v9121
        %v9123 = vpop.f32.mrf.mxu0
        %v9124 = vpop.f32.mrf.mxu0
        %v9125 = vpop.f32.mrf.mxu0
        %9126 = vdwg.mxu0
        %v9127 = vadd.f32 %v8980, %v9122
        %9128 = vmatprep.subr.bf16.mxu0 0
        %9129 = vmatpush1.bf16.msra.mxu0 0
        %9130 = vmatprep.subr.bf16.mxu0 0
        %9131 = vmatpush1.bf16.msra.mxu0 0
        %9132 = vmatprep.subr.bf16.mxu0 0
        %9133 = vmatpush1.bf16.msra.mxu0 0
        %9134 = vmatprep.subr.bf16.mxu0 0
        %9135 = vmatpush1.bf16.msra.mxu0 0
        %9136 = vmatprep.subr.bf16.mxu0 0
        %9137 = vmatpush1.bf16.msra.mxu0 0
        %9138 = vmatprep.subr.bf16.mxu0 0
        %9139 = vmatpush1.bf16.msra.mxu0 0
        %9140 = vmatprep.subr.bf16.mxu0 0
        %9141 = vmatpush1.bf16.msra.mxu0 0
        %9142 = vmatprep.subr.bf16.mxu0 0
        %9143 = vmatpush1.bf16.msra.mxu0 %v8100
        %9144 = vmatprep.subr.bf16.mxu0 0
        %9145 = vmatpush2.bf16.msra.mxu0 0
        %9146 = vmatprep.subr.bf16.mxu0 0
        %9147 = vmatpush2.bf16.msra.mxu0 0
        %9148 = vmatprep.subr.bf16.mxu0 0
        %9149 = vmatpush2.bf16.msra.mxu0 0
        %9150 = vmatprep.subr.bf16.mxu0 0
        %9151 = vmatpush2.bf16.msra.mxu0 0
        %9152 = vmatprep.subr.bf16.mxu0 0
        %9153 = vmatpush2.bf16.msra.mxu0 0
        %9154 = vmatprep.subr.bf16.mxu0 0
        %9155 = vmatpush2.bf16.msra.mxu0 0
        %9156 = vmatprep.subr.bf16.mxu0 0
        %9157 = vmatpush2.bf16.msra.mxu0 0
        %9158 = vmatprep.subr.bf16.mxu0 0
        %9159 = vmatpush2.bf16.msra.mxu0 0
        %9160 = vmatprep.mubr.bf16.mxu0 0
        %9161 = vmatmul.mubr.bf16.gmra.mxu0 %v6398
        %v9162 = vpop.f32.mrf.mxu0
        %v9163 = vadd.f32 0.0, %v9162
        %v9164 = vpop.f32.mrf.mxu0
        %v9165 = vpop.f32.mrf.mxu0
        %v9166 = vpop.f32.mrf.mxu0
        %9167 = vdwg.mxu0
        %v9168 = vpack.c.bf16 %v9163, %v9163
        %s9169 = scalar_lea.vmem [#allocation19], 448
        %v9170 = vld [vmem:[%s9169] sm:$0xf]
        %v9171 = vld [vmem:[%s9169 + $0x4] sm:$0xf]
        %v9172 = vld [vmem:[%s9169 + $0x8] sm:$0xf]
        %v9173 = vld [vmem:[%s9169 + $0xc] sm:$0xf]
        %v9174 = vld [vmem:[%s9169 + $0x10] sm:$0xf]
        %v9175 = vld [vmem:[%s9169 + $0x14] sm:$0xf]
        %v9176 = vld [vmem:[%s9169 + $0x18] sm:$0xf]
        %v9177 = vld [vmem:[%s9169 + $0x1c] sm:$0xf]
        %v9178 = vld [vmem:[%s9169 + $0x20] sm:$0xf]
        %v9179 = vld [vmem:[%s9169 + $0x24] sm:$0xf]
        %v9180 = vld [vmem:[%s9169 + $0x28] sm:$0xf]
        %v9181 = vld [vmem:[%s9169 + $0x2c] sm:$0xf]
        %v9182 = vld [vmem:[%s9169 + $0x30] sm:$0xf]
        %v9183 = vld [vmem:[%s9169 + $0x34] sm:$0xf]
        %v9184 = vld [vmem:[%s9169 + $0x38] sm:$0xf]
        %v9185 = vld [vmem:[%s9169 + $0x3c] sm:$0xf]
        %v9202 = vunpack.c.l.b16 %v9170
        %v9203 = vunpack.c.l.b16 %v9171
        %v9204 = vunpack.c.l.b16 %v9172
        %v9205 = vunpack.c.l.b16 %v9173
        %v9206 = vunpack.c.l.b16 %v9174
        %v9207 = vunpack.c.l.b16 %v9175
        %v9208 = vunpack.c.l.b16 %v9176
        %v9209 = vunpack.c.l.b16 %v9177
        %v9210 = vunpack.c.l.b16 %v9178
        %v9211 = vunpack.c.l.b16 %v9179
        %v9212 = vunpack.c.l.b16 %v9180
        %v9213 = vunpack.c.l.b16 %v9181
        %v9214 = vunpack.c.l.b16 %v9182
        %v9215 = vunpack.c.l.b16 %v9183
        %v9216 = vunpack.c.l.b16 %v9184
        %v9217 = vunpack.c.l.b16 %v9185
        %v9218 = vpack.c.b16 %v9203, %v9202
        %v9219 = vpack.c.b16 %v9205, %v9204
        %v9220 = vpack.c.b16 %v9207, %v9206
        %v9221 = vpack.c.b16 %v9209, %v9208
        %v9222 = vpack.c.b16 %v9211, %v9210
        %v9223 = vpack.c.b16 %v9213, %v9212
        %v9224 = vpack.c.b16 %v9215, %v9214
        %v9225 = vpack.c.b16 %v9217, %v9216
        %9234 = vmatprep.subr.bf16.mxu0 0
        %9235 = vmatpush1.bf16.msra.mxu0 %v9225
        %9236 = vmatprep.subr.bf16.mxu0 0
        %9237 = vmatpush1.bf16.msra.mxu0 %v9224
        %9238 = vmatprep.subr.bf16.mxu0 0
        %9239 = vmatpush1.bf16.msra.mxu0 %v9223
        %9240 = vmatprep.subr.bf16.mxu0 0
        %9241 = vmatpush1.bf16.msra.mxu0 %v9222
        %9242 = vmatprep.subr.bf16.mxu0 0
        %9243 = vmatpush1.bf16.msra.mxu0 %v9221
        %9244 = vmatprep.subr.bf16.mxu0 0
        %9245 = vmatpush1.bf16.msra.mxu0 %v9220
        %9246 = vmatprep.subr.bf16.mxu0 0
        %9247 = vmatpush1.bf16.msra.mxu0 %v9219
        %9248 = vmatprep.subr.bf16.mxu0 0
        %9249 = vmatpush1.bf16.msra.mxu0 %v9218
        %9250 = vmatprep.subr.bf16.mxu0 0
        %9251 = vmatpush2.bf16.msra.mxu0 0
        %9252 = vmatprep.subr.bf16.mxu0 0
        %9253 = vmatpush2.bf16.msra.mxu0 0
        %9254 = vmatprep.subr.bf16.mxu0 0
        %9255 = vmatpush2.bf16.msra.mxu0 0
        %9256 = vmatprep.subr.bf16.mxu0 0
        %9257 = vmatpush2.bf16.msra.mxu0 0
        %9258 = vmatprep.subr.bf16.mxu0 0
        %9259 = vmatpush2.bf16.msra.mxu0 0
        %9260 = vmatprep.subr.bf16.mxu0 0
        %9261 = vmatpush2.bf16.msra.mxu0 0
        %9262 = vmatprep.subr.bf16.mxu0 0
        %9263 = vmatpush2.bf16.msra.mxu0 0
        %9264 = vmatprep.subr.bf16.mxu0 0
        %9265 = vmatpush2.bf16.msra.mxu0 0
        %9266 = vmatprep.mubr.bf16.mxu0 0
        %9267 = vmatmul.mubr.bf16.gmra.mxu0 %v9168
        %v9268 = vpop.f32.mrf.mxu0
        %v9269 = vadd.f32 0.0, %v9268
        %v9270 = vpop.f32.mrf.mxu0
        %v9271 = vpop.f32.mrf.mxu0
        %v9272 = vpop.f32.mrf.mxu0
        %9273 = vdwg.mxu0
        %v9274 = vadd.f32 %v9127, %v9269
        %9275 = vmatprep.subr.bf16.mxu0 0
        %9276 = vmatpush1.bf16.msra.mxu0 0
        %9277 = vmatprep.subr.bf16.mxu0 0
        %9278 = vmatpush1.bf16.msra.mxu0 0
        %9279 = vmatprep.subr.bf16.mxu0 0
        %9280 = vmatpush1.bf16.msra.mxu0 0
        %9281 = vmatprep.subr.bf16.mxu0 0
        %9282 = vmatpush1.bf16.msra.mxu0 0
        %9283 = vmatprep.subr.bf16.mxu0 0
        %9284 = vmatpush1.bf16.msra.mxu0 0
        %9285 = vmatprep.subr.bf16.mxu0 0
        %9286 = vmatpush1.bf16.msra.mxu0 0
        %9287 = vmatprep.subr.bf16.mxu0 0
        %9288 = vmatpush1.bf16.msra.mxu0 0
        %9289 = vmatprep.subr.bf16.mxu0 0
        %9290 = vmatpush1.bf16.msra.mxu0 %v8100
        %9291 = vmatprep.subr.bf16.mxu0 0
        %9292 = vmatpush2.bf16.msra.mxu0 0
        %9293 = vmatprep.subr.bf16.mxu0 0
        %9294 = vmatpush2.bf16.msra.mxu0 0
        %9295 = vmatprep.subr.bf16.mxu0 0
        %9296 = vmatpush2.bf16.msra.mxu0 0
        %9297 = vmatprep.subr.bf16.mxu0 0
        %9298 = vmatpush2.bf16.msra.mxu0 0
        %9299 = vmatprep.subr.bf16.mxu0 0
        %9300 = vmatpush2.bf16.msra.mxu0 0
        %9301 = vmatprep.subr.bf16.mxu0 0
        %9302 = vmatpush2.bf16.msra.mxu0 0
        %9303 = vmatprep.subr.bf16.mxu0 0
        %9304 = vmatpush2.bf16.msra.mxu0 0
        %9305 = vmatprep.subr.bf16.mxu0 0
        %9306 = vmatpush2.bf16.msra.mxu0 0
        %9307 = vmatprep.mubr.bf16.mxu0 0
        %9308 = vmatmul.mubr.bf16.gmra.mxu0 %v6550
        %v9309 = vpop.f32.mrf.mxu0
        %v9310 = vadd.f32 0.0, %v9309
        %v9311 = vpop.f32.mrf.mxu0
        %v9312 = vpop.f32.mrf.mxu0
        %v9313 = vpop.f32.mrf.mxu0
        %9314 = vdwg.mxu0
        %v9315 = vpack.c.bf16 %v9310, %v9310
        %s9316 = scalar_lea.vmem [#allocation19], 512
        %v9317 = vld [vmem:[%s9316] sm:$0xf]
        %v9318 = vld [vmem:[%s9316 + $0x4] sm:$0xf]
        %v9319 = vld [vmem:[%s9316 + $0x8] sm:$0xf]
        %v9320 = vld [vmem:[%s9316 + $0xc] sm:$0xf]
        %v9321 = vld [vmem:[%s9316 + $0x10] sm:$0xf]
        %v9322 = vld [vmem:[%s9316 + $0x14] sm:$0xf]
        %v9323 = vld [vmem:[%s9316 + $0x18] sm:$0xf]
        %v9324 = vld [vmem:[%s9316 + $0x1c] sm:$0xf]
        %v9325 = vld [vmem:[%s9316 + $0x20] sm:$0xf]
        %v9326 = vld [vmem:[%s9316 + $0x24] sm:$0xf]
        %v9327 = vld [vmem:[%s9316 + $0x28] sm:$0xf]
        %v9328 = vld [vmem:[%s9316 + $0x2c] sm:$0xf]
        %v9329 = vld [vmem:[%s9316 + $0x30] sm:$0xf]
        %v9330 = vld [vmem:[%s9316 + $0x34] sm:$0xf]
        %v9331 = vld [vmem:[%s9316 + $0x38] sm:$0xf]
        %v9332 = vld [vmem:[%s9316 + $0x3c] sm:$0xf]
        %v9349 = vunpack.c.l.b16 %v9317
        %v9350 = vunpack.c.l.b16 %v9318
        %v9351 = vunpack.c.l.b16 %v9319
        %v9352 = vunpack.c.l.b16 %v9320
        %v9353 = vunpack.c.l.b16 %v9321
        %v9354 = vunpack.c.l.b16 %v9322
        %v9355 = vunpack.c.l.b16 %v9323
        %v9356 = vunpack.c.l.b16 %v9324
        %v9357 = vunpack.c.l.b16 %v9325
        %v9358 = vunpack.c.l.b16 %v9326
        %v9359 = vunpack.c.l.b16 %v9327
        %v9360 = vunpack.c.l.b16 %v9328
        %v9361 = vunpack.c.l.b16 %v9329
        %v9362 = vunpack.c.l.b16 %v9330
        %v9363 = vunpack.c.l.b16 %v9331
        %v9364 = vunpack.c.l.b16 %v9332
        %v9365 = vpack.c.b16 %v9350, %v9349
        %v9366 = vpack.c.b16 %v9352, %v9351
        %v9367 = vpack.c.b16 %v9354, %v9353
        %v9368 = vpack.c.b16 %v9356, %v9355
        %v9369 = vpack.c.b16 %v9358, %v9357
        %v9370 = vpack.c.b16 %v9360, %v9359
        %v9371 = vpack.c.b16 %v9362, %v9361
        %v9372 = vpack.c.b16 %v9364, %v9363
        %9381 = vmatprep.subr.bf16.mxu0 0
        %9382 = vmatpush1.bf16.msra.mxu0 %v9372
        %9383 = vmatprep.subr.bf16.mxu0 0
        %9384 = vmatpush1.bf16.msra.mxu0 %v9371
        %9385 = vmatprep.subr.bf16.mxu0 0
        %9386 = vmatpush1.bf16.msra.mxu0 %v9370
        %9387 = vmatprep.subr.bf16.mxu0 0
        %9388 = vmatpush1.bf16.msra.mxu0 %v9369
        %9389 = vmatprep.subr.bf16.mxu0 0
        %9390 = vmatpush1.bf16.msra.mxu0 %v9368
        %9391 = vmatprep.subr.bf16.mxu0 0
        %9392 = vmatpush1.bf16.msra.mxu0 %v9367
        %9393 = vmatprep.subr.bf16.mxu0 0
        %9394 = vmatpush1.bf16.msra.mxu0 %v9366
        %9395 = vmatprep.subr.bf16.mxu0 0
        %9396 = vmatpush1.bf16.msra.mxu0 %v9365
        %9397 = vmatprep.subr.bf16.mxu0 0
        %9398 = vmatpush2.bf16.msra.mxu0 0
        %9399 = vmatprep.subr.bf16.mxu0 0
        %9400 = vmatpush2.bf16.msra.mxu0 0
        %9401 = vmatprep.subr.bf16.mxu0 0
        %9402 = vmatpush2.bf16.msra.mxu0 0
        %9403 = vmatprep.subr.bf16.mxu0 0
        %9404 = vmatpush2.bf16.msra.mxu0 0
        %9405 = vmatprep.subr.bf16.mxu0 0
        %9406 = vmatpush2.bf16.msra.mxu0 0
        %9407 = vmatprep.subr.bf16.mxu0 0
        %9408 = vmatpush2.bf16.msra.mxu0 0
        %9409 = vmatprep.subr.bf16.mxu0 0
        %9410 = vmatpush2.bf16.msra.mxu0 0
        %9411 = vmatprep.subr.bf16.mxu0 0
        %9412 = vmatpush2.bf16.msra.mxu0 0
        %9413 = vmatprep.mubr.bf16.mxu0 0
        %9414 = vmatmul.mubr.bf16.gmra.mxu0 %v9315
        %v9415 = vpop.f32.mrf.mxu0
        %v9416 = vadd.f32 0.0, %v9415
        %v9417 = vpop.f32.mrf.mxu0
        %v9418 = vpop.f32.mrf.mxu0
        %v9419 = vpop.f32.mrf.mxu0
        %9420 = vdwg.mxu0
        %v9421 = vadd.f32 %v9274, %v9416
        %v9422 = vadd.f32 %v9421, %v6772
        %v9423 = vmax.f32 %v9422, 0.0
        %9424 = vst [vmem:[%s810] sm:$0xf] %v9423
        %s9425 = sand.u32 %s483, 1
        %s9426 = scalar_lea.sflag [#allocation4], %s9425
        %s9427 = sand.u32 %s483, 1
        %s9428 = smul.addr %s9427, 4
        %s9429 = scalar_lea.vmem [#allocation20], %s9428
        // Predicated region
        $region145: #{mff_oce_forward.1} parent=99 // pred_check
          %p9430 = pneg %p493
        $region146: #{mff_oce_forward.1} parent=99 // pred_check_branch
          %9432 = sbr.rel (%p9430) target = $region148
        $region147: #{mff_oce_forward.1} parent=99 // pred_region
          %s9434 = ssub.s32 64, 64
          %9435 = vsyncadd %s9426, %s9434
          %s9436 = smul.addr %s40, 64
          %s9437 = scalar_lea.hbm %s20, %s9436
          %s9439 = sshll.u32 %s9429, 4
          %s9440 = int_to_ptr.vmem [resolvable:$true] %s9439
          %9442 = dma.vmem_to_hbm [thread:$0]  %s9440, 64, %s9437, %s9426
        $region148: #{mff_oce_forward.1} parent=99 // pred_fallthru
          _
      $region100: #{mff_oce_forward.1} parent=5 // pred_fallthru
        _
      %p9443 = scmp.le.s32.totalorder 2, %s35
      // Predicated region
      $region149: #{mff_oce_forward.1} parent=5 // pred_check
        %p9444 = pneg %p9443
      $region150: #{mff_oce_forward.1} parent=5 // pred_check_branch
        %9446 = sbr.rel (%p9444) target = $region152
      $region151: #{mff_oce_forward.1} parent=5 // pred_region
        %s9447 = ssub.s32 %s35, 2
        // Predicated region
        $region153: #{mff_oce_forward.1} parent=151 // pred_check
          %p9448 = pneg %p499
        $region154: #{mff_oce_forward.1} parent=151 // pred_check_branch
          %9450 = sbr.rel (%p9448) target = $region156
        $region155: #{mff_oce_forward.1} parent=151 // pred_region
          %s9451 = sand.u32 %s484, 1
          %s9452 = scalar_lea.sflag [#allocation4], %s9451
          %s9453 = sand.u32 %s484, 1
          %s9454 = smul.addr %s9453, 4
          %s9455 = scalar_lea.vmem [#allocation20], %s9454
          %9456 = dma.done %s9452, 64
        $region156: #{mff_oce_forward.1} parent=151 // pred_fallthru
          _
      $region152: #{mff_oce_forward.1} parent=5 // pred_fallthru
        _
    $region6: #{mff_oce_forward.1} parent=1 // loop_footer
      %s39 = sadd.s32 1, %s35
    $region7: #{mff_oce_forward.1} parent=1 // loop_footer_branch
      %34 = sbr.rel target = $region3
    $region8: #{mff_oce_forward.1} parent=1 // loop_exit
      _
    %9457 = vsyncpa [#allocation3], 1
    %s9458 = scalar_lea.sflag [#allocation3], 1
    %9459 = vsyncpa %s9458, 1
    %9460 = vsyncpa [#allocation6], 1
    %9461 = vsyncpa [#allocation9], 1
    %9462 = vsyncpa [#allocation12], 1
    %9463 = vsyncpa [#allocation15], 1
    %9464 = vsyncpa [#allocation18], 1
    %9465 = vsyncpa [#allocation4], 1
    %s9466 = scalar_lea.sflag [#allocation4], 1
    %9467 = vsyncpa %s9466, 1

</llo_original>
